<compile_context>
chip_gen: v7x
topology: tpu7x:2x2x1
jax: 0.10.0
libtpu: 0.0.40
codegen_flags: <defaults>
</compile_context>

<pallas_src>
import math

import jax
import jax.numpy as jnp
from jax import lax
from jax.experimental import pallas as pl
from jax.experimental.pallas import tpu as pltpu

_PREV = 8      # sublane-aligned left-context rows carried for the causal conv (>= d_conv - 1)
_UNROLL = 8    # scan unroll factor -> dense (8, d_inner) y stores


# -----------------------------------------------------------------------------
# Pallas kernel: one (batch, L-chunk) tile per grid step.
# -----------------------------------------------------------------------------
def _selective_ssm_kernel(
    x_ref,        # (1, Lc, d_model)        bf16
    w_in_ref,     # (d_model, 2*d_inner)    bf16
    w_conv_ref,   # (d_conv, d_inner)       f32   depthwise taps [k, channel]
    b_conv_ref,   # (1, d_inner)            f32
    w_dtf_ref,    # (d_inner, d_inner)      bf16  x_proj[:, :dt_rank] @ dt_proj (fused offline)
    w_bc_ref,     # (d_inner, 2*d_state)    bf16  x_proj[:, dt_rank:]  ->  [B | C]
    b_dt_ref,     # (1, d_inner)            f32
    a_neg_ref,    # (d_state, d_inner)      f32   -exp(A_log)
    d_ref,        # (1, d_inner)            f32
    w_out_ref,    # (d_inner, d_model)      bf16
    out_ref,      # (1, Lc, d_model)        bf16
    h_scr,        # (d_state, d_inner)      f32   SSM state carried across chunks
    xpad_scr,     # (_PREV + Lc, d_inner)   f32   conv input with carried left context
    dt_scr,       # (Lc, d_inner)           f32   softplus(dt)
    dtx_scr,      # (Lc, d_inner)           f32   dt * x
    bc_scr,       # (Lc, 2*d_state)         f32   [B | C] rows
    y_scr,        # (Lc, d_inner)           f32
):
    Lc = x_ref.shape[1]
    d_conv, d_inner = w_conv_ref.shape
    d_state = a_neg_ref.shape[0]
    chunk = pl.program_id(1)   # innermost grid axis -> all chunks of a batch run consecutively

    # ---- reset cross-chunk carries at the first chunk of every sequence ----
    @pl.when(chunk == 0)
    def _():
        h_scr[...] = jnp.zeros_like(h_scr)
        xpad_scr[0:_PREV, :] = jnp.zeros((_PREV, d_inner), jnp.float32)

    # ---- in_proj (bf16 MXU, f32 accumulation) ----
    xz = jnp.dot(x_ref[0], w_in_ref[...], preferred_element_type=jnp.float32)  # (Lc, 2*d_inner)
    xc = xz[:, :d_inner]            # conv / SSM branch
    z = xz[:, d_inner:]             # gate branch

    # ---- depthwise causal conv1d (padding = d_conv - 1) with carried left context ----
    xpad_scr[_PREV:, :] = xc                                    # aligned store of the chunk
    xfull = xpad_scr[...]                                       # (_PREV + Lc, d_inner)
    acc = None
    for k in range(d_conv):
        start = _PREV - (d_conv - 1) + k
        term = xfull[start:start + Lc, :] * w_conv_ref[k:k + 1, :]
        acc = term if acc is None else acc + term
    conv = acc + b_conv_ref[...]
    xs = conv * jax.nn.sigmoid(conv)                            # SiLU, (Lc, d_inner)
    # carry the last _PREV pre-conv rows for the next chunk (aligned 8-row store)
    xpad_scr[0:_PREV, :] = xc[Lc - _PREV:, :]

    # ---- dt (x_proj + dt_proj fused), B/C projection (bf16 MXU), dense slab writes ----
    xs_bf = xs.astype(jnp.bfloat16)
    dt = jax.nn.softplus(
        jnp.dot(xs_bf, w_dtf_ref[...], preferred_element_type=jnp.float32) + b_dt_ref[...])
    bc_scr[...] = jnp.dot(xs_bf, w_bc_ref[...], preferred_element_type=jnp.float32)
    dt_scr[...] = dt
    dtx_scr[...] = dt * xs

    a_neg = a_neg_ref[...]                                      # hoisted, (d_state, d_inner)

    # ---- selective scan: h_t = exp(dt_t*A)*h + B_t (x) (dt_t*x_t) ; y_t = C_t . h_t ----
    # Entirely off the MXU: VPU broadcasts for the outer product, EUP for exp(dt*A) computed
    # per step (no (Lc, d_state, d_inner) slab), XLU cross-sublane reduce for the C-reduction.
    n_groups = Lc // _UNROLL

    def group_body(g, h):
        t0 = pl.multiple_of(g * _UNROLL, _UNROLL)
        dt_blk = dt_scr[pl.ds(t0, _UNROLL), :]                  # (8, d_inner)  aligned load
        dtx_blk = dtx_scr[pl.ds(t0, _UNROLL), :]                # (8, d_inner)
        # One small transpose per group so B_t / C_t become (d_state, 1) columns (XLU slot).
        bcT_blk = bc_scr[pl.ds(t0, _UNROLL), :].T               # (2*d_state, 8)
        y_rows = []
        for j in range(_UNROLL):
            dt_row = dt_blk[j:j + 1, :]                         # (1, d_inner)
            dtx_row = dtx_blk[j:j + 1, :]                       # (1, d_inner)
            b_col = bcT_blk[0:d_state, j:j + 1]                 # (d_state, 1)
            c_col = bcT_blk[d_state:2 * d_state, j:j + 1]       # (d_state, 1)
            da = jnp.exp(dt_row * a_neg)                        # (d_state, d_inner)  EUP
            h = da * h + b_col * dtx_row                        # VPU FMA chain (critical path)
            # C-reduction over d_state on the XLU (cross-sublane reduce), MXU untouched.
            y_rows.append(jnp.sum(c_col * h, axis=0, keepdims=True))
        y_scr[pl.ds(t0, _UNROLL), :] = jnp.concatenate(y_rows, axis=0)   # dense (8, d_inner)
        return h

    # unroll=True -> LLO scheduler sees across group boundaries (overlaps loads/exps/stores
    # of group g with the serial h chain of group g+1).
    h_final = lax.fori_loop(0, n_groups, group_body, h_scr[...], unroll=True)
    h_scr[...] = h_final
    # TODO(synk): at production d_inner (>=2048) block the scan over d_inner channel tiles to
    # bound vreg pressure (h alone is d_inner/2 vregs), and expose that block dim as an extra
    # "parallel" grid axis to fill both v7x TensorCores when batch is small.

    # ---- skip (D), SiLU gate, out_proj (bf16 MXU) ----
    y = y_scr[...] + xs * d_ref[...]
    gate = z * jax.nn.sigmoid(z)
    out = jnp.dot((y * gate).astype(jnp.bfloat16), w_out_ref[...],
                  preferred_element_type=jnp.float32)
    out_ref[0] = out.astype(out_ref.dtype)                      # bf16 writeback (half the bytes)
    # TODO(synk): for d_model < 128 the final store stays lane-masked; a wrapper-side fold of
    # sequence rows into 128-lane output blocks would make it lane-dense for tiny d_model.


# -----------------------------------------------------------------------------
# Wrapper
# -----------------------------------------------------------------------------
def selective_ssm_pallas(x, p, chunk_len=128, vmem_limit_bytes=48 * 1024 * 1024):
    B, L, d_model = x.shape
    d_state, d_inner = p["a_log"].shape
    dt_rank = p["w_dt"].shape[0]
    d_conv = p["w_conv"].shape[0]
    assert L % chunk_len == 0 and chunk_len % _UNROLL == 0 and chunk_len >= _PREV
    assert d_conv - 1 <= _PREV

    bf16 = jnp.bfloat16
    # Exact offline fusion: dt = softplus(xs @ (W_x[:, :dt_rank] @ W_dt) + b_dt).
    w_dtf = (p["w_x"][:, :dt_rank] @ p["w_dt"]).astype(bf16)            # (d_inner, d_inner)
    w_bc = p["w_x"][:, dt_rank:].astype(bf16)                           # (d_inner, 2*d_state)
    a_neg = (-jnp.exp(p["a_log"])).astype(jnp.float32)                  # (d_state, d_inner)
    weights = [p["w_in"].astype(bf16), p["w_conv"], p["b_conv"], w_dtf, w_bc,
               p["b_dt"], a_neg, p["d_param"], p["w_out"].astype(bf16)]
    # Constant index_map -> fetched once; TODO(synk): pipeline_mode=pl.Buffered(1) would also
    # single-buffer these weight blocks (worth it at production d_model/d_inner on v7x).
    w_specs = [pl.BlockSpec(w.shape, lambda b, c: (0, 0)) for w in weights]

    grid_spec = pltpu.PrefetchScalarGridSpec(
        num_scalar_prefetch=0,
        grid=(B, L // chunk_len),     # chunk axis MUST stay innermost (carry reset relies on it)
        in_specs=[pl.BlockSpec((1, chunk_len, d_model), lambda b, c: (b, c, 0))] + w_specs,
        out_specs=pl.BlockSpec((1, chunk_len, d_model), lambda b, c: (b, c, 0)),
        scratch_shapes=[
            pltpu.VMEM((d_state, d_inner), jnp.float32),                # h carry
            pltpu.VMEM((_PREV + chunk_len, d_inner), jnp.float32),      # conv pad + carry
            pltpu.VMEM((chunk_len, d_inner), jnp.float32),              # dt
            pltpu.VMEM((chunk_len, d_inner), jnp.float32),              # dt*x
            pltpu.VMEM((chunk_len, 2 * d_state), jnp.float32),          # [B | C]
            pltpu.VMEM((chunk_len, d_inner), jnp.float32),              # y
        ],
    )
    return pl.pallas_call(
        _selective_ssm_kernel,
        out_shape=jax.ShapeDtypeStruct((B, L, d_model), jnp.bfloat16),
        grid_spec=grid_spec,
        compiler_params=pltpu.CompilerParams(
            dimension_semantics=("parallel", "arbitrary"),   # batch across TCs, chunks sequential
            vmem_limit_bytes=vmem_limit_bytes),              # <=48 MiB keeps v7x (64 MiB) safe
    )(x.astype(bf16), *weights)


# -----------------------------------------------------------------------------
# Deterministic parameter init (shapes as in SelectiveSSM.__init__)
# -----------------------------------------------------------------------------
def init_params(key, d_model, d_state=16, d_conv=4, expand=2,
                dt_min=1e-3, dt_max=0.1, dt_scale=1.0):
    d_inner = int(expand * d_model)
    dt_rank = math.ceil(d_model / 16)
    ks = jax.random.split(key, 7)

    def u(k, shape, s):
        return jax.random.uniform(k, shape, jnp.float32, -s, s)

    w_in = u(ks[0], (d_model, 2 * d_inner), 1.0 / math.sqrt(d_model))
    w_conv = u(ks[1], (d_conv, d_inner), 1.0 / math.sqrt(d_conv))      # depthwise [k, ch]
    b_conv = u(ks[2], (1, d_inner), 1.0 / math.sqrt(d_conv))
    w_x = u(ks[3], (d_inner, dt_rank + 2 * d_state), 1.0 / math.sqrt(d_inner))
    dt_init_std = dt_rank ** (-0.5) * dt_scale
    w_dt = u(ks[4], (dt_rank, d_inner), dt_init_std)
    dt = jnp.exp(jax.random.uniform(ks[5], (d_inner,), jnp.float32)
                 * (math.log(dt_max) - math.log(dt_min)) + math.log(dt_min))
    dt = jnp.maximum(dt, dt_min)
    b_dt = (dt + jnp.log(-jnp.expm1(-dt)))[None, :]                    # inverse-softplus init
    a_log = jnp.log(jnp.broadcast_to(
        jnp.arange(1, d_state + 1, dtype=jnp.float32)[:, None], (d_state, d_inner)))
    d_param = jnp.ones((1, d_inner), jnp.float32)
    w_out = u(ks[6], (d_inner, d_model), 1.0 / math.sqrt(d_inner))

    return dict(w_in=w_in, w_conv=w_conv, b_conv=b_conv, w_x=w_x, w_dt=w_dt,
                b_dt=b_dt, a_log=a_log, d_param=d_param, w_out=w_out)


# -----------------------------------------------------------------------------
# Pure-JAX f32 reference (same math as the PyTorch module, eval mode)
# -----------------------------------------------------------------------------
def selective_ssm_reference(x, p):
    d_state, d_inner = p["a_log"].shape
    dt_rank = p["w_dt"].shape[0]
    d_conv = p["w_conv"].shape[0]
    Bsz, L, _ = x.shape

    xz = x @ p["w_in"]
    xc, z = xz[..., :d_inner], xz[..., d_inner:]
    xpad = jnp.pad(xc, ((0, 0), (d_conv - 1, 0), (0, 0)))
    acc = jnp.zeros_like(xc)
    for k in range(d_conv):
        acc = acc + xpad[:, k:k + L, :] * p["w_conv"][k][None, None, :]
    conv = acc + p["b_conv"][0]
    xs = conv * jax.nn.sigmoid(conv)

    x_dbl = xs @ p["w_x"]
    dt_in = x_dbl[..., :dt_rank]
    Bp = x_dbl[..., dt_rank:dt_rank + d_state]
    Cp = x_dbl[..., dt_rank + d_state:]
    dt = jax.nn.softplus(dt_in @ p["w_dt"] + p["b_dt"][0])
    A = -jnp.exp(p["a_log"])                                            # (d_state, d_inner)

    def step(h, inp):
        dt_t, x_t, b_t, c_t = inp
        dA = jnp.exp(dt_t[:, None, :] * A[None, :, :])
        h = dA * h + (dt_t[:, None, :] * b_t[:, :, None]) * x_t[:, None, :]
        y = jnp.sum(h * c_t[:, :, None], axis=1)
        return h, y

    h0 = jnp.zeros((Bsz, d_state, d_inner), jnp.float32)
    _, ys = lax.scan(step, h0, (jnp.swapaxes(dt, 0, 1), jnp.swapaxes(xs, 0, 1),
                                jnp.swapaxes(Bp, 0, 1), jnp.swapaxes(Cp, 0, 1)))
    y = jnp.swapaxes(ys, 0, 1) + xs * p["d_param"][0]
    gate = z * jax.nn.sigmoid(z)
    return (y * gate) @ p["w_out"]


if __name__ == "__main__":
    # d_model=64 -> d_inner=128, dt_rank=4, d_state=16, d_conv=4.
    # L=128 with chunk_len=64 exercises the cross-chunk h / conv-context carries.
    d_model, d_state, d_conv, expand = 64, 16, 4, 2
    B, L = 2, 128

    key = jax.random.PRNGKey(0)
    k_params, k_x = jax.random.split(key)
    params = init_params(k_params, d_model, d_state, d_conv, expand)
    x = jax.random.normal(k_x, (B, L, d_model), jnp.float32)

    out = selective_ssm_pallas(x, params, chunk_len=64)
    jax.block_until_ready(out)
    out_f32 = out.astype(jnp.float32)

    ref = selective_ssm_reference(x, params)
    max_diff = float(jnp.max(jnp.abs(out_f32 - ref)))
    scale = max(1.0, float(jnp.max(jnp.abs(ref))))
    assert out.shape == (B, L, d_model)
    # bf16 MXU operands + bf16 output (f32 accumulation / f32 scan) -> small deviation vs f32 ref.
    assert max_diff < 5e-2 * scale, f"mismatch vs reference: max|diff|={max_diff}"

    # TODO(synk): gradient checkpointing and the training-mode Gumbel-sigmoid SDM mask are
    # training-only control flow with no inference-forward Pallas equivalent (use_sdm=False here);
    # return_hidden_states=True (h_seq output) is likewise not materialized.
    print("KERNEL_OK")
</pallas_src>

<mosaic_0001>
module attributes {stable_mosaic.version = 11 : i64} {
  func.func @_selective_ssm_kernel(%arg0: i32, %arg1: i32, %arg2: memref<1x64x64xbf16, #tpu.memory_space<vmem>>, %arg3: memref<64x256xbf16, #tpu.memory_space<vmem>>, %arg4: memref<4x128xf32, #tpu.memory_space<vmem>>, %arg5: memref<1x128xf32, #tpu.memory_space<vmem>>, %arg6: memref<128x128xbf16, #tpu.memory_space<vmem>>, %arg7: memref<128x32xbf16, #tpu.memory_space<vmem>>, %arg8: memref<1x128xf32, #tpu.memory_space<vmem>>, %arg9: memref<16x128xf32, #tpu.memory_space<vmem>>, %arg10: memref<1x128xf32, #tpu.memory_space<vmem>>, %arg11: memref<128x64xbf16, #tpu.memory_space<vmem>>, %arg12: memref<1x64x64xbf16, #tpu.memory_space<vmem>>, %arg13: memref<16x128xf32, #tpu.memory_space<vmem>>, %arg14: memref<72x128xf32, #tpu.memory_space<vmem>>, %arg15: memref<64x128xf32, #tpu.memory_space<vmem>>, %arg16: memref<64x128xf32, #tpu.memory_space<vmem>>, %arg17: memref<64x32xf32, #tpu.memory_space<vmem>>, %arg18: memref<64x128xf32, #tpu.memory_space<vmem>>) attributes {dimension_semantics = [#tpu.dimension_semantics<parallel>, #tpu.dimension_semantics<arbitrary>], iteration_bounds = array<i64: 2, 2>, scalar_prefetch = 0 : i64, scratch_operands = 6 : i64, tpu.core_type = #tpu.core_type<tc>, window_params = [{transform_indices = @transform_0, window_bounds = array<i64: 1, 64, 64>}, {pipeline_mode = #tpu.pipeline_mode<synchronous>, transform_indices = @transform_1, window_bounds = array<i64: 64, 256>}, {pipeline_mode = #tpu.pipeline_mode<synchronous>, transform_indices = @transform_2, window_bounds = array<i64: 4, 128>}, {pipeline_mode = #tpu.pipeline_mode<synchronous>, transform_indices = @transform_3, window_bounds = array<i64: 1, 128>}, {pipeline_mode = #tpu.pipeline_mode<synchronous>, transform_indices = @transform_4, window_bounds = array<i64: 128, 128>}, {pipeline_mode = #tpu.pipeline_mode<synchronous>, transform_indices = @transform_5, window_bounds = array<i64: 128, 32>}, {pipeline_mode = #tpu.pipeline_mode<synchronous>, transform_indices = @transform_6, window_bounds = array<i64: 1, 128>}, {pipeline_mode = #tpu.pipeline_mode<synchronous>, transform_indices = @transform_7, window_bounds = array<i64: 16, 128>}, {pipeline_mode = #tpu.pipeline_mode<synchronous>, transform_indices = @transform_8, window_bounds = array<i64: 1, 128>}, {pipeline_mode = #tpu.pipeline_mode<synchronous>, transform_indices = @transform_9, window_bounds = array<i64: 128, 64>}, {transform_indices = @transform_10, window_bounds = array<i64: 1, 64, 64>}]} {
    %c0_i32 = arith.constant 0 : i32
    %0 = arith.cmpi eq, %arg1, %c0_i32 : i32
    %1 = arith.extui %0 : i1 to i32
    %c0_i32_0 = arith.constant 0 : i32
    %2 = arith.cmpi ne, %1, %c0_i32_0 : i32
    scf.if %2 {
      %cst_156 = arith.constant 0.000000e+00 : f32
      %1209 = vector.broadcast %cst_156 : f32 to vector<16x128xf32>
      %c0_157 = arith.constant 0 : index
      %c0_158 = arith.constant 0 : index
      %1210 = vector.load %arg13[%c0_157, %c0_158] : memref<16x128xf32, #tpu.memory_space<vmem>>, vector<16x128xf32>
      tpu.vector_store %arg13[%c0_157, %c0_158], %1209 {strides = array<i32>} : memref<16x128xf32, #tpu.memory_space<vmem>>, vector<16x128xf32>,
      %cst_159 = arith.constant 0.000000e+00 : f32
      %1211 = vector.broadcast %cst_159 : f32 to vector<8x128xf32>
      %c0_160 = arith.constant 0 : index
      %c0_161 = arith.constant 0 : index
      %1212 = vector.load %arg14[%c0_160, %c0_161] : memref<72x128xf32, #tpu.memory_space<vmem>>, vector<8x128xf32>
      tpu.vector_store %arg14[%c0_160, %c0_161], %1211 {strides = array<i32>} : memref<72x128xf32, #tpu.memory_space<vmem>>, vector<8x128xf32>,
    } else {
    }
    %c0 = arith.constant 0 : index
    %c0_1 = arith.constant 0 : index
    %c0_2 = arith.constant 0 : index
    %3 = vector.load %arg2[%c0, %c0_1, %c0_2] : memref<1x64x64xbf16, #tpu.memory_space<vmem>>, vector<1x64x64xbf16>
    %4 = vector.shape_cast %3 : vector<1x64x64xbf16> to vector<64x64xbf16>
    %c0_3 = arith.constant 0 : index
    %c0_4 = arith.constant 0 : index
    %5 = vector.load %arg3[%c0_3, %c0_4] : memref<64x256xbf16, #tpu.memory_space<vmem>>, vector<64x256xbf16>
    %cst = arith.constant dense<0.000000e+00> : vector<64x256xf32>
    %6 = tpu.matmul %4, %5, %cst {dimension_numbers = #tpu.dot_dimension_numbers<[1], [0], [0], [1], [0, 0, 1, 1], [], []>} : vector<64x64xbf16>, vector<64x256xbf16>, vector<64x256xf32> -> vector<64x256xf32>
    %7 = vector.extract_strided_slice %6 {offsets = [0, 0], sizes = [64, 128], strides = [1, 1]} : vector<64x256xf32> to vector<64x128xf32>
    %8 = vector.extract_strided_slice %6 {offsets = [0, 128], sizes = [64, 128], strides = [1, 1]} : vector<64x256xf32> to vector<64x128xf32>
    %c8 = arith.constant 8 : index
    %c0_5 = arith.constant 0 : index
    %9 = vector.load %arg14[%c8, %c0_5] : memref<72x128xf32, #tpu.memory_space<vmem>>, vector<64x128xf32>
    tpu.vector_store %arg14[%c8, %c0_5], %7 {strides = array<i32>} : memref<72x128xf32, #tpu.memory_space<vmem>>, vector<64x128xf32>,
    %c0_6 = arith.constant 0 : index
    %c0_7 = arith.constant 0 : index
    %10 = vector.load %arg14[%c0_6, %c0_7] : memref<72x128xf32, #tpu.memory_space<vmem>>, vector<72x128xf32>
    %11 = vector.extract_strided_slice %10 {offsets = [5, 0], sizes = [64, 128], strides = [1, 1]} : vector<72x128xf32> to vector<64x128xf32>
    %c0_8 = arith.constant 0 : index
    %c0_9 = arith.constant 0 : index
    %12 = vector.load %arg4[%c0_8, %c0_9] : memref<4x128xf32, #tpu.memory_space<vmem>>, vector<1x128xf32>
    %13 = vector.broadcast %12 : vector<1x128xf32> to vector<64x128xf32>
    %14 = arith.mulf %11, %13 : vector<64x128xf32>
    %15 = vector.extract_strided_slice %10 {offsets = [6, 0], sizes = [64, 128], strides = [1, 1]} : vector<72x128xf32> to vector<64x128xf32>
    %c1 = arith.constant 1 : index
    %c0_10 = arith.constant 0 : index
    %16 = vector.load %arg4[%c1, %c0_10] : memref<4x128xf32, #tpu.memory_space<vmem>>, vector<1x128xf32>
    %17 = vector.broadcast %16 : vector<1x128xf32> to vector<64x128xf32>
    %18 = arith.mulf %15, %17 : vector<64x128xf32>
    %19 = arith.addf %14, %18 : vector<64x128xf32>
    %20 = vector.extract_strided_slice %10 {offsets = [7, 0], sizes = [64, 128], strides = [1, 1]} : vector<72x128xf32> to vector<64x128xf32>
    %c2 = arith.constant 2 : index
    %c0_11 = arith.constant 0 : index
    %21 = vector.load %arg4[%c2, %c0_11] : memref<4x128xf32, #tpu.memory_space<vmem>>, vector<1x128xf32>
    %22 = vector.broadcast %21 : vector<1x128xf32> to vector<64x128xf32>
    %23 = arith.mulf %20, %22 : vector<64x128xf32>
    %24 = arith.addf %19, %23 : vector<64x128xf32>
    %25 = vector.extract_strided_slice %10 {offsets = [8, 0], sizes = [64, 128], strides = [1, 1]} : vector<72x128xf32> to vector<64x128xf32>
    %c3 = arith.constant 3 : index
    %c0_12 = arith.constant 0 : index
    %26 = vector.load %arg4[%c3, %c0_12] : memref<4x128xf32, #tpu.memory_space<vmem>>, vector<1x128xf32>
    %27 = vector.broadcast %26 : vector<1x128xf32> to vector<64x128xf32>
    %28 = arith.mulf %25, %27 : vector<64x128xf32>
    %29 = arith.addf %24, %28 : vector<64x128xf32>
    %c0_13 = arith.constant 0 : index
    %c0_14 = arith.constant 0 : index
    %30 = vector.load %arg5[%c0_13, %c0_14] : memref<1x128xf32, #tpu.memory_space<vmem>>, vector<1x128xf32>
    %31 = vector.broadcast %30 : vector<1x128xf32> to vector<64x128xf32>
    %32 = arith.addf %29, %31 : vector<64x128xf32>
    %33 = arith.negf %32 : vector<64x128xf32>
    %34 = math.exp %33 : vector<64x128xf32>
    %cst_15 = arith.constant 1.000000e+00 : f32
    %35 = vector.broadcast %cst_15 : f32 to vector<64x128xf32>
    %36 = arith.addf %35, %34 : vector<64x128xf32>
    %37 = arith.divf %35, %36 : vector<64x128xf32>
    %38 = arith.mulf %32, %37 : vector<64x128xf32>
    %39 = vector.extract_strided_slice %7 {offsets = [56, 0], sizes = [8, 128], strides = [1, 1]} : vector<64x128xf32> to vector<8x128xf32>
    %c0_16 = arith.constant 0 : index
    %c0_17 = arith.constant 0 : index
    %40 = vector.load %arg14[%c0_16, %c0_17] : memref<72x128xf32, #tpu.memory_space<vmem>>, vector<8x128xf32>
    tpu.vector_store %arg14[%c0_16, %c0_17], %39 {strides = array<i32>} : memref<72x128xf32, #tpu.memory_space<vmem>>, vector<8x128xf32>,
    %41 = arith.truncf %38 : vector<64x128xf32> to vector<64x128xbf16>
    %c0_18 = arith.constant 0 : index
    %c0_19 = arith.constant 0 : index
    %42 = vector.load %arg6[%c0_18, %c0_19] : memref<128x128xbf16, #tpu.memory_space<vmem>>, vector<128x128xbf16>
    %cst_20 = arith.constant dense<0.000000e+00> : vector<64x128xf32>
    %43 = tpu.matmul %41, %42, %cst_20 {dimension_numbers = #tpu.dot_dimension_numbers<[1], [0], [0], [1], [0, 0, 1, 1], [], []>} : vector<64x128xbf16>, vector<128x128xbf16>, vector<64x128xf32> -> vector<64x128xf32>
    %c0_21 = arith.constant 0 : index
    %c0_22 = arith.constant 0 : index
    %44 = vector.load %arg8[%c0_21, %c0_22] : memref<1x128xf32, #tpu.memory_space<vmem>>, vector<1x128xf32>
    %45 = vector.broadcast %44 : vector<1x128xf32> to vector<64x128xf32>
    %46 = arith.addf %43, %45 : vector<64x128xf32>
    %cst_23 = arith.constant 0.000000e+00 : f32
    %47 = vector.broadcast %cst_23 : f32 to vector<64x128xf32>
    %48 = arith.maximumf %46, %47 : vector<64x128xf32>
    %49 = vector.broadcast %cst_23 : f32 to vector<64x128xf32>
    %50 = arith.subf %46, %49 : vector<64x128xf32>
    %51 = arith.cmpf one, %50, %50 : vector<64x128xf32>
    %52 = vector.broadcast %cst_23 : f32 to vector<64x128xf32>
    %53 = arith.addf %46, %52 : vector<64x128xf32>
    %54 = math.absf %50 : vector<64x128xf32>
    %cst_24 = arith.constant 0.000000e+00 : f32
    %55 = vector.broadcast %cst_24 : f32 to vector<64x128xf32>
    %56 = arith.subf %55, %54 : vector<64x128xf32>
    %57 = math.exp %56 : vector<64x128xf32>
    %58 = math.log1p %57 : vector<64x128xf32>
    %59 = arith.addf %48, %58 : vector<64x128xf32>
    %60 = arith.select %51, %53, %59 : vector<64x128xi1>, vector<64x128xf32>
    %c0_25 = arith.constant 0 : index
    %c0_26 = arith.constant 0 : index
    %61 = vector.load %arg7[%c0_25, %c0_26] : memref<128x32xbf16, #tpu.memory_space<vmem>>, vector<128x32xbf16>
    %cst_27 = arith.constant dense<0.000000e+00> : vector<64x32xf32>
    %62 = tpu.matmul %41, %61, %cst_27 {dimension_numbers = #tpu.dot_dimension_numbers<[1], [0], [0], [1], [0, 0, 1, 1], [], []>} : vector<64x128xbf16>, vector<128x32xbf16>, vector<64x32xf32> -> vector<64x32xf32>
    %c0_28 = arith.constant 0 : index
    %c0_29 = arith.constant 0 : index
    %63 = vector.load %arg17[%c0_28, %c0_29] : memref<64x32xf32, #tpu.memory_space<vmem>>, vector<64x32xf32>
    tpu.vector_store %arg17[%c0_28, %c0_29], %62 {strides = array<i32>} : memref<64x32xf32, #tpu.memory_space<vmem>>, vector<64x32xf32>,
    %c0_30 = arith.constant 0 : index
    %c0_31 = arith.constant 0 : index
    %64 = vector.load %arg15[%c0_30, %c0_31] : memref<64x128xf32, #tpu.memory_space<vmem>>, vector<64x128xf32>
    tpu.vector_store %arg15[%c0_30, %c0_31], %60 {strides = array<i32>} : memref<64x128xf32, #tpu.memory_space<vmem>>, vector<64x128xf32>,
    %65 = arith.mulf %60, %38 : vector<64x128xf32>
    %c0_32 = arith.constant 0 : index
    %c0_33 = arith.constant 0 : index
    %66 = vector.load %arg16[%c0_32, %c0_33] : memref<64x128xf32, #tpu.memory_space<vmem>>, vector<64x128xf32>
    tpu.vector_store %arg16[%c0_32, %c0_33], %65 {strides = array<i32>} : memref<64x128xf32, #tpu.memory_space<vmem>>, vector<64x128xf32>,
    %c0_34 = arith.constant 0 : index
    %c0_35 = arith.constant 0 : index
    %67 = vector.load %arg9[%c0_34, %c0_35] : memref<16x128xf32, #tpu.memory_space<vmem>>, vector<16x128xf32>
    %c0_36 = arith.constant 0 : index
    %c0_37 = arith.constant 0 : index
    %68 = vector.load %arg13[%c0_36, %c0_37] : memref<16x128xf32, #tpu.memory_space<vmem>>, vector<16x128xf32>
    %c0_i32_38 = arith.constant 0 : i32
    %c8_i32 = arith.constant 8 : i32
    %69 = arith.muli %c0_i32_38, %c8_i32 : i32
    %70 = tpu.assume_multiple %69, 8 : i32
    %71 = arith.index_cast %70 : i32 to index
    %c0_39 = arith.constant 0 : index
    %72 = vector.load %arg15[%71, %c0_39] : memref<64x128xf32, #tpu.memory_space<vmem>>, vector<8x128xf32>
    %73 = arith.index_cast %70 : i32 to index
    %c0_40 = arith.constant 0 : index
    %74 = vector.load %arg16[%73, %c0_40] : memref<64x128xf32, #tpu.memory_space<vmem>>, vector<8x128xf32>
    %75 = arith.index_cast %70 : i32 to index
    %c0_41 = arith.constant 0 : index
    %76 = vector.load %arg17[%75, %c0_41] : memref<64x32xf32, #tpu.memory_space<vmem>>, vector<8x32xf32>
    %77 = tpu.transpose %76, [1, 0] : vector<8x32xf32> -> vector<32x8xf32>
    %78 = vector.extract_strided_slice %72 {offsets = [0, 0], sizes = [1, 128], strides = [1, 1]} : vector<8x128xf32> to vector<1x128xf32>
    %79 = vector.extract_strided_slice %74 {offsets = [0, 0], sizes = [1, 128], strides = [1, 1]} : vector<8x128xf32> to vector<1x128xf32>
    %80 = vector.extract_strided_slice %77 {offsets = [0, 0], sizes = [16, 1], strides = [1, 1]} : vector<32x8xf32> to vector<16x1xf32>
    %81 = vector.extract_strided_slice %77 {offsets = [16, 0], sizes = [16, 1], strides = [1, 1]} : vector<32x8xf32> to vector<16x1xf32>
    %82 = vector.broadcast %78 : vector<1x128xf32> to vector<16x128xf32>
    %83 = arith.mulf %82, %67 : vector<16x128xf32>
    %84 = math.exp %83 : vector<16x128xf32>
    %85 = arith.mulf %84, %68 : vector<16x128xf32>
    %86 = vector.broadcast %80 : vector<16x1xf32> to vector<16x128xf32>
    %87 = vector.broadcast %79 : vector<1x128xf32> to vector<16x128xf32>
    %88 = arith.mulf %86, %87 : vector<16x128xf32>
    %89 = arith.addf %85, %88 : vector<16x128xf32>
    %90 = vector.broadcast %81 : vector<16x1xf32> to vector<16x128xf32>
    %91 = arith.mulf %90, %89 : vector<16x128xf32>
    %cst_42 = arith.constant dense<0.000000e+00> : vector<128xf32>
    %92 = vector.multi_reduction <add>, %91, %cst_42 [0] : vector<16x128xf32> to vector<128xf32>
    %93 = vector.shape_cast %92 : vector<128xf32> to vector<1x128xf32>
    %94 = vector.extract_strided_slice %72 {offsets = [1, 0], sizes = [1, 128], strides = [1, 1]} : vector<8x128xf32> to vector<1x128xf32>
    %95 = vector.extract_strided_slice %74 {offsets = [1, 0], sizes = [1, 128], strides = [1, 1]} : vector<8x128xf32> to vector<1x128xf32>
    %96 = vector.extract_strided_slice %77 {offsets = [0, 1], sizes = [16, 1], strides = [1, 1]} : vector<32x8xf32> to vector<16x1xf32>
    %97 = vector.extract_strided_slice %77 {offsets = [16, 1], sizes = [16, 1], strides = [1, 1]} : vector<32x8xf32> to vector<16x1xf32>
    %98 = vector.broadcast %94 : vector<1x128xf32> to vector<16x128xf32>
    %99 = arith.mulf %98, %67 : vector<16x128xf32>
    %100 = math.exp %99 : vector<16x128xf32>
    %101 = arith.mulf %100, %89 : vector<16x128xf32>
    %102 = vector.broadcast %96 : vector<16x1xf32> to vector<16x128xf32>
    %103 = vector.broadcast %95 : vector<1x128xf32> to vector<16x128xf32>
    %104 = arith.mulf %102, %103 : vector<16x128xf32>
    %105 = arith.addf %101, %104 : vector<16x128xf32>
    %106 = vector.broadcast %97 : vector<16x1xf32> to vector<16x128xf32>
    %107 = arith.mulf %106, %105 : vector<16x128xf32>
    %cst_43 = arith.constant dense<0.000000e+00> : vector<128xf32>
    %108 = vector.multi_reduction <add>, %107, %cst_43 [0] : vector<16x128xf32> to vector<128xf32>
    %109 = vector.shape_cast %108 : vector<128xf32> to vector<1x128xf32>
    %110 = vector.extract_strided_slice %72 {offsets = [2, 0], sizes = [1, 128], strides = [1, 1]} : vector<8x128xf32> to vector<1x128xf32>
    %111 = vector.extract_strided_slice %74 {offsets = [2, 0], sizes = [1, 128], strides = [1, 1]} : vector<8x128xf32> to vector<1x128xf32>
    %112 = vector.extract_strided_slice %77 {offsets = [0, 2], sizes = [16, 1], strides = [1, 1]} : vector<32x8xf32> to vector<16x1xf32>
    %113 = vector.extract_strided_slice %77 {offsets = [16, 2], sizes = [16, 1], strides = [1, 1]} : vector<32x8xf32> to vector<16x1xf32>
    %114 = vector.broadcast %110 : vector<1x128xf32> to vector<16x128xf32>
    %115 = arith.mulf %114, %67 : vector<16x128xf32>
    %116 = math.exp %115 : vector<16x128xf32>
    %117 = arith.mulf %116, %105 : vector<16x128xf32>
    %118 = vector.broadcast %112 : vector<16x1xf32> to vector<16x128xf32>
    %119 = vector.broadcast %111 : vector<1x128xf32> to vector<16x128xf32>
    %120 = arith.mulf %118, %119 : vector<16x128xf32>
    %121 = arith.addf %117, %120 : vector<16x128xf32>
    %122 = vector.broadcast %113 : vector<16x1xf32> to vector<16x128xf32>
    %123 = arith.mulf %122, %121 : vector<16x128xf32>
    %cst_44 = arith.constant dense<0.000000e+00> : vector<128xf32>
    %124 = vector.multi_reduction <add>, %123, %cst_44 [0] : vector<16x128xf32> to vector<128xf32>
    %125 = vector.shape_cast %124 : vector<128xf32> to vector<1x128xf32>
    %126 = vector.extract_strided_slice %72 {offsets = [3, 0], sizes = [1, 128], strides = [1, 1]} : vector<8x128xf32> to vector<1x128xf32>
    %127 = vector.extract_strided_slice %74 {offsets = [3, 0], sizes = [1, 128], strides = [1, 1]} : vector<8x128xf32> to vector<1x128xf32>
    %128 = vector.extract_strided_slice %77 {offsets = [0, 3], sizes = [16, 1], strides = [1, 1]} : vector<32x8xf32> to vector<16x1xf32>
    %129 = vector.extract_strided_slice %77 {offsets = [16, 3], sizes = [16, 1], strides = [1, 1]} : vector<32x8xf32> to vector<16x1xf32>
    %130 = vector.broadcast %126 : vector<1x128xf32> to vector<16x128xf32>
    %131 = arith.mulf %130, %67 : vector<16x128xf32>
    %132 = math.exp %131 : vector<16x128xf32>
    %133 = arith.mulf %132, %121 : vector<16x128xf32>
    %134 = vector.broadcast %128 : vector<16x1xf32> to vector<16x128xf32>
    %135 = vector.broadcast %127 : vector<1x128xf32> to vector<16x128xf32>
    %136 = arith.mulf %134, %135 : vector<16x128xf32>
    %137 = arith.addf %133, %136 : vector<16x128xf32>
    %138 = vector.broadcast %129 : vector<16x1xf32> to vector<16x128xf32>
    %139 = arith.mulf %138, %137 : vector<16x128xf32>
    %cst_45 = arith.constant dense<0.000000e+00> : vector<128xf32>
    %140 = vector.multi_reduction <add>, %139, %cst_45 [0] : vector<16x128xf32> to vector<128xf32>
    %141 = vector.shape_cast %140 : vector<128xf32> to vector<1x128xf32>
    %142 = vector.extract_strided_slice %72 {offsets = [4, 0], sizes = [1, 128], strides = [1, 1]} : vector<8x128xf32> to vector<1x128xf32>
    %143 = vector.extract_strided_slice %74 {offsets = [4, 0], sizes = [1, 128], strides = [1, 1]} : vector<8x128xf32> to vector<1x128xf32>
    %144 = vector.extract_strided_slice %77 {offsets = [0, 4], sizes = [16, 1], strides = [1, 1]} : vector<32x8xf32> to vector<16x1xf32>
    %145 = vector.extract_strided_slice %77 {offsets = [16, 4], sizes = [16, 1], strides = [1, 1]} : vector<32x8xf32> to vector<16x1xf32>
    %146 = vector.broadcast %142 : vector<1x128xf32> to vector<16x128xf32>
    %147 = arith.mulf %146, %67 : vector<16x128xf32>
    %148 = math.exp %147 : vector<16x128xf32>
    %149 = arith.mulf %148, %137 : vector<16x128xf32>
    %150 = vector.broadcast %144 : vector<16x1xf32> to vector<16x128xf32>
    %151 = vector.broadcast %143 : vector<1x128xf32> to vector<16x128xf32>
    %152 = arith.mulf %150, %151 : vector<16x128xf32>
    %153 = arith.addf %149, %152 : vector<16x128xf32>
    %154 = vector.broadcast %145 : vector<16x1xf32> to vector<16x128xf32>
    %155 = arith.mulf %154, %153 : vector<16x128xf32>
    %cst_46 = arith.constant dense<0.000000e+00> : vector<128xf32>
    %156 = vector.multi_reduction <add>, %155, %cst_46 [0] : vector<16x128xf32> to vector<128xf32>
    %157 = vector.shape_cast %156 : vector<128xf32> to vector<1x128xf32>
    %158 = vector.extract_strided_slice %72 {offsets = [5, 0], sizes = [1, 128], strides = [1, 1]} : vector<8x128xf32> to vector<1x128xf32>
    %159 = vector.extract_strided_slice %74 {offsets = [5, 0], sizes = [1, 128], strides = [1, 1]} : vector<8x128xf32> to vector<1x128xf32>
    %160 = vector.extract_strided_slice %77 {offsets = [0, 5], sizes = [16, 1], strides = [1, 1]} : vector<32x8xf32> to vector<16x1xf32>
    %161 = vector.extract_strided_slice %77 {offsets = [16, 5], sizes = [16, 1], strides = [1, 1]} : vector<32x8xf32> to vector<16x1xf32>
    %162 = vector.broadcast %158 : vector<1x128xf32> to vector<16x128xf32>
    %163 = arith.mulf %162, %67 : vector<16x128xf32>
    %164 = math.exp %163 : vector<16x128xf32>
    %165 = arith.mulf %164, %153 : vector<16x128xf32>
    %166 = vector.broadcast %160 : vector<16x1xf32> to vector<16x128xf32>
    %167 = vector.broadcast %159 : vector<1x128xf32> to vector<16x128xf32>
    %168 = arith.mulf %166, %167 : vector<16x128xf32>
    %169 = arith.addf %165, %168 : vector<16x128xf32>
    %170 = vector.broadcast %161 : vector<16x1xf32> to vector<16x128xf32>
    %171 = arith.mulf %170, %169 : vector<16x128xf32>
    %cst_47 = arith.constant dense<0.000000e+00> : vector<128xf32>
    %172 = vector.multi_reduction <add>, %171, %cst_47 [0] : vector<16x128xf32> to vector<128xf32>
    %173 = vector.shape_cast %172 : vector<128xf32> to vector<1x128xf32>
    %174 = vector.extract_strided_slice %72 {offsets = [6, 0], sizes = [1, 128], strides = [1, 1]} : vector<8x128xf32> to vector<1x128xf32>
    %175 = vector.extract_strided_slice %74 {offsets = [6, 0], sizes = [1, 128], strides = [1, 1]} : vector<8x128xf32> to vector<1x128xf32>
    %176 = vector.extract_strided_slice %77 {offsets = [0, 6], sizes = [16, 1], strides = [1, 1]} : vector<32x8xf32> to vector<16x1xf32>
    %177 = vector.extract_strided_slice %77 {offsets = [16, 6], sizes = [16, 1], strides = [1, 1]} : vector<32x8xf32> to vector<16x1xf32>
    %178 = vector.broadcast %174 : vector<1x128xf32> to vector<16x128xf32>
    %179 = arith.mulf %178, %67 : vector<16x128xf32>
    %180 = math.exp %179 : vector<16x128xf32>
    %181 = arith.mulf %180, %169 : vector<16x128xf32>
    %182 = vector.broadcast %176 : vector<16x1xf32> to vector<16x128xf32>
    %183 = vector.broadcast %175 : vector<1x128xf32> to vector<16x128xf32>
    %184 = arith.mulf %182, %183 : vector<16x128xf32>
    %185 = arith.addf %181, %184 : vector<16x128xf32>
    %186 = vector.broadcast %177 : vector<16x1xf32> to vector<16x128xf32>
    %187 = arith.mulf %186, %185 : vector<16x128xf32>
    %cst_48 = arith.constant dense<0.000000e+00> : vector<128xf32>
    %188 = vector.multi_reduction <add>, %187, %cst_48 [0] : vector<16x128xf32> to vector<128xf32>
    %189 = vector.shape_cast %188 : vector<128xf32> to vector<1x128xf32>
    %190 = vector.extract_strided_slice %72 {offsets = [7, 0], sizes = [1, 128], strides = [1, 1]} : vector<8x128xf32> to vector<1x128xf32>
    %191 = vector.extract_strided_slice %74 {offsets = [7, 0], sizes = [1, 128], strides = [1, 1]} : vector<8x128xf32> to vector<1x128xf32>
    %192 = vector.extract_strided_slice %77 {offsets = [0, 7], sizes = [16, 1], strides = [1, 1]} : vector<32x8xf32> to vector<16x1xf32>
    %193 = vector.extract_strided_slice %77 {offsets = [16, 7], sizes = [16, 1], strides = [1, 1]} : vector<32x8xf32> to vector<16x1xf32>
    %194 = vector.broadcast %190 : vector<1x128xf32> to vector<16x128xf32>
    %195 = arith.mulf %194, %67 : vector<16x128xf32>
    %196 = math.exp %195 : vector<16x128xf32>
    %197 = arith.mulf %196, %185 : vector<16x128xf32>
    %198 = vector.broadcast %192 : vector<16x1xf32> to vector<16x128xf32>
    %199 = vector.broadcast %191 : vector<1x128xf32> to vector<16x128xf32>
    %200 = arith.mulf %198, %199 : vector<16x128xf32>
    %201 = arith.addf %197, %200 : vector<16x128xf32>
    %202 = vector.broadcast %193 : vector<16x1xf32> to vector<16x128xf32>
    %203 = arith.mulf %202, %201 : vector<16x128xf32>
    %cst_49 = arith.constant dense<0.000000e+00> : vector<128xf32>
    %204 = vector.multi_reduction <add>, %203, %cst_49 [0] : vector<16x128xf32> to vector<128xf32>
    %205 = vector.shape_cast %204 : vector<128xf32> to vector<1x128xf32>
    %206 = tpu.concatenate %93, %109, %125, %141, %157, %173, %189, %205 in 0 : vector<1x128xf32>, vector<1x128xf32>, vector<1x128xf32>, vector<1x128xf32>, vector<1x128xf32>, vector<1x128xf32>, vector<1x128xf32>, vector<1x128xf32> -> vector<8x128xf32>
    %207 = arith.index_cast %70 : i32 to index
    %c0_50 = arith.constant 0 : index
    %208 = vector.load %arg18[%207, %c0_50] : memref<64x128xf32, #tpu.memory_space<vmem>>, vector<8x128xf32>
    tpu.vector_store %arg18[%207, %c0_50], %206 {strides = array<i32>} : memref<64x128xf32, #tpu.memory_space<vmem>>, vector<8x128xf32>,
    %c1_i32 = arith.constant 1 : i32
    %c8_i32_51 = arith.constant 8 : i32
    %209 = arith.muli %c1_i32, %c8_i32_51 : i32
    %210 = tpu.assume_multiple %209, 8 : i32
    %211 = arith.index_cast %210 : i32 to index
    %c0_52 = arith.constant 0 : index
    %212 = vector.load %arg15[%211, %c0_52] : memref<64x128xf32, #tpu.memory_space<vmem>>, vector<8x128xf32>
    %213 = arith.index_cast %210 : i32 to index
    %c0_53 = arith.constant 0 : index
    %214 = vector.load %arg16[%213, %c0_53] : memref<64x128xf32, #tpu.memory_space<vmem>>, vector<8x128xf32>
    %215 = arith.index_cast %210 : i32 to index
    %c0_54 = arith.constant 0 : index
    %216 = vector.load %arg17[%215, %c0_54] : memref<64x32xf32, #tpu.memory_space<vmem>>, vector<8x32xf32>
    %217 = tpu.transpose %216, [1, 0] : vector<8x32xf32> -> vector<32x8xf32>
    %218 = vector.extract_strided_slice %212 {offsets = [0, 0], sizes = [1, 128], strides = [1, 1]} : vector<8x128xf32> to vector<1x128xf32>
    %219 = vector.extract_strided_slice %214 {offsets = [0, 0], sizes = [1, 128], strides = [1, 1]} : vector<8x128xf32> to vector<1x128xf32>
    %220 = vector.extract_strided_slice %217 {offsets = [0, 0], sizes = [16, 1], strides = [1, 1]} : vector<32x8xf32> to vector<16x1xf32>
    %221 = vector.extract_strided_slice %217 {offsets = [16, 0], sizes = [16, 1], strides = [1, 1]} : vector<32x8xf32> to vector<16x1xf32>
    %222 = vector.broadcast %218 : vector<1x128xf32> to vector<16x128xf32>
    %223 = arith.mulf %222, %67 : vector<16x128xf32>
    %224 = math.exp %223 : vector<16x128xf32>
    %225 = arith.mulf %224, %201 : vector<16x128xf32>
    %226 = vector.broadcast %220 : vector<16x1xf32> to vector<16x128xf32>
    %227 = vector.broadcast %219 : vector<1x128xf32> to vector<16x128xf32>
    %228 = arith.mulf %226, %227 : vector<16x128xf32>
    %229 = arith.addf %225, %228 : vector<16x128xf32>
    %230 = vector.broadcast %221 : vector<16x1xf32> to vector<16x128xf32>
    %231 = arith.mulf %230, %229 : vector<16x128xf32>
    %cst_55 = arith.constant dense<0.000000e+00> : vector<128xf32>
    %232 = vector.multi_reduction <add>, %231, %cst_55 [0] : vector<16x128xf32> to vector<128xf32>
    %233 = vector.shape_cast %232 : vector<128xf32> to vector<1x128xf32>
    %234 = vector.extract_strided_slice %212 {offsets = [1, 0], sizes = [1, 128], strides = [1, 1]} : vector<8x128xf32> to vector<1x128xf32>
    %235 = vector.extract_strided_slice %214 {offsets = [1, 0], sizes = [1, 128], strides = [1, 1]} : vector<8x128xf32> to vector<1x128xf32>
    %236 = vector.extract_strided_slice %217 {offsets = [0, 1], sizes = [16, 1], strides = [1, 1]} : vector<32x8xf32> to vector<16x1xf32>
    %237 = vector.extract_strided_slice %217 {offsets = [16, 1], sizes = [16, 1], strides = [1, 1]} : vector<32x8xf32> to vector<16x1xf32>
    %238 = vector.broadcast %234 : vector<1x128xf32> to vector<16x128xf32>
    %239 = arith.mulf %238, %67 : vector<16x128xf32>
    %240 = math.exp %239 : vector<16x128xf32>
    %241 = arith.mulf %240, %229 : vector<16x128xf32>
    %242 = vector.broadcast %236 : vector<16x1xf32> to vector<16x128xf32>
    %243 = vector.broadcast %235 : vector<1x128xf32> to vector<16x128xf32>
    %244 = arith.mulf %242, %243 : vector<16x128xf32>
    %245 = arith.addf %241, %244 : vector<16x128xf32>
    %246 = vector.broadcast %237 : vector<16x1xf32> to vector<16x128xf32>
    %247 = arith.mulf %246, %245 : vector<16x128xf32>
    %cst_56 = arith.constant dense<0.000000e+00> : vector<128xf32>
    %248 = vector.multi_reduction <add>, %247, %cst_56 [0] : vector<16x128xf32> to vector<128xf32>
    %249 = vector.shape_cast %248 : vector<128xf32> to vector<1x128xf32>
    %250 = vector.extract_strided_slice %212 {offsets = [2, 0], sizes = [1, 128], strides = [1, 1]} : vector<8x128xf32> to vector<1x128xf32>
    %251 = vector.extract_strided_slice %214 {offsets = [2, 0], sizes = [1, 128], strides = [1, 1]} : vector<8x128xf32> to vector<1x128xf32>
    %252 = vector.extract_strided_slice %217 {offsets = [0, 2], sizes = [16, 1], strides = [1, 1]} : vector<32x8xf32> to vector<16x1xf32>
    %253 = vector.extract_strided_slice %217 {offsets = [16, 2], sizes = [16, 1], strides = [1, 1]} : vector<32x8xf32> to vector<16x1xf32>
    %254 = vector.broadcast %250 : vector<1x128xf32> to vector<16x128xf32>
    %255 = arith.mulf %254, %67 : vector<16x128xf32>
    %256 = math.exp %255 : vector<16x128xf32>
    %257 = arith.mulf %256, %245 : vector<16x128xf32>
    %258 = vector.broadcast %252 : vector<16x1xf32> to vector<16x128xf32>
    %259 = vector.broadcast %251 : vector<1x128xf32> to vector<16x128xf32>
    %260 = arith.mulf %258, %259 : vector<16x128xf32>
    %261 = arith.addf %257, %260 : vector<16x128xf32>
    %262 = vector.broadcast %253 : vector<16x1xf32> to vector<16x128xf32>
    %263 = arith.mulf %262, %261 : vector<16x128xf32>
    %cst_57 = arith.constant dense<0.000000e+00> : vector<128xf32>
    %264 = vector.multi_reduction <add>, %263, %cst_57 [0] : vector<16x128xf32> to vector<128xf32>
    %265 = vector.shape_cast %264 : vector<128xf32> to vector<1x128xf32>
    %266 = vector.extract_strided_slice %212 {offsets = [3, 0], sizes = [1, 128], strides = [1, 1]} : vector<8x128xf32> to vector<1x128xf32>
    %267 = vector.extract_strided_slice %214 {offsets = [3, 0], sizes = [1, 128], strides = [1, 1]} : vector<8x128xf32> to vector<1x128xf32>
    %268 = vector.extract_strided_slice %217 {offsets = [0, 3], sizes = [16, 1], strides = [1, 1]} : vector<32x8xf32> to vector<16x1xf32>
    %269 = vector.extract_strided_slice %217 {offsets = [16, 3], sizes = [16, 1], strides = [1, 1]} : vector<32x8xf32> to vector<16x1xf32>
    %270 = vector.broadcast %266 : vector<1x128xf32> to vector<16x128xf32>
    %271 = arith.mulf %270, %67 : vector<16x128xf32>
    %272 = math.exp %271 : vector<16x128xf32>
    %273 = arith.mulf %272, %261 : vector<16x128xf32>
    %274 = vector.broadcast %268 : vector<16x1xf32> to vector<16x128xf32>
    %275 = vector.broadcast %267 : vector<1x128xf32> to vector<16x128xf32>
    %276 = arith.mulf %274, %275 : vector<16x128xf32>
    %277 = arith.addf %273, %276 : vector<16x128xf32>
    %278 = vector.broadcast %269 : vector<16x1xf32> to vector<16x128xf32>
    %279 = arith.mulf %278, %277 : vector<16x128xf32>
    %cst_58 = arith.constant dense<0.000000e+00> : vector<128xf32>
    %280 = vector.multi_reduction <add>, %279, %cst_58 [0] : vector<16x128xf32> to vector<128xf32>
    %281 = vector.shape_cast %280 : vector<128xf32> to vector<1x128xf32>
    %282 = vector.extract_strided_slice %212 {offsets = [4, 0], sizes = [1, 128], strides = [1, 1]} : vector<8x128xf32> to vector<1x128xf32>
    %283 = vector.extract_strided_slice %214 {offsets = [4, 0], sizes = [1, 128], strides = [1, 1]} : vector<8x128xf32> to vector<1x128xf32>
    %284 = vector.extract_strided_slice %217 {offsets = [0, 4], sizes = [16, 1], strides = [1, 1]} : vector<32x8xf32> to vector<16x1xf32>
    %285 = vector.extract_strided_slice %217 {offsets = [16, 4], sizes = [16, 1], strides = [1, 1]} : vector<32x8xf32> to vector<16x1xf32>
    %286 = vector.broadcast %282 : vector<1x128xf32> to vector<16x128xf32>
    %287 = arith.mulf %286, %67 : vector<16x128xf32>
    %288 = math.exp %287 : vector<16x128xf32>
    %289 = arith.mulf %288, %277 : vector<16x128xf32>
    %290 = vector.broadcast %284 : vector<16x1xf32> to vector<16x128xf32>
    %291 = vector.broadcast %283 : vector<1x128xf32> to vector<16x128xf32>
    %292 = arith.mulf %290, %291 : vector<16x128xf32>
    %293 = arith.addf %289, %292 : vector<16x128xf32>
    %294 = vector.broadcast %285 : vector<16x1xf32> to vector<16x128xf32>
    %295 = arith.mulf %294, %293 : vector<16x128xf32>
    %cst_59 = arith.constant dense<0.000000e+00> : vector<128xf32>
    %296 = vector.multi_reduction <add>, %295, %cst_59 [0] : vector<16x128xf32> to vector<128xf32>
    %297 = vector.shape_cast %296 : vector<128xf32> to vector<1x128xf32>
    %298 = vector.extract_strided_slice %212 {offsets = [5, 0], sizes = [1, 128], strides = [1, 1]} : vector<8x128xf32> to vector<1x128xf32>
    %299 = vector.extract_strided_slice %214 {offsets = [5, 0], sizes = [1, 128], strides = [1, 1]} : vector<8x128xf32> to vector<1x128xf32>
    %300 = vector.extract_strided_slice %217 {offsets = [0, 5], sizes = [16, 1], strides = [1, 1]} : vector<32x8xf32> to vector<16x1xf32>
    %301 = vector.extract_strided_slice %217 {offsets = [16, 5], sizes = [16, 1], strides = [1, 1]} : vector<32x8xf32> to vector<16x1xf32>
    %302 = vector.broadcast %298 : vector<1x128xf32> to vector<16x128xf32>
    %303 = arith.mulf %302, %67 : vector<16x128xf32>
    %304 = math.exp %303 : vector<16x128xf32>
    %305 = arith.mulf %304, %293 : vector<16x128xf32>
    %306 = vector.broadcast %300 : vector<16x1xf32> to vector<16x128xf32>
    %307 = vector.broadcast %299 : vector<1x128xf32> to vector<16x128xf32>
    %308 = arith.mulf %306, %307 : vector<16x128xf32>
    %309 = arith.addf %305, %308 : vector<16x128xf32>
    %310 = vector.broadcast %301 : vector<16x1xf32> to vector<16x128xf32>
    %311 = arith.mulf %310, %309 : vector<16x128xf32>
    %cst_60 = arith.constant dense<0.000000e+00> : vector<128xf32>
    %312 = vector.multi_reduction <add>, %311, %cst_60 [0] : vector<16x128xf32> to vector<128xf32>
    %313 = vector.shape_cast %312 : vector<128xf32> to vector<1x128xf32>
    %314 = vector.extract_strided_slice %212 {offsets = [6, 0], sizes = [1, 128], strides = [1, 1]} : vector<8x128xf32> to vector<1x128xf32>
    %315 = vector.extract_strided_slice %214 {offsets = [6, 0], sizes = [1, 128], strides = [1, 1]} : vector<8x128xf32> to vector<1x128xf32>
    %316 = vector.extract_strided_slice %217 {offsets = [0, 6], sizes = [16, 1], strides = [1, 1]} : vector<32x8xf32> to vector<16x1xf32>
    %317 = vector.extract_strided_slice %217 {offsets = [16, 6], sizes = [16, 1], strides = [1, 1]} : vector<32x8xf32> to vector<16x1xf32>
    %318 = vector.broadcast %314 : vector<1x128xf32> to vector<16x128xf32>
    %319 = arith.mulf %318, %67 : vector<16x128xf32>
    %320 = math.exp %319 : vector<16x128xf32>
    %321 = arith.mulf %320, %309 : vector<16x128xf32>
    %322 = vector.broadcast %316 : vector<16x1xf32> to vector<16x128xf32>
    %323 = vector.broadcast %315 : vector<1x128xf32> to vector<16x128xf32>
    %324 = arith.mulf %322, %323 : vector<16x128xf32>
    %325 = arith.addf %321, %324 : vector<16x128xf32>
    %326 = vector.broadcast %317 : vector<16x1xf32> to vector<16x128xf32>
    %327 = arith.mulf %326, %325 : vector<16x128xf32>
    %cst_61 = arith.constant dense<0.000000e+00> : vector<128xf32>
    %328 = vector.multi_reduction <add>, %327, %cst_61 [0] : vector<16x128xf32> to vector<128xf32>
    %329 = vector.shape_cast %328 : vector<128xf32> to vector<1x128xf32>
    %330 = vector.extract_strided_slice %212 {offsets = [7, 0], sizes = [1, 128], strides = [1, 1]} : vector<8x128xf32> to vector<1x128xf32>
    %331 = vector.extract_strided_slice %214 {offsets = [7, 0], sizes = [1, 128], strides = [1, 1]} : vector<8x128xf32> to vector<1x128xf32>
    %332 = vector.extract_strided_slice %217 {offsets = [0, 7], sizes = [16, 1], strides = [1, 1]} : vector<32x8xf32> to vector<16x1xf32>
    %333 = vector.extract_strided_slice %217 {offsets = [16, 7], sizes = [16, 1], strides = [1, 1]} : vector<32x8xf32> to vector<16x1xf32>
    %334 = vector.broadcast %330 : vector<1x128xf32> to vector<16x128xf32>
    %335 = arith.mulf %334, %67 : vector<16x128xf32>
    %336 = math.exp %335 : vector<16x128xf32>
    %337 = arith.mulf %336, %325 : vector<16x128xf32>
    %338 = vector.broadcast %332 : vector<16x1xf32> to vector<16x128xf32>
    %339 = vector.broadcast %331 : vector<1x128xf32> to vector<16x128xf32>
    %340 = arith.mulf %338, %339 : vector<16x128xf32>
    %341 = arith.addf %337, %340 : vector<16x128xf32>
    %342 = vector.broadcast %333 : vector<16x1xf32> to vector<16x128xf32>
    %343 = arith.mulf %342, %341 : vector<16x128xf32>
    %cst_62 = arith.constant dense<0.000000e+00> : vector<128xf32>
    %344 = vector.multi_reduction <add>, %343, %cst_62 [0] : vector<16x128xf32> to vector<128xf32>
    %345 = vector.shape_cast %344 : vector<128xf32> to vector<1x128xf32>
    %346 = tpu.concatenate %233, %249, %265, %281, %297, %313, %329, %345 in 0 : vector<1x128xf32>, vector<1x128xf32>, vector<1x128xf32>, vector<1x128xf32>, vector<1x128xf32>, vector<1x128xf32>, vector<1x128xf32>, vector<1x128xf32> -> vector<8x128xf32>
    %347 = arith.index_cast %210 : i32 to index
    %c0_63 = arith.constant 0 : index
    %348 = vector.load %arg18[%347, %c0_63] : memref<64x128xf32, #tpu.memory_space<vmem>>, vector<8x128xf32>
    tpu.vector_store %arg18[%347, %c0_63], %346 {strides = array<i32>} : memref<64x128xf32, #tpu.memory_space<vmem>>, vector<8x128xf32>,
    %c2_i32 = arith.constant 2 : i32
    %c8_i32_64 = arith.constant 8 : i32
    %349 = arith.muli %c2_i32, %c8_i32_64 : i32
    %350 = tpu.assume_multiple %349, 8 : i32
    %351 = arith.index_cast %350 : i32 to index
    %c0_65 = arith.constant 0 : index
    %352 = vector.load %arg15[%351, %c0_65] : memref<64x128xf32, #tpu.memory_space<vmem>>, vector<8x128xf32>
    %353 = arith.index_cast %350 : i32 to index
    %c0_66 = arith.constant 0 : index
    %354 = vector.load %arg16[%353, %c0_66] : memref<64x128xf32, #tpu.memory_space<vmem>>, vector<8x128xf32>
    %355 = arith.index_cast %350 : i32 to index
    %c0_67 = arith.constant 0 : index
    %356 = vector.load %arg17[%355, %c0_67] : memref<64x32xf32, #tpu.memory_space<vmem>>, vector<8x32xf32>
    %357 = tpu.transpose %356, [1, 0] : vector<8x32xf32> -> vector<32x8xf32>
    %358 = vector.extract_strided_slice %352 {offsets = [0, 0], sizes = [1, 128], strides = [1, 1]} : vector<8x128xf32> to vector<1x128xf32>
    %359 = vector.extract_strided_slice %354 {offsets = [0, 0], sizes = [1, 128], strides = [1, 1]} : vector<8x128xf32> to vector<1x128xf32>
    %360 = vector.extract_strided_slice %357 {offsets = [0, 0], sizes = [16, 1], strides = [1, 1]} : vector<32x8xf32> to vector<16x1xf32>
    %361 = vector.extract_strided_slice %357 {offsets = [16, 0], sizes = [16, 1], strides = [1, 1]} : vector<32x8xf32> to vector<16x1xf32>
    %362 = vector.broadcast %358 : vector<1x128xf32> to vector<16x128xf32>
    %363 = arith.mulf %362, %67 : vector<16x128xf32>
    %364 = math.exp %363 : vector<16x128xf32>
    %365 = arith.mulf %364, %341 : vector<16x128xf32>
    %366 = vector.broadcast %360 : vector<16x1xf32> to vector<16x128xf32>
    %367 = vector.broadcast %359 : vector<1x128xf32> to vector<16x128xf32>
    %368 = arith.mulf %366, %367 : vector<16x128xf32>
    %369 = arith.addf %365, %368 : vector<16x128xf32>
    %370 = vector.broadcast %361 : vector<16x1xf32> to vector<16x128xf32>
    %371 = arith.mulf %370, %369 : vector<16x128xf32>
    %cst_68 = arith.constant dense<0.000000e+00> : vector<128xf32>
    %372 = vector.multi_reduction <add>, %371, %cst_68 [0] : vector<16x128xf32> to vector<128xf32>
    %373 = vector.shape_cast %372 : vector<128xf32> to vector<1x128xf32>
    %374 = vector.extract_strided_slice %352 {offsets = [1, 0], sizes = [1, 128], strides = [1, 1]} : vector<8x128xf32> to vector<1x128xf32>
    %375 = vector.extract_strided_slice %354 {offsets = [1, 0], sizes = [1, 128], strides = [1, 1]} : vector<8x128xf32> to vector<1x128xf32>
    %376 = vector.extract_strided_slice %357 {offsets = [0, 1], sizes = [16, 1], strides = [1, 1]} : vector<32x8xf32> to vector<16x1xf32>
    %377 = vector.extract_strided_slice %357 {offsets = [16, 1], sizes = [16, 1], strides = [1, 1]} : vector<32x8xf32> to vector<16x1xf32>
    %378 = vector.broadcast %374 : vector<1x128xf32> to vector<16x128xf32>
    %379 = arith.mulf %378, %67 : vector<16x128xf32>
    %380 = math.exp %379 : vector<16x128xf32>
    %381 = arith.mulf %380, %369 : vector<16x128xf32>
    %382 = vector.broadcast %376 : vector<16x1xf32> to vector<16x128xf32>
    %383 = vector.broadcast %375 : vector<1x128xf32> to vector<16x128xf32>
    %384 = arith.mulf %382, %383 : vector<16x128xf32>
    %385 = arith.addf %381, %384 : vector<16x128xf32>
    %386 = vector.broadcast %377 : vector<16x1xf32> to vector<16x128xf32>
    %387 = arith.mulf %386, %385 : vector<16x128xf32>
    %cst_69 = arith.constant dense<0.000000e+00> : vector<128xf32>
    %388 = vector.multi_reduction <add>, %387, %cst_69 [0] : vector<16x128xf32> to vector<128xf32>
    %389 = vector.shape_cast %388 : vector<128xf32> to vector<1x128xf32>
    %390 = vector.extract_strided_slice %352 {offsets = [2, 0], sizes = [1, 128], strides = [1, 1]} : vector<8x128xf32> to vector<1x128xf32>
    %391 = vector.extract_strided_slice %354 {offsets = [2, 0], sizes = [1, 128], strides = [1, 1]} : vector<8x128xf32> to vector<1x128xf32>
    %392 = vector.extract_strided_slice %357 {offsets = [0, 2], sizes = [16, 1], strides = [1, 1]} : vector<32x8xf32> to vector<16x1xf32>
    %393 = vector.extract_strided_slice %357 {offsets = [16, 2], sizes = [16, 1], strides = [1, 1]} : vector<32x8xf32> to vector<16x1xf32>
    %394 = vector.broadcast %390 : vector<1x128xf32> to vector<16x128xf32>
    %395 = arith.mulf %394, %67 : vector<16x128xf32>
    %396 = math.exp %395 : vector<16x128xf32>
    %397 = arith.mulf %396, %385 : vector<16x128xf32>
    %398 = vector.broadcast %392 : vector<16x1xf32> to vector<16x128xf32>
    %399 = vector.broadcast %391 : vector<1x128xf32> to vector<16x128xf32>
    %400 = arith.mulf %398, %399 : vector<16x128xf32>
    %401 = arith.addf %397, %400 : vector<16x128xf32>
    %402 = vector.broadcast %393 : vector<16x1xf32> to vector<16x128xf32>
    %403 = arith.mulf %402, %401 : vector<16x128xf32>
    %cst_70 = arith.constant dense<0.000000e+00> : vector<128xf32>
    %404 = vector.multi_reduction <add>, %403, %cst_70 [0] : vector<16x128xf32> to vector<128xf32>
    %405 = vector.shape_cast %404 : vector<128xf32> to vector<1x128xf32>
    %406 = vector.extract_strided_slice %352 {offsets = [3, 0], sizes = [1, 128], strides = [1, 1]} : vector<8x128xf32> to vector<1x128xf32>
    %407 = vector.extract_strided_slice %354 {offsets = [3, 0], sizes = [1, 128], strides = [1, 1]} : vector<8x128xf32> to vector<1x128xf32>
    %408 = vector.extract_strided_slice %357 {offsets = [0, 3], sizes = [16, 1], strides = [1, 1]} : vector<32x8xf32> to vector<16x1xf32>
    %409 = vector.extract_strided_slice %357 {offsets = [16, 3], sizes = [16, 1], strides = [1, 1]} : vector<32x8xf32> to vector<16x1xf32>
    %410 = vector.broadcast %406 : vector<1x128xf32> to vector<16x128xf32>
    %411 = arith.mulf %410, %67 : vector<16x128xf32>
    %412 = math.exp %411 : vector<16x128xf32>
    %413 = arith.mulf %412, %401 : vector<16x128xf32>
    %414 = vector.broadcast %408 : vector<16x1xf32> to vector<16x128xf32>
    %415 = vector.broadcast %407 : vector<1x128xf32> to vector<16x128xf32>
    %416 = arith.mulf %414, %415 : vector<16x128xf32>
    %417 = arith.addf %413, %416 : vector<16x128xf32>
    %418 = vector.broadcast %409 : vector<16x1xf32> to vector<16x128xf32>
    %419 = arith.mulf %418, %417 : vector<16x128xf32>
    %cst_71 = arith.constant dense<0.000000e+00> : vector<128xf32>
    %420 = vector.multi_reduction <add>, %419, %cst_71 [0] : vector<16x128xf32> to vector<128xf32>
    %421 = vector.shape_cast %420 : vector<128xf32> to vector<1x128xf32>
    %422 = vector.extract_strided_slice %352 {offsets = [4, 0], sizes = [1, 128], strides = [1, 1]} : vector<8x128xf32> to vector<1x128xf32>
    %423 = vector.extract_strided_slice %354 {offsets = [4, 0], sizes = [1, 128], strides = [1, 1]} : vector<8x128xf32> to vector<1x128xf32>
    %424 = vector.extract_strided_slice %357 {offsets = [0, 4], sizes = [16, 1], strides = [1, 1]} : vector<32x8xf32> to vector<16x1xf32>
    %425 = vector.extract_strided_slice %357 {offsets = [16, 4], sizes = [16, 1], strides = [1, 1]} : vector<32x8xf32> to vector<16x1xf32>
    %426 = vector.broadcast %422 : vector<1x128xf32> to vector<16x128xf32>
    %427 = arith.mulf %426, %67 : vector<16x128xf32>
    %428 = math.exp %427 : vector<16x128xf32>
    %429 = arith.mulf %428, %417 : vector<16x128xf32>
    %430 = vector.broadcast %424 : vector<16x1xf32> to vector<16x128xf32>
    %431 = vector.broadcast %423 : vector<1x128xf32> to vector<16x128xf32>
    %432 = arith.mulf %430, %431 : vector<16x128xf32>
    %433 = arith.addf %429, %432 : vector<16x128xf32>
    %434 = vector.broadcast %425 : vector<16x1xf32> to vector<16x128xf32>
    %435 = arith.mulf %434, %433 : vector<16x128xf32>
    %cst_72 = arith.constant dense<0.000000e+00> : vector<128xf32>
    %436 = vector.multi_reduction <add>, %435, %cst_72 [0] : vector<16x128xf32> to vector<128xf32>
    %437 = vector.shape_cast %436 : vector<128xf32> to vector<1x128xf32>
    %438 = vector.extract_strided_slice %352 {offsets = [5, 0], sizes = [1, 128], strides = [1, 1]} : vector<8x128xf32> to vector<1x128xf32>
    %439 = vector.extract_strided_slice %354 {offsets = [5, 0], sizes = [1, 128], strides = [1, 1]} : vector<8x128xf32> to vector<1x128xf32>
    %440 = vector.extract_strided_slice %357 {offsets = [0, 5], sizes = [16, 1], strides = [1, 1]} : vector<32x8xf32> to vector<16x1xf32>
    %441 = vector.extract_strided_slice %357 {offsets = [16, 5], sizes = [16, 1], strides = [1, 1]} : vector<32x8xf32> to vector<16x1xf32>
    %442 = vector.broadcast %438 : vector<1x128xf32> to vector<16x128xf32>
    %443 = arith.mulf %442, %67 : vector<16x128xf32>
    %444 = math.exp %443 : vector<16x128xf32>
    %445 = arith.mulf %444, %433 : vector<16x128xf32>
    %446 = vector.broadcast %440 : vector<16x1xf32> to vector<16x128xf32>
    %447 = vector.broadcast %439 : vector<1x128xf32> to vector<16x128xf32>
    %448 = arith.mulf %446, %447 : vector<16x128xf32>
    %449 = arith.addf %445, %448 : vector<16x128xf32>
    %450 = vector.broadcast %441 : vector<16x1xf32> to vector<16x128xf32>
    %451 = arith.mulf %450, %449 : vector<16x128xf32>
    %cst_73 = arith.constant dense<0.000000e+00> : vector<128xf32>
    %452 = vector.multi_reduction <add>, %451, %cst_73 [0] : vector<16x128xf32> to vector<128xf32>
    %453 = vector.shape_cast %452 : vector<128xf32> to vector<1x128xf32>
    %454 = vector.extract_strided_slice %352 {offsets = [6, 0], sizes = [1, 128], strides = [1, 1]} : vector<8x128xf32> to vector<1x128xf32>
    %455 = vector.extract_strided_slice %354 {offsets = [6, 0], sizes = [1, 128], strides = [1, 1]} : vector<8x128xf32> to vector<1x128xf32>
    %456 = vector.extract_strided_slice %357 {offsets = [0, 6], sizes = [16, 1], strides = [1, 1]} : vector<32x8xf32> to vector<16x1xf32>
    %457 = vector.extract_strided_slice %357 {offsets = [16, 6], sizes = [16, 1], strides = [1, 1]} : vector<32x8xf32> to vector<16x1xf32>
    %458 = vector.broadcast %454 : vector<1x128xf32> to vector<16x128xf32>
    %459 = arith.mulf %458, %67 : vector<16x128xf32>
    %460 = math.exp %459 : vector<16x128xf32>
    %461 = arith.mulf %460, %449 : vector<16x128xf32>
    %462 = vector.broadcast %456 : vector<16x1xf32> to vector<16x128xf32>
    %463 = vector.broadcast %455 : vector<1x128xf32> to vector<16x128xf32>
    %464 = arith.mulf %462, %463 : vector<16x128xf32>
    %465 = arith.addf %461, %464 : vector<16x128xf32>
    %466 = vector.broadcast %457 : vector<16x1xf32> to vector<16x128xf32>
    %467 = arith.mulf %466, %465 : vector<16x128xf32>
    %cst_74 = arith.constant dense<0.000000e+00> : vector<128xf32>
    %468 = vector.multi_reduction <add>, %467, %cst_74 [0] : vector<16x128xf32> to vector<128xf32>
    %469 = vector.shape_cast %468 : vector<128xf32> to vector<1x128xf32>
    %470 = vector.extract_strided_slice %352 {offsets = [7, 0], sizes = [1, 128], strides = [1, 1]} : vector<8x128xf32> to vector<1x128xf32>
    %471 = vector.extract_strided_slice %354 {offsets = [7, 0], sizes = [1, 128], strides = [1, 1]} : vector<8x128xf32> to vector<1x128xf32>
    %472 = vector.extract_strided_slice %357 {offsets = [0, 7], sizes = [16, 1], strides = [1, 1]} : vector<32x8xf32> to vector<16x1xf32>
    %473 = vector.extract_strided_slice %357 {offsets = [16, 7], sizes = [16, 1], strides = [1, 1]} : vector<32x8xf32> to vector<16x1xf32>
    %474 = vector.broadcast %470 : vector<1x128xf32> to vector<16x128xf32>
    %475 = arith.mulf %474, %67 : vector<16x128xf32>
    %476 = math.exp %475 : vector<16x128xf32>
    %477 = arith.mulf %476, %465 : vector<16x128xf32>
    %478 = vector.broadcast %472 : vector<16x1xf32> to vector<16x128xf32>
    %479 = vector.broadcast %471 : vector<1x128xf32> to vector<16x128xf32>
    %480 = arith.mulf %478, %479 : vector<16x128xf32>
    %481 = arith.addf %477, %480 : vector<16x128xf32>
    %482 = vector.broadcast %473 : vector<16x1xf32> to vector<16x128xf32>
    %483 = arith.mulf %482, %481 : vector<16x128xf32>
    %cst_75 = arith.constant dense<0.000000e+00> : vector<128xf32>
    %484 = vector.multi_reduction <add>, %483, %cst_75 [0] : vector<16x128xf32> to vector<128xf32>
    %485 = vector.shape_cast %484 : vector<128xf32> to vector<1x128xf32>
    %486 = tpu.concatenate %373, %389, %405, %421, %437, %453, %469, %485 in 0 : vector<1x128xf32>, vector<1x128xf32>, vector<1x128xf32>, vector<1x128xf32>, vector<1x128xf32>, vector<1x128xf32>, vector<1x128xf32>, vector<1x128xf32> -> vector<8x128xf32>
    %487 = arith.index_cast %350 : i32 to index
    %c0_76 = arith.constant 0 : index
    %488 = vector.load %arg18[%487, %c0_76] : memref<64x128xf32, #tpu.memory_space<vmem>>, vector<8x128xf32>
    tpu.vector_store %arg18[%487, %c0_76], %486 {strides = array<i32>} : memref<64x128xf32, #tpu.memory_space<vmem>>, vector<8x128xf32>,
    %c3_i32 = arith.constant 3 : i32
    %c8_i32_77 = arith.constant 8 : i32
    %489 = arith.muli %c3_i32, %c8_i32_77 : i32
    %490 = tpu.assume_multiple %489, 8 : i32
    %491 = arith.index_cast %490 : i32 to index
    %c0_78 = arith.constant 0 : index
    %492 = vector.load %arg15[%491, %c0_78] : memref<64x128xf32, #tpu.memory_space<vmem>>, vector<8x128xf32>
    %493 = arith.index_cast %490 : i32 to index
    %c0_79 = arith.constant 0 : index
    %494 = vector.load %arg16[%493, %c0_79] : memref<64x128xf32, #tpu.memory_space<vmem>>, vector<8x128xf32>
    %495 = arith.index_cast %490 : i32 to index
    %c0_80 = arith.constant 0 : index
    %496 = vector.load %arg17[%495, %c0_80] : memref<64x32xf32, #tpu.memory_space<vmem>>, vector<8x32xf32>
    %497 = tpu.transpose %496, [1, 0] : vector<8x32xf32> -> vector<32x8xf32>
    %498 = vector.extract_strided_slice %492 {offsets = [0, 0], sizes = [1, 128], strides = [1, 1]} : vector<8x128xf32> to vector<1x128xf32>
    %499 = vector.extract_strided_slice %494 {offsets = [0, 0], sizes = [1, 128], strides = [1, 1]} : vector<8x128xf32> to vector<1x128xf32>
    %500 = vector.extract_strided_slice %497 {offsets = [0, 0], sizes = [16, 1], strides = [1, 1]} : vector<32x8xf32> to vector<16x1xf32>
    %501 = vector.extract_strided_slice %497 {offsets = [16, 0], sizes = [16, 1], strides = [1, 1]} : vector<32x8xf32> to vector<16x1xf32>
    %502 = vector.broadcast %498 : vector<1x128xf32> to vector<16x128xf32>
    %503 = arith.mulf %502, %67 : vector<16x128xf32>
    %504 = math.exp %503 : vector<16x128xf32>
    %505 = arith.mulf %504, %481 : vector<16x128xf32>
    %506 = vector.broadcast %500 : vector<16x1xf32> to vector<16x128xf32>
    %507 = vector.broadcast %499 : vector<1x128xf32> to vector<16x128xf32>
    %508 = arith.mulf %506, %507 : vector<16x128xf32>
    %509 = arith.addf %505, %508 : vector<16x128xf32>
    %510 = vector.broadcast %501 : vector<16x1xf32> to vector<16x128xf32>
    %511 = arith.mulf %510, %509 : vector<16x128xf32>
    %cst_81 = arith.constant dense<0.000000e+00> : vector<128xf32>
    %512 = vector.multi_reduction <add>, %511, %cst_81 [0] : vector<16x128xf32> to vector<128xf32>
    %513 = vector.shape_cast %512 : vector<128xf32> to vector<1x128xf32>
    %514 = vector.extract_strided_slice %492 {offsets = [1, 0], sizes = [1, 128], strides = [1, 1]} : vector<8x128xf32> to vector<1x128xf32>
    %515 = vector.extract_strided_slice %494 {offsets = [1, 0], sizes = [1, 128], strides = [1, 1]} : vector<8x128xf32> to vector<1x128xf32>
    %516 = vector.extract_strided_slice %497 {offsets = [0, 1], sizes = [16, 1], strides = [1, 1]} : vector<32x8xf32> to vector<16x1xf32>
    %517 = vector.extract_strided_slice %497 {offsets = [16, 1], sizes = [16, 1], strides = [1, 1]} : vector<32x8xf32> to vector<16x1xf32>
    %518 = vector.broadcast %514 : vector<1x128xf32> to vector<16x128xf32>
    %519 = arith.mulf %518, %67 : vector<16x128xf32>
    %520 = math.exp %519 : vector<16x128xf32>
    %521 = arith.mulf %520, %509 : vector<16x128xf32>
    %522 = vector.broadcast %516 : vector<16x1xf32> to vector<16x128xf32>
    %523 = vector.broadcast %515 : vector<1x128xf32> to vector<16x128xf32>
    %524 = arith.mulf %522, %523 : vector<16x128xf32>
    %525 = arith.addf %521, %524 : vector<16x128xf32>
    %526 = vector.broadcast %517 : vector<16x1xf32> to vector<16x128xf32>
    %527 = arith.mulf %526, %525 : vector<16x128xf32>
    %cst_82 = arith.constant dense<0.000000e+00> : vector<128xf32>
    %528 = vector.multi_reduction <add>, %527, %cst_82 [0] : vector<16x128xf32> to vector<128xf32>
    %529 = vector.shape_cast %528 : vector<128xf32> to vector<1x128xf32>
    %530 = vector.extract_strided_slice %492 {offsets = [2, 0], sizes = [1, 128], strides = [1, 1]} : vector<8x128xf32> to vector<1x128xf32>
    %531 = vector.extract_strided_slice %494 {offsets = [2, 0], sizes = [1, 128], strides = [1, 1]} : vector<8x128xf32> to vector<1x128xf32>
    %532 = vector.extract_strided_slice %497 {offsets = [0, 2], sizes = [16, 1], strides = [1, 1]} : vector<32x8xf32> to vector<16x1xf32>
    %533 = vector.extract_strided_slice %497 {offsets = [16, 2], sizes = [16, 1], strides = [1, 1]} : vector<32x8xf32> to vector<16x1xf32>
    %534 = vector.broadcast %530 : vector<1x128xf32> to vector<16x128xf32>
    %535 = arith.mulf %534, %67 : vector<16x128xf32>
    %536 = math.exp %535 : vector<16x128xf32>
    %537 = arith.mulf %536, %525 : vector<16x128xf32>
    %538 = vector.broadcast %532 : vector<16x1xf32> to vector<16x128xf32>
    %539 = vector.broadcast %531 : vector<1x128xf32> to vector<16x128xf32>
    %540 = arith.mulf %538, %539 : vector<16x128xf32>
    %541 = arith.addf %537, %540 : vector<16x128xf32>
    %542 = vector.broadcast %533 : vector<16x1xf32> to vector<16x128xf32>
    %543 = arith.mulf %542, %541 : vector<16x128xf32>
    %cst_83 = arith.constant dense<0.000000e+00> : vector<128xf32>
    %544 = vector.multi_reduction <add>, %543, %cst_83 [0] : vector<16x128xf32> to vector<128xf32>
    %545 = vector.shape_cast %544 : vector<128xf32> to vector<1x128xf32>
    %546 = vector.extract_strided_slice %492 {offsets = [3, 0], sizes = [1, 128], strides = [1, 1]} : vector<8x128xf32> to vector<1x128xf32>
    %547 = vector.extract_strided_slice %494 {offsets = [3, 0], sizes = [1, 128], strides = [1, 1]} : vector<8x128xf32> to vector<1x128xf32>
    %548 = vector.extract_strided_slice %497 {offsets = [0, 3], sizes = [16, 1], strides = [1, 1]} : vector<32x8xf32> to vector<16x1xf32>
    %549 = vector.extract_strided_slice %497 {offsets = [16, 3], sizes = [16, 1], strides = [1, 1]} : vector<32x8xf32> to vector<16x1xf32>
    %550 = vector.broadcast %546 : vector<1x128xf32> to vector<16x128xf32>
    %551 = arith.mulf %550, %67 : vector<16x128xf32>
    %552 = math.exp %551 : vector<16x128xf32>
    %553 = arith.mulf %552, %541 : vector<16x128xf32>
    %554 = vector.broadcast %548 : vector<16x1xf32> to vector<16x128xf32>
    %555 = vector.broadcast %547 : vector<1x128xf32> to vector<16x128xf32>
    %556 = arith.mulf %554, %555 : vector<16x128xf32>
    %557 = arith.addf %553, %556 : vector<16x128xf32>
    %558 = vector.broadcast %549 : vector<16x1xf32> to vector<16x128xf32>
    %559 = arith.mulf %558, %557 : vector<16x128xf32>
    %cst_84 = arith.constant dense<0.000000e+00> : vector<128xf32>
    %560 = vector.multi_reduction <add>, %559, %cst_84 [0] : vector<16x128xf32> to vector<128xf32>
    %561 = vector.shape_cast %560 : vector<128xf32> to vector<1x128xf32>
    %562 = vector.extract_strided_slice %492 {offsets = [4, 0], sizes = [1, 128], strides = [1, 1]} : vector<8x128xf32> to vector<1x128xf32>
    %563 = vector.extract_strided_slice %494 {offsets = [4, 0], sizes = [1, 128], strides = [1, 1]} : vector<8x128xf32> to vector<1x128xf32>
    %564 = vector.extract_strided_slice %497 {offsets = [0, 4], sizes = [16, 1], strides = [1, 1]} : vector<32x8xf32> to vector<16x1xf32>
    %565 = vector.extract_strided_slice %497 {offsets = [16, 4], sizes = [16, 1], strides = [1, 1]} : vector<32x8xf32> to vector<16x1xf32>
    %566 = vector.broadcast %562 : vector<1x128xf32> to vector<16x128xf32>
    %567 = arith.mulf %566, %67 : vector<16x128xf32>
    %568 = math.exp %567 : vector<16x128xf32>
    %569 = arith.mulf %568, %557 : vector<16x128xf32>
    %570 = vector.broadcast %564 : vector<16x1xf32> to vector<16x128xf32>
    %571 = vector.broadcast %563 : vector<1x128xf32> to vector<16x128xf32>
    %572 = arith.mulf %570, %571 : vector<16x128xf32>
    %573 = arith.addf %569, %572 : vector<16x128xf32>
    %574 = vector.broadcast %565 : vector<16x1xf32> to vector<16x128xf32>
    %575 = arith.mulf %574, %573 : vector<16x128xf32>
    %cst_85 = arith.constant dense<0.000000e+00> : vector<128xf32>
    %576 = vector.multi_reduction <add>, %575, %cst_85 [0] : vector<16x128xf32> to vector<128xf32>
    %577 = vector.shape_cast %576 : vector<128xf32> to vector<1x128xf32>
    %578 = vector.extract_strided_slice %492 {offsets = [5, 0], sizes = [1, 128], strides = [1, 1]} : vector<8x128xf32> to vector<1x128xf32>
    %579 = vector.extract_strided_slice %494 {offsets = [5, 0], sizes = [1, 128], strides = [1, 1]} : vector<8x128xf32> to vector<1x128xf32>
    %580 = vector.extract_strided_slice %497 {offsets = [0, 5], sizes = [16, 1], strides = [1, 1]} : vector<32x8xf32> to vector<16x1xf32>
    %581 = vector.extract_strided_slice %497 {offsets = [16, 5], sizes = [16, 1], strides = [1, 1]} : vector<32x8xf32> to vector<16x1xf32>
    %582 = vector.broadcast %578 : vector<1x128xf32> to vector<16x128xf32>
    %583 = arith.mulf %582, %67 : vector<16x128xf32>
    %584 = math.exp %583 : vector<16x128xf32>
    %585 = arith.mulf %584, %573 : vector<16x128xf32>
    %586 = vector.broadcast %580 : vector<16x1xf32> to vector<16x128xf32>
    %587 = vector.broadcast %579 : vector<1x128xf32> to vector<16x128xf32>
    %588 = arith.mulf %586, %587 : vector<16x128xf32>
    %589 = arith.addf %585, %588 : vector<16x128xf32>
    %590 = vector.broadcast %581 : vector<16x1xf32> to vector<16x128xf32>
    %591 = arith.mulf %590, %589 : vector<16x128xf32>
    %cst_86 = arith.constant dense<0.000000e+00> : vector<128xf32>
    %592 = vector.multi_reduction <add>, %591, %cst_86 [0] : vector<16x128xf32> to vector<128xf32>
    %593 = vector.shape_cast %592 : vector<128xf32> to vector<1x128xf32>
    %594 = vector.extract_strided_slice %492 {offsets = [6, 0], sizes = [1, 128], strides = [1, 1]} : vector<8x128xf32> to vector<1x128xf32>
    %595 = vector.extract_strided_slice %494 {offsets = [6, 0], sizes = [1, 128], strides = [1, 1]} : vector<8x128xf32> to vector<1x128xf32>
    %596 = vector.extract_strided_slice %497 {offsets = [0, 6], sizes = [16, 1], strides = [1, 1]} : vector<32x8xf32> to vector<16x1xf32>
    %597 = vector.extract_strided_slice %497 {offsets = [16, 6], sizes = [16, 1], strides = [1, 1]} : vector<32x8xf32> to vector<16x1xf32>
    %598 = vector.broadcast %594 : vector<1x128xf32> to vector<16x128xf32>
    %599 = arith.mulf %598, %67 : vector<16x128xf32>
    %600 = math.exp %599 : vector<16x128xf32>
    %601 = arith.mulf %600, %589 : vector<16x128xf32>
    %602 = vector.broadcast %596 : vector<16x1xf32> to vector<16x128xf32>
    %603 = vector.broadcast %595 : vector<1x128xf32> to vector<16x128xf32>
    %604 = arith.mulf %602, %603 : vector<16x128xf32>
    %605 = arith.addf %601, %604 : vector<16x128xf32>
    %606 = vector.broadcast %597 : vector<16x1xf32> to vector<16x128xf32>
    %607 = arith.mulf %606, %605 : vector<16x128xf32>
    %cst_87 = arith.constant dense<0.000000e+00> : vector<128xf32>
    %608 = vector.multi_reduction <add>, %607, %cst_87 [0] : vector<16x128xf32> to vector<128xf32>
    %609 = vector.shape_cast %608 : vector<128xf32> to vector<1x128xf32>
    %610 = vector.extract_strided_slice %492 {offsets = [7, 0], sizes = [1, 128], strides = [1, 1]} : vector<8x128xf32> to vector<1x128xf32>
    %611 = vector.extract_strided_slice %494 {offsets = [7, 0], sizes = [1, 128], strides = [1, 1]} : vector<8x128xf32> to vector<1x128xf32>
    %612 = vector.extract_strided_slice %497 {offsets = [0, 7], sizes = [16, 1], strides = [1, 1]} : vector<32x8xf32> to vector<16x1xf32>
    %613 = vector.extract_strided_slice %497 {offsets = [16, 7], sizes = [16, 1], strides = [1, 1]} : vector<32x8xf32> to vector<16x1xf32>
    %614 = vector.broadcast %610 : vector<1x128xf32> to vector<16x128xf32>
    %615 = arith.mulf %614, %67 : vector<16x128xf32>
    %616 = math.exp %615 : vector<16x128xf32>
    %617 = arith.mulf %616, %605 : vector<16x128xf32>
    %618 = vector.broadcast %612 : vector<16x1xf32> to vector<16x128xf32>
    %619 = vector.broadcast %611 : vector<1x128xf32> to vector<16x128xf32>
    %620 = arith.mulf %618, %619 : vector<16x128xf32>
    %621 = arith.addf %617, %620 : vector<16x128xf32>
    %622 = vector.broadcast %613 : vector<16x1xf32> to vector<16x128xf32>
    %623 = arith.mulf %622, %621 : vector<16x128xf32>
    %cst_88 = arith.constant dense<0.000000e+00> : vector<128xf32>
    %624 = vector.multi_reduction <add>, %623, %cst_88 [0] : vector<16x128xf32> to vector<128xf32>
    %625 = vector.shape_cast %624 : vector<128xf32> to vector<1x128xf32>
    %626 = tpu.concatenate %513, %529, %545, %561, %577, %593, %609, %625 in 0 : vector<1x128xf32>, vector<1x128xf32>, vector<1x128xf32>, vector<1x128xf32>, vector<1x128xf32>, vector<1x128xf32>, vector<1x128xf32>, vector<1x128xf32> -> vector<8x128xf32>
    %627 = arith.index_cast %490 : i32 to index
    %c0_89 = arith.constant 0 : index
    %628 = vector.load %arg18[%627, %c0_89] : memref<64x128xf32, #tpu.memory_space<vmem>>, vector<8x128xf32>
    tpu.vector_store %arg18[%627, %c0_89], %626 {strides = array<i32>} : memref<64x128xf32, #tpu.memory_space<vmem>>, vector<8x128xf32>,
    %c4_i32 = arith.constant 4 : i32
    %c8_i32_90 = arith.constant 8 : i32
    %629 = arith.muli %c4_i32, %c8_i32_90 : i32
    %630 = tpu.assume_multiple %629, 8 : i32
    %631 = arith.index_cast %630 : i32 to index
    %c0_91 = arith.constant 0 : index
    %632 = vector.load %arg15[%631, %c0_91] : memref<64x128xf32, #tpu.memory_space<vmem>>, vector<8x128xf32>
    %633 = arith.index_cast %630 : i32 to index
    %c0_92 = arith.constant 0 : index
    %634 = vector.load %arg16[%633, %c0_92] : memref<64x128xf32, #tpu.memory_space<vmem>>, vector<8x128xf32>
    %635 = arith.index_cast %630 : i32 to index
    %c0_93 = arith.constant 0 : index
    %636 = vector.load %arg17[%635, %c0_93] : memref<64x32xf32, #tpu.memory_space<vmem>>, vector<8x32xf32>
    %637 = tpu.transpose %636, [1, 0] : vector<8x32xf32> -> vector<32x8xf32>
    %638 = vector.extract_strided_slice %632 {offsets = [0, 0], sizes = [1, 128], strides = [1, 1]} : vector<8x128xf32> to vector<1x128xf32>
    %639 = vector.extract_strided_slice %634 {offsets = [0, 0], sizes = [1, 128], strides = [1, 1]} : vector<8x128xf32> to vector<1x128xf32>
    %640 = vector.extract_strided_slice %637 {offsets = [0, 0], sizes = [16, 1], strides = [1, 1]} : vector<32x8xf32> to vector<16x1xf32>
    %641 = vector.extract_strided_slice %637 {offsets = [16, 0], sizes = [16, 1], strides = [1, 1]} : vector<32x8xf32> to vector<16x1xf32>
    %642 = vector.broadcast %638 : vector<1x128xf32> to vector<16x128xf32>
    %643 = arith.mulf %642, %67 : vector<16x128xf32>
    %644 = math.exp %643 : vector<16x128xf32>
    %645 = arith.mulf %644, %621 : vector<16x128xf32>
    %646 = vector.broadcast %640 : vector<16x1xf32> to vector<16x128xf32>
    %647 = vector.broadcast %639 : vector<1x128xf32> to vector<16x128xf32>
    %648 = arith.mulf %646, %647 : vector<16x128xf32>
    %649 = arith.addf %645, %648 : vector<16x128xf32>
    %650 = vector.broadcast %641 : vector<16x1xf32> to vector<16x128xf32>
    %651 = arith.mulf %650, %649 : vector<16x128xf32>
    %cst_94 = arith.constant dense<0.000000e+00> : vector<128xf32>
    %652 = vector.multi_reduction <add>, %651, %cst_94 [0] : vector<16x128xf32> to vector<128xf32>
    %653 = vector.shape_cast %652 : vector<128xf32> to vector<1x128xf32>
    %654 = vector.extract_strided_slice %632 {offsets = [1, 0], sizes = [1, 128], strides = [1, 1]} : vector<8x128xf32> to vector<1x128xf32>
    %655 = vector.extract_strided_slice %634 {offsets = [1, 0], sizes = [1, 128], strides = [1, 1]} : vector<8x128xf32> to vector<1x128xf32>
    %656 = vector.extract_strided_slice %637 {offsets = [0, 1], sizes = [16, 1], strides = [1, 1]} : vector<32x8xf32> to vector<16x1xf32>
    %657 = vector.extract_strided_slice %637 {offsets = [16, 1], sizes = [16, 1], strides = [1, 1]} : vector<32x8xf32> to vector<16x1xf32>
    %658 = vector.broadcast %654 : vector<1x128xf32> to vector<16x128xf32>
    %659 = arith.mulf %658, %67 : vector<16x128xf32>
    %660 = math.exp %659 : vector<16x128xf32>
    %661 = arith.mulf %660, %649 : vector<16x128xf32>
    %662 = vector.broadcast %656 : vector<16x1xf32> to vector<16x128xf32>
    %663 = vector.broadcast %655 : vector<1x128xf32> to vector<16x128xf32>
    %664 = arith.mulf %662, %663 : vector<16x128xf32>
    %665 = arith.addf %661, %664 : vector<16x128xf32>
    %666 = vector.broadcast %657 : vector<16x1xf32> to vector<16x128xf32>
    %667 = arith.mulf %666, %665 : vector<16x128xf32>
    %cst_95 = arith.constant dense<0.000000e+00> : vector<128xf32>
    %668 = vector.multi_reduction <add>, %667, %cst_95 [0] : vector<16x128xf32> to vector<128xf32>
    %669 = vector.shape_cast %668 : vector<128xf32> to vector<1x128xf32>
    %670 = vector.extract_strided_slice %632 {offsets = [2, 0], sizes = [1, 128], strides = [1, 1]} : vector<8x128xf32> to vector<1x128xf32>
    %671 = vector.extract_strided_slice %634 {offsets = [2, 0], sizes = [1, 128], strides = [1, 1]} : vector<8x128xf32> to vector<1x128xf32>
    %672 = vector.extract_strided_slice %637 {offsets = [0, 2], sizes = [16, 1], strides = [1, 1]} : vector<32x8xf32> to vector<16x1xf32>
    %673 = vector.extract_strided_slice %637 {offsets = [16, 2], sizes = [16, 1], strides = [1, 1]} : vector<32x8xf32> to vector<16x1xf32>
    %674 = vector.broadcast %670 : vector<1x128xf32> to vector<16x128xf32>
    %675 = arith.mulf %674, %67 : vector<16x128xf32>
    %676 = math.exp %675 : vector<16x128xf32>
    %677 = arith.mulf %676, %665 : vector<16x128xf32>
    %678 = vector.broadcast %672 : vector<16x1xf32> to vector<16x128xf32>
    %679 = vector.broadcast %671 : vector<1x128xf32> to vector<16x128xf32>
    %680 = arith.mulf %678, %679 : vector<16x128xf32>
    %681 = arith.addf %677, %680 : vector<16x128xf32>
    %682 = vector.broadcast %673 : vector<16x1xf32> to vector<16x128xf32>
    %683 = arith.mulf %682, %681 : vector<16x128xf32>
    %cst_96 = arith.constant dense<0.000000e+00> : vector<128xf32>
    %684 = vector.multi_reduction <add>, %683, %cst_96 [0] : vector<16x128xf32> to vector<128xf32>
    %685 = vector.shape_cast %684 : vector<128xf32> to vector<1x128xf32>
    %686 = vector.extract_strided_slice %632 {offsets = [3, 0], sizes = [1, 128], strides = [1, 1]} : vector<8x128xf32> to vector<1x128xf32>
    %687 = vector.extract_strided_slice %634 {offsets = [3, 0], sizes = [1, 128], strides = [1, 1]} : vector<8x128xf32> to vector<1x128xf32>
    %688 = vector.extract_strided_slice %637 {offsets = [0, 3], sizes = [16, 1], strides = [1, 1]} : vector<32x8xf32> to vector<16x1xf32>
    %689 = vector.extract_strided_slice %637 {offsets = [16, 3], sizes = [16, 1], strides = [1, 1]} : vector<32x8xf32> to vector<16x1xf32>
    %690 = vector.broadcast %686 : vector<1x128xf32> to vector<16x128xf32>
    %691 = arith.mulf %690, %67 : vector<16x128xf32>
    %692 = math.exp %691 : vector<16x128xf32>
    %693 = arith.mulf %692, %681 : vector<16x128xf32>
    %694 = vector.broadcast %688 : vector<16x1xf32> to vector<16x128xf32>
    %695 = vector.broadcast %687 : vector<1x128xf32> to vector<16x128xf32>
    %696 = arith.mulf %694, %695 : vector<16x128xf32>
    %697 = arith.addf %693, %696 : vector<16x128xf32>
    %698 = vector.broadcast %689 : vector<16x1xf32> to vector<16x128xf32>
    %699 = arith.mulf %698, %697 : vector<16x128xf32>
    %cst_97 = arith.constant dense<0.000000e+00> : vector<128xf32>
    %700 = vector.multi_reduction <add>, %699, %cst_97 [0] : vector<16x128xf32> to vector<128xf32>
    %701 = vector.shape_cast %700 : vector<128xf32> to vector<1x128xf32>
    %702 = vector.extract_strided_slice %632 {offsets = [4, 0], sizes = [1, 128], strides = [1, 1]} : vector<8x128xf32> to vector<1x128xf32>
    %703 = vector.extract_strided_slice %634 {offsets = [4, 0], sizes = [1, 128], strides = [1, 1]} : vector<8x128xf32> to vector<1x128xf32>
    %704 = vector.extract_strided_slice %637 {offsets = [0, 4], sizes = [16, 1], strides = [1, 1]} : vector<32x8xf32> to vector<16x1xf32>
    %705 = vector.extract_strided_slice %637 {offsets = [16, 4], sizes = [16, 1], strides = [1, 1]} : vector<32x8xf32> to vector<16x1xf32>
    %706 = vector.broadcast %702 : vector<1x128xf32> to vector<16x128xf32>
    %707 = arith.mulf %706, %67 : vector<16x128xf32>
    %708 = math.exp %707 : vector<16x128xf32>
    %709 = arith.mulf %708, %697 : vector<16x128xf32>
    %710 = vector.broadcast %704 : vector<16x1xf32> to vector<16x128xf32>
    %711 = vector.broadcast %703 : vector<1x128xf32> to vector<16x128xf32>
    %712 = arith.mulf %710, %711 : vector<16x128xf32>
    %713 = arith.addf %709, %712 : vector<16x128xf32>
    %714 = vector.broadcast %705 : vector<16x1xf32> to vector<16x128xf32>
    %715 = arith.mulf %714, %713 : vector<16x128xf32>
    %cst_98 = arith.constant dense<0.000000e+00> : vector<128xf32>
    %716 = vector.multi_reduction <add>, %715, %cst_98 [0] : vector<16x128xf32> to vector<128xf32>
    %717 = vector.shape_cast %716 : vector<128xf32> to vector<1x128xf32>
    %718 = vector.extract_strided_slice %632 {offsets = [5, 0], sizes = [1, 128], strides = [1, 1]} : vector<8x128xf32> to vector<1x128xf32>
    %719 = vector.extract_strided_slice %634 {offsets = [5, 0], sizes = [1, 128], strides = [1, 1]} : vector<8x128xf32> to vector<1x128xf32>
    %720 = vector.extract_strided_slice %637 {offsets = [0, 5], sizes = [16, 1], strides = [1, 1]} : vector<32x8xf32> to vector<16x1xf32>
    %721 = vector.extract_strided_slice %637 {offsets = [16, 5], sizes = [16, 1], strides = [1, 1]} : vector<32x8xf32> to vector<16x1xf32>
    %722 = vector.broadcast %718 : vector<1x128xf32> to vector<16x128xf32>
    %723 = arith.mulf %722, %67 : vector<16x128xf32>
    %724 = math.exp %723 : vector<16x128xf32>
    %725 = arith.mulf %724, %713 : vector<16x128xf32>
    %726 = vector.broadcast %720 : vector<16x1xf32> to vector<16x128xf32>
    %727 = vector.broadcast %719 : vector<1x128xf32> to vector<16x128xf32>
    %728 = arith.mulf %726, %727 : vector<16x128xf32>
    %729 = arith.addf %725, %728 : vector<16x128xf32>
    %730 = vector.broadcast %721 : vector<16x1xf32> to vector<16x128xf32>
    %731 = arith.mulf %730, %729 : vector<16x128xf32>
    %cst_99 = arith.constant dense<0.000000e+00> : vector<128xf32>
    %732 = vector.multi_reduction <add>, %731, %cst_99 [0] : vector<16x128xf32> to vector<128xf32>
    %733 = vector.shape_cast %732 : vector<128xf32> to vector<1x128xf32>
    %734 = vector.extract_strided_slice %632 {offsets = [6, 0], sizes = [1, 128], strides = [1, 1]} : vector<8x128xf32> to vector<1x128xf32>
    %735 = vector.extract_strided_slice %634 {offsets = [6, 0], sizes = [1, 128], strides = [1, 1]} : vector<8x128xf32> to vector<1x128xf32>
    %736 = vector.extract_strided_slice %637 {offsets = [0, 6], sizes = [16, 1], strides = [1, 1]} : vector<32x8xf32> to vector<16x1xf32>
    %737 = vector.extract_strided_slice %637 {offsets = [16, 6], sizes = [16, 1], strides = [1, 1]} : vector<32x8xf32> to vector<16x1xf32>
    %738 = vector.broadcast %734 : vector<1x128xf32> to vector<16x128xf32>
    %739 = arith.mulf %738, %67 : vector<16x128xf32>
    %740 = math.exp %739 : vector<16x128xf32>
    %741 = arith.mulf %740, %729 : vector<16x128xf32>
    %742 = vector.broadcast %736 : vector<16x1xf32> to vector<16x128xf32>
    %743 = vector.broadcast %735 : vector<1x128xf32> to vector<16x128xf32>
    %744 = arith.mulf %742, %743 : vector<16x128xf32>
    %745 = arith.addf %741, %744 : vector<16x128xf32>
    %746 = vector.broadcast %737 : vector<16x1xf32> to vector<16x128xf32>
    %747 = arith.mulf %746, %745 : vector<16x128xf32>
    %cst_100 = arith.constant dense<0.000000e+00> : vector<128xf32>
    %748 = vector.multi_reduction <add>, %747, %cst_100 [0] : vector<16x128xf32> to vector<128xf32>
    %749 = vector.shape_cast %748 : vector<128xf32> to vector<1x128xf32>
    %750 = vector.extract_strided_slice %632 {offsets = [7, 0], sizes = [1, 128], strides = [1, 1]} : vector<8x128xf32> to vector<1x128xf32>
    %751 = vector.extract_strided_slice %634 {offsets = [7, 0], sizes = [1, 128], strides = [1, 1]} : vector<8x128xf32> to vector<1x128xf32>
    %752 = vector.extract_strided_slice %637 {offsets = [0, 7], sizes = [16, 1], strides = [1, 1]} : vector<32x8xf32> to vector<16x1xf32>
    %753 = vector.extract_strided_slice %637 {offsets = [16, 7], sizes = [16, 1], strides = [1, 1]} : vector<32x8xf32> to vector<16x1xf32>
    %754 = vector.broadcast %750 : vector<1x128xf32> to vector<16x128xf32>
    %755 = arith.mulf %754, %67 : vector<16x128xf32>
    %756 = math.exp %755 : vector<16x128xf32>
    %757 = arith.mulf %756, %745 : vector<16x128xf32>
    %758 = vector.broadcast %752 : vector<16x1xf32> to vector<16x128xf32>
    %759 = vector.broadcast %751 : vector<1x128xf32> to vector<16x128xf32>
    %760 = arith.mulf %758, %759 : vector<16x128xf32>
    %761 = arith.addf %757, %760 : vector<16x128xf32>
    %762 = vector.broadcast %753 : vector<16x1xf32> to vector<16x128xf32>
    %763 = arith.mulf %762, %761 : vector<16x128xf32>
    %cst_101 = arith.constant dense<0.000000e+00> : vector<128xf32>
    %764 = vector.multi_reduction <add>, %763, %cst_101 [0] : vector<16x128xf32> to vector<128xf32>
    %765 = vector.shape_cast %764 : vector<128xf32> to vector<1x128xf32>
    %766 = tpu.concatenate %653, %669, %685, %701, %717, %733, %749, %765 in 0 : vector<1x128xf32>, vector<1x128xf32>, vector<1x128xf32>, vector<1x128xf32>, vector<1x128xf32>, vector<1x128xf32>, vector<1x128xf32>, vector<1x128xf32> -> vector<8x128xf32>
    %767 = arith.index_cast %630 : i32 to index
    %c0_102 = arith.constant 0 : index
    %768 = vector.load %arg18[%767, %c0_102] : memref<64x128xf32, #tpu.memory_space<vmem>>, vector<8x128xf32>
    tpu.vector_store %arg18[%767, %c0_102], %766 {strides = array<i32>} : memref<64x128xf32, #tpu.memory_space<vmem>>, vector<8x128xf32>,
    %c5_i32 = arith.constant 5 : i32
    %c8_i32_103 = arith.constant 8 : i32
    %769 = arith.muli %c5_i32, %c8_i32_103 : i32
    %770 = tpu.assume_multiple %769, 8 : i32
    %771 = arith.index_cast %770 : i32 to index
    %c0_104 = arith.constant 0 : index
    %772 = vector.load %arg15[%771, %c0_104] : memref<64x128xf32, #tpu.memory_space<vmem>>, vector<8x128xf32>
    %773 = arith.index_cast %770 : i32 to index
    %c0_105 = arith.constant 0 : index
    %774 = vector.load %arg16[%773, %c0_105] : memref<64x128xf32, #tpu.memory_space<vmem>>, vector<8x128xf32>
    %775 = arith.index_cast %770 : i32 to index
    %c0_106 = arith.constant 0 : index
    %776 = vector.load %arg17[%775, %c0_106] : memref<64x32xf32, #tpu.memory_space<vmem>>, vector<8x32xf32>
    %777 = tpu.transpose %776, [1, 0] : vector<8x32xf32> -> vector<32x8xf32>
    %778 = vector.extract_strided_slice %772 {offsets = [0, 0], sizes = [1, 128], strides = [1, 1]} : vector<8x128xf32> to vector<1x128xf32>
    %779 = vector.extract_strided_slice %774 {offsets = [0, 0], sizes = [1, 128], strides = [1, 1]} : vector<8x128xf32> to vector<1x128xf32>
    %780 = vector.extract_strided_slice %777 {offsets = [0, 0], sizes = [16, 1], strides = [1, 1]} : vector<32x8xf32> to vector<16x1xf32>
    %781 = vector.extract_strided_slice %777 {offsets = [16, 0], sizes = [16, 1], strides = [1, 1]} : vector<32x8xf32> to vector<16x1xf32>
    %782 = vector.broadcast %778 : vector<1x128xf32> to vector<16x128xf32>
    %783 = arith.mulf %782, %67 : vector<16x128xf32>
    %784 = math.exp %783 : vector<16x128xf32>
    %785 = arith.mulf %784, %761 : vector<16x128xf32>
    %786 = vector.broadcast %780 : vector<16x1xf32> to vector<16x128xf32>
    %787 = vector.broadcast %779 : vector<1x128xf32> to vector<16x128xf32>
    %788 = arith.mulf %786, %787 : vector<16x128xf32>
    %789 = arith.addf %785, %788 : vector<16x128xf32>
    %790 = vector.broadcast %781 : vector<16x1xf32> to vector<16x128xf32>
    %791 = arith.mulf %790, %789 : vector<16x128xf32>
    %cst_107 = arith.constant dense<0.000000e+00> : vector<128xf32>
    %792 = vector.multi_reduction <add>, %791, %cst_107 [0] : vector<16x128xf32> to vector<128xf32>
    %793 = vector.shape_cast %792 : vector<128xf32> to vector<1x128xf32>
    %794 = vector.extract_strided_slice %772 {offsets = [1, 0], sizes = [1, 128], strides = [1, 1]} : vector<8x128xf32> to vector<1x128xf32>
    %795 = vector.extract_strided_slice %774 {offsets = [1, 0], sizes = [1, 128], strides = [1, 1]} : vector<8x128xf32> to vector<1x128xf32>
    %796 = vector.extract_strided_slice %777 {offsets = [0, 1], sizes = [16, 1], strides = [1, 1]} : vector<32x8xf32> to vector<16x1xf32>
    %797 = vector.extract_strided_slice %777 {offsets = [16, 1], sizes = [16, 1], strides = [1, 1]} : vector<32x8xf32> to vector<16x1xf32>
    %798 = vector.broadcast %794 : vector<1x128xf32> to vector<16x128xf32>
    %799 = arith.mulf %798, %67 : vector<16x128xf32>
    %800 = math.exp %799 : vector<16x128xf32>
    %801 = arith.mulf %800, %789 : vector<16x128xf32>
    %802 = vector.broadcast %796 : vector<16x1xf32> to vector<16x128xf32>
    %803 = vector.broadcast %795 : vector<1x128xf32> to vector<16x128xf32>
    %804 = arith.mulf %802, %803 : vector<16x128xf32>
    %805 = arith.addf %801, %804 : vector<16x128xf32>
    %806 = vector.broadcast %797 : vector<16x1xf32> to vector<16x128xf32>
    %807 = arith.mulf %806, %805 : vector<16x128xf32>
    %cst_108 = arith.constant dense<0.000000e+00> : vector<128xf32>
    %808 = vector.multi_reduction <add>, %807, %cst_108 [0] : vector<16x128xf32> to vector<128xf32>
    %809 = vector.shape_cast %808 : vector<128xf32> to vector<1x128xf32>
    %810 = vector.extract_strided_slice %772 {offsets = [2, 0], sizes = [1, 128], strides = [1, 1]} : vector<8x128xf32> to vector<1x128xf32>
    %811 = vector.extract_strided_slice %774 {offsets = [2, 0], sizes = [1, 128], strides = [1, 1]} : vector<8x128xf32> to vector<1x128xf32>
    %812 = vector.extract_strided_slice %777 {offsets = [0, 2], sizes = [16, 1], strides = [1, 1]} : vector<32x8xf32> to vector<16x1xf32>
    %813 = vector.extract_strided_slice %777 {offsets = [16, 2], sizes = [16, 1], strides = [1, 1]} : vector<32x8xf32> to vector<16x1xf32>
    %814 = vector.broadcast %810 : vector<1x128xf32> to vector<16x128xf32>
    %815 = arith.mulf %814, %67 : vector<16x128xf32>
    %816 = math.exp %815 : vector<16x128xf32>
    %817 = arith.mulf %816, %805 : vector<16x128xf32>
    %818 = vector.broadcast %812 : vector<16x1xf32> to vector<16x128xf32>
    %819 = vector.broadcast %811 : vector<1x128xf32> to vector<16x128xf32>
    %820 = arith.mulf %818, %819 : vector<16x128xf32>
    %821 = arith.addf %817, %820 : vector<16x128xf32>
    %822 = vector.broadcast %813 : vector<16x1xf32> to vector<16x128xf32>
    %823 = arith.mulf %822, %821 : vector<16x128xf32>
    %cst_109 = arith.constant dense<0.000000e+00> : vector<128xf32>
    %824 = vector.multi_reduction <add>, %823, %cst_109 [0] : vector<16x128xf32> to vector<128xf32>
    %825 = vector.shape_cast %824 : vector<128xf32> to vector<1x128xf32>
    %826 = vector.extract_strided_slice %772 {offsets = [3, 0], sizes = [1, 128], strides = [1, 1]} : vector<8x128xf32> to vector<1x128xf32>
    %827 = vector.extract_strided_slice %774 {offsets = [3, 0], sizes = [1, 128], strides = [1, 1]} : vector<8x128xf32> to vector<1x128xf32>
    %828 = vector.extract_strided_slice %777 {offsets = [0, 3], sizes = [16, 1], strides = [1, 1]} : vector<32x8xf32> to vector<16x1xf32>
    %829 = vector.extract_strided_slice %777 {offsets = [16, 3], sizes = [16, 1], strides = [1, 1]} : vector<32x8xf32> to vector<16x1xf32>
    %830 = vector.broadcast %826 : vector<1x128xf32> to vector<16x128xf32>
    %831 = arith.mulf %830, %67 : vector<16x128xf32>
    %832 = math.exp %831 : vector<16x128xf32>
    %833 = arith.mulf %832, %821 : vector<16x128xf32>
    %834 = vector.broadcast %828 : vector<16x1xf32> to vector<16x128xf32>
    %835 = vector.broadcast %827 : vector<1x128xf32> to vector<16x128xf32>
    %836 = arith.mulf %834, %835 : vector<16x128xf32>
    %837 = arith.addf %833, %836 : vector<16x128xf32>
    %838 = vector.broadcast %829 : vector<16x1xf32> to vector<16x128xf32>
    %839 = arith.mulf %838, %837 : vector<16x128xf32>
    %cst_110 = arith.constant dense<0.000000e+00> : vector<128xf32>
    %840 = vector.multi_reduction <add>, %839, %cst_110 [0] : vector<16x128xf32> to vector<128xf32>
    %841 = vector.shape_cast %840 : vector<128xf32> to vector<1x128xf32>
    %842 = vector.extract_strided_slice %772 {offsets = [4, 0], sizes = [1, 128], strides = [1, 1]} : vector<8x128xf32> to vector<1x128xf32>
    %843 = vector.extract_strided_slice %774 {offsets = [4, 0], sizes = [1, 128], strides = [1, 1]} : vector<8x128xf32> to vector<1x128xf32>
    %844 = vector.extract_strided_slice %777 {offsets = [0, 4], sizes = [16, 1], strides = [1, 1]} : vector<32x8xf32> to vector<16x1xf32>
    %845 = vector.extract_strided_slice %777 {offsets = [16, 4], sizes = [16, 1], strides = [1, 1]} : vector<32x8xf32> to vector<16x1xf32>
    %846 = vector.broadcast %842 : vector<1x128xf32> to vector<16x128xf32>
    %847 = arith.mulf %846, %67 : vector<16x128xf32>
    %848 = math.exp %847 : vector<16x128xf32>
    %849 = arith.mulf %848, %837 : vector<16x128xf32>
    %850 = vector.broadcast %844 : vector<16x1xf32> to vector<16x128xf32>
    %851 = vector.broadcast %843 : vector<1x128xf32> to vector<16x128xf32>
    %852 = arith.mulf %850, %851 : vector<16x128xf32>
    %853 = arith.addf %849, %852 : vector<16x128xf32>
    %854 = vector.broadcast %845 : vector<16x1xf32> to vector<16x128xf32>
    %855 = arith.mulf %854, %853 : vector<16x128xf32>
    %cst_111 = arith.constant dense<0.000000e+00> : vector<128xf32>
    %856 = vector.multi_reduction <add>, %855, %cst_111 [0] : vector<16x128xf32> to vector<128xf32>
    %857 = vector.shape_cast %856 : vector<128xf32> to vector<1x128xf32>
    %858 = vector.extract_strided_slice %772 {offsets = [5, 0], sizes = [1, 128], strides = [1, 1]} : vector<8x128xf32> to vector<1x128xf32>
    %859 = vector.extract_strided_slice %774 {offsets = [5, 0], sizes = [1, 128], strides = [1, 1]} : vector<8x128xf32> to vector<1x128xf32>
    %860 = vector.extract_strided_slice %777 {offsets = [0, 5], sizes = [16, 1], strides = [1, 1]} : vector<32x8xf32> to vector<16x1xf32>
    %861 = vector.extract_strided_slice %777 {offsets = [16, 5], sizes = [16, 1], strides = [1, 1]} : vector<32x8xf32> to vector<16x1xf32>
    %862 = vector.broadcast %858 : vector<1x128xf32> to vector<16x128xf32>
    %863 = arith.mulf %862, %67 : vector<16x128xf32>
    %864 = math.exp %863 : vector<16x128xf32>
    %865 = arith.mulf %864, %853 : vector<16x128xf32>
    %866 = vector.broadcast %860 : vector<16x1xf32> to vector<16x128xf32>
    %867 = vector.broadcast %859 : vector<1x128xf32> to vector<16x128xf32>
    %868 = arith.mulf %866, %867 : vector<16x128xf32>
    %869 = arith.addf %865, %868 : vector<16x128xf32>
    %870 = vector.broadcast %861 : vector<16x1xf32> to vector<16x128xf32>
    %871 = arith.mulf %870, %869 : vector<16x128xf32>
    %cst_112 = arith.constant dense<0.000000e+00> : vector<128xf32>
    %872 = vector.multi_reduction <add>, %871, %cst_112 [0] : vector<16x128xf32> to vector<128xf32>
    %873 = vector.shape_cast %872 : vector<128xf32> to vector<1x128xf32>
    %874 = vector.extract_strided_slice %772 {offsets = [6, 0], sizes = [1, 128], strides = [1, 1]} : vector<8x128xf32> to vector<1x128xf32>
    %875 = vector.extract_strided_slice %774 {offsets = [6, 0], sizes = [1, 128], strides = [1, 1]} : vector<8x128xf32> to vector<1x128xf32>
    %876 = vector.extract_strided_slice %777 {offsets = [0, 6], sizes = [16, 1], strides = [1, 1]} : vector<32x8xf32> to vector<16x1xf32>
    %877 = vector.extract_strided_slice %777 {offsets = [16, 6], sizes = [16, 1], strides = [1, 1]} : vector<32x8xf32> to vector<16x1xf32>
    %878 = vector.broadcast %874 : vector<1x128xf32> to vector<16x128xf32>
    %879 = arith.mulf %878, %67 : vector<16x128xf32>
    %880 = math.exp %879 : vector<16x128xf32>
    %881 = arith.mulf %880, %869 : vector<16x128xf32>
    %882 = vector.broadcast %876 : vector<16x1xf32> to vector<16x128xf32>
    %883 = vector.broadcast %875 : vector<1x128xf32> to vector<16x128xf32>
    %884 = arith.mulf %882, %883 : vector<16x128xf32>
    %885 = arith.addf %881, %884 : vector<16x128xf32>
    %886 = vector.broadcast %877 : vector<16x1xf32> to vector<16x128xf32>
    %887 = arith.mulf %886, %885 : vector<16x128xf32>
    %cst_113 = arith.constant dense<0.000000e+00> : vector<128xf32>
    %888 = vector.multi_reduction <add>, %887, %cst_113 [0] : vector<16x128xf32> to vector<128xf32>
    %889 = vector.shape_cast %888 : vector<128xf32> to vector<1x128xf32>
    %890 = vector.extract_strided_slice %772 {offsets = [7, 0], sizes = [1, 128], strides = [1, 1]} : vector<8x128xf32> to vector<1x128xf32>
    %891 = vector.extract_strided_slice %774 {offsets = [7, 0], sizes = [1, 128], strides = [1, 1]} : vector<8x128xf32> to vector<1x128xf32>
    %892 = vector.extract_strided_slice %777 {offsets = [0, 7], sizes = [16, 1], strides = [1, 1]} : vector<32x8xf32> to vector<16x1xf32>
    %893 = vector.extract_strided_slice %777 {offsets = [16, 7], sizes = [16, 1], strides = [1, 1]} : vector<32x8xf32> to vector<16x1xf32>
    %894 = vector.broadcast %890 : vector<1x128xf32> to vector<16x128xf32>
    %895 = arith.mulf %894, %67 : vector<16x128xf32>
    %896 = math.exp %895 : vector<16x128xf32>
    %897 = arith.mulf %896, %885 : vector<16x128xf32>
    %898 = vector.broadcast %892 : vector<16x1xf32> to vector<16x128xf32>
    %899 = vector.broadcast %891 : vector<1x128xf32> to vector<16x128xf32>
    %900 = arith.mulf %898, %899 : vector<16x128xf32>
    %901 = arith.addf %897, %900 : vector<16x128xf32>
    %902 = vector.broadcast %893 : vector<16x1xf32> to vector<16x128xf32>
    %903 = arith.mulf %902, %901 : vector<16x128xf32>
    %cst_114 = arith.constant dense<0.000000e+00> : vector<128xf32>
    %904 = vector.multi_reduction <add>, %903, %cst_114 [0] : vector<16x128xf32> to vector<128xf32>
    %905 = vector.shape_cast %904 : vector<128xf32> to vector<1x128xf32>
    %906 = tpu.concatenate %793, %809, %825, %841, %857, %873, %889, %905 in 0 : vector<1x128xf32>, vector<1x128xf32>, vector<1x128xf32>, vector<1x128xf32>, vector<1x128xf32>, vector<1x128xf32>, vector<1x128xf32>, vector<1x128xf32> -> vector<8x128xf32>
    %907 = arith.index_cast %770 : i32 to index
    %c0_115 = arith.constant 0 : index
    %908 = vector.load %arg18[%907, %c0_115] : memref<64x128xf32, #tpu.memory_space<vmem>>, vector<8x128xf32>
    tpu.vector_store %arg18[%907, %c0_115], %906 {strides = array<i32>} : memref<64x128xf32, #tpu.memory_space<vmem>>, vector<8x128xf32>,
    %c6_i32 = arith.constant 6 : i32
    %c8_i32_116 = arith.constant 8 : i32
    %909 = arith.muli %c6_i32, %c8_i32_116 : i32
    %910 = tpu.assume_multiple %909, 8 : i32
    %911 = arith.index_cast %910 : i32 to index
    %c0_117 = arith.constant 0 : index
    %912 = vector.load %arg15[%911, %c0_117] : memref<64x128xf32, #tpu.memory_space<vmem>>, vector<8x128xf32>
    %913 = arith.index_cast %910 : i32 to index
    %c0_118 = arith.constant 0 : index
    %914 = vector.load %arg16[%913, %c0_118] : memref<64x128xf32, #tpu.memory_space<vmem>>, vector<8x128xf32>
    %915 = arith.index_cast %910 : i32 to index
    %c0_119 = arith.constant 0 : index
    %916 = vector.load %arg17[%915, %c0_119] : memref<64x32xf32, #tpu.memory_space<vmem>>, vector<8x32xf32>
    %917 = tpu.transpose %916, [1, 0] : vector<8x32xf32> -> vector<32x8xf32>
    %918 = vector.extract_strided_slice %912 {offsets = [0, 0], sizes = [1, 128], strides = [1, 1]} : vector<8x128xf32> to vector<1x128xf32>
    %919 = vector.extract_strided_slice %914 {offsets = [0, 0], sizes = [1, 128], strides = [1, 1]} : vector<8x128xf32> to vector<1x128xf32>
    %920 = vector.extract_strided_slice %917 {offsets = [0, 0], sizes = [16, 1], strides = [1, 1]} : vector<32x8xf32> to vector<16x1xf32>
    %921 = vector.extract_strided_slice %917 {offsets = [16, 0], sizes = [16, 1], strides = [1, 1]} : vector<32x8xf32> to vector<16x1xf32>
    %922 = vector.broadcast %918 : vector<1x128xf32> to vector<16x128xf32>
    %923 = arith.mulf %922, %67 : vector<16x128xf32>
    %924 = math.exp %923 : vector<16x128xf32>
    %925 = arith.mulf %924, %901 : vector<16x128xf32>
    %926 = vector.broadcast %920 : vector<16x1xf32> to vector<16x128xf32>
    %927 = vector.broadcast %919 : vector<1x128xf32> to vector<16x128xf32>
    %928 = arith.mulf %926, %927 : vector<16x128xf32>
    %929 = arith.addf %925, %928 : vector<16x128xf32>
    %930 = vector.broadcast %921 : vector<16x1xf32> to vector<16x128xf32>
    %931 = arith.mulf %930, %929 : vector<16x128xf32>
    %cst_120 = arith.constant dense<0.000000e+00> : vector<128xf32>
    %932 = vector.multi_reduction <add>, %931, %cst_120 [0] : vector<16x128xf32> to vector<128xf32>
    %933 = vector.shape_cast %932 : vector<128xf32> to vector<1x128xf32>
    %934 = vector.extract_strided_slice %912 {offsets = [1, 0], sizes = [1, 128], strides = [1, 1]} : vector<8x128xf32> to vector<1x128xf32>
    %935 = vector.extract_strided_slice %914 {offsets = [1, 0], sizes = [1, 128], strides = [1, 1]} : vector<8x128xf32> to vector<1x128xf32>
    %936 = vector.extract_strided_slice %917 {offsets = [0, 1], sizes = [16, 1], strides = [1, 1]} : vector<32x8xf32> to vector<16x1xf32>
    %937 = vector.extract_strided_slice %917 {offsets = [16, 1], sizes = [16, 1], strides = [1, 1]} : vector<32x8xf32> to vector<16x1xf32>
    %938 = vector.broadcast %934 : vector<1x128xf32> to vector<16x128xf32>
    %939 = arith.mulf %938, %67 : vector<16x128xf32>
    %940 = math.exp %939 : vector<16x128xf32>
    %941 = arith.mulf %940, %929 : vector<16x128xf32>
    %942 = vector.broadcast %936 : vector<16x1xf32> to vector<16x128xf32>
    %943 = vector.broadcast %935 : vector<1x128xf32> to vector<16x128xf32>
    %944 = arith.mulf %942, %943 : vector<16x128xf32>
    %945 = arith.addf %941, %944 : vector<16x128xf32>
    %946 = vector.broadcast %937 : vector<16x1xf32> to vector<16x128xf32>
    %947 = arith.mulf %946, %945 : vector<16x128xf32>
    %cst_121 = arith.constant dense<0.000000e+00> : vector<128xf32>
    %948 = vector.multi_reduction <add>, %947, %cst_121 [0] : vector<16x128xf32> to vector<128xf32>
    %949 = vector.shape_cast %948 : vector<128xf32> to vector<1x128xf32>
    %950 = vector.extract_strided_slice %912 {offsets = [2, 0], sizes = [1, 128], strides = [1, 1]} : vector<8x128xf32> to vector<1x128xf32>
    %951 = vector.extract_strided_slice %914 {offsets = [2, 0], sizes = [1, 128], strides = [1, 1]} : vector<8x128xf32> to vector<1x128xf32>
    %952 = vector.extract_strided_slice %917 {offsets = [0, 2], sizes = [16, 1], strides = [1, 1]} : vector<32x8xf32> to vector<16x1xf32>
    %953 = vector.extract_strided_slice %917 {offsets = [16, 2], sizes = [16, 1], strides = [1, 1]} : vector<32x8xf32> to vector<16x1xf32>
    %954 = vector.broadcast %950 : vector<1x128xf32> to vector<16x128xf32>
    %955 = arith.mulf %954, %67 : vector<16x128xf32>
    %956 = math.exp %955 : vector<16x128xf32>
    %957 = arith.mulf %956, %945 : vector<16x128xf32>
    %958 = vector.broadcast %952 : vector<16x1xf32> to vector<16x128xf32>
    %959 = vector.broadcast %951 : vector<1x128xf32> to vector<16x128xf32>
    %960 = arith.mulf %958, %959 : vector<16x128xf32>
    %961 = arith.addf %957, %960 : vector<16x128xf32>
    %962 = vector.broadcast %953 : vector<16x1xf32> to vector<16x128xf32>
    %963 = arith.mulf %962, %961 : vector<16x128xf32>
    %cst_122 = arith.constant dense<0.000000e+00> : vector<128xf32>
    %964 = vector.multi_reduction <add>, %963, %cst_122 [0] : vector<16x128xf32> to vector<128xf32>
    %965 = vector.shape_cast %964 : vector<128xf32> to vector<1x128xf32>
    %966 = vector.extract_strided_slice %912 {offsets = [3, 0], sizes = [1, 128], strides = [1, 1]} : vector<8x128xf32> to vector<1x128xf32>
    %967 = vector.extract_strided_slice %914 {offsets = [3, 0], sizes = [1, 128], strides = [1, 1]} : vector<8x128xf32> to vector<1x128xf32>
    %968 = vector.extract_strided_slice %917 {offsets = [0, 3], sizes = [16, 1], strides = [1, 1]} : vector<32x8xf32> to vector<16x1xf32>
    %969 = vector.extract_strided_slice %917 {offsets = [16, 3], sizes = [16, 1], strides = [1, 1]} : vector<32x8xf32> to vector<16x1xf32>
    %970 = vector.broadcast %966 : vector<1x128xf32> to vector<16x128xf32>
    %971 = arith.mulf %970, %67 : vector<16x128xf32>
    %972 = math.exp %971 : vector<16x128xf32>
    %973 = arith.mulf %972, %961 : vector<16x128xf32>
    %974 = vector.broadcast %968 : vector<16x1xf32> to vector<16x128xf32>
    %975 = vector.broadcast %967 : vector<1x128xf32> to vector<16x128xf32>
    %976 = arith.mulf %974, %975 : vector<16x128xf32>
    %977 = arith.addf %973, %976 : vector<16x128xf32>
    %978 = vector.broadcast %969 : vector<16x1xf32> to vector<16x128xf32>
    %979 = arith.mulf %978, %977 : vector<16x128xf32>
    %cst_123 = arith.constant dense<0.000000e+00> : vector<128xf32>
    %980 = vector.multi_reduction <add>, %979, %cst_123 [0] : vector<16x128xf32> to vector<128xf32>
    %981 = vector.shape_cast %980 : vector<128xf32> to vector<1x128xf32>
    %982 = vector.extract_strided_slice %912 {offsets = [4, 0], sizes = [1, 128], strides = [1, 1]} : vector<8x128xf32> to vector<1x128xf32>
    %983 = vector.extract_strided_slice %914 {offsets = [4, 0], sizes = [1, 128], strides = [1, 1]} : vector<8x128xf32> to vector<1x128xf32>
    %984 = vector.extract_strided_slice %917 {offsets = [0, 4], sizes = [16, 1], strides = [1, 1]} : vector<32x8xf32> to vector<16x1xf32>
    %985 = vector.extract_strided_slice %917 {offsets = [16, 4], sizes = [16, 1], strides = [1, 1]} : vector<32x8xf32> to vector<16x1xf32>
    %986 = vector.broadcast %982 : vector<1x128xf32> to vector<16x128xf32>
    %987 = arith.mulf %986, %67 : vector<16x128xf32>
    %988 = math.exp %987 : vector<16x128xf32>
    %989 = arith.mulf %988, %977 : vector<16x128xf32>
    %990 = vector.broadcast %984 : vector<16x1xf32> to vector<16x128xf32>
    %991 = vector.broadcast %983 : vector<1x128xf32> to vector<16x128xf32>
    %992 = arith.mulf %990, %991 : vector<16x128xf32>
    %993 = arith.addf %989, %992 : vector<16x128xf32>
    %994 = vector.broadcast %985 : vector<16x1xf32> to vector<16x128xf32>
    %995 = arith.mulf %994, %993 : vector<16x128xf32>
    %cst_124 = arith.constant dense<0.000000e+00> : vector<128xf32>
    %996 = vector.multi_reduction <add>, %995, %cst_124 [0] : vector<16x128xf32> to vector<128xf32>
    %997 = vector.shape_cast %996 : vector<128xf32> to vector<1x128xf32>
    %998 = vector.extract_strided_slice %912 {offsets = [5, 0], sizes = [1, 128], strides = [1, 1]} : vector<8x128xf32> to vector<1x128xf32>
    %999 = vector.extract_strided_slice %914 {offsets = [5, 0], sizes = [1, 128], strides = [1, 1]} : vector<8x128xf32> to vector<1x128xf32>
    %1000 = vector.extract_strided_slice %917 {offsets = [0, 5], sizes = [16, 1], strides = [1, 1]} : vector<32x8xf32> to vector<16x1xf32>
    %1001 = vector.extract_strided_slice %917 {offsets = [16, 5], sizes = [16, 1], strides = [1, 1]} : vector<32x8xf32> to vector<16x1xf32>
    %1002 = vector.broadcast %998 : vector<1x128xf32> to vector<16x128xf32>
    %1003 = arith.mulf %1002, %67 : vector<16x128xf32>
    %1004 = math.exp %1003 : vector<16x128xf32>
    %1005 = arith.mulf %1004, %993 : vector<16x128xf32>
    %1006 = vector.broadcast %1000 : vector<16x1xf32> to vector<16x128xf32>
    %1007 = vector.broadcast %999 : vector<1x128xf32> to vector<16x128xf32>
    %1008 = arith.mulf %1006, %1007 : vector<16x128xf32>
    %1009 = arith.addf %1005, %1008 : vector<16x128xf32>
    %1010 = vector.broadcast %1001 : vector<16x1xf32> to vector<16x128xf32>
    %1011 = arith.mulf %1010, %1009 : vector<16x128xf32>
    %cst_125 = arith.constant dense<0.000000e+00> : vector<128xf32>
    %1012 = vector.multi_reduction <add>, %1011, %cst_125 [0] : vector<16x128xf32> to vector<128xf32>
    %1013 = vector.shape_cast %1012 : vector<128xf32> to vector<1x128xf32>
    %1014 = vector.extract_strided_slice %912 {offsets = [6, 0], sizes = [1, 128], strides = [1, 1]} : vector<8x128xf32> to vector<1x128xf32>
    %1015 = vector.extract_strided_slice %914 {offsets = [6, 0], sizes = [1, 128], strides = [1, 1]} : vector<8x128xf32> to vector<1x128xf32>
    %1016 = vector.extract_strided_slice %917 {offsets = [0, 6], sizes = [16, 1], strides = [1, 1]} : vector<32x8xf32> to vector<16x1xf32>
    %1017 = vector.extract_strided_slice %917 {offsets = [16, 6], sizes = [16, 1], strides = [1, 1]} : vector<32x8xf32> to vector<16x1xf32>
    %1018 = vector.broadcast %1014 : vector<1x128xf32> to vector<16x128xf32>
    %1019 = arith.mulf %1018, %67 : vector<16x128xf32>
    %1020 = math.exp %1019 : vector<16x128xf32>
    %1021 = arith.mulf %1020, %1009 : vector<16x128xf32>
    %1022 = vector.broadcast %1016 : vector<16x1xf32> to vector<16x128xf32>
    %1023 = vector.broadcast %1015 : vector<1x128xf32> to vector<16x128xf32>
    %1024 = arith.mulf %1022, %1023 : vector<16x128xf32>
    %1025 = arith.addf %1021, %1024 : vector<16x128xf32>
    %1026 = vector.broadcast %1017 : vector<16x1xf32> to vector<16x128xf32>
    %1027 = arith.mulf %1026, %1025 : vector<16x128xf32>
    %cst_126 = arith.constant dense<0.000000e+00> : vector<128xf32>
    %1028 = vector.multi_reduction <add>, %1027, %cst_126 [0] : vector<16x128xf32> to vector<128xf32>
    %1029 = vector.shape_cast %1028 : vector<128xf32> to vector<1x128xf32>
    %1030 = vector.extract_strided_slice %912 {offsets = [7, 0], sizes = [1, 128], strides = [1, 1]} : vector<8x128xf32> to vector<1x128xf32>
    %1031 = vector.extract_strided_slice %914 {offsets = [7, 0], sizes = [1, 128], strides = [1, 1]} : vector<8x128xf32> to vector<1x128xf32>
    %1032 = vector.extract_strided_slice %917 {offsets = [0, 7], sizes = [16, 1], strides = [1, 1]} : vector<32x8xf32> to vector<16x1xf32>
    %1033 = vector.extract_strided_slice %917 {offsets = [16, 7], sizes = [16, 1], strides = [1, 1]} : vector<32x8xf32> to vector<16x1xf32>
    %1034 = vector.broadcast %1030 : vector<1x128xf32> to vector<16x128xf32>
    %1035 = arith.mulf %1034, %67 : vector<16x128xf32>
    %1036 = math.exp %1035 : vector<16x128xf32>
    %1037 = arith.mulf %1036, %1025 : vector<16x128xf32>
    %1038 = vector.broadcast %1032 : vector<16x1xf32> to vector<16x128xf32>
    %1039 = vector.broadcast %1031 : vector<1x128xf32> to vector<16x128xf32>
    %1040 = arith.mulf %1038, %1039 : vector<16x128xf32>
    %1041 = arith.addf %1037, %1040 : vector<16x128xf32>
    %1042 = vector.broadcast %1033 : vector<16x1xf32> to vector<16x128xf32>
    %1043 = arith.mulf %1042, %1041 : vector<16x128xf32>
    %cst_127 = arith.constant dense<0.000000e+00> : vector<128xf32>
    %1044 = vector.multi_reduction <add>, %1043, %cst_127 [0] : vector<16x128xf32> to vector<128xf32>
    %1045 = vector.shape_cast %1044 : vector<128xf32> to vector<1x128xf32>
    %1046 = tpu.concatenate %933, %949, %965, %981, %997, %1013, %1029, %1045 in 0 : vector<1x128xf32>, vector<1x128xf32>, vector<1x128xf32>, vector<1x128xf32>, vector<1x128xf32>, vector<1x128xf32>, vector<1x128xf32>, vector<1x128xf32> -> vector<8x128xf32>
    %1047 = arith.index_cast %910 : i32 to index
    %c0_128 = arith.constant 0 : index
    %1048 = vector.load %arg18[%1047, %c0_128] : memref<64x128xf32, #tpu.memory_space<vmem>>, vector<8x128xf32>
    tpu.vector_store %arg18[%1047, %c0_128], %1046 {strides = array<i32>} : memref<64x128xf32, #tpu.memory_space<vmem>>, vector<8x128xf32>,
    %c7_i32 = arith.constant 7 : i32
    %c8_i32_129 = arith.constant 8 : i32
    %1049 = arith.muli %c7_i32, %c8_i32_129 : i32
    %1050 = tpu.assume_multiple %1049, 8 : i32
    %1051 = arith.index_cast %1050 : i32 to index
    %c0_130 = arith.constant 0 : index
    %1052 = vector.load %arg15[%1051, %c0_130] : memref<64x128xf32, #tpu.memory_space<vmem>>, vector<8x128xf32>
    %1053 = arith.index_cast %1050 : i32 to index
    %c0_131 = arith.constant 0 : index
    %1054 = vector.load %arg16[%1053, %c0_131] : memref<64x128xf32, #tpu.memory_space<vmem>>, vector<8x128xf32>
    %1055 = arith.index_cast %1050 : i32 to index
    %c0_132 = arith.constant 0 : index
    %1056 = vector.load %arg17[%1055, %c0_132] : memref<64x32xf32, #tpu.memory_space<vmem>>, vector<8x32xf32>
    %1057 = tpu.transpose %1056, [1, 0] : vector<8x32xf32> -> vector<32x8xf32>
    %1058 = vector.extract_strided_slice %1052 {offsets = [0, 0], sizes = [1, 128], strides = [1, 1]} : vector<8x128xf32> to vector<1x128xf32>
    %1059 = vector.extract_strided_slice %1054 {offsets = [0, 0], sizes = [1, 128], strides = [1, 1]} : vector<8x128xf32> to vector<1x128xf32>
    %1060 = vector.extract_strided_slice %1057 {offsets = [0, 0], sizes = [16, 1], strides = [1, 1]} : vector<32x8xf32> to vector<16x1xf32>
    %1061 = vector.extract_strided_slice %1057 {offsets = [16, 0], sizes = [16, 1], strides = [1, 1]} : vector<32x8xf32> to vector<16x1xf32>
    %1062 = vector.broadcast %1058 : vector<1x128xf32> to vector<16x128xf32>
    %1063 = arith.mulf %1062, %67 : vector<16x128xf32>
    %1064 = math.exp %1063 : vector<16x128xf32>
    %1065 = arith.mulf %1064, %1041 : vector<16x128xf32>
    %1066 = vector.broadcast %1060 : vector<16x1xf32> to vector<16x128xf32>
    %1067 = vector.broadcast %1059 : vector<1x128xf32> to vector<16x128xf32>
    %1068 = arith.mulf %1066, %1067 : vector<16x128xf32>
    %1069 = arith.addf %1065, %1068 : vector<16x128xf32>
    %1070 = vector.broadcast %1061 : vector<16x1xf32> to vector<16x128xf32>
    %1071 = arith.mulf %1070, %1069 : vector<16x128xf32>
    %cst_133 = arith.constant dense<0.000000e+00> : vector<128xf32>
    %1072 = vector.multi_reduction <add>, %1071, %cst_133 [0] : vector<16x128xf32> to vector<128xf32>
    %1073 = vector.shape_cast %1072 : vector<128xf32> to vector<1x128xf32>
    %1074 = vector.extract_strided_slice %1052 {offsets = [1, 0], sizes = [1, 128], strides = [1, 1]} : vector<8x128xf32> to vector<1x128xf32>
    %1075 = vector.extract_strided_slice %1054 {offsets = [1, 0], sizes = [1, 128], strides = [1, 1]} : vector<8x128xf32> to vector<1x128xf32>
    %1076 = vector.extract_strided_slice %1057 {offsets = [0, 1], sizes = [16, 1], strides = [1, 1]} : vector<32x8xf32> to vector<16x1xf32>
    %1077 = vector.extract_strided_slice %1057 {offsets = [16, 1], sizes = [16, 1], strides = [1, 1]} : vector<32x8xf32> to vector<16x1xf32>
    %1078 = vector.broadcast %1074 : vector<1x128xf32> to vector<16x128xf32>
    %1079 = arith.mulf %1078, %67 : vector<16x128xf32>
    %1080 = math.exp %1079 : vector<16x128xf32>
    %1081 = arith.mulf %1080, %1069 : vector<16x128xf32>
    %1082 = vector.broadcast %1076 : vector<16x1xf32> to vector<16x128xf32>
    %1083 = vector.broadcast %1075 : vector<1x128xf32> to vector<16x128xf32>
    %1084 = arith.mulf %1082, %1083 : vector<16x128xf32>
    %1085 = arith.addf %1081, %1084 : vector<16x128xf32>
    %1086 = vector.broadcast %1077 : vector<16x1xf32> to vector<16x128xf32>
    %1087 = arith.mulf %1086, %1085 : vector<16x128xf32>
    %cst_134 = arith.constant dense<0.000000e+00> : vector<128xf32>
    %1088 = vector.multi_reduction <add>, %1087, %cst_134 [0] : vector<16x128xf32> to vector<128xf32>
    %1089 = vector.shape_cast %1088 : vector<128xf32> to vector<1x128xf32>
    %1090 = vector.extract_strided_slice %1052 {offsets = [2, 0], sizes = [1, 128], strides = [1, 1]} : vector<8x128xf32> to vector<1x128xf32>
    %1091 = vector.extract_strided_slice %1054 {offsets = [2, 0], sizes = [1, 128], strides = [1, 1]} : vector<8x128xf32> to vector<1x128xf32>
    %1092 = vector.extract_strided_slice %1057 {offsets = [0, 2], sizes = [16, 1], strides = [1, 1]} : vector<32x8xf32> to vector<16x1xf32>
    %1093 = vector.extract_strided_slice %1057 {offsets = [16, 2], sizes = [16, 1], strides = [1, 1]} : vector<32x8xf32> to vector<16x1xf32>
    %1094 = vector.broadcast %1090 : vector<1x128xf32> to vector<16x128xf32>
    %1095 = arith.mulf %1094, %67 : vector<16x128xf32>
    %1096 = math.exp %1095 : vector<16x128xf32>
    %1097 = arith.mulf %1096, %1085 : vector<16x128xf32>
    %1098 = vector.broadcast %1092 : vector<16x1xf32> to vector<16x128xf32>
    %1099 = vector.broadcast %1091 : vector<1x128xf32> to vector<16x128xf32>
    %1100 = arith.mulf %1098, %1099 : vector<16x128xf32>
    %1101 = arith.addf %1097, %1100 : vector<16x128xf32>
    %1102 = vector.broadcast %1093 : vector<16x1xf32> to vector<16x128xf32>
    %1103 = arith.mulf %1102, %1101 : vector<16x128xf32>
    %cst_135 = arith.constant dense<0.000000e+00> : vector<128xf32>
    %1104 = vector.multi_reduction <add>, %1103, %cst_135 [0] : vector<16x128xf32> to vector<128xf32>
    %1105 = vector.shape_cast %1104 : vector<128xf32> to vector<1x128xf32>
    %1106 = vector.extract_strided_slice %1052 {offsets = [3, 0], sizes = [1, 128], strides = [1, 1]} : vector<8x128xf32> to vector<1x128xf32>
    %1107 = vector.extract_strided_slice %1054 {offsets = [3, 0], sizes = [1, 128], strides = [1, 1]} : vector<8x128xf32> to vector<1x128xf32>
    %1108 = vector.extract_strided_slice %1057 {offsets = [0, 3], sizes = [16, 1], strides = [1, 1]} : vector<32x8xf32> to vector<16x1xf32>
    %1109 = vector.extract_strided_slice %1057 {offsets = [16, 3], sizes = [16, 1], strides = [1, 1]} : vector<32x8xf32> to vector<16x1xf32>
    %1110 = vector.broadcast %1106 : vector<1x128xf32> to vector<16x128xf32>
    %1111 = arith.mulf %1110, %67 : vector<16x128xf32>
    %1112 = math.exp %1111 : vector<16x128xf32>
    %1113 = arith.mulf %1112, %1101 : vector<16x128xf32>
    %1114 = vector.broadcast %1108 : vector<16x1xf32> to vector<16x128xf32>
    %1115 = vector.broadcast %1107 : vector<1x128xf32> to vector<16x128xf32>
    %1116 = arith.mulf %1114, %1115 : vector<16x128xf32>
    %1117 = arith.addf %1113, %1116 : vector<16x128xf32>
    %1118 = vector.broadcast %1109 : vector<16x1xf32> to vector<16x128xf32>
    %1119 = arith.mulf %1118, %1117 : vector<16x128xf32>
    %cst_136 = arith.constant dense<0.000000e+00> : vector<128xf32>
    %1120 = vector.multi_reduction <add>, %1119, %cst_136 [0] : vector<16x128xf32> to vector<128xf32>
    %1121 = vector.shape_cast %1120 : vector<128xf32> to vector<1x128xf32>
    %1122 = vector.extract_strided_slice %1052 {offsets = [4, 0], sizes = [1, 128], strides = [1, 1]} : vector<8x128xf32> to vector<1x128xf32>
    %1123 = vector.extract_strided_slice %1054 {offsets = [4, 0], sizes = [1, 128], strides = [1, 1]} : vector<8x128xf32> to vector<1x128xf32>
    %1124 = vector.extract_strided_slice %1057 {offsets = [0, 4], sizes = [16, 1], strides = [1, 1]} : vector<32x8xf32> to vector<16x1xf32>
    %1125 = vector.extract_strided_slice %1057 {offsets = [16, 4], sizes = [16, 1], strides = [1, 1]} : vector<32x8xf32> to vector<16x1xf32>
    %1126 = vector.broadcast %1122 : vector<1x128xf32> to vector<16x128xf32>
    %1127 = arith.mulf %1126, %67 : vector<16x128xf32>
    %1128 = math.exp %1127 : vector<16x128xf32>
    %1129 = arith.mulf %1128, %1117 : vector<16x128xf32>
    %1130 = vector.broadcast %1124 : vector<16x1xf32> to vector<16x128xf32>
    %1131 = vector.broadcast %1123 : vector<1x128xf32> to vector<16x128xf32>
    %1132 = arith.mulf %1130, %1131 : vector<16x128xf32>
    %1133 = arith.addf %1129, %1132 : vector<16x128xf32>
    %1134 = vector.broadcast %1125 : vector<16x1xf32> to vector<16x128xf32>
    %1135 = arith.mulf %1134, %1133 : vector<16x128xf32>
    %cst_137 = arith.constant dense<0.000000e+00> : vector<128xf32>
    %1136 = vector.multi_reduction <add>, %1135, %cst_137 [0] : vector<16x128xf32> to vector<128xf32>
    %1137 = vector.shape_cast %1136 : vector<128xf32> to vector<1x128xf32>
    %1138 = vector.extract_strided_slice %1052 {offsets = [5, 0], sizes = [1, 128], strides = [1, 1]} : vector<8x128xf32> to vector<1x128xf32>
    %1139 = vector.extract_strided_slice %1054 {offsets = [5, 0], sizes = [1, 128], strides = [1, 1]} : vector<8x128xf32> to vector<1x128xf32>
    %1140 = vector.extract_strided_slice %1057 {offsets = [0, 5], sizes = [16, 1], strides = [1, 1]} : vector<32x8xf32> to vector<16x1xf32>
    %1141 = vector.extract_strided_slice %1057 {offsets = [16, 5], sizes = [16, 1], strides = [1, 1]} : vector<32x8xf32> to vector<16x1xf32>
    %1142 = vector.broadcast %1138 : vector<1x128xf32> to vector<16x128xf32>
    %1143 = arith.mulf %1142, %67 : vector<16x128xf32>
    %1144 = math.exp %1143 : vector<16x128xf32>
    %1145 = arith.mulf %1144, %1133 : vector<16x128xf32>
    %1146 = vector.broadcast %1140 : vector<16x1xf32> to vector<16x128xf32>
    %1147 = vector.broadcast %1139 : vector<1x128xf32> to vector<16x128xf32>
    %1148 = arith.mulf %1146, %1147 : vector<16x128xf32>
    %1149 = arith.addf %1145, %1148 : vector<16x128xf32>
    %1150 = vector.broadcast %1141 : vector<16x1xf32> to vector<16x128xf32>
    %1151 = arith.mulf %1150, %1149 : vector<16x128xf32>
    %cst_138 = arith.constant dense<0.000000e+00> : vector<128xf32>
    %1152 = vector.multi_reduction <add>, %1151, %cst_138 [0] : vector<16x128xf32> to vector<128xf32>
    %1153 = vector.shape_cast %1152 : vector<128xf32> to vector<1x128xf32>
    %1154 = vector.extract_strided_slice %1052 {offsets = [6, 0], sizes = [1, 128], strides = [1, 1]} : vector<8x128xf32> to vector<1x128xf32>
    %1155 = vector.extract_strided_slice %1054 {offsets = [6, 0], sizes = [1, 128], strides = [1, 1]} : vector<8x128xf32> to vector<1x128xf32>
    %1156 = vector.extract_strided_slice %1057 {offsets = [0, 6], sizes = [16, 1], strides = [1, 1]} : vector<32x8xf32> to vector<16x1xf32>
    %1157 = vector.extract_strided_slice %1057 {offsets = [16, 6], sizes = [16, 1], strides = [1, 1]} : vector<32x8xf32> to vector<16x1xf32>
    %1158 = vector.broadcast %1154 : vector<1x128xf32> to vector<16x128xf32>
    %1159 = arith.mulf %1158, %67 : vector<16x128xf32>
    %1160 = math.exp %1159 : vector<16x128xf32>
    %1161 = arith.mulf %1160, %1149 : vector<16x128xf32>
    %1162 = vector.broadcast %1156 : vector<16x1xf32> to vector<16x128xf32>
    %1163 = vector.broadcast %1155 : vector<1x128xf32> to vector<16x128xf32>
    %1164 = arith.mulf %1162, %1163 : vector<16x128xf32>
    %1165 = arith.addf %1161, %1164 : vector<16x128xf32>
    %1166 = vector.broadcast %1157 : vector<16x1xf32> to vector<16x128xf32>
    %1167 = arith.mulf %1166, %1165 : vector<16x128xf32>
    %cst_139 = arith.constant dense<0.000000e+00> : vector<128xf32>
    %1168 = vector.multi_reduction <add>, %1167, %cst_139 [0] : vector<16x128xf32> to vector<128xf32>
    %1169 = vector.shape_cast %1168 : vector<128xf32> to vector<1x128xf32>
    %1170 = vector.extract_strided_slice %1052 {offsets = [7, 0], sizes = [1, 128], strides = [1, 1]} : vector<8x128xf32> to vector<1x128xf32>
    %1171 = vector.extract_strided_slice %1054 {offsets = [7, 0], sizes = [1, 128], strides = [1, 1]} : vector<8x128xf32> to vector<1x128xf32>
    %1172 = vector.extract_strided_slice %1057 {offsets = [0, 7], sizes = [16, 1], strides = [1, 1]} : vector<32x8xf32> to vector<16x1xf32>
    %1173 = vector.extract_strided_slice %1057 {offsets = [16, 7], sizes = [16, 1], strides = [1, 1]} : vector<32x8xf32> to vector<16x1xf32>
    %1174 = vector.broadcast %1170 : vector<1x128xf32> to vector<16x128xf32>
    %1175 = arith.mulf %1174, %67 : vector<16x128xf32>
    %1176 = math.exp %1175 : vector<16x128xf32>
    %1177 = arith.mulf %1176, %1165 : vector<16x128xf32>
    %1178 = vector.broadcast %1172 : vector<16x1xf32> to vector<16x128xf32>
    %1179 = vector.broadcast %1171 : vector<1x128xf32> to vector<16x128xf32>
    %1180 = arith.mulf %1178, %1179 : vector<16x128xf32>
    %1181 = arith.addf %1177, %1180 : vector<16x128xf32>
    %1182 = vector.broadcast %1173 : vector<16x1xf32> to vector<16x128xf32>
    %1183 = arith.mulf %1182, %1181 : vector<16x128xf32>
    %cst_140 = arith.constant dense<0.000000e+00> : vector<128xf32>
    %1184 = vector.multi_reduction <add>, %1183, %cst_140 [0] : vector<16x128xf32> to vector<128xf32>
    %1185 = vector.shape_cast %1184 : vector<128xf32> to vector<1x128xf32>
    %1186 = tpu.concatenate %1073, %1089, %1105, %1121, %1137, %1153, %1169, %1185 in 0 : vector<1x128xf32>, vector<1x128xf32>, vector<1x128xf32>, vector<1x128xf32>, vector<1x128xf32>, vector<1x128xf32>, vector<1x128xf32>, vector<1x128xf32> -> vector<8x128xf32>
    %1187 = arith.index_cast %1050 : i32 to index
    %c0_141 = arith.constant 0 : index
    %1188 = vector.load %arg18[%1187, %c0_141] : memref<64x128xf32, #tpu.memory_space<vmem>>, vector<8x128xf32>
    tpu.vector_store %arg18[%1187, %c0_141], %1186 {strides = array<i32>} : memref<64x128xf32, #tpu.memory_space<vmem>>, vector<8x128xf32>,
    %c8_i32_142 = arith.constant 8 : i32
    %c0_143 = arith.constant 0 : index
    %c0_144 = arith.constant 0 : index
    %1189 = vector.load %arg13[%c0_143, %c0_144] : memref<16x128xf32, #tpu.memory_space<vmem>>, vector<16x128xf32>
    tpu.vector_store %arg13[%c0_143, %c0_144], %1181 {strides = array<i32>} : memref<16x128xf32, #tpu.memory_space<vmem>>, vector<16x128xf32>,
    %c0_145 = arith.constant 0 : index
    %c0_146 = arith.constant 0 : index
    %1190 = vector.load %arg18[%c0_145, %c0_146] : memref<64x128xf32, #tpu.memory_space<vmem>>, vector<64x128xf32>
    %c0_147 = arith.constant 0 : index
    %c0_148 = arith.constant 0 : index
    %1191 = vector.load %arg10[%c0_147, %c0_148] : memref<1x128xf32, #tpu.memory_space<vmem>>, vector<1x128xf32>
    %1192 = vector.broadcast %1191 : vector<1x128xf32> to vector<64x128xf32>
    %1193 = arith.mulf %38, %1192 : vector<64x128xf32>
    %1194 = arith.addf %1190, %1193 : vector<64x128xf32>
    %1195 = arith.negf %8 : vector<64x128xf32>
    %1196 = math.exp %1195 : vector<64x128xf32>
    %cst_149 = arith.constant 1.000000e+00 : f32
    %1197 = vector.broadcast %cst_149 : f32 to vector<64x128xf32>
    %1198 = arith.addf %1197, %1196 : vector<64x128xf32>
    %1199 = arith.divf %1197, %1198 : vector<64x128xf32>
    %1200 = arith.mulf %8, %1199 : vector<64x128xf32>
    %1201 = arith.mulf %1194, %1200 : vector<64x128xf32>
    %1202 = arith.truncf %1201 : vector<64x128xf32> to vector<64x128xbf16>
    %c0_150 = arith.constant 0 : index
    %c0_151 = arith.constant 0 : index
    %1203 = vector.load %arg11[%c0_150, %c0_151] : memref<128x64xbf16, #tpu.memory_space<vmem>>, vector<128x64xbf16>
    %cst_152 = arith.constant dense<0.000000e+00> : vector<64x64xf32>
    %1204 = tpu.matmul %1202, %1203, %cst_152 {dimension_numbers = #tpu.dot_dimension_numbers<[1], [0], [0], [1], [0, 0, 1, 1], [], []>} : vector<64x128xbf16>, vector<128x64xbf16>, vector<64x64xf32> -> vector<64x64xf32>
    %1205 = arith.truncf %1204 : vector<64x64xf32> to vector<64x64xbf16>
    %c0_153 = arith.constant 0 : index
    %c0_154 = arith.constant 0 : index
    %c0_155 = arith.constant 0 : index
    %1206 = vector.load %arg12[%c0_153, %c0_154, %c0_155] : memref<1x64x64xbf16, #tpu.memory_space<vmem>>, vector<1x64x64xbf16>
    %1207 = vector.shape_cast %1206 : vector<1x64x64xbf16> to vector<64x64xbf16>
    %1208 = vector.shape_cast %1205 : vector<64x64xbf16> to vector<1x64x64xbf16>
    tpu.vector_store %arg12[%c0_153, %c0_154, %c0_155], %1208 {strides = array<i32>} : memref<1x64x64xbf16, #tpu.memory_space<vmem>>, vector<1x64x64xbf16>,
    return
  }
  func.func @transform_0(%arg0: i32, %arg1: i32) -> (i32, i32, i32) {
    %c0_i32 = arith.constant 0 : i32
    %c0_i32_0 = arith.constant 0 : i32
    return %arg0, %arg1, %c0_i32 : i32, i32, i32
  }
  func.func @transform_1(%arg0: i32, %arg1: i32) -> (i32, i32) {
    %c0_i32 = arith.constant 0 : i32
    %c0_i32_0 = arith.constant 0 : i32
    %c0_i32_1 = arith.constant 0 : i32
    return %c0_i32, %c0_i32_0 : i32, i32
  }
  func.func @transform_2(%arg0: i32, %arg1: i32) -> (i32, i32) {
    %c0_i32 = arith.constant 0 : i32
    %c0_i32_0 = arith.constant 0 : i32
    %c0_i32_1 = arith.constant 0 : i32
    return %c0_i32, %c0_i32_0 : i32, i32
  }
  func.func @transform_3(%arg0: i32, %arg1: i32) -> (i32, i32) {
    %c0_i32 = arith.constant 0 : i32
    %c0_i32_0 = arith.constant 0 : i32
    %c0_i32_1 = arith.constant 0 : i32
    return %c0_i32, %c0_i32_0 : i32, i32
  }
  func.func @transform_4(%arg0: i32, %arg1: i32) -> (i32, i32) {
    %c0_i32 = arith.constant 0 : i32
    %c0_i32_0 = arith.constant 0 : i32
    %c0_i32_1 = arith.constant 0 : i32
    return %c0_i32, %c0_i32_0 : i32, i32
  }
  func.func @transform_5(%arg0: i32, %arg1: i32) -> (i32, i32) {
    %c0_i32 = arith.constant 0 : i32
    %c0_i32_0 = arith.constant 0 : i32
    %c0_i32_1 = arith.constant 0 : i32
    return %c0_i32, %c0_i32_0 : i32, i32
  }
  func.func @transform_6(%arg0: i32, %arg1: i32) -> (i32, i32) {
    %c0_i32 = arith.constant 0 : i32
    %c0_i32_0 = arith.constant 0 : i32
    %c0_i32_1 = arith.constant 0 : i32
    return %c0_i32, %c0_i32_0 : i32, i32
  }
  func.func @transform_7(%arg0: i32, %arg1: i32) -> (i32, i32) {
    %c0_i32 = arith.constant 0 : i32
    %c0_i32_0 = arith.constant 0 : i32
    %c0_i32_1 = arith.constant 0 : i32
    return %c0_i32, %c0_i32_0 : i32, i32
  }
  func.func @transform_8(%arg0: i32, %arg1: i32) -> (i32, i32) {
    %c0_i32 = arith.constant 0 : i32
    %c0_i32_0 = arith.constant 0 : i32
    %c0_i32_1 = arith.constant 0 : i32
    return %c0_i32, %c0_i32_0 : i32, i32
  }
  func.func @transform_9(%arg0: i32, %arg1: i32) -> (i32, i32) {
    %c0_i32 = arith.constant 0 : i32
    %c0_i32_0 = arith.constant 0 : i32
    %c0_i32_1 = arith.constant 0 : i32
    return %c0_i32, %c0_i32_0 : i32, i32
  }
  func.func @transform_10(%arg0: i32, %arg1: i32) -> (i32, i32, i32) {
    %c0_i32 = arith.constant 0 : i32
    %c0_i32_0 = arith.constant 0 : i32
    return %arg0, %arg1, %c0_i32 : i32, i32, i32
  }
}

</mosaic_0001>

<llo_original>
// kernel: tpu_custom_call.1
$region0: #{tpu_custom_call.1}
  #allocation0 [shape = 'u32[]', space=smem, size = 0x4, offset = 0x4, fixed_abs, tag = 'smem constant byte address 0x4 - core index']
  #allocation1 [shape = 'u32[144,128]{1,0:T(1,128)}', space=vmem, size = 0x12000, scoped, tag = 'internal scratch']
  #allocation2 [shape = 'f32[16,128]{1,0:T(8,128)}', space=vmem, size = 0x2000, scoped, tag = 'scratch operand']
  #allocation3 [shape = 'f32[72,128]{1,0:T(8,128)}', space=vmem, size = 0x9000, scoped, tag = 'scratch operand']
  #allocation4 [shape = 'f32[64,128]{1,0:T(8,128)}', space=vmem, size = 0x8000, scoped, tag = 'scratch operand']
  #allocation5 [shape = 'f32[64,128]{1,0:T(8,128)}', space=vmem, size = 0x8000, scoped, tag = 'scratch operand']
  #allocation6 [shape = 'f32[64,32]{1,0:T(8,128)}', space=vmem, size = 0x8000, scoped, tag = 'scratch operand']
  #allocation7 [shape = 'f32[64,128]{1,0:T(8,128)}', space=vmem, size = 0x8000, scoped, tag = 'scratch operand']
  %s0 = inlined_call_operand.vmem [shape: bf16[2,128,64], index: 0, kind: input, shape index: {}]
  %s1 = inlined_call_operand.vmem [shape: bf16[64,256], index: 1, kind: input, shape index: {}]
  %s2 = inlined_call_operand.vmem [shape: f32[4,128], index: 2, kind: input, shape index: {}]
  %s3 = inlined_call_operand.vmem [shape: f32[1,128], index: 3, kind: input, shape index: {}]
  %s4 = inlined_call_operand.vmem [shape: bf16[128,128], index: 4, kind: input, shape index: {}]
  %s5 = inlined_call_operand.vmem [shape: bf16[128,32], index: 5, kind: input, shape index: {}]
  %s6 = inlined_call_operand.vmem [shape: f32[1,128], index: 6, kind: input, shape index: {}]
  %s7 = inlined_call_operand.vmem [shape: f32[16,128], index: 7, kind: input, shape index: {}]
  %s8 = inlined_call_operand.vmem [shape: f32[1,128], index: 8, kind: input, shape index: {}]
  %s9 = inlined_call_operand.vmem [shape: bf16[128,64], index: 9, kind: input, shape index: {}]
  %s10 = inlined_call_operand.vmem [shape: bf16[2,128,64], index: 10, kind: output, shape index: {}]
  %s11 = sld [smem:[#allocation0]]
  $region77: #{tpu_custom_call.1} parent=0
    _
  %s13 = ssub.s32 1, %s11
  %s14 = scalar_select 0, %s13, %s11
  loop: start=0, step=1, limit=6
  $region2: #{tpu_custom_call.1} parent=0 // loop_pre_header
    _
  $region3: #{tpu_custom_call.1} parent=0 // loop_header
    %s16 = sphi 0, %s20
    %p17 = scmp.ge.s32.totalorder %s16, 6
    %s23 = sphi 0, %s35
    %s24 = sphi 0, %s31
    %s25 = sphi 0, %s23
    %s26 = sphi 0, %s24
    %s27 = sphi 0, %s25
    %s28 = sphi 0, %s26
    %s40 = sphi 0, %s42
    %s43 = sphi 0, %s40
    %s44 = sphi 0, %s43
    %s60 = sphi 0, %s44
    %s64 = sphi 0, %s64
    %s66 = sphi 0, %s64
    %s67 = sphi 0, %s66
    %s81 = sphi 0, %s67
    %s85 = sphi 0, %s85
    %s87 = sphi 0, %s85
    %s88 = sphi 0, %s87
    %s102 = sphi 0, %s88
    %s106 = sphi 0, %s106
    %s108 = sphi 0, %s106
    %s109 = sphi 0, %s108
    %s123 = sphi 0, %s109
    %s127 = sphi 0, %s127
    %s129 = sphi 0, %s127
    %s130 = sphi 0, %s129
    %s144 = sphi 0, %s130
    %s148 = sphi 0, %s148
    %s150 = sphi 0, %s148
    %s151 = sphi 0, %s150
    %s165 = sphi 0, %s151
    %s169 = sphi 0, %s169
    %s171 = sphi 0, %s169
    %s172 = sphi 0, %s171
    %s186 = sphi 0, %s172
    %s190 = sphi 0, %s190
    %s192 = sphi 0, %s190
    %s193 = sphi 0, %s192
    %s207 = sphi 0, %s193
    %s211 = sphi 0, %s211
    %s213 = sphi 0, %s211
    %s214 = sphi 0, %s213
    %s228 = sphi 0, %s214
    %s232 = sphi 0, %s232
    %s234 = sphi 0, %s232
    %s235 = sphi 0, %s234
    %s249 = sphi 0, %s235
    %s257 = sphi 0, %s259
    %s260 = sphi 0, %s257
    %s261 = sphi 0, %s260
    %s277 = sphi 0, %s261
  $region4: #{tpu_custom_call.1} parent=0 // loop_header_branch
    %19 = sbr.rel (%p17) target = $region8
  $region5: #{tpu_custom_call.1} parent=0 // loop_body
    %s21 = ssub.s32 %s16, 1
    %s22 = ssub.s32 %s16, 2
    %s29 = sadd.s32 1, %s24
    %p30 = scmp.ge.s32.totalorder %s29, 2
    %s31 = scalar_select %p30, 0, %s29
    %s32 = sadd.s32 1, %s23
    %s33 = scalar_select %p30, %s32, %s23
    %p34 = scmp.ge.s32.totalorder %s33, 2
    %s35 = scalar_select %p34, 0, %s33
    %s36 = ssub.s32 %s23, %s35
    %s37 = ssub.s32 %s24, %s31
    %s38 = sor.u32 %s36, %s37
    %p39 = scmp.eq.s32.totalorder %s38, 0
    %s41 = sadd.s32 %s40, 1
    %s42 = scalar_select %p39, %s40, %s41
    %p45 = pneg %p39
    %p46 = scmp.eq.s32.totalorder %s16, 3
    %p47 = por %p45, %p46
    %p48 = scmp.ne.s32.totalorder %s40, %s43
    %p49 = scmp.eq.s32.totalorder %s16, 0
    %p50 = por %p48, %p49
    %p51 = scmp.ne.s32.totalorder %s40, %s43
    %p52 = scmp.eq.s32.totalorder %s21, 3
    %p53 = por %p51, %p52
    %p54 = scmp.ne.s32.totalorder %s43, %s44
    %p55 = scmp.eq.s32.totalorder %s21, 0
    %p56 = por %p54, %p55
    %p57 = scmp.ne.s32.totalorder %s43, %s44
    %p58 = scmp.eq.s32.totalorder %s22, 3
    %p59 = por %p57, %p58
    %p61 = scmp.ne.s32.totalorder %s44, %s60
    %p62 = scmp.eq.s32.totalorder %s22, 0
    %p63 = por %p61, %p62
    %s65 = sadd.s32 %s64, 1
    %p68 = scmp.eq.s32.totalorder %s16, 3
    %p69 = scmp.ne.s32.totalorder %s64, %s66
    %p70 = scmp.eq.s32.totalorder %s16, 0
    %p71 = por %p69, %p70
    %p72 = scmp.ne.s32.totalorder %s64, %s66
    %p73 = scmp.eq.s32.totalorder %s21, 3
    %p74 = por %p72, %p73
    %p75 = scmp.ne.s32.totalorder %s66, %s67
    %p76 = scmp.eq.s32.totalorder %s21, 0
    %p77 = por %p75, %p76
    %p78 = scmp.ne.s32.totalorder %s66, %s67
    %p79 = scmp.eq.s32.totalorder %s22, 3
    %p80 = por %p78, %p79
    %p82 = scmp.ne.s32.totalorder %s67, %s81
    %p83 = scmp.eq.s32.totalorder %s22, 0
    %p84 = por %p82, %p83
    %s86 = sadd.s32 %s85, 1
    %p89 = scmp.eq.s32.totalorder %s16, 3
    %p90 = scmp.ne.s32.totalorder %s85, %s87
    %p91 = scmp.eq.s32.totalorder %s16, 0
    %p92 = por %p90, %p91
    %p93 = scmp.ne.s32.totalorder %s85, %s87
    %p94 = scmp.eq.s32.totalorder %s21, 3
    %p95 = por %p93, %p94
    %p96 = scmp.ne.s32.totalorder %s87, %s88
    %p97 = scmp.eq.s32.totalorder %s21, 0
    %p98 = por %p96, %p97
    %p99 = scmp.ne.s32.totalorder %s87, %s88
    %p100 = scmp.eq.s32.totalorder %s22, 3
    %p101 = por %p99, %p100
    %p103 = scmp.ne.s32.totalorder %s88, %s102
    %p104 = scmp.eq.s32.totalorder %s22, 0
    %p105 = por %p103, %p104
    %s107 = sadd.s32 %s106, 1
    %p110 = scmp.eq.s32.totalorder %s16, 3
    %p111 = scmp.ne.s32.totalorder %s106, %s108
    %p112 = scmp.eq.s32.totalorder %s16, 0
    %p113 = por %p111, %p112
    %p114 = scmp.ne.s32.totalorder %s106, %s108
    %p115 = scmp.eq.s32.totalorder %s21, 3
    %p116 = por %p114, %p115
    %p117 = scmp.ne.s32.totalorder %s108, %s109
    %p118 = scmp.eq.s32.totalorder %s21, 0
    %p119 = por %p117, %p118
    %p120 = scmp.ne.s32.totalorder %s108, %s109
    %p121 = scmp.eq.s32.totalorder %s22, 3
    %p122 = por %p120, %p121
    %p124 = scmp.ne.s32.totalorder %s109, %s123
    %p125 = scmp.eq.s32.totalorder %s22, 0
    %p126 = por %p124, %p125
    %s128 = sadd.s32 %s127, 1
    %p131 = scmp.eq.s32.totalorder %s16, 3
    %p132 = scmp.ne.s32.totalorder %s127, %s129
    %p133 = scmp.eq.s32.totalorder %s16, 0
    %p134 = por %p132, %p133
    %p135 = scmp.ne.s32.totalorder %s127, %s129
    %p136 = scmp.eq.s32.totalorder %s21, 3
    %p137 = por %p135, %p136
    %p138 = scmp.ne.s32.totalorder %s129, %s130
    %p139 = scmp.eq.s32.totalorder %s21, 0
    %p140 = por %p138, %p139
    %p141 = scmp.ne.s32.totalorder %s129, %s130
    %p142 = scmp.eq.s32.totalorder %s22, 3
    %p143 = por %p141, %p142
    %p145 = scmp.ne.s32.totalorder %s130, %s144
    %p146 = scmp.eq.s32.totalorder %s22, 0
    %p147 = por %p145, %p146
    %s149 = sadd.s32 %s148, 1
    %p152 = scmp.eq.s32.totalorder %s16, 3
    %p153 = scmp.ne.s32.totalorder %s148, %s150
    %p154 = scmp.eq.s32.totalorder %s16, 0
    %p155 = por %p153, %p154
    %p156 = scmp.ne.s32.totalorder %s148, %s150
    %p157 = scmp.eq.s32.totalorder %s21, 3
    %p158 = por %p156, %p157
    %p159 = scmp.ne.s32.totalorder %s150, %s151
    %p160 = scmp.eq.s32.totalorder %s21, 0
    %p161 = por %p159, %p160
    %p162 = scmp.ne.s32.totalorder %s150, %s151
    %p163 = scmp.eq.s32.totalorder %s22, 3
    %p164 = por %p162, %p163
    %p166 = scmp.ne.s32.totalorder %s151, %s165
    %p167 = scmp.eq.s32.totalorder %s22, 0
    %p168 = por %p166, %p167
    %s170 = sadd.s32 %s169, 1
    %p173 = scmp.eq.s32.totalorder %s16, 3
    %p174 = scmp.ne.s32.totalorder %s169, %s171
    %p175 = scmp.eq.s32.totalorder %s16, 0
    %p176 = por %p174, %p175
    %p177 = scmp.ne.s32.totalorder %s169, %s171
    %p178 = scmp.eq.s32.totalorder %s21, 3
    %p179 = por %p177, %p178
    %p180 = scmp.ne.s32.totalorder %s171, %s172
    %p181 = scmp.eq.s32.totalorder %s21, 0
    %p182 = por %p180, %p181
    %p183 = scmp.ne.s32.totalorder %s171, %s172
    %p184 = scmp.eq.s32.totalorder %s22, 3
    %p185 = por %p183, %p184
    %p187 = scmp.ne.s32.totalorder %s172, %s186
    %p188 = scmp.eq.s32.totalorder %s22, 0
    %p189 = por %p187, %p188
    %s191 = sadd.s32 %s190, 1
    %p194 = scmp.eq.s32.totalorder %s16, 3
    %p195 = scmp.ne.s32.totalorder %s190, %s192
    %p196 = scmp.eq.s32.totalorder %s16, 0
    %p197 = por %p195, %p196
    %p198 = scmp.ne.s32.totalorder %s190, %s192
    %p199 = scmp.eq.s32.totalorder %s21, 3
    %p200 = por %p198, %p199
    %p201 = scmp.ne.s32.totalorder %s192, %s193
    %p202 = scmp.eq.s32.totalorder %s21, 0
    %p203 = por %p201, %p202
    %p204 = scmp.ne.s32.totalorder %s192, %s193
    %p205 = scmp.eq.s32.totalorder %s22, 3
    %p206 = por %p204, %p205
    %p208 = scmp.ne.s32.totalorder %s193, %s207
    %p209 = scmp.eq.s32.totalorder %s22, 0
    %p210 = por %p208, %p209
    %s212 = sadd.s32 %s211, 1
    %p215 = scmp.eq.s32.totalorder %s16, 3
    %p216 = scmp.ne.s32.totalorder %s211, %s213
    %p217 = scmp.eq.s32.totalorder %s16, 0
    %p218 = por %p216, %p217
    %p219 = scmp.ne.s32.totalorder %s211, %s213
    %p220 = scmp.eq.s32.totalorder %s21, 3
    %p221 = por %p219, %p220
    %p222 = scmp.ne.s32.totalorder %s213, %s214
    %p223 = scmp.eq.s32.totalorder %s21, 0
    %p224 = por %p222, %p223
    %p225 = scmp.ne.s32.totalorder %s213, %s214
    %p226 = scmp.eq.s32.totalorder %s22, 3
    %p227 = por %p225, %p226
    %p229 = scmp.ne.s32.totalorder %s214, %s228
    %p230 = scmp.eq.s32.totalorder %s22, 0
    %p231 = por %p229, %p230
    %s233 = sadd.s32 %s232, 1
    %p236 = scmp.eq.s32.totalorder %s16, 3
    %p237 = scmp.ne.s32.totalorder %s232, %s234
    %p238 = scmp.eq.s32.totalorder %s16, 0
    %p239 = por %p237, %p238
    %p240 = scmp.ne.s32.totalorder %s232, %s234
    %p241 = scmp.eq.s32.totalorder %s21, 3
    %p242 = por %p240, %p241
    %p243 = scmp.ne.s32.totalorder %s234, %s235
    %p244 = scmp.eq.s32.totalorder %s21, 0
    %p245 = por %p243, %p244
    %p246 = scmp.ne.s32.totalorder %s234, %s235
    %p247 = scmp.eq.s32.totalorder %s22, 3
    %p248 = por %p246, %p247
    %p250 = scmp.ne.s32.totalorder %s235, %s249
    %p251 = scmp.eq.s32.totalorder %s22, 0
    %p252 = por %p250, %p251
    %s253 = ssub.s32 %s23, %s35
    %s254 = ssub.s32 %s24, %s31
    %s255 = sor.u32 %s253, %s254
    %p256 = scmp.eq.s32.totalorder %s255, 0
    %s258 = sadd.s32 %s257, 1
    %s259 = scalar_select %p256, %s257, %s258
    %p262 = pneg %p256
    %p263 = scmp.eq.s32.totalorder %s16, 3
    %p264 = por %p262, %p263
    %p265 = scmp.ne.s32.totalorder %s257, %s260
    %p266 = scmp.eq.s32.totalorder %s16, 0
    %p267 = por %p265, %p266
    %p268 = scmp.ne.s32.totalorder %s257, %s260
    %p269 = scmp.eq.s32.totalorder %s21, 3
    %p270 = por %p268, %p269
    %p271 = scmp.ne.s32.totalorder %s260, %s261
    %p272 = scmp.eq.s32.totalorder %s21, 0
    %p273 = por %p271, %p272
    %p274 = scmp.ne.s32.totalorder %s260, %s261
    %p275 = scmp.eq.s32.totalorder %s22, 3
    %p276 = por %p274, %p275
    %p278 = scmp.ne.s32.totalorder %s261, %s277
    %p279 = scmp.eq.s32.totalorder %s22, 0
    %p280 = por %p278, %p279
    %p281 = scmp.le.s32.totalorder 1, %s16
    %p282 = scmp.lt.s32.totalorder %s16, 5
    %p283 = pnand %p281, %p282
    %p284 = pneg %p283
    // Predicated region
    $region9: #{tpu_custom_call.1} parent=5 // pred_check
      _
    $region10: #{tpu_custom_call.1} parent=5 // pred_check_branch
      %286 = sbr.rel (%p283) target = $region12
    $region11: #{tpu_custom_call.1} parent=5 // pred_region
      %s287 = ssub.s32 %s16, 1
      // Predicated region
      $region13: #{tpu_custom_call.1} parent=11 // pred_check
        %p288 = pneg %p77
      $region14: #{tpu_custom_call.1} parent=11 // pred_check_branch
        %290 = sbr.rel (%p288) target = $region16
      $region15: #{tpu_custom_call.1} parent=11 // pred_region
        _
      $region16: #{tpu_custom_call.1} parent=11 // pred_fallthru
        _
      // Predicated region
      $region17: #{tpu_custom_call.1} parent=11 // pred_check
        %p291 = pneg %p98
      $region18: #{tpu_custom_call.1} parent=11 // pred_check_branch
        %293 = sbr.rel (%p291) target = $region20
      $region19: #{tpu_custom_call.1} parent=11 // pred_region
        _
      $region20: #{tpu_custom_call.1} parent=11 // pred_fallthru
        _
      // Predicated region
      $region21: #{tpu_custom_call.1} parent=11 // pred_check
        %p294 = pneg %p119
      $region22: #{tpu_custom_call.1} parent=11 // pred_check_branch
        %296 = sbr.rel (%p294) target = $region24
      $region23: #{tpu_custom_call.1} parent=11 // pred_region
        _
      $region24: #{tpu_custom_call.1} parent=11 // pred_fallthru
        _
      // Predicated region
      $region25: #{tpu_custom_call.1} parent=11 // pred_check
        %p297 = pneg %p140
      $region26: #{tpu_custom_call.1} parent=11 // pred_check_branch
        %299 = sbr.rel (%p297) target = $region28
      $region27: #{tpu_custom_call.1} parent=11 // pred_region
        _
      $region28: #{tpu_custom_call.1} parent=11 // pred_fallthru
        _
      // Predicated region
      $region29: #{tpu_custom_call.1} parent=11 // pred_check
        %p300 = pneg %p161
      $region30: #{tpu_custom_call.1} parent=11 // pred_check_branch
        %302 = sbr.rel (%p300) target = $region32
      $region31: #{tpu_custom_call.1} parent=11 // pred_region
        _
      $region32: #{tpu_custom_call.1} parent=11 // pred_fallthru
        _
      // Predicated region
      $region33: #{tpu_custom_call.1} parent=11 // pred_check
        %p303 = pneg %p182
      $region34: #{tpu_custom_call.1} parent=11 // pred_check_branch
        %305 = sbr.rel (%p303) target = $region36
      $region35: #{tpu_custom_call.1} parent=11 // pred_region
        _
      $region36: #{tpu_custom_call.1} parent=11 // pred_fallthru
        _
      // Predicated region
      $region37: #{tpu_custom_call.1} parent=11 // pred_check
        %p306 = pneg %p203
      $region38: #{tpu_custom_call.1} parent=11 // pred_check_branch
        %308 = sbr.rel (%p306) target = $region40
      $region39: #{tpu_custom_call.1} parent=11 // pred_region
        _
      $region40: #{tpu_custom_call.1} parent=11 // pred_fallthru
        _
      // Predicated region
      $region41: #{tpu_custom_call.1} parent=11 // pred_check
        %p309 = pneg %p224
      $region42: #{tpu_custom_call.1} parent=11 // pred_check_branch
        %311 = sbr.rel (%p309) target = $region44
      $region43: #{tpu_custom_call.1} parent=11 // pred_region
        _
      $region44: #{tpu_custom_call.1} parent=11 // pred_fallthru
        _
      // Predicated region
      $region45: #{tpu_custom_call.1} parent=11 // pred_check
        %p312 = pneg %p245
      $region46: #{tpu_custom_call.1} parent=11 // pred_check_branch
        %314 = sbr.rel (%p312) target = $region48
      $region47: #{tpu_custom_call.1} parent=11 // pred_region
        _
      $region48: #{tpu_custom_call.1} parent=11 // pred_fallthru
        _
    $region12: #{tpu_custom_call.1} parent=5 // pred_fallthru
      _
    %p315 = scmp.lt.s32.totalorder %s16, 4
    // Predicated region
    $region49: #{tpu_custom_call.1} parent=5 // pred_check
      %p316 = pneg %p315
    $region50: #{tpu_custom_call.1} parent=5 // pred_check_branch
      %318 = sbr.rel (%p316) target = $region52
    $region51: #{tpu_custom_call.1} parent=5 // pred_region
      // Predicated region
      $region53: #{tpu_custom_call.1} parent=51 // pred_check
        %p319 = pneg %p50
      $region54: #{tpu_custom_call.1} parent=51 // pred_check_branch
        %321 = sbr.rel (%p319) target = $region56
      $region55: #{tpu_custom_call.1} parent=51 // pred_region
        %s322 = smul.u32 8, %s24
        %p323 = scmp.lt.s32.totalorder %s23, 1
        %s324 = scalar_select %p323, %s23, 1
        %p325 = scmp.lt.s32.totalorder %s322, 15
        %s326 = scalar_select %p325, %s322, 15
        %s327 = smul.addr %s324, 16
        %s328 = sadd.s32 %s326, %s327
        %s329 = smul.addr %s328, 4
        %s330 = scalar_lea.vmem %s0, %s329
        %s331 = smul.u32 8, %s24
      $region56: #{tpu_custom_call.1} parent=51 // pred_fallthru
        _
    $region52: #{tpu_custom_call.1} parent=5 // pred_fallthru
      _
    %p332 = scmp.le.s32.totalorder 1, %s16
    %p333 = scmp.lt.s32.totalorder %s16, 5
    %p334 = pnand %p332, %p333
    %p335 = pneg %p334
    // Predicated region
    $region57: #{tpu_custom_call.1} parent=5 // pred_check
      _
    $region58: #{tpu_custom_call.1} parent=5 // pred_check_branch
      %337 = sbr.rel (%p334) target = $region60
    $region59: #{tpu_custom_call.1} parent=5 // pred_region
      %s338 = ssub.s32 %s16, 1
      %s339 = smul.u32 8, %s26
      %p340 = scmp.lt.s32.totalorder %s25, 1
      %s341 = scalar_select %p340, %s25, 1
      %p342 = scmp.lt.s32.totalorder %s339, 15
      %s343 = scalar_select %p342, %s339, 15
      %s344 = smul.addr %s341, 16
      %s345 = sadd.s32 %s343, %s344
      %s346 = smul.addr %s345, 4
      %s347 = scalar_lea.vmem %s0, %s346
      %p348 = pneg %p56
      %p349 = pneg %p53
      %p350 = pneg %p77
      %p351 = pneg %p74
      %p352 = pneg %p98
      %p353 = pneg %p95
      %p354 = pneg %p119
      %p355 = pneg %p116
      %p356 = pneg %p140
      %p357 = pneg %p137
      %p358 = pneg %p161
      %p359 = pneg %p158
      %p360 = pneg %p182
      %p361 = pneg %p179
      %p362 = pneg %p203
      %p363 = pneg %p200
      %p364 = pneg %p224
      %p365 = pneg %p221
      %p366 = pneg %p245
      %p367 = pneg %p242
      %p368 = pneg %p273
      %p369 = pneg %p270
      %s370 = smul.u32 8, %s26
      %p371 = scmp.lt.s32.totalorder %s25, 1
      %s372 = scalar_select %p371, %s25, 1
      %p373 = scmp.lt.s32.totalorder %s370, 15
      %s374 = scalar_select %p373, %s370, 15
      %s375 = smul.addr %s372, 16
      %s376 = sadd.s32 %s374, %s375
      %s377 = smul.addr %s376, 4
      %s378 = scalar_lea.vmem %s10, %s377
      %s379 = smul.u32 8, %s26
      %p380 = scmp.lt.s32.totalorder %s25, 1
      %s381 = scalar_select %p380, %s25, 1
      %p382 = scmp.lt.s32.totalorder %s379, 15
      %s383 = scalar_select %p382, %s379, 15
      %s384 = smul.addr %s381, 16
      %s385 = sadd.s32 %s383, %s384
      %s386 = smul.addr %s385, 4
      %s387 = scalar_lea.vmem %s0, %s386
      %s388 = smul.u32 8, %s26
      %s389 = smul.u32 8, %s26
      %p390 = scmp.lt.s32.totalorder %s25, 1
      %s391 = scalar_select %p390, %s25, 1
      %p392 = scmp.lt.s32.totalorder %s389, 15
      %s393 = scalar_select %p392, %s389, 15
      %s394 = smul.addr %s391, 16
      %s395 = sadd.s32 %s393, %s394
      %s396 = smul.addr %s395, 4
      %s397 = scalar_lea.vmem %s10, %s396
      %s398 = smul.u32 8, %s26
      %p400 = scmp.eq.s32.totalorder %s26, 0
      // Predicated region
      $region61: #{tpu_custom_call.1} parent=59 // pred_check
        %p401 = pneg %p400
      $region62: #{tpu_custom_call.1} parent=59 // pred_check_branch
        %403 = sbr.rel (%p401) target = $region64
      $region63: #{tpu_custom_call.1} parent=59 // pred_region
        %404 = vst [vmem:[#allocation2] sm:$0xff] 0.0
        %405 = vst [vmem:[#allocation2 + $0x8] sm:$0xff] 0.0
        %406 = vst [vmem:[#allocation3] sm:$0xff] 0.0
      $region64: #{tpu_custom_call.1} parent=59 // pred_fallthru
        _
      %v407 = vld [vmem:[%s387] sm:$0xf]
      %v408 = vld [vmem:[%s387 + $0x4] sm:$0xf]
      %v409 = vld [vmem:[%s387 + $0x8] sm:$0xf]
      %v410 = vld [vmem:[%s387 + $0xc] sm:$0xf]
      %v411 = vld [vmem:[%s387 + $0x10] sm:$0xf]
      %v412 = vld [vmem:[%s387 + $0x14] sm:$0xf]
      %v413 = vld [vmem:[%s387 + $0x18] sm:$0xf]
      %v414 = vld [vmem:[%s387 + $0x1c] sm:$0xf]
      %v415 = vld [vmem:[%s1] sm:$0xff]
      %v416 = vld [vmem:[%s1 + $0x8] sm:$0xff]
      %v417 = vld [vmem:[%s1 + $0x10] sm:$0xff]
      %v418 = vld [vmem:[%s1 + $0x18] sm:$0xff]
      %v419 = vld [vmem:[%s1 + $0x20] sm:$0xff]
      %v420 = vld [vmem:[%s1 + $0x28] sm:$0xff]
      %v421 = vld [vmem:[%s1 + $0x30] sm:$0xff]
      %v422 = vld [vmem:[%s1 + $0x38] sm:$0xff]
      %v431 = vunpack.c.l.b16 %v407
      %v432 = vunpack.c.l.b16 %v408
      %v433 = vunpack.c.l.b16 %v409
      %v434 = vunpack.c.l.b16 %v410
      %v435 = vunpack.c.l.b16 %v411
      %v436 = vunpack.c.l.b16 %v412
      %v437 = vunpack.c.l.b16 %v413
      %v438 = vunpack.c.l.b16 %v414
      %v439 = vpack.c.b16 %v432, %v431
      %v440 = vpack.c.b16 %v434, %v433
      %v441 = vpack.c.b16 %v436, %v435
      %v442 = vpack.c.b16 %v438, %v437
      %v451 = vunpack.c.l.b16 %v415
      %v452 = vunpack.c.h.b16 %v415
      %v453 = vunpack.c.l.b16 %v416
      %v454 = vunpack.c.h.b16 %v416
      %v455 = vunpack.c.l.b16 %v417
      %v456 = vunpack.c.h.b16 %v417
      %v457 = vunpack.c.l.b16 %v418
      %v458 = vunpack.c.h.b16 %v418
      %v459 = vunpack.c.l.b16 %v419
      %v460 = vunpack.c.h.b16 %v419
      %v461 = vunpack.c.l.b16 %v420
      %v462 = vunpack.c.h.b16 %v420
      %v463 = vunpack.c.l.b16 %v421
      %v464 = vunpack.c.h.b16 %v421
      %v465 = vunpack.c.l.b16 %v422
      %v466 = vunpack.c.h.b16 %v422
      %v467 = vpack.c.b16 %v453, %v451
      %v468 = vpack.c.b16 %v454, %v452
      %v469 = vpack.c.b16 %v457, %v455
      %v470 = vpack.c.b16 %v458, %v456
      %v471 = vpack.c.b16 %v461, %v459
      %v472 = vpack.c.b16 %v462, %v460
      %v473 = vpack.c.b16 %v465, %v463
      %v474 = vpack.c.b16 %v466, %v464
      %vm483 = vcmask 523264
      %v485 = vsel %vm483, %v439, 0
      %v488 = vsel %vm483, %v440, 0
      %v491 = vsel %vm483, %v441, 0
      %v494 = vsel %vm483, %v442, 0
      %496 = vmatprep.subr.bf16.mxu0 %v468
      %497 = vmatpush1.bf16.msra.mxu0 %v467
      %498 = vmatprep.subr.bf16.mxu0 %v470
      %499 = vmatpush1.bf16.msra.mxu0 %v469
      %500 = vmatprep.subr.bf16.mxu0 %v472
      %501 = vmatpush1.bf16.msra.mxu0 %v471
      %502 = vmatprep.subr.bf16.mxu0 %v474
      %503 = vmatpush1.bf16.msra.mxu0 %v473
      %504 = vmatprep.subr.bf16.mxu0 0
      %505 = vmatpush1.bf16.msra.mxu0 0
      %506 = vmatprep.subr.bf16.mxu0 0
      %507 = vmatpush1.bf16.msra.mxu0 0
      %508 = vmatprep.subr.bf16.mxu0 0
      %509 = vmatpush1.bf16.msra.mxu0 0
      %510 = vmatprep.subr.bf16.mxu0 0
      %511 = vmatpush1.bf16.msra.mxu0 0
      %512 = vmatprep.subr.bf16.mxu0 0
      %513 = vmatpush1.bf16.msra.mxu0 0
      %514 = vmatprep.subr.bf16.mxu0 0
      %515 = vmatpush1.bf16.msra.mxu0 0
      %516 = vmatprep.subr.bf16.mxu0 0
      %517 = vmatpush1.bf16.msra.mxu0 0
      %518 = vmatprep.subr.bf16.mxu0 0
      %519 = vmatpush1.bf16.msra.mxu0 0
      %520 = vmatprep.subr.bf16.mxu0 0
      %521 = vmatpush1.bf16.msra.mxu0 0
      %522 = vmatprep.subr.bf16.mxu0 0
      %523 = vmatpush1.bf16.msra.mxu0 0
      %524 = vmatprep.subr.bf16.mxu0 0
      %525 = vmatpush1.bf16.msra.mxu0 0
      %526 = vmatprep.subr.bf16.mxu0 0
      %527 = vmatpush1.bf16.msra.mxu0 0
      %528 = vmatprep.mubr.bf16.mxu0 0
      %529 = vmatmul.mubr.bf16.gmra.mrb[0].mxu0 %v485
      %v530 = vpop.f32.mrb[0].mxu0
      %v531 = vadd.f32 0.0, %v530
      %v532 = vpop.f32.mrb[0].mxu0
      %v533 = vadd.f32 0.0, %v532
      %v534 = vpop.f32.mrb[0].mxu0
      %v535 = vadd.f32 0.0, %v534
      %v536 = vpop.f32.mrb[0].mxu0
      %v537 = vadd.f32 0.0, %v536
      %538 = vmatprep.mubr.bf16.mxu0 0
      %539 = vmatmul.mubr.bf16.gmra.mrb[0].mxu0 %v488
      %v540 = vpop.f32.mrb[0].mxu0
      %v541 = vadd.f32 0.0, %v540
      %v542 = vpop.f32.mrb[0].mxu0
      %v543 = vadd.f32 0.0, %v542
      %v544 = vpop.f32.mrb[0].mxu0
      %v545 = vadd.f32 0.0, %v544
      %v546 = vpop.f32.mrb[0].mxu0
      %v547 = vadd.f32 0.0, %v546
      %548 = vmatprep.mubr.bf16.mxu0 0
      %549 = vmatmul.mubr.bf16.gmra.mrb[0].mxu0 %v491
      %v550 = vpop.f32.mrb[0].mxu0
      %v551 = vadd.f32 0.0, %v550
      %v552 = vpop.f32.mrb[0].mxu0
      %v553 = vadd.f32 0.0, %v552
      %v554 = vpop.f32.mrb[0].mxu0
      %v555 = vadd.f32 0.0, %v554
      %v556 = vpop.f32.mrb[0].mxu0
      %v557 = vadd.f32 0.0, %v556
      %558 = vmatprep.mubr.bf16.mxu0 0
      %559 = vmatmul.mubr.bf16.gmra.mrb[0].mxu0 %v494
      %v560 = vpop.f32.mrb[0].mxu0
      %v561 = vadd.f32 0.0, %v560
      %v562 = vpop.f32.mrb[0].mxu0
      %v563 = vadd.f32 0.0, %v562
      %v564 = vpop.f32.mrb[0].mxu0
      %v565 = vadd.f32 0.0, %v564
      %v566 = vpop.f32.mrb[0].mxu0
      %v567 = vadd.f32 0.0, %v566
      %568 = vdwg.mxu0
      %569 = vst [vmem:[#allocation3 + $0x8] sm:$0xff] %v531
      %570 = vst [vmem:[#allocation3 + $0x10] sm:$0xff] %v535
      %571 = vst [vmem:[#allocation3 + $0x18] sm:$0xff] %v541
      %572 = vst [vmem:[#allocation3 + $0x20] sm:$0xff] %v545
      %573 = vst [vmem:[#allocation3 + $0x28] sm:$0xff] %v551
      %574 = vst [vmem:[#allocation3 + $0x30] sm:$0xff] %v555
      %575 = vst [vmem:[#allocation3 + $0x38] sm:$0xff] %v561
      %576 = vst [vmem:[#allocation3 + $0x40] sm:$0xff] %v565
      %v577 = vld [vmem:[#allocation3] sm:$0xff]
      %v578 = vld [vmem:[#allocation3 + $0x8] sm:$0xff]
      %v579 = vld [vmem:[#allocation3 + $0x10] sm:$0xff]
      %v580 = vld [vmem:[#allocation3 + $0x18] sm:$0xff]
      %v581 = vld [vmem:[#allocation3 + $0x20] sm:$0xff]
      %v582 = vld [vmem:[#allocation3 + $0x28] sm:$0xff]
      %v583 = vld [vmem:[#allocation3 + $0x30] sm:$0xff]
      %v584 = vld [vmem:[#allocation3 + $0x38] sm:$0xff]
      %v585 = vld [vmem:[#allocation3 + $0x40] sm:$0xff]
      %v586 = vld [vmem:[%s2] sm:$0x1]
      %v587 = vlaneseq
      %v588 = vshrl.u32 %v587, 7
      %v589 = vsub.s32 0, %v588
      %v590 = vrot.slane %v586, %v589
      %v591 = vmul.f32 %v577, %v590
      %v592 = vmul.f32 %v578, %v590
      %v593 = vmul.f32 %v579, %v590
      %v594 = vmul.f32 %v580, %v590
      %v595 = vmul.f32 %v581, %v590
      %v596 = vmul.f32 %v582, %v590
      %v597 = vmul.f32 %v583, %v590
      %v598 = vmul.f32 %v584, %v590
      %v599 = vmul.f32 %v585, %v590
      %v600 = vld [vmem:[%s2 + $0x1] sm:$0x1]
      %v601 = vlaneseq
      %v602 = vshrl.u32 %v601, 7
      %v603 = vsub.s32 0, %v602
      %v604 = vrot.slane %v600, %v603
      %v605 = vmul.f32 %v577, %v604
      %v606 = vmul.f32 %v578, %v604
      %v607 = vmul.f32 %v579, %v604
      %v608 = vmul.f32 %v580, %v604
      %v609 = vmul.f32 %v581, %v604
      %v610 = vmul.f32 %v582, %v604
      %v611 = vmul.f32 %v583, %v604
      %v612 = vmul.f32 %v584, %v604
      %v613 = vmul.f32 %v585, %v604
      %vm623 = vcmask 1046528
      %v624 = vrot.slane %v605, 1
      %v625 = vrot.slane %v606, 1
      %v626 = vsel %vm623, %v624, %v625
      %v627 = vrot.slane %v607, 1
      %v628 = vsel %vm623, %v625, %v627
      %v629 = vrot.slane %v608, 1
      %v630 = vsel %vm623, %v627, %v629
      %v631 = vrot.slane %v609, 1
      %v632 = vsel %vm623, %v629, %v631
      %v633 = vrot.slane %v610, 1
      %v634 = vsel %vm623, %v631, %v633
      %v635 = vrot.slane %v611, 1
      %v636 = vsel %vm623, %v633, %v635
      %v637 = vrot.slane %v612, 1
      %v638 = vsel %vm623, %v635, %v637
      %v639 = vrot.slane %v613, 1
      %v640 = vsel %vm623, %v637, %v639
      %v650 = vadd.f32 %v591, %v626
      %v651 = vadd.f32 %v592, %v628
      %v652 = vadd.f32 %v593, %v630
      %v653 = vadd.f32 %v594, %v632
      %v654 = vadd.f32 %v595, %v634
      %v655 = vadd.f32 %v596, %v636
      %v656 = vadd.f32 %v597, %v638
      %v657 = vadd.f32 %v598, %v640
      %v658 = vadd.f32 %v599, %v639
      %v659 = vld [vmem:[%s2 + $0x2] sm:$0x1]
      %v660 = vlaneseq
      %v661 = vshrl.u32 %v660, 7
      %v662 = vsub.s32 0, %v661
      %v663 = vrot.slane %v659, %v662
      %v664 = vmul.f32 %v577, %v663
      %v665 = vmul.f32 %v578, %v663
      %v666 = vmul.f32 %v579, %v663
      %v667 = vmul.f32 %v580, %v663
      %v668 = vmul.f32 %v581, %v663
      %v669 = vmul.f32 %v582, %v663
      %v670 = vmul.f32 %v583, %v663
      %v671 = vmul.f32 %v584, %v663
      %v672 = vmul.f32 %v585, %v663
      %vm682 = vcmask 1045504
      %v683 = vrot.slane %v664, 2
      %v684 = vrot.slane %v665, 2
      %v685 = vsel %vm682, %v683, %v684
      %v686 = vrot.slane %v666, 2
      %v687 = vsel %vm682, %v684, %v686
      %v688 = vrot.slane %v667, 2
      %v689 = vsel %vm682, %v686, %v688
      %v690 = vrot.slane %v668, 2
      %v691 = vsel %vm682, %v688, %v690
      %v692 = vrot.slane %v669, 2
      %v693 = vsel %vm682, %v690, %v692
      %v694 = vrot.slane %v670, 2
      %v695 = vsel %vm682, %v692, %v694
      %v696 = vrot.slane %v671, 2
      %v697 = vsel %vm682, %v694, %v696
      %v698 = vrot.slane %v672, 2
      %v699 = vsel %vm682, %v696, %v698
      %v709 = vadd.f32 %v650, %v685
      %v710 = vadd.f32 %v651, %v687
      %v711 = vadd.f32 %v652, %v689
      %v712 = vadd.f32 %v653, %v691
      %v713 = vadd.f32 %v654, %v693
      %v714 = vadd.f32 %v655, %v695
      %v715 = vadd.f32 %v656, %v697
      %v716 = vadd.f32 %v657, %v699
      %v717 = vadd.f32 %v658, %v698
      %v718 = vld [vmem:[%s2 + $0x3] sm:$0x1]
      %v719 = vlaneseq
      %v720 = vshrl.u32 %v719, 7
      %v721 = vsub.s32 0, %v720
      %v722 = vrot.slane %v718, %v721
      %v723 = vmul.f32 %v578, %v722
      %v724 = vmul.f32 %v579, %v722
      %v725 = vmul.f32 %v580, %v722
      %v726 = vmul.f32 %v581, %v722
      %v727 = vmul.f32 %v582, %v722
      %v728 = vmul.f32 %v583, %v722
      %v729 = vmul.f32 %v584, %v722
      %v730 = vmul.f32 %v585, %v722
      %vm739 = vcmask 1044480
      %v740 = vrot.slane %v723, 3
      %v741 = vrot.slane %v724, 3
      %v742 = vsel %vm739, %v740, %v741
      %v743 = vrot.slane %v725, 3
      %v744 = vsel %vm739, %v741, %v743
      %v745 = vrot.slane %v726, 3
      %v746 = vsel %vm739, %v743, %v745
      %v747 = vrot.slane %v727, 3
      %v748 = vsel %vm739, %v745, %v747
      %v749 = vrot.slane %v728, 3
      %v750 = vsel %vm739, %v747, %v749
      %v751 = vrot.slane %v729, 3
      %v752 = vsel %vm739, %v749, %v751
      %v753 = vrot.slane %v730, 3
      %v754 = vsel %vm739, %v751, %v753
      %v764 = vadd.f32 %v709, %v740
      %v765 = vadd.f32 %v710, %v742
      %v766 = vadd.f32 %v711, %v744
      %v767 = vadd.f32 %v712, %v746
      %v768 = vadd.f32 %v713, %v748
      %v769 = vadd.f32 %v714, %v750
      %v770 = vadd.f32 %v715, %v752
      %v771 = vadd.f32 %v716, %v754
      %v772 = vadd.f32 %v717, %v753
      %v773 = vld [vmem:[%s3] sm:$0x1]
      %v775 = vlaneseq
      %v776 = vshrl.u32 %v775, 7
      %v777 = vsub.s32 0, %v776
      %v778 = vrot.slane %v773, %v777
      %v780 = vadd.f32 %v764, %v778
      %v781 = vadd.f32 %v765, %v778
      %v782 = vadd.f32 %v766, %v778
      %v783 = vadd.f32 %v767, %v778
      %v784 = vadd.f32 %v768, %v778
      %v785 = vadd.f32 %v769, %v778
      %v786 = vadd.f32 %v770, %v778
      %v787 = vadd.f32 %v771, %v778
      %v788 = vadd.f32 %v772, %v778
      %v789 = vxor.u32 %v780, 2147483648
      %v790 = vxor.u32 %v781, 2147483648
      %v791 = vxor.u32 %v782, 2147483648
      %v792 = vxor.u32 %v783, 2147483648
      %v793 = vxor.u32 %v784, 2147483648
      %v794 = vxor.u32 %v785, 2147483648
      %v795 = vxor.u32 %v786, 2147483648
      %v796 = vxor.u32 %v787, 2147483648
      %v797 = vxor.u32 %v788, 2147483648
      %v798 = vmul.f32 %v789, 1.442695
      %v799 = vpow.pop %v798
      %v800 = vmul.f32 %v790, 1.442695
      %v801 = vpow.pop %v800
      %v802 = vmul.f32 %v791, 1.442695
      %v803 = vpow.pop %v802
      %v804 = vmul.f32 %v792, 1.442695
      %v805 = vpow.pop %v804
      %v806 = vmul.f32 %v793, 1.442695
      %v807 = vpow.pop %v806
      %v808 = vmul.f32 %v794, 1.442695
      %v809 = vpow.pop %v808
      %v810 = vmul.f32 %v795, 1.442695
      %v811 = vpow.pop %v810
      %v812 = vmul.f32 %v796, 1.442695
      %v813 = vpow.pop %v812
      %v814 = vmul.f32 %v797, 1.442695
      %v815 = vpow.pop %v814
      %v816 = vadd.f32 %v799, 1.0
      %v817 = vadd.f32 %v801, 1.0
      %v818 = vadd.f32 %v803, 1.0
      %v819 = vadd.f32 %v805, 1.0
      %v820 = vadd.f32 %v807, 1.0
      %v821 = vadd.f32 %v809, 1.0
      %v822 = vadd.f32 %v811, 1.0
      %v823 = vadd.f32 %v813, 1.0
      %v824 = vadd.f32 %v815, 1.0
      %v825 = vrcp.pop %v816
      %v826 = vmul.f32 1.0, %v825
      %v827 = vrcp.pop %v817
      %v828 = vmul.f32 1.0, %v827
      %v829 = vrcp.pop %v818
      %v830 = vmul.f32 1.0, %v829
      %v831 = vrcp.pop %v819
      %v832 = vmul.f32 1.0, %v831
      %v833 = vrcp.pop %v820
      %v834 = vmul.f32 1.0, %v833
      %v835 = vrcp.pop %v821
      %v836 = vmul.f32 1.0, %v835
      %v837 = vrcp.pop %v822
      %v838 = vmul.f32 1.0, %v837
      %v839 = vrcp.pop %v823
      %v840 = vmul.f32 1.0, %v839
      %v841 = vrcp.pop %v824
      %v842 = vmul.f32 1.0, %v841
      %v843 = vmul.f32 %v780, %v826
      %v844 = vmul.f32 %v781, %v828
      %v845 = vmul.f32 %v782, %v830
      %v846 = vmul.f32 %v783, %v832
      %v847 = vmul.f32 %v784, %v834
      %v848 = vmul.f32 %v785, %v836
      %v849 = vmul.f32 %v786, %v838
      %v850 = vmul.f32 %v787, %v840
      %v851 = vmul.f32 %v788, %v842
      %852 = vst [vmem:[#allocation3] sm:$0xff] %v565
      %v853 = vpack.c.bf16 %v844, %v843
      %v854 = vpack.c.bf16 %v846, %v845
      %v855 = vpack.c.bf16 %v848, %v847
      %v856 = vpack.c.bf16 %v850, %v849
      %v857 = vpack.c.bf16 %v851, %v851
      %v858 = vld [vmem:[%s4] sm:$0xf]
      %v859 = vld [vmem:[%s4 + $0x4] sm:$0xf]
      %v860 = vld [vmem:[%s4 + $0x8] sm:$0xf]
      %v861 = vld [vmem:[%s4 + $0xc] sm:$0xf]
      %v862 = vld [vmem:[%s4 + $0x10] sm:$0xf]
      %v863 = vld [vmem:[%s4 + $0x14] sm:$0xf]
      %v864 = vld [vmem:[%s4 + $0x18] sm:$0xf]
      %v865 = vld [vmem:[%s4 + $0x1c] sm:$0xf]
      %v866 = vld [vmem:[%s4 + $0x20] sm:$0xf]
      %v867 = vld [vmem:[%s4 + $0x24] sm:$0xf]
      %v868 = vld [vmem:[%s4 + $0x28] sm:$0xf]
      %v869 = vld [vmem:[%s4 + $0x2c] sm:$0xf]
      %v870 = vld [vmem:[%s4 + $0x30] sm:$0xf]
      %v871 = vld [vmem:[%s4 + $0x34] sm:$0xf]
      %v872 = vld [vmem:[%s4 + $0x38] sm:$0xf]
      %v873 = vld [vmem:[%s4 + $0x3c] sm:$0xf]
      %v874 = vld [vmem:[%s6] sm:$0x1]
      %v876 = vlaneseq
      %v877 = vshrl.u32 %v876, 7
      %v878 = vsub.s32 0, %v877
      %v879 = vrot.slane %v874, %v878
      %vm881 = vsmask.f32 5376
      %v883 = vshrl.u32 %v853, 16
      %v885 = vrot.slane %v883, 2
      %v886 = vshll.u32 %v853, 16
      %v888 = vrot.slane %v886, 3
      %v889 = vor.u32 %v885, %v888
      %v891 = vshrl.u32 %v854, 16
      %v893 = vrot.slane %v891, 2
      %v894 = vshll.u32 %v854, 16
      %v896 = vrot.slane %v894, 3
      %v897 = vor.u32 %v893, %v896
      %v898 = vsel %vm881, %v889, %v897
      %v900 = vshrl.u32 %v855, 16
      %v902 = vrot.slane %v900, 2
      %v903 = vshll.u32 %v855, 16
      %v905 = vrot.slane %v903, 3
      %v906 = vor.u32 %v902, %v905
      %v907 = vsel %vm881, %v897, %v906
      %v909 = vshrl.u32 %v856, 16
      %v911 = vrot.slane %v909, 2
      %v912 = vshll.u32 %v856, 16
      %v914 = vrot.slane %v912, 3
      %v915 = vor.u32 %v911, %v914
      %v916 = vsel %vm881, %v906, %v915
      %v918 = vshrl.u32 %v857, 16
      %v920 = vrot.slane %v918, 2
      %v921 = vshll.u32 %v857, 16
      %v923 = vrot.slane %v921, 3
      %v924 = vor.u32 %v920, %v923
      %v925 = vsel %vm881, %v915, %v924
      %v946 = vunpack.c.l.b16 %v858
      %v947 = vunpack.c.l.b16 %v859
      %v948 = vunpack.c.l.b16 %v860
      %v949 = vunpack.c.l.b16 %v861
      %v950 = vunpack.c.l.b16 %v862
      %v951 = vunpack.c.l.b16 %v863
      %v952 = vunpack.c.l.b16 %v864
      %v953 = vunpack.c.l.b16 %v865
      %v954 = vunpack.c.l.b16 %v866
      %v955 = vunpack.c.l.b16 %v867
      %v956 = vunpack.c.l.b16 %v868
      %v957 = vunpack.c.l.b16 %v869
      %v958 = vunpack.c.l.b16 %v870
      %v959 = vunpack.c.l.b16 %v871
      %v960 = vunpack.c.l.b16 %v872
      %v961 = vunpack.c.l.b16 %v873
      %v962 = vpack.c.b16 %v947, %v946
      %v963 = vpack.c.b16 %v949, %v948
      %v964 = vpack.c.b16 %v951, %v950
      %v965 = vpack.c.b16 %v953, %v952
      %v966 = vpack.c.b16 %v955, %v954
      %v967 = vpack.c.b16 %v957, %v956
      %v968 = vpack.c.b16 %v959, %v958
      %v969 = vpack.c.b16 %v961, %v960
      %978 = vmatprep.subr.bf16.mxu0 0
      %979 = vmatpush1.bf16.msra.mxu0 %v962
      %980 = vmatprep.subr.bf16.mxu0 0
      %981 = vmatpush1.bf16.msra.mxu0 %v963
      %982 = vmatprep.subr.bf16.mxu0 0
      %983 = vmatpush1.bf16.msra.mxu0 %v964
      %984 = vmatprep.subr.bf16.mxu0 0
      %985 = vmatpush1.bf16.msra.mxu0 %v965
      %986 = vmatprep.subr.bf16.mxu0 0
      %987 = vmatpush1.bf16.msra.mxu0 %v966
      %988 = vmatprep.subr.bf16.mxu0 0
      %989 = vmatpush1.bf16.msra.mxu0 %v967
      %990 = vmatprep.subr.bf16.mxu0 0
      %991 = vmatpush1.bf16.msra.mxu0 %v968
      %992 = vmatprep.subr.bf16.mxu0 0
      %993 = vmatpush1.bf16.msra.mxu0 %v969
      %994 = vmatprep.subr.bf16.mxu0 0
      %995 = vmatpush1.bf16.msra.mxu0 0
      %996 = vmatprep.subr.bf16.mxu0 0
      %997 = vmatpush1.bf16.msra.mxu0 0
      %998 = vmatprep.subr.bf16.mxu0 0
      %999 = vmatpush1.bf16.msra.mxu0 0
      %1000 = vmatprep.subr.bf16.mxu0 0
      %1001 = vmatpush1.bf16.msra.mxu0 0
      %1002 = vmatprep.subr.bf16.mxu0 0
      %1003 = vmatpush1.bf16.msra.mxu0 0
      %1004 = vmatprep.subr.bf16.mxu0 0
      %1005 = vmatpush1.bf16.msra.mxu0 0
      %1006 = vmatprep.subr.bf16.mxu0 0
      %1007 = vmatpush1.bf16.msra.mxu0 0
      %1008 = vmatprep.subr.bf16.mxu0 0
      %1009 = vmatpush1.bf16.msra.mxu0 0
      %1010 = vmatprep.mubr.bf16.mxu0 0
      %1011 = vmatmul.mubr.bf16.gmra.mrb[0].mxu0 %v898
      %v1012 = vpop.f32.mrb[0].mxu0
      %v1013 = vadd.f32 %v879, %v1012
      %v1014 = vpop.f32.mrb[0].mxu0
      %v1015 = vpop.f32.mrb[0].mxu0
      %v1016 = vadd.f32 %v879, %v1015
      %v1017 = vpop.f32.mrb[0].mxu0
      %1018 = vmatprep.mubr.bf16.mxu0 0
      %1019 = vmatmul.mubr.bf16.gmra.mrb[0].mxu0 %v907
      %v1020 = vpop.f32.mrb[0].mxu0
      %v1021 = vadd.f32 %v879, %v1020
      %v1022 = vpop.f32.mrb[0].mxu0
      %v1023 = vpop.f32.mrb[0].mxu0
      %v1024 = vadd.f32 %v879, %v1023
      %v1025 = vpop.f32.mrb[0].mxu0
      %1026 = vmatprep.mubr.bf16.mxu0 0
      %1027 = vmatmul.mubr.bf16.gmra.mrb[0].mxu0 %v916
      %v1028 = vpop.f32.mrb[0].mxu0
      %v1029 = vadd.f32 %v879, %v1028
      %v1030 = vpop.f32.mrb[0].mxu0
      %v1031 = vpop.f32.mrb[0].mxu0
      %v1032 = vadd.f32 %v879, %v1031
      %v1033 = vpop.f32.mrb[0].mxu0
      %1034 = vmatprep.mubr.bf16.mxu0 0
      %1035 = vmatmul.mubr.bf16.gmra.mrb[0].mxu0 %v925
      %v1036 = vpop.f32.mrb[0].mxu0
      %v1037 = vadd.f32 %v879, %v1036
      %v1038 = vpop.f32.mrb[0].mxu0
      %v1039 = vpop.f32.mrb[0].mxu0
      %v1040 = vadd.f32 %v879, %v1039
      %v1041 = vpop.f32.mrb[0].mxu0
      %1042 = vdwg.mxu0
      %v1043 = vmax.f32 %v1013, 0.0
      %v1044 = vmax.f32 %v1016, 0.0
      %v1045 = vmax.f32 %v1021, 0.0
      %v1046 = vmax.f32 %v1024, 0.0
      %v1047 = vmax.f32 %v1029, 0.0
      %v1048 = vmax.f32 %v1032, 0.0
      %v1049 = vmax.f32 %v1037, 0.0
      %v1050 = vmax.f32 %v1040, 0.0
      %vm1051 = vcmp.ne.f32.partialorder %v1013, %v1013
      %vm1052 = vcmp.ne.f32.partialorder %v1016, %v1016
      %vm1053 = vcmp.ne.f32.partialorder %v1021, %v1021
      %vm1054 = vcmp.ne.f32.partialorder %v1024, %v1024
      %vm1055 = vcmp.ne.f32.partialorder %v1029, %v1029
      %vm1056 = vcmp.ne.f32.partialorder %v1032, %v1032
      %vm1057 = vcmp.ne.f32.partialorder %v1037, %v1037
      %vm1058 = vcmp.ne.f32.partialorder %v1040, %v1040
      %v1059 = vadd.f32 %v1013, 0.0
      %v1060 = vadd.f32 %v1016, 0.0
      %v1061 = vadd.f32 %v1021, 0.0
      %v1062 = vadd.f32 %v1024, 0.0
      %v1063 = vadd.f32 %v1029, 0.0
      %v1064 = vadd.f32 %v1032, 0.0
      %v1065 = vadd.f32 %v1037, 0.0
      %v1066 = vadd.f32 %v1040, 0.0
      %v1067 = vand.u32 2147483647, %v1013
      %v1068 = vand.u32 2147483647, %v1016
      %v1069 = vand.u32 2147483647, %v1021
      %v1070 = vand.u32 2147483647, %v1024
      %v1071 = vand.u32 2147483647, %v1029
      %v1072 = vand.u32 2147483647, %v1032
      %v1073 = vand.u32 2147483647, %v1037
      %v1074 = vand.u32 2147483647, %v1040
      %v1075 = vsub.f32 0.0, %v1067
      %v1076 = vsub.f32 0.0, %v1068
      %v1077 = vsub.f32 0.0, %v1069
      %v1078 = vsub.f32 0.0, %v1070
      %v1079 = vsub.f32 0.0, %v1071
      %v1080 = vsub.f32 0.0, %v1072
      %v1081 = vsub.f32 0.0, %v1073
      %v1082 = vsub.f32 0.0, %v1074
      %v1083 = vmul.f32 %v1075, 1.442695
      %v1084 = vpow.pop %v1083
      %v1085 = vmul.f32 %v1076, 1.442695
      %v1086 = vpow.pop %v1085
      %v1087 = vmul.f32 %v1077, 1.442695
      %v1088 = vpow.pop %v1087
      %v1089 = vmul.f32 %v1078, 1.442695
      %v1090 = vpow.pop %v1089
      %v1091 = vmul.f32 %v1079, 1.442695
      %v1092 = vpow.pop %v1091
      %v1093 = vmul.f32 %v1080, 1.442695
      %v1094 = vpow.pop %v1093
      %v1095 = vmul.f32 %v1081, 1.442695
      %v1096 = vpow.pop %v1095
      %v1097 = vmul.f32 %v1082, 1.442695
      %v1098 = vpow.pop %v1097
      %v1099 = vadd.f32 %v1084, 1.0
      %v1100 = vlog2.pop %v1099
      %v1101 = vmul.f32 %v1100, 0.6931472
      %v1102 = vmul.f32 -0.5, %v1084
      %v1103 = vadd.f32 %v1102, 1.0
      %v1104 = vmul.f32 %v1103, %v1084
      %v1105 = vand.u32 2147483647, %v1084
      %vm1106 = vcmp.lt.f32.partialorder %v1105, 0.0004427343
      %v1107 = vsel %vm1106, %v1104, %v1101
      %v1108 = vadd.f32 %v1086, 1.0
      %v1109 = vlog2.pop %v1108
      %v1110 = vmul.f32 %v1109, 0.6931472
      %v1111 = vmul.f32 -0.5, %v1086
      %v1112 = vadd.f32 %v1111, 1.0
      %v1113 = vmul.f32 %v1112, %v1086
      %v1114 = vand.u32 2147483647, %v1086
      %vm1115 = vcmp.lt.f32.partialorder %v1114, 0.0004427343
      %v1116 = vsel %vm1115, %v1113, %v1110
      %v1117 = vadd.f32 %v1088, 1.0
      %v1118 = vlog2.pop %v1117
      %v1119 = vmul.f32 %v1118, 0.6931472
      %v1120 = vmul.f32 -0.5, %v1088
      %v1121 = vadd.f32 %v1120, 1.0
      %v1122 = vmul.f32 %v1121, %v1088
      %v1123 = vand.u32 2147483647, %v1088
      %vm1124 = vcmp.lt.f32.partialorder %v1123, 0.0004427343
      %v1125 = vsel %vm1124, %v1122, %v1119
      %v1126 = vadd.f32 %v1090, 1.0
      %v1127 = vlog2.pop %v1126
      %v1128 = vmul.f32 %v1127, 0.6931472
      %v1129 = vmul.f32 -0.5, %v1090
      %v1130 = vadd.f32 %v1129, 1.0
      %v1131 = vmul.f32 %v1130, %v1090
      %v1132 = vand.u32 2147483647, %v1090
      %vm1133 = vcmp.lt.f32.partialorder %v1132, 0.0004427343
      %v1134 = vsel %vm1133, %v1131, %v1128
      %v1135 = vadd.f32 %v1092, 1.0
      %v1136 = vlog2.pop %v1135
      %v1137 = vmul.f32 %v1136, 0.6931472
      %v1138 = vmul.f32 -0.5, %v1092
      %v1139 = vadd.f32 %v1138, 1.0
      %v1140 = vmul.f32 %v1139, %v1092
      %v1141 = vand.u32 2147483647, %v1092
      %vm1142 = vcmp.lt.f32.partialorder %v1141, 0.0004427343
      %v1143 = vsel %vm1142, %v1140, %v1137
      %v1144 = vadd.f32 %v1094, 1.0
      %v1145 = vlog2.pop %v1144
      %v1146 = vmul.f32 %v1145, 0.6931472
      %v1147 = vmul.f32 -0.5, %v1094
      %v1148 = vadd.f32 %v1147, 1.0
      %v1149 = vmul.f32 %v1148, %v1094
      %v1150 = vand.u32 2147483647, %v1094
      %vm1151 = vcmp.lt.f32.partialorder %v1150, 0.0004427343
      %v1152 = vsel %vm1151, %v1149, %v1146
      %v1153 = vadd.f32 %v1096, 1.0
      %v1154 = vlog2.pop %v1153
      %v1155 = vmul.f32 %v1154, 0.6931472
      %v1156 = vmul.f32 -0.5, %v1096
      %v1157 = vadd.f32 %v1156, 1.0
      %v1158 = vmul.f32 %v1157, %v1096
      %v1159 = vand.u32 2147483647, %v1096
      %vm1160 = vcmp.lt.f32.partialorder %v1159, 0.0004427343
      %v1161 = vsel %vm1160, %v1158, %v1155
      %v1162 = vadd.f32 %v1098, 1.0
      %v1163 = vlog2.pop %v1162
      %v1164 = vmul.f32 %v1163, 0.6931472
      %v1165 = vmul.f32 -0.5, %v1098
      %v1166 = vadd.f32 %v1165, 1.0
      %v1167 = vmul.f32 %v1166, %v1098
      %v1168 = vand.u32 2147483647, %v1098
      %vm1169 = vcmp.lt.f32.partialorder %v1168, 0.0004427343
      %v1170 = vsel %vm1169, %v1167, %v1164
      %v1171 = vadd.f32 %v1043, %v1107
      %v1172 = vadd.f32 %v1044, %v1116
      %v1173 = vadd.f32 %v1045, %v1125
      %v1174 = vadd.f32 %v1046, %v1134
      %v1175 = vadd.f32 %v1047, %v1143
      %v1176 = vadd.f32 %v1048, %v1152
      %v1177 = vadd.f32 %v1049, %v1161
      %v1178 = vadd.f32 %v1050, %v1170
      %v1179 = vsel %vm1051, %v1059, %v1171
      %v1180 = vsel %vm1052, %v1060, %v1172
      %v1181 = vsel %vm1053, %v1061, %v1173
      %v1182 = vsel %vm1054, %v1062, %v1174
      %v1183 = vsel %vm1055, %v1063, %v1175
      %v1184 = vsel %vm1056, %v1064, %v1176
      %v1185 = vsel %vm1057, %v1065, %v1177
      %v1186 = vsel %vm1058, %v1066, %v1178
      %v1187 = vld [vmem:[%s5] sm:$0xf]
      %v1188 = vld [vmem:[%s5 + $0x4] sm:$0xf]
      %v1189 = vld [vmem:[%s5 + $0x8] sm:$0xf]
      %v1190 = vld [vmem:[%s5 + $0xc] sm:$0xf]
      %v1191 = vld [vmem:[%s5 + $0x10] sm:$0xf]
      %v1192 = vld [vmem:[%s5 + $0x14] sm:$0xf]
      %v1193 = vld [vmem:[%s5 + $0x18] sm:$0xf]
      %v1194 = vld [vmem:[%s5 + $0x1c] sm:$0xf]
      %v1195 = vld [vmem:[%s5 + $0x20] sm:$0xf]
      %v1196 = vld [vmem:[%s5 + $0x24] sm:$0xf]
      %v1197 = vld [vmem:[%s5 + $0x28] sm:$0xf]
      %v1198 = vld [vmem:[%s5 + $0x2c] sm:$0xf]
      %v1199 = vld [vmem:[%s5 + $0x30] sm:$0xf]
      %v1200 = vld [vmem:[%s5 + $0x34] sm:$0xf]
      %v1201 = vld [vmem:[%s5 + $0x38] sm:$0xf]
      %v1202 = vld [vmem:[%s5 + $0x3c] sm:$0xf]
      %v1219 = vunpack.c.l.b16 %v1187
      %v1220 = vunpack.c.l.b16 %v1188
      %v1221 = vunpack.c.l.b16 %v1189
      %v1222 = vunpack.c.l.b16 %v1190
      %v1223 = vunpack.c.l.b16 %v1191
      %v1224 = vunpack.c.l.b16 %v1192
      %v1225 = vunpack.c.l.b16 %v1193
      %v1226 = vunpack.c.l.b16 %v1194
      %v1227 = vunpack.c.l.b16 %v1195
      %v1228 = vunpack.c.l.b16 %v1196
      %v1229 = vunpack.c.l.b16 %v1197
      %v1230 = vunpack.c.l.b16 %v1198
      %v1231 = vunpack.c.l.b16 %v1199
      %v1232 = vunpack.c.l.b16 %v1200
      %v1233 = vunpack.c.l.b16 %v1201
      %v1234 = vunpack.c.l.b16 %v1202
      %v1235 = vpack.c.b16 %v1220, %v1219
      %v1236 = vpack.c.b16 %v1222, %v1221
      %v1237 = vpack.c.b16 %v1224, %v1223
      %v1238 = vpack.c.b16 %v1226, %v1225
      %v1239 = vpack.c.b16 %v1228, %v1227
      %v1240 = vpack.c.b16 %v1230, %v1229
      %v1241 = vpack.c.b16 %v1232, %v1231
      %v1242 = vpack.c.b16 %v1234, %v1233
      %1251 = vmatprep.subr.bf16.mxu0 0
      %1252 = vmatpush1.bf16.msra.mxu0 %v1235
      %1253 = vmatprep.subr.bf16.mxu0 0
      %1254 = vmatpush1.bf16.msra.mxu0 %v1236
      %1255 = vmatprep.subr.bf16.mxu0 0
      %1256 = vmatpush1.bf16.msra.mxu0 %v1237
      %1257 = vmatprep.subr.bf16.mxu0 0
      %1258 = vmatpush1.bf16.msra.mxu0 %v1238
      %1259 = vmatprep.subr.bf16.mxu0 0
      %1260 = vmatpush1.bf16.msra.mxu0 %v1239
      %1261 = vmatprep.subr.bf16.mxu0 0
      %1262 = vmatpush1.bf16.msra.mxu0 %v1240
      %1263 = vmatprep.subr.bf16.mxu0 0
      %1264 = vmatpush1.bf16.msra.mxu0 %v1241
      %1265 = vmatprep.subr.bf16.mxu0 0
      %1266 = vmatpush1.bf16.msra.mxu0 %v1242
      %1267 = vmatprep.subr.bf16.mxu0 0
      %1268 = vmatpush1.bf16.msra.mxu0 0
      %1269 = vmatprep.subr.bf16.mxu0 0
      %1270 = vmatpush1.bf16.msra.mxu0 0
      %1271 = vmatprep.subr.bf16.mxu0 0
      %1272 = vmatpush1.bf16.msra.mxu0 0
      %1273 = vmatprep.subr.bf16.mxu0 0
      %1274 = vmatpush1.bf16.msra.mxu0 0
      %1275 = vmatprep.subr.bf16.mxu0 0
      %1276 = vmatpush1.bf16.msra.mxu0 0
      %1277 = vmatprep.subr.bf16.mxu0 0
      %1278 = vmatpush1.bf16.msra.mxu0 0
      %1279 = vmatprep.subr.bf16.mxu0 0
      %1280 = vmatpush1.bf16.msra.mxu0 0
      %1281 = vmatprep.subr.bf16.mxu0 0
      %1282 = vmatpush1.bf16.msra.mxu0 0
      %1283 = vmatprep.mubr.bf16.mxu0 0
      %1284 = vmatmul.mubr.bf16.gmra.mrb[0].mxu0 %v898
      %v1285 = vpop.f32.mrb[0].mxu0
      %v1286 = vadd.f32 0.0, %v1285
      %v1287 = vpop.f32.mrb[0].mxu0
      %v1288 = vpop.f32.mrb[0].mxu0
      %v1289 = vadd.f32 0.0, %v1288
      %v1290 = vpop.f32.mrb[0].mxu0
      %1291 = vmatprep.mubr.bf16.mxu0 0
      %1292 = vmatmul.mubr.bf16.gmra.mrb[0].mxu0 %v907
      %v1293 = vpop.f32.mrb[0].mxu0
      %v1294 = vadd.f32 0.0, %v1293
      %v1295 = vpop.f32.mrb[0].mxu0
      %v1296 = vpop.f32.mrb[0].mxu0
      %v1297 = vadd.f32 0.0, %v1296
      %v1298 = vpop.f32.mrb[0].mxu0
      %1299 = vmatprep.mubr.bf16.mxu0 0
      %1300 = vmatmul.mubr.bf16.gmra.mrb[0].mxu0 %v916
      %v1301 = vpop.f32.mrb[0].mxu0
      %v1302 = vadd.f32 0.0, %v1301
      %v1303 = vpop.f32.mrb[0].mxu0
      %v1304 = vpop.f32.mrb[0].mxu0
      %v1305 = vadd.f32 0.0, %v1304
      %v1306 = vpop.f32.mrb[0].mxu0
      %1307 = vmatprep.mubr.bf16.mxu0 0
      %1308 = vmatmul.mubr.bf16.gmra.mrb[0].mxu0 %v925
      %v1309 = vpop.f32.mrb[0].mxu0
      %v1310 = vadd.f32 0.0, %v1309
      %v1311 = vpop.f32.mrb[0].mxu0
      %v1312 = vpop.f32.mrb[0].mxu0
      %v1313 = vadd.f32 0.0, %v1312
      %v1314 = vpop.f32.mrb[0].mxu0
      %1315 = vdwg.mxu0
      %vm1316 = vcmask 261120
      %1317 = vst.msk [vmem:[#allocation6] sm:$0xff] %vm1316, %v1286
      %1318 = vst.msk [vmem:[#allocation6 + $0x8] sm:$0xff] %vm1316, %v1289
      %1319 = vst.msk [vmem:[#allocation6 + $0x10] sm:$0xff] %vm1316, %v1294
      %1320 = vst.msk [vmem:[#allocation6 + $0x18] sm:$0xff] %vm1316, %v1297
      %1321 = vst.msk [vmem:[#allocation6 + $0x20] sm:$0xff] %vm1316, %v1302
      %1322 = vst.msk [vmem:[#allocation6 + $0x28] sm:$0xff] %vm1316, %v1305
      %1323 = vst.msk [vmem:[#allocation6 + $0x30] sm:$0xff] %vm1316, %v1310
      %1324 = vst.msk [vmem:[#allocation6 + $0x38] sm:$0xff] %vm1316, %v1313
      %1325 = vst [vmem:[#allocation4] sm:$0xff] %v1179
      %1326 = vst [vmem:[#allocation4 + $0x8] sm:$0xff] %v1180
      %1327 = vst [vmem:[#allocation4 + $0x10] sm:$0xff] %v1181
      %1328 = vst [vmem:[#allocation4 + $0x18] sm:$0xff] %v1182
      %1329 = vst [vmem:[#allocation4 + $0x20] sm:$0xff] %v1183
      %1330 = vst [vmem:[#allocation4 + $0x28] sm:$0xff] %v1184
      %1331 = vst [vmem:[#allocation4 + $0x30] sm:$0xff] %v1185
      %1332 = vst [vmem:[#allocation4 + $0x38] sm:$0xff] %v1186
      %vm1342 = vcmask 1042432
      %v1343 = vrot.slane %v843, 5
      %v1344 = vrot.slane %v844, 5
      %v1345 = vsel %vm1342, %v1343, %v1344
      %v1346 = vrot.slane %v845, 5
      %v1347 = vsel %vm1342, %v1344, %v1346
      %v1348 = vrot.slane %v846, 5
      %v1349 = vsel %vm1342, %v1346, %v1348
      %v1350 = vrot.slane %v847, 5
      %v1351 = vsel %vm1342, %v1348, %v1350
      %v1352 = vrot.slane %v848, 5
      %v1353 = vsel %vm1342, %v1350, %v1352
      %v1354 = vrot.slane %v849, 5
      %v1355 = vsel %vm1342, %v1352, %v1354
      %v1356 = vrot.slane %v850, 5
      %v1357 = vsel %vm1342, %v1354, %v1356
      %v1358 = vrot.slane %v851, 5
      %v1359 = vsel %vm1342, %v1356, %v1358
      %v1368 = vmul.f32 %v1179, %v1345
      %v1369 = vmul.f32 %v1180, %v1347
      %v1370 = vmul.f32 %v1181, %v1349
      %v1371 = vmul.f32 %v1182, %v1351
      %v1372 = vmul.f32 %v1183, %v1353
      %v1373 = vmul.f32 %v1184, %v1355
      %v1374 = vmul.f32 %v1185, %v1357
      %v1375 = vmul.f32 %v1186, %v1359
      %1376 = vst [vmem:[#allocation5] sm:$0xff] %v1368
      %1377 = vst [vmem:[#allocation5 + $0x8] sm:$0xff] %v1369
      %1378 = vst [vmem:[#allocation5 + $0x10] sm:$0xff] %v1370
      %1379 = vst [vmem:[#allocation5 + $0x18] sm:$0xff] %v1371
      %1380 = vst [vmem:[#allocation5 + $0x20] sm:$0xff] %v1372
      %1381 = vst [vmem:[#allocation5 + $0x28] sm:$0xff] %v1373
      %1382 = vst [vmem:[#allocation5 + $0x30] sm:$0xff] %v1374
      %1383 = vst [vmem:[#allocation5 + $0x38] sm:$0xff] %v1375
      %v1384 = vld [vmem:[%s7] sm:$0xff]
      %v1385 = vld [vmem:[%s7 + $0x8] sm:$0xff]
      %v1386 = vld [vmem:[#allocation2] sm:$0xff]
      %v1387 = vld [vmem:[#allocation2 + $0x8] sm:$0xff]
      %v1388 = vld [vmem:[#allocation4] sm:$0xff]
      %v1389 = vld [vmem:[#allocation5] sm:$0xff]
      %v1390 = vld [vmem:[#allocation6] sm:$0xff]
      %1391 = vxpose.xlu0.b32.start [1/16] %v1390, 128
      %1392 = vxpose.xlu0.b32.cont [2/16] 0.0, 128
      %1393 = vxpose.xlu0.b32.cont [3/16] 0.0, 128
      %1394 = vxpose.xlu0.b32.cont [4/16] 0.0, 128
      %1395 = vxpose.xlu0.b32.cont [5/16] 0.0, 128
      %1396 = vxpose.xlu0.b32.cont [6/16] 0.0, 128
      %1397 = vxpose.xlu0.b32.cont [7/16] 0.0, 128
      %1398 = vxpose.xlu0.b32.cont [8/16] 0.0, 128
      %1399 = vxpose.xlu0.b32.cont [9/16] 0.0, 128
      %1400 = vxpose.xlu0.b32.cont [10/16] 0.0, 128
      %1401 = vxpose.xlu0.b32.cont [11/16] 0.0, 128
      %1402 = vxpose.xlu0.b32.cont [12/16] 0.0, 128
      %1403 = vxpose.xlu0.b32.cont [13/16] 0.0, 128
      %1404 = vxpose.xlu0.b32.cont [14/16] 0.0, 128
      %1405 = vxpose.xlu0.b32.cont [15/16] 0.0, 128
      %1406 = vxpose.xlu0.b32.end [16/16] 0.0, 128
      %v1407 = vpop.trf.xlu0
      %v1408 = vpop.trf.xlu0
      %v1409 = vpop.trf.xlu0
      %v1410 = vpop.trf.xlu0
      %v1411 = vpop.trf.xlu0
      %v1412 = vpop.trf.xlu0
      %v1413 = vpop.trf.xlu0
      %v1414 = vpop.trf.xlu0
      %v1415 = vpop.trf.xlu0
      %v1416 = vpop.trf.xlu0
      %v1417 = vpop.trf.xlu0
      %v1418 = vpop.trf.xlu0
      %v1419 = vpop.trf.xlu0
      %v1420 = vpop.trf.xlu0
      %v1421 = vpop.trf.xlu0
      %v1422 = vpop.trf.xlu0
      %v1423 = vlaneseq
      %v1424 = vshrl.u32 %v1423, 7
      %v1425 = vsub.s32 0, %v1424
      %v1426 = vrot.slane %v1388, %v1425
      %v1427 = vmul.f32 %v1426, %v1384
      %v1428 = vmul.f32 %v1426, %v1385
      %v1429 = vmul.f32 %v1427, 1.442695
      %v1430 = vpow.pop %v1429
      %v1431 = vmul.f32 %v1428, 1.442695
      %v1432 = vpow.pop %v1431
      %v1433 = vmul.f32 %v1430, %v1386
      %v1434 = vmul.f32 %v1432, %v1387
      %1436 = vset.pattern.permute.xlu0 0
      %1437 = vperm.xlu0 %1436, %v1407
      %v1438 = vpop.permute.xlu0 %1437
      %1441 = vset.pattern.permute.xlu0 0
      %1442 = vperm.xlu0 %1441, %v1408
      %v1443 = vpop.permute.xlu0 %1442
      %v1445 = vlaneseq
      %v1446 = vshrl.u32 %v1445, 7
      %v1447 = vsub.s32 0, %v1446
      %v1448 = vrot.slane %v1389, %v1447
      %v1449 = vmul.f32 %v1438, %v1448
      %v1450 = vmul.f32 %v1443, %v1448
      %v1451 = vadd.f32 %v1433, %v1449
      %v1452 = vadd.f32 %v1434, %v1450
      %1454 = vset.pattern.permute.xlu0 0
      %1455 = vperm.xlu0 %1454, %v1409
      %v1456 = vpop.permute.xlu0 %1455
      %1459 = vset.pattern.permute.xlu0 0
      %1460 = vperm.xlu0 %1459, %v1410
      %v1461 = vpop.permute.xlu0 %1460
      %v1463 = vmul.f32 %v1456, %v1451
      %v1464 = vmul.f32 %v1461, %v1452
      %v1465 = vadd.f32 %v1463, %v1464
      %v1466 = vrot.slane %v1465, 4
      %v1467 = vadd.f32 %v1465, %v1466
      %v1468 = vrot.slane %v1467, 2
      %v1469 = vadd.f32 %v1467, %v1468
      %v1470 = vrot.slane %v1469, 1
      %v1471 = vadd.f32 %v1469, %v1470
      %v1472 = vlaneseq
      %v1473 = vshrl.u32 %v1472, 7
      %v1474 = vsub.s32 1, %v1473
      %v1475 = vrot.slane %v1388, %v1474
      %v1476 = vmul.f32 %v1475, %v1384
      %v1477 = vmul.f32 %v1475, %v1385
      %v1478 = vmul.f32 %v1476, 1.442695
      %v1479 = vpow.pop %v1478
      %v1480 = vmul.f32 %v1477, 1.442695
      %v1481 = vpow.pop %v1480
      %v1482 = vmul.f32 %v1479, %v1451
      %v1483 = vmul.f32 %v1481, %v1452
      %1484 = vset.pattern.permute.xlu0 1
      %1485 = vperm.xlu0 %1484, %v1407
      %v1486 = vpop.permute.xlu0 %1485
      %1488 = vset.pattern.permute.xlu0 1
      %1489 = vperm.xlu0 %1488, %v1408
      %v1490 = vpop.permute.xlu0 %1489
      %v1492 = vlaneseq
      %v1493 = vshrl.u32 %v1492, 7
      %v1494 = vsub.s32 1, %v1493
      %v1495 = vrot.slane %v1389, %v1494
      %v1496 = vmul.f32 %v1486, %v1495
      %v1497 = vmul.f32 %v1490, %v1495
      %v1498 = vadd.f32 %v1482, %v1496
      %v1499 = vadd.f32 %v1483, %v1497
      %1500 = vset.pattern.permute.xlu0 1
      %1501 = vperm.xlu0 %1500, %v1409
      %v1502 = vpop.permute.xlu0 %1501
      %1504 = vset.pattern.permute.xlu0 1
      %1505 = vperm.xlu0 %1504, %v1410
      %v1506 = vpop.permute.xlu0 %1505
      %v1508 = vmul.f32 %v1502, %v1498
      %v1509 = vmul.f32 %v1506, %v1499
      %v1510 = vadd.f32 %v1508, %v1509
      %v1511 = vrot.slane %v1510, 4
      %v1512 = vadd.f32 %v1510, %v1511
      %v1513 = vrot.slane %v1512, 2
      %v1514 = vadd.f32 %v1512, %v1513
      %v1515 = vrot.slane %v1514, 1
      %v1516 = vadd.f32 %v1514, %v1515
      %v1517 = vlaneseq
      %v1518 = vshrl.u32 %v1517, 7
      %v1519 = vsub.s32 2, %v1518
      %v1520 = vrot.slane %v1388, %v1519
      %v1521 = vmul.f32 %v1520, %v1384
      %v1522 = vmul.f32 %v1520, %v1385
      %v1523 = vmul.f32 %v1521, 1.442695
      %v1524 = vpow.pop %v1523
      %v1525 = vmul.f32 %v1522, 1.442695
      %v1526 = vpow.pop %v1525
      %v1527 = vmul.f32 %v1524, %v1498
      %v1528 = vmul.f32 %v1526, %v1499
      %1529 = vset.pattern.permute.xlu0 2
      %1530 = vperm.xlu0 %1529, %v1407
      %v1531 = vpop.permute.xlu0 %1530
      %1533 = vset.pattern.permute.xlu0 2
      %1534 = vperm.xlu0 %1533, %v1408
      %v1535 = vpop.permute.xlu0 %1534
      %v1537 = vlaneseq
      %v1538 = vshrl.u32 %v1537, 7
      %v1539 = vsub.s32 2, %v1538
      %v1540 = vrot.slane %v1389, %v1539
      %v1541 = vmul.f32 %v1531, %v1540
      %v1542 = vmul.f32 %v1535, %v1540
      %v1543 = vadd.f32 %v1527, %v1541
      %v1544 = vadd.f32 %v1528, %v1542
      %1545 = vset.pattern.permute.xlu0 2
      %1546 = vperm.xlu0 %1545, %v1409
      %v1547 = vpop.permute.xlu0 %1546
      %1549 = vset.pattern.permute.xlu0 2
      %1550 = vperm.xlu0 %1549, %v1410
      %v1551 = vpop.permute.xlu0 %1550
      %v1553 = vmul.f32 %v1547, %v1543
      %v1554 = vmul.f32 %v1551, %v1544
      %v1555 = vadd.f32 %v1553, %v1554
      %v1556 = vrot.slane %v1555, 4
      %v1557 = vadd.f32 %v1555, %v1556
      %v1558 = vrot.slane %v1557, 2
      %v1559 = vadd.f32 %v1557, %v1558
      %v1560 = vrot.slane %v1559, 1
      %v1561 = vadd.f32 %v1559, %v1560
      %v1562 = vlaneseq
      %v1563 = vshrl.u32 %v1562, 7
      %v1564 = vsub.s32 3, %v1563
      %v1565 = vrot.slane %v1388, %v1564
      %v1566 = vmul.f32 %v1565, %v1384
      %v1567 = vmul.f32 %v1565, %v1385
      %v1568 = vmul.f32 %v1566, 1.442695
      %v1569 = vpow.pop %v1568
      %v1570 = vmul.f32 %v1567, 1.442695
      %v1571 = vpow.pop %v1570
      %v1572 = vmul.f32 %v1569, %v1543
      %v1573 = vmul.f32 %v1571, %v1544
      %1574 = vset.pattern.permute.xlu0 3
      %1575 = vperm.xlu0 %1574, %v1407
      %v1576 = vpop.permute.xlu0 %1575
      %1578 = vset.pattern.permute.xlu0 3
      %1579 = vperm.xlu0 %1578, %v1408
      %v1580 = vpop.permute.xlu0 %1579
      %v1582 = vlaneseq
      %v1583 = vshrl.u32 %v1582, 7
      %v1584 = vsub.s32 3, %v1583
      %v1585 = vrot.slane %v1389, %v1584
      %v1586 = vmul.f32 %v1576, %v1585
      %v1587 = vmul.f32 %v1580, %v1585
      %v1588 = vadd.f32 %v1572, %v1586
      %v1589 = vadd.f32 %v1573, %v1587
      %1590 = vset.pattern.permute.xlu0 3
      %1591 = vperm.xlu0 %1590, %v1409
      %v1592 = vpop.permute.xlu0 %1591
      %1594 = vset.pattern.permute.xlu0 3
      %1595 = vperm.xlu0 %1594, %v1410
      %v1596 = vpop.permute.xlu0 %1595
      %v1598 = vmul.f32 %v1592, %v1588
      %v1599 = vmul.f32 %v1596, %v1589
      %v1600 = vadd.f32 %v1598, %v1599
      %v1601 = vrot.slane %v1600, 4
      %v1602 = vadd.f32 %v1600, %v1601
      %v1603 = vrot.slane %v1602, 2
      %v1604 = vadd.f32 %v1602, %v1603
      %v1605 = vrot.slane %v1604, 1
      %v1606 = vadd.f32 %v1604, %v1605
      %v1607 = vlaneseq
      %v1608 = vshrl.u32 %v1607, 7
      %v1609 = vsub.s32 4, %v1608
      %v1610 = vrot.slane %v1388, %v1609
      %v1611 = vmul.f32 %v1610, %v1384
      %v1612 = vmul.f32 %v1610, %v1385
      %v1613 = vmul.f32 %v1611, 1.442695
      %v1614 = vpow.pop %v1613
      %v1615 = vmul.f32 %v1612, 1.442695
      %v1616 = vpow.pop %v1615
      %v1617 = vmul.f32 %v1614, %v1588
      %v1618 = vmul.f32 %v1616, %v1589
      %1619 = vset.pattern.permute.xlu0 4
      %1620 = vperm.xlu0 %1619, %v1407
      %v1621 = vpop.permute.xlu0 %1620
      %1623 = vset.pattern.permute.xlu0 4
      %1624 = vperm.xlu0 %1623, %v1408
      %v1625 = vpop.permute.xlu0 %1624
      %v1627 = vlaneseq
      %v1628 = vshrl.u32 %v1627, 7
      %v1629 = vsub.s32 4, %v1628
      %v1630 = vrot.slane %v1389, %v1629
      %v1631 = vmul.f32 %v1621, %v1630
      %v1632 = vmul.f32 %v1625, %v1630
      %v1633 = vadd.f32 %v1617, %v1631
      %v1634 = vadd.f32 %v1618, %v1632
      %1635 = vset.pattern.permute.xlu0 4
      %1636 = vperm.xlu0 %1635, %v1409
      %v1637 = vpop.permute.xlu0 %1636
      %1639 = vset.pattern.permute.xlu0 4
      %1640 = vperm.xlu0 %1639, %v1410
      %v1641 = vpop.permute.xlu0 %1640
      %v1643 = vmul.f32 %v1637, %v1633
      %v1644 = vmul.f32 %v1641, %v1634
      %v1645 = vadd.f32 %v1643, %v1644
      %v1646 = vrot.slane %v1645, 4
      %v1647 = vadd.f32 %v1645, %v1646
      %v1648 = vrot.slane %v1647, 2
      %v1649 = vadd.f32 %v1647, %v1648
      %v1650 = vrot.slane %v1649, 1
      %v1651 = vadd.f32 %v1649, %v1650
      %v1652 = vlaneseq
      %v1653 = vshrl.u32 %v1652, 7
      %v1654 = vsub.s32 5, %v1653
      %v1655 = vrot.slane %v1388, %v1654
      %v1656 = vmul.f32 %v1655, %v1384
      %v1657 = vmul.f32 %v1655, %v1385
      %v1658 = vmul.f32 %v1656, 1.442695
      %v1659 = vpow.pop %v1658
      %v1660 = vmul.f32 %v1657, 1.442695
      %v1661 = vpow.pop %v1660
      %v1662 = vmul.f32 %v1659, %v1633
      %v1663 = vmul.f32 %v1661, %v1634
      %1664 = vset.pattern.permute.xlu0 5
      %1665 = vperm.xlu0 %1664, %v1407
      %v1666 = vpop.permute.xlu0 %1665
      %1668 = vset.pattern.permute.xlu0 5
      %1669 = vperm.xlu0 %1668, %v1408
      %v1670 = vpop.permute.xlu0 %1669
      %v1672 = vlaneseq
      %v1673 = vshrl.u32 %v1672, 7
      %v1674 = vsub.s32 5, %v1673
      %v1675 = vrot.slane %v1389, %v1674
      %v1676 = vmul.f32 %v1666, %v1675
      %v1677 = vmul.f32 %v1670, %v1675
      %v1678 = vadd.f32 %v1662, %v1676
      %v1679 = vadd.f32 %v1663, %v1677
      %1680 = vset.pattern.permute.xlu0 5
      %1681 = vperm.xlu0 %1680, %v1409
      %v1682 = vpop.permute.xlu0 %1681
      %1684 = vset.pattern.permute.xlu0 5
      %1685 = vperm.xlu0 %1684, %v1410
      %v1686 = vpop.permute.xlu0 %1685
      %v1688 = vmul.f32 %v1682, %v1678
      %v1689 = vmul.f32 %v1686, %v1679
      %v1690 = vadd.f32 %v1688, %v1689
      %v1691 = vrot.slane %v1690, 4
      %v1692 = vadd.f32 %v1690, %v1691
      %v1693 = vrot.slane %v1692, 2
      %v1694 = vadd.f32 %v1692, %v1693
      %v1695 = vrot.slane %v1694, 1
      %v1696 = vadd.f32 %v1694, %v1695
      %v1697 = vlaneseq
      %v1698 = vshrl.u32 %v1697, 7
      %v1699 = vsub.s32 6, %v1698
      %v1700 = vrot.slane %v1388, %v1699
      %v1701 = vmul.f32 %v1700, %v1384
      %v1702 = vmul.f32 %v1700, %v1385
      %v1703 = vmul.f32 %v1701, 1.442695
      %v1704 = vpow.pop %v1703
      %v1705 = vmul.f32 %v1702, 1.442695
      %v1706 = vpow.pop %v1705
      %v1707 = vmul.f32 %v1704, %v1678
      %v1708 = vmul.f32 %v1706, %v1679
      %1709 = vset.pattern.permute.xlu0 6
      %1710 = vperm.xlu0 %1709, %v1407
      %v1711 = vpop.permute.xlu0 %1710
      %1713 = vset.pattern.permute.xlu0 6
      %1714 = vperm.xlu0 %1713, %v1408
      %v1715 = vpop.permute.xlu0 %1714
      %v1717 = vlaneseq
      %v1718 = vshrl.u32 %v1717, 7
      %v1719 = vsub.s32 6, %v1718
      %v1720 = vrot.slane %v1389, %v1719
      %v1721 = vmul.f32 %v1711, %v1720
      %v1722 = vmul.f32 %v1715, %v1720
      %v1723 = vadd.f32 %v1707, %v1721
      %v1724 = vadd.f32 %v1708, %v1722
      %1725 = vset.pattern.permute.xlu0 6
      %1726 = vperm.xlu0 %1725, %v1409
      %v1727 = vpop.permute.xlu0 %1726
      %1729 = vset.pattern.permute.xlu0 6
      %1730 = vperm.xlu0 %1729, %v1410
      %v1731 = vpop.permute.xlu0 %1730
      %v1733 = vmul.f32 %v1727, %v1723
      %v1734 = vmul.f32 %v1731, %v1724
      %v1735 = vadd.f32 %v1733, %v1734
      %v1736 = vrot.slane %v1735, 4
      %v1737 = vadd.f32 %v1735, %v1736
      %v1738 = vrot.slane %v1737, 2
      %v1739 = vadd.f32 %v1737, %v1738
      %v1740 = vrot.slane %v1739, 1
      %v1741 = vadd.f32 %v1739, %v1740
      %v1742 = vlaneseq
      %v1743 = vshrl.u32 %v1742, 7
      %v1744 = vsub.s32 7, %v1743
      %v1745 = vrot.slane %v1388, %v1744
      %v1746 = vmul.f32 %v1745, %v1384
      %v1747 = vmul.f32 %v1745, %v1385
      %v1748 = vmul.f32 %v1746, 1.442695
      %v1749 = vpow.pop %v1748
      %v1750 = vmul.f32 %v1747, 1.442695
      %v1751 = vpow.pop %v1750
      %v1752 = vmul.f32 %v1749, %v1723
      %v1753 = vmul.f32 %v1751, %v1724
      %1754 = vset.pattern.permute.xlu0 7
      %1755 = vperm.xlu0 %1754, %v1407
      %v1756 = vpop.permute.xlu0 %1755
      %1758 = vset.pattern.permute.xlu0 7
      %1759 = vperm.xlu0 %1758, %v1408
      %v1760 = vpop.permute.xlu0 %1759
      %v1762 = vlaneseq
      %v1763 = vshrl.u32 %v1762, 7
      %v1764 = vsub.s32 7, %v1763
      %v1765 = vrot.slane %v1389, %v1764
      %v1766 = vmul.f32 %v1756, %v1765
      %v1767 = vmul.f32 %v1760, %v1765
      %v1768 = vadd.f32 %v1752, %v1766
      %v1769 = vadd.f32 %v1753, %v1767
      %1770 = vset.pattern.permute.xlu0 7
      %1771 = vperm.xlu0 %1770, %v1409
      %v1772 = vpop.permute.xlu0 %1771
      %1774 = vset.pattern.permute.xlu0 7
      %1775 = vperm.xlu0 %1774, %v1410
      %v1776 = vpop.permute.xlu0 %1775
      %v1778 = vmul.f32 %v1772, %v1768
      %v1779 = vmul.f32 %v1776, %v1769
      %v1780 = vadd.f32 %v1778, %v1779
      %v1781 = vrot.slane %v1780, 4
      %v1782 = vadd.f32 %v1780, %v1781
      %v1783 = vrot.slane %v1782, 2
      %v1784 = vadd.f32 %v1782, %v1783
      %v1785 = vrot.slane %v1784, 1
      %v1786 = vadd.f32 %v1784, %v1785
      %vm1787 = vcmask 1040384
      %v1788 = vsel %vm1787, %v1471, %v1516
      %vm1789 = vcmask 1041408
      %v1790 = vsel %vm1789, %v1788, %v1561
      %v1791 = vsel %vm1342, %v1790, %v1606
      %vm1792 = vcmask 1043456
      %v1793 = vsel %vm1792, %v1791, %v1651
      %v1794 = vsel %vm739, %v1793, %v1696
      %v1795 = vsel %vm682, %v1794, %v1741
      %v1796 = vsel %vm623, %v1795, %v1786
      %1797 = vst [vmem:[#allocation7] sm:$0xff] %v1796
      %s1798 = scalar_lea.vmem [#allocation4], 8
      %v1799 = vld [vmem:[%s1798] sm:$0xff]
      %s1800 = scalar_lea.vmem [#allocation5], 8
      %v1801 = vld [vmem:[%s1800] sm:$0xff]
      %s1802 = scalar_lea.vmem [#allocation6], 8
      %v1803 = vld [vmem:[%s1802] sm:$0xff]
      %1804 = vxpose.xlu0.b32.start [1/16] %v1803, 128
      %1805 = vxpose.xlu0.b32.cont [2/16] 0.0, 128
      %1806 = vxpose.xlu0.b32.cont [3/16] 0.0, 128
      %1807 = vxpose.xlu0.b32.cont [4/16] 0.0, 128
      %1808 = vxpose.xlu0.b32.cont [5/16] 0.0, 128
      %1809 = vxpose.xlu0.b32.cont [6/16] 0.0, 128
      %1810 = vxpose.xlu0.b32.cont [7/16] 0.0, 128
      %1811 = vxpose.xlu0.b32.cont [8/16] 0.0, 128
      %1812 = vxpose.xlu0.b32.cont [9/16] 0.0, 128
      %1813 = vxpose.xlu0.b32.cont [10/16] 0.0, 128
      %1814 = vxpose.xlu0.b32.cont [11/16] 0.0, 128
      %1815 = vxpose.xlu0.b32.cont [12/16] 0.0, 128
      %1816 = vxpose.xlu0.b32.cont [13/16] 0.0, 128
      %1817 = vxpose.xlu0.b32.cont [14/16] 0.0, 128
      %1818 = vxpose.xlu0.b32.cont [15/16] 0.0, 128
      %1819 = vxpose.xlu0.b32.end [16/16] 0.0, 128
      %v1820 = vpop.trf.xlu0
      %v1821 = vpop.trf.xlu0
      %v1822 = vpop.trf.xlu0
      %v1823 = vpop.trf.xlu0
      %v1824 = vpop.trf.xlu0
      %v1825 = vpop.trf.xlu0
      %v1826 = vpop.trf.xlu0
      %v1827 = vpop.trf.xlu0
      %v1828 = vpop.trf.xlu0
      %v1829 = vpop.trf.xlu0
      %v1830 = vpop.trf.xlu0
      %v1831 = vpop.trf.xlu0
      %v1832 = vpop.trf.xlu0
      %v1833 = vpop.trf.xlu0
      %v1834 = vpop.trf.xlu0
      %v1835 = vpop.trf.xlu0
      %v1836 = vlaneseq
      %v1837 = vshrl.u32 %v1836, 7
      %v1838 = vsub.s32 0, %v1837
      %v1839 = vrot.slane %v1799, %v1838
      %v1840 = vmul.f32 %v1839, %v1384
      %v1841 = vmul.f32 %v1839, %v1385
      %v1842 = vmul.f32 %v1840, 1.442695
      %v1843 = vpow.pop %v1842
      %v1844 = vmul.f32 %v1841, 1.442695
      %v1845 = vpow.pop %v1844
      %v1846 = vmul.f32 %v1843, %v1768
      %v1847 = vmul.f32 %v1845, %v1769
      %1849 = vset.pattern.permute.xlu0 0
      %1850 = vperm.xlu0 %1849, %v1820
      %v1851 = vpop.permute.xlu0 %1850
      %1854 = vset.pattern.permute.xlu0 0
      %1855 = vperm.xlu0 %1854, %v1821
      %v1856 = vpop.permute.xlu0 %1855
      %v1858 = vlaneseq
      %v1859 = vshrl.u32 %v1858, 7
      %v1860 = vsub.s32 0, %v1859
      %v1861 = vrot.slane %v1801, %v1860
      %v1862 = vmul.f32 %v1851, %v1861
      %v1863 = vmul.f32 %v1856, %v1861
      %v1864 = vadd.f32 %v1846, %v1862
      %v1865 = vadd.f32 %v1847, %v1863
      %1867 = vset.pattern.permute.xlu0 0
      %1868 = vperm.xlu0 %1867, %v1822
      %v1869 = vpop.permute.xlu0 %1868
      %1872 = vset.pattern.permute.xlu0 0
      %1873 = vperm.xlu0 %1872, %v1823
      %v1874 = vpop.permute.xlu0 %1873
      %v1876 = vmul.f32 %v1869, %v1864
      %v1877 = vmul.f32 %v1874, %v1865
      %v1878 = vadd.f32 %v1876, %v1877
      %v1879 = vrot.slane %v1878, 4
      %v1880 = vadd.f32 %v1878, %v1879
      %v1881 = vrot.slane %v1880, 2
      %v1882 = vadd.f32 %v1880, %v1881
      %v1883 = vrot.slane %v1882, 1
      %v1884 = vadd.f32 %v1882, %v1883
      %v1885 = vlaneseq
      %v1886 = vshrl.u32 %v1885, 7
      %v1887 = vsub.s32 1, %v1886
      %v1888 = vrot.slane %v1799, %v1887
      %v1889 = vmul.f32 %v1888, %v1384
      %v1890 = vmul.f32 %v1888, %v1385
      %v1891 = vmul.f32 %v1889, 1.442695
      %v1892 = vpow.pop %v1891
      %v1893 = vmul.f32 %v1890, 1.442695
      %v1894 = vpow.pop %v1893
      %v1895 = vmul.f32 %v1892, %v1864
      %v1896 = vmul.f32 %v1894, %v1865
      %1897 = vset.pattern.permute.xlu0 1
      %1898 = vperm.xlu0 %1897, %v1820
      %v1899 = vpop.permute.xlu0 %1898
      %1901 = vset.pattern.permute.xlu0 1
      %1902 = vperm.xlu0 %1901, %v1821
      %v1903 = vpop.permute.xlu0 %1902
      %v1905 = vlaneseq
      %v1906 = vshrl.u32 %v1905, 7
      %v1907 = vsub.s32 1, %v1906
      %v1908 = vrot.slane %v1801, %v1907
      %v1909 = vmul.f32 %v1899, %v1908
      %v1910 = vmul.f32 %v1903, %v1908
      %v1911 = vadd.f32 %v1895, %v1909
      %v1912 = vadd.f32 %v1896, %v1910
      %1913 = vset.pattern.permute.xlu0 1
      %1914 = vperm.xlu0 %1913, %v1822
      %v1915 = vpop.permute.xlu0 %1914
      %1917 = vset.pattern.permute.xlu0 1
      %1918 = vperm.xlu0 %1917, %v1823
      %v1919 = vpop.permute.xlu0 %1918
      %v1921 = vmul.f32 %v1915, %v1911
      %v1922 = vmul.f32 %v1919, %v1912
      %v1923 = vadd.f32 %v1921, %v1922
      %v1924 = vrot.slane %v1923, 4
      %v1925 = vadd.f32 %v1923, %v1924
      %v1926 = vrot.slane %v1925, 2
      %v1927 = vadd.f32 %v1925, %v1926
      %v1928 = vrot.slane %v1927, 1
      %v1929 = vadd.f32 %v1927, %v1928
      %v1930 = vlaneseq
      %v1931 = vshrl.u32 %v1930, 7
      %v1932 = vsub.s32 2, %v1931
      %v1933 = vrot.slane %v1799, %v1932
      %v1934 = vmul.f32 %v1933, %v1384
      %v1935 = vmul.f32 %v1933, %v1385
      %v1936 = vmul.f32 %v1934, 1.442695
      %v1937 = vpow.pop %v1936
      %v1938 = vmul.f32 %v1935, 1.442695
      %v1939 = vpow.pop %v1938
      %v1940 = vmul.f32 %v1937, %v1911
      %v1941 = vmul.f32 %v1939, %v1912
      %1942 = vset.pattern.permute.xlu0 2
      %1943 = vperm.xlu0 %1942, %v1820
      %v1944 = vpop.permute.xlu0 %1943
      %1946 = vset.pattern.permute.xlu0 2
      %1947 = vperm.xlu0 %1946, %v1821
      %v1948 = vpop.permute.xlu0 %1947
      %v1950 = vlaneseq
      %v1951 = vshrl.u32 %v1950, 7
      %v1952 = vsub.s32 2, %v1951
      %v1953 = vrot.slane %v1801, %v1952
      %v1954 = vmul.f32 %v1944, %v1953
      %v1955 = vmul.f32 %v1948, %v1953
      %v1956 = vadd.f32 %v1940, %v1954
      %v1957 = vadd.f32 %v1941, %v1955
      %1958 = vset.pattern.permute.xlu0 2
      %1959 = vperm.xlu0 %1958, %v1822
      %v1960 = vpop.permute.xlu0 %1959
      %1962 = vset.pattern.permute.xlu0 2
      %1963 = vperm.xlu0 %1962, %v1823
      %v1964 = vpop.permute.xlu0 %1963
      %v1966 = vmul.f32 %v1960, %v1956
      %v1967 = vmul.f32 %v1964, %v1957
      %v1968 = vadd.f32 %v1966, %v1967
      %v1969 = vrot.slane %v1968, 4
      %v1970 = vadd.f32 %v1968, %v1969
      %v1971 = vrot.slane %v1970, 2
      %v1972 = vadd.f32 %v1970, %v1971
      %v1973 = vrot.slane %v1972, 1
      %v1974 = vadd.f32 %v1972, %v1973
      %v1975 = vlaneseq
      %v1976 = vshrl.u32 %v1975, 7
      %v1977 = vsub.s32 3, %v1976
      %v1978 = vrot.slane %v1799, %v1977
      %v1979 = vmul.f32 %v1978, %v1384
      %v1980 = vmul.f32 %v1978, %v1385
      %v1981 = vmul.f32 %v1979, 1.442695
      %v1982 = vpow.pop %v1981
      %v1983 = vmul.f32 %v1980, 1.442695
      %v1984 = vpow.pop %v1983
      %v1985 = vmul.f32 %v1982, %v1956
      %v1986 = vmul.f32 %v1984, %v1957
      %1987 = vset.pattern.permute.xlu0 3
      %1988 = vperm.xlu0 %1987, %v1820
      %v1989 = vpop.permute.xlu0 %1988
      %1991 = vset.pattern.permute.xlu0 3
      %1992 = vperm.xlu0 %1991, %v1821
      %v1993 = vpop.permute.xlu0 %1992
      %v1995 = vlaneseq
      %v1996 = vshrl.u32 %v1995, 7
      %v1997 = vsub.s32 3, %v1996
      %v1998 = vrot.slane %v1801, %v1997
      %v1999 = vmul.f32 %v1989, %v1998
      %v2000 = vmul.f32 %v1993, %v1998
      %v2001 = vadd.f32 %v1985, %v1999
      %v2002 = vadd.f32 %v1986, %v2000
      %2003 = vset.pattern.permute.xlu0 3
      %2004 = vperm.xlu0 %2003, %v1822
      %v2005 = vpop.permute.xlu0 %2004
      %2007 = vset.pattern.permute.xlu0 3
      %2008 = vperm.xlu0 %2007, %v1823
      %v2009 = vpop.permute.xlu0 %2008
      %v2011 = vmul.f32 %v2005, %v2001
      %v2012 = vmul.f32 %v2009, %v2002
      %v2013 = vadd.f32 %v2011, %v2012
      %v2014 = vrot.slane %v2013, 4
      %v2015 = vadd.f32 %v2013, %v2014
      %v2016 = vrot.slane %v2015, 2
      %v2017 = vadd.f32 %v2015, %v2016
      %v2018 = vrot.slane %v2017, 1
      %v2019 = vadd.f32 %v2017, %v2018
      %v2020 = vlaneseq
      %v2021 = vshrl.u32 %v2020, 7
      %v2022 = vsub.s32 4, %v2021
      %v2023 = vrot.slane %v1799, %v2022
      %v2024 = vmul.f32 %v2023, %v1384
      %v2025 = vmul.f32 %v2023, %v1385
      %v2026 = vmul.f32 %v2024, 1.442695
      %v2027 = vpow.pop %v2026
      %v2028 = vmul.f32 %v2025, 1.442695
      %v2029 = vpow.pop %v2028
      %v2030 = vmul.f32 %v2027, %v2001
      %v2031 = vmul.f32 %v2029, %v2002
      %2032 = vset.pattern.permute.xlu0 4
      %2033 = vperm.xlu0 %2032, %v1820
      %v2034 = vpop.permute.xlu0 %2033
      %2036 = vset.pattern.permute.xlu0 4
      %2037 = vperm.xlu0 %2036, %v1821
      %v2038 = vpop.permute.xlu0 %2037
      %v2040 = vlaneseq
      %v2041 = vshrl.u32 %v2040, 7
      %v2042 = vsub.s32 4, %v2041
      %v2043 = vrot.slane %v1801, %v2042
      %v2044 = vmul.f32 %v2034, %v2043
      %v2045 = vmul.f32 %v2038, %v2043
      %v2046 = vadd.f32 %v2030, %v2044
      %v2047 = vadd.f32 %v2031, %v2045
      %2048 = vset.pattern.permute.xlu0 4
      %2049 = vperm.xlu0 %2048, %v1822
      %v2050 = vpop.permute.xlu0 %2049
      %2052 = vset.pattern.permute.xlu0 4
      %2053 = vperm.xlu0 %2052, %v1823
      %v2054 = vpop.permute.xlu0 %2053
      %v2056 = vmul.f32 %v2050, %v2046
      %v2057 = vmul.f32 %v2054, %v2047
      %v2058 = vadd.f32 %v2056, %v2057
      %v2059 = vrot.slane %v2058, 4
      %v2060 = vadd.f32 %v2058, %v2059
      %v2061 = vrot.slane %v2060, 2
      %v2062 = vadd.f32 %v2060, %v2061
      %v2063 = vrot.slane %v2062, 1
      %v2064 = vadd.f32 %v2062, %v2063
      %v2065 = vlaneseq
      %v2066 = vshrl.u32 %v2065, 7
      %v2067 = vsub.s32 5, %v2066
      %v2068 = vrot.slane %v1799, %v2067
      %v2069 = vmul.f32 %v2068, %v1384
      %v2070 = vmul.f32 %v2068, %v1385
      %v2071 = vmul.f32 %v2069, 1.442695
      %v2072 = vpow.pop %v2071
      %v2073 = vmul.f32 %v2070, 1.442695
      %v2074 = vpow.pop %v2073
      %v2075 = vmul.f32 %v2072, %v2046
      %v2076 = vmul.f32 %v2074, %v2047
      %2077 = vset.pattern.permute.xlu0 5
      %2078 = vperm.xlu0 %2077, %v1820
      %v2079 = vpop.permute.xlu0 %2078
      %2081 = vset.pattern.permute.xlu0 5
      %2082 = vperm.xlu0 %2081, %v1821
      %v2083 = vpop.permute.xlu0 %2082
      %v2085 = vlaneseq
      %v2086 = vshrl.u32 %v2085, 7
      %v2087 = vsub.s32 5, %v2086
      %v2088 = vrot.slane %v1801, %v2087
      %v2089 = vmul.f32 %v2079, %v2088
      %v2090 = vmul.f32 %v2083, %v2088
      %v2091 = vadd.f32 %v2075, %v2089
      %v2092 = vadd.f32 %v2076, %v2090
      %2093 = vset.pattern.permute.xlu0 5
      %2094 = vperm.xlu0 %2093, %v1822
      %v2095 = vpop.permute.xlu0 %2094
      %2097 = vset.pattern.permute.xlu0 5
      %2098 = vperm.xlu0 %2097, %v1823
      %v2099 = vpop.permute.xlu0 %2098
      %v2101 = vmul.f32 %v2095, %v2091
      %v2102 = vmul.f32 %v2099, %v2092
      %v2103 = vadd.f32 %v2101, %v2102
      %v2104 = vrot.slane %v2103, 4
      %v2105 = vadd.f32 %v2103, %v2104
      %v2106 = vrot.slane %v2105, 2
      %v2107 = vadd.f32 %v2105, %v2106
      %v2108 = vrot.slane %v2107, 1
      %v2109 = vadd.f32 %v2107, %v2108
      %v2110 = vlaneseq
      %v2111 = vshrl.u32 %v2110, 7
      %v2112 = vsub.s32 6, %v2111
      %v2113 = vrot.slane %v1799, %v2112
      %v2114 = vmul.f32 %v2113, %v1384
      %v2115 = vmul.f32 %v2113, %v1385
      %v2116 = vmul.f32 %v2114, 1.442695
      %v2117 = vpow.pop %v2116
      %v2118 = vmul.f32 %v2115, 1.442695
      %v2119 = vpow.pop %v2118
      %v2120 = vmul.f32 %v2117, %v2091
      %v2121 = vmul.f32 %v2119, %v2092
      %2122 = vset.pattern.permute.xlu0 6
      %2123 = vperm.xlu0 %2122, %v1820
      %v2124 = vpop.permute.xlu0 %2123
      %2126 = vset.pattern.permute.xlu0 6
      %2127 = vperm.xlu0 %2126, %v1821
      %v2128 = vpop.permute.xlu0 %2127
      %v2130 = vlaneseq
      %v2131 = vshrl.u32 %v2130, 7
      %v2132 = vsub.s32 6, %v2131
      %v2133 = vrot.slane %v1801, %v2132
      %v2134 = vmul.f32 %v2124, %v2133
      %v2135 = vmul.f32 %v2128, %v2133
      %v2136 = vadd.f32 %v2120, %v2134
      %v2137 = vadd.f32 %v2121, %v2135
      %2138 = vset.pattern.permute.xlu0 6
      %2139 = vperm.xlu0 %2138, %v1822
      %v2140 = vpop.permute.xlu0 %2139
      %2142 = vset.pattern.permute.xlu0 6
      %2143 = vperm.xlu0 %2142, %v1823
      %v2144 = vpop.permute.xlu0 %2143
      %v2146 = vmul.f32 %v2140, %v2136
      %v2147 = vmul.f32 %v2144, %v2137
      %v2148 = vadd.f32 %v2146, %v2147
      %v2149 = vrot.slane %v2148, 4
      %v2150 = vadd.f32 %v2148, %v2149
      %v2151 = vrot.slane %v2150, 2
      %v2152 = vadd.f32 %v2150, %v2151
      %v2153 = vrot.slane %v2152, 1
      %v2154 = vadd.f32 %v2152, %v2153
      %v2155 = vlaneseq
      %v2156 = vshrl.u32 %v2155, 7
      %v2157 = vsub.s32 7, %v2156
      %v2158 = vrot.slane %v1799, %v2157
      %v2159 = vmul.f32 %v2158, %v1384
      %v2160 = vmul.f32 %v2158, %v1385
      %v2161 = vmul.f32 %v2159, 1.442695
      %v2162 = vpow.pop %v2161
      %v2163 = vmul.f32 %v2160, 1.442695
      %v2164 = vpow.pop %v2163
      %v2165 = vmul.f32 %v2162, %v2136
      %v2166 = vmul.f32 %v2164, %v2137
      %2167 = vset.pattern.permute.xlu0 7
      %2168 = vperm.xlu0 %2167, %v1820
      %v2169 = vpop.permute.xlu0 %2168
      %2171 = vset.pattern.permute.xlu0 7
      %2172 = vperm.xlu0 %2171, %v1821
      %v2173 = vpop.permute.xlu0 %2172
      %v2175 = vlaneseq
      %v2176 = vshrl.u32 %v2175, 7
      %v2177 = vsub.s32 7, %v2176
      %v2178 = vrot.slane %v1801, %v2177
      %v2179 = vmul.f32 %v2169, %v2178
      %v2180 = vmul.f32 %v2173, %v2178
      %v2181 = vadd.f32 %v2165, %v2179
      %v2182 = vadd.f32 %v2166, %v2180
      %2183 = vset.pattern.permute.xlu0 7
      %2184 = vperm.xlu0 %2183, %v1822
      %v2185 = vpop.permute.xlu0 %2184
      %2187 = vset.pattern.permute.xlu0 7
      %2188 = vperm.xlu0 %2187, %v1823
      %v2189 = vpop.permute.xlu0 %2188
      %v2191 = vmul.f32 %v2185, %v2181
      %v2192 = vmul.f32 %v2189, %v2182
      %v2193 = vadd.f32 %v2191, %v2192
      %v2194 = vrot.slane %v2193, 4
      %v2195 = vadd.f32 %v2193, %v2194
      %v2196 = vrot.slane %v2195, 2
      %v2197 = vadd.f32 %v2195, %v2196
      %v2198 = vrot.slane %v2197, 1
      %v2199 = vadd.f32 %v2197, %v2198
      %v2200 = vsel %vm1787, %v1884, %v1929
      %v2201 = vsel %vm1789, %v2200, %v1974
      %v2202 = vsel %vm1342, %v2201, %v2019
      %v2203 = vsel %vm1792, %v2202, %v2064
      %v2204 = vsel %vm739, %v2203, %v2109
      %v2205 = vsel %vm682, %v2204, %v2154
      %v2206 = vsel %vm623, %v2205, %v2199
      %s2207 = scalar_lea.vmem [#allocation7], 8
      %2208 = vst [vmem:[%s2207] sm:$0xff] %v2206
      %s2209 = scalar_lea.vmem [#allocation4], 16
      %v2210 = vld [vmem:[%s2209] sm:$0xff]
      %s2211 = scalar_lea.vmem [#allocation5], 16
      %v2212 = vld [vmem:[%s2211] sm:$0xff]
      %s2213 = scalar_lea.vmem [#allocation6], 16
      %v2214 = vld [vmem:[%s2213] sm:$0xff]
      %2215 = vxpose.xlu0.b32.start [1/16] %v2214, 128
      %2216 = vxpose.xlu0.b32.cont [2/16] 0.0, 128
      %2217 = vxpose.xlu0.b32.cont [3/16] 0.0, 128
      %2218 = vxpose.xlu0.b32.cont [4/16] 0.0, 128
      %2219 = vxpose.xlu0.b32.cont [5/16] 0.0, 128
      %2220 = vxpose.xlu0.b32.cont [6/16] 0.0, 128
      %2221 = vxpose.xlu0.b32.cont [7/16] 0.0, 128
      %2222 = vxpose.xlu0.b32.cont [8/16] 0.0, 128
      %2223 = vxpose.xlu0.b32.cont [9/16] 0.0, 128
      %2224 = vxpose.xlu0.b32.cont [10/16] 0.0, 128
      %2225 = vxpose.xlu0.b32.cont [11/16] 0.0, 128
      %2226 = vxpose.xlu0.b32.cont [12/16] 0.0, 128
      %2227 = vxpose.xlu0.b32.cont [13/16] 0.0, 128
      %2228 = vxpose.xlu0.b32.cont [14/16] 0.0, 128
      %2229 = vxpose.xlu0.b32.cont [15/16] 0.0, 128
      %2230 = vxpose.xlu0.b32.end [16/16] 0.0, 128
      %v2231 = vpop.trf.xlu0
      %v2232 = vpop.trf.xlu0
      %v2233 = vpop.trf.xlu0
      %v2234 = vpop.trf.xlu0
      %v2235 = vpop.trf.xlu0
      %v2236 = vpop.trf.xlu0
      %v2237 = vpop.trf.xlu0
      %v2238 = vpop.trf.xlu0
      %v2239 = vpop.trf.xlu0
      %v2240 = vpop.trf.xlu0
      %v2241 = vpop.trf.xlu0
      %v2242 = vpop.trf.xlu0
      %v2243 = vpop.trf.xlu0
      %v2244 = vpop.trf.xlu0
      %v2245 = vpop.trf.xlu0
      %v2246 = vpop.trf.xlu0
      %v2247 = vlaneseq
      %v2248 = vshrl.u32 %v2247, 7
      %v2249 = vsub.s32 0, %v2248
      %v2250 = vrot.slane %v2210, %v2249
      %v2251 = vmul.f32 %v2250, %v1384
      %v2252 = vmul.f32 %v2250, %v1385
      %v2253 = vmul.f32 %v2251, 1.442695
      %v2254 = vpow.pop %v2253
      %v2255 = vmul.f32 %v2252, 1.442695
      %v2256 = vpow.pop %v2255
      %v2257 = vmul.f32 %v2254, %v2181
      %v2258 = vmul.f32 %v2256, %v2182
      %2260 = vset.pattern.permute.xlu0 0
      %2261 = vperm.xlu0 %2260, %v2231
      %v2262 = vpop.permute.xlu0 %2261
      %2265 = vset.pattern.permute.xlu0 0
      %2266 = vperm.xlu0 %2265, %v2232
      %v2267 = vpop.permute.xlu0 %2266
      %v2269 = vlaneseq
      %v2270 = vshrl.u32 %v2269, 7
      %v2271 = vsub.s32 0, %v2270
      %v2272 = vrot.slane %v2212, %v2271
      %v2273 = vmul.f32 %v2262, %v2272
      %v2274 = vmul.f32 %v2267, %v2272
      %v2275 = vadd.f32 %v2257, %v2273
      %v2276 = vadd.f32 %v2258, %v2274
      %2278 = vset.pattern.permute.xlu0 0
      %2279 = vperm.xlu0 %2278, %v2233
      %v2280 = vpop.permute.xlu0 %2279
      %2283 = vset.pattern.permute.xlu0 0
      %2284 = vperm.xlu0 %2283, %v2234
      %v2285 = vpop.permute.xlu0 %2284
      %v2287 = vmul.f32 %v2280, %v2275
      %v2288 = vmul.f32 %v2285, %v2276
      %v2289 = vadd.f32 %v2287, %v2288
      %v2290 = vrot.slane %v2289, 4
      %v2291 = vadd.f32 %v2289, %v2290
      %v2292 = vrot.slane %v2291, 2
      %v2293 = vadd.f32 %v2291, %v2292
      %v2294 = vrot.slane %v2293, 1
      %v2295 = vadd.f32 %v2293, %v2294
      %v2296 = vlaneseq
      %v2297 = vshrl.u32 %v2296, 7
      %v2298 = vsub.s32 1, %v2297
      %v2299 = vrot.slane %v2210, %v2298
      %v2300 = vmul.f32 %v2299, %v1384
      %v2301 = vmul.f32 %v2299, %v1385
      %v2302 = vmul.f32 %v2300, 1.442695
      %v2303 = vpow.pop %v2302
      %v2304 = vmul.f32 %v2301, 1.442695
      %v2305 = vpow.pop %v2304
      %v2306 = vmul.f32 %v2303, %v2275
      %v2307 = vmul.f32 %v2305, %v2276
      %2308 = vset.pattern.permute.xlu0 1
      %2309 = vperm.xlu0 %2308, %v2231
      %v2310 = vpop.permute.xlu0 %2309
      %2312 = vset.pattern.permute.xlu0 1
      %2313 = vperm.xlu0 %2312, %v2232
      %v2314 = vpop.permute.xlu0 %2313
      %v2316 = vlaneseq
      %v2317 = vshrl.u32 %v2316, 7
      %v2318 = vsub.s32 1, %v2317
      %v2319 = vrot.slane %v2212, %v2318
      %v2320 = vmul.f32 %v2310, %v2319
      %v2321 = vmul.f32 %v2314, %v2319
      %v2322 = vadd.f32 %v2306, %v2320
      %v2323 = vadd.f32 %v2307, %v2321
      %2324 = vset.pattern.permute.xlu0 1
      %2325 = vperm.xlu0 %2324, %v2233
      %v2326 = vpop.permute.xlu0 %2325
      %2328 = vset.pattern.permute.xlu0 1
      %2329 = vperm.xlu0 %2328, %v2234
      %v2330 = vpop.permute.xlu0 %2329
      %v2332 = vmul.f32 %v2326, %v2322
      %v2333 = vmul.f32 %v2330, %v2323
      %v2334 = vadd.f32 %v2332, %v2333
      %v2335 = vrot.slane %v2334, 4
      %v2336 = vadd.f32 %v2334, %v2335
      %v2337 = vrot.slane %v2336, 2
      %v2338 = vadd.f32 %v2336, %v2337
      %v2339 = vrot.slane %v2338, 1
      %v2340 = vadd.f32 %v2338, %v2339
      %v2341 = vlaneseq
      %v2342 = vshrl.u32 %v2341, 7
      %v2343 = vsub.s32 2, %v2342
      %v2344 = vrot.slane %v2210, %v2343
      %v2345 = vmul.f32 %v2344, %v1384
      %v2346 = vmul.f32 %v2344, %v1385
      %v2347 = vmul.f32 %v2345, 1.442695
      %v2348 = vpow.pop %v2347
      %v2349 = vmul.f32 %v2346, 1.442695
      %v2350 = vpow.pop %v2349
      %v2351 = vmul.f32 %v2348, %v2322
      %v2352 = vmul.f32 %v2350, %v2323
      %2353 = vset.pattern.permute.xlu0 2
      %2354 = vperm.xlu0 %2353, %v2231
      %v2355 = vpop.permute.xlu0 %2354
      %2357 = vset.pattern.permute.xlu0 2
      %2358 = vperm.xlu0 %2357, %v2232
      %v2359 = vpop.permute.xlu0 %2358
      %v2361 = vlaneseq
      %v2362 = vshrl.u32 %v2361, 7
      %v2363 = vsub.s32 2, %v2362
      %v2364 = vrot.slane %v2212, %v2363
      %v2365 = vmul.f32 %v2355, %v2364
      %v2366 = vmul.f32 %v2359, %v2364
      %v2367 = vadd.f32 %v2351, %v2365
      %v2368 = vadd.f32 %v2352, %v2366
      %2369 = vset.pattern.permute.xlu0 2
      %2370 = vperm.xlu0 %2369, %v2233
      %v2371 = vpop.permute.xlu0 %2370
      %2373 = vset.pattern.permute.xlu0 2
      %2374 = vperm.xlu0 %2373, %v2234
      %v2375 = vpop.permute.xlu0 %2374
      %v2377 = vmul.f32 %v2371, %v2367
      %v2378 = vmul.f32 %v2375, %v2368
      %v2379 = vadd.f32 %v2377, %v2378
      %v2380 = vrot.slane %v2379, 4
      %v2381 = vadd.f32 %v2379, %v2380
      %v2382 = vrot.slane %v2381, 2
      %v2383 = vadd.f32 %v2381, %v2382
      %v2384 = vrot.slane %v2383, 1
      %v2385 = vadd.f32 %v2383, %v2384
      %v2386 = vlaneseq
      %v2387 = vshrl.u32 %v2386, 7
      %v2388 = vsub.s32 3, %v2387
      %v2389 = vrot.slane %v2210, %v2388
      %v2390 = vmul.f32 %v2389, %v1384
      %v2391 = vmul.f32 %v2389, %v1385
      %v2392 = vmul.f32 %v2390, 1.442695
      %v2393 = vpow.pop %v2392
      %v2394 = vmul.f32 %v2391, 1.442695
      %v2395 = vpow.pop %v2394
      %v2396 = vmul.f32 %v2393, %v2367
      %v2397 = vmul.f32 %v2395, %v2368
      %2398 = vset.pattern.permute.xlu0 3
      %2399 = vperm.xlu0 %2398, %v2231
      %v2400 = vpop.permute.xlu0 %2399
      %2402 = vset.pattern.permute.xlu0 3
      %2403 = vperm.xlu0 %2402, %v2232
      %v2404 = vpop.permute.xlu0 %2403
      %v2406 = vlaneseq
      %v2407 = vshrl.u32 %v2406, 7
      %v2408 = vsub.s32 3, %v2407
      %v2409 = vrot.slane %v2212, %v2408
      %v2410 = vmul.f32 %v2400, %v2409
      %v2411 = vmul.f32 %v2404, %v2409
      %v2412 = vadd.f32 %v2396, %v2410
      %v2413 = vadd.f32 %v2397, %v2411
      %2414 = vset.pattern.permute.xlu0 3
      %2415 = vperm.xlu0 %2414, %v2233
      %v2416 = vpop.permute.xlu0 %2415
      %2418 = vset.pattern.permute.xlu0 3
      %2419 = vperm.xlu0 %2418, %v2234
      %v2420 = vpop.permute.xlu0 %2419
      %v2422 = vmul.f32 %v2416, %v2412
      %v2423 = vmul.f32 %v2420, %v2413
      %v2424 = vadd.f32 %v2422, %v2423
      %v2425 = vrot.slane %v2424, 4
      %v2426 = vadd.f32 %v2424, %v2425
      %v2427 = vrot.slane %v2426, 2
      %v2428 = vadd.f32 %v2426, %v2427
      %v2429 = vrot.slane %v2428, 1
      %v2430 = vadd.f32 %v2428, %v2429
      %v2431 = vlaneseq
      %v2432 = vshrl.u32 %v2431, 7
      %v2433 = vsub.s32 4, %v2432
      %v2434 = vrot.slane %v2210, %v2433
      %v2435 = vmul.f32 %v2434, %v1384
      %v2436 = vmul.f32 %v2434, %v1385
      %v2437 = vmul.f32 %v2435, 1.442695
      %v2438 = vpow.pop %v2437
      %v2439 = vmul.f32 %v2436, 1.442695
      %v2440 = vpow.pop %v2439
      %v2441 = vmul.f32 %v2438, %v2412
      %v2442 = vmul.f32 %v2440, %v2413
      %2443 = vset.pattern.permute.xlu0 4
      %2444 = vperm.xlu0 %2443, %v2231
      %v2445 = vpop.permute.xlu0 %2444
      %2447 = vset.pattern.permute.xlu0 4
      %2448 = vperm.xlu0 %2447, %v2232
      %v2449 = vpop.permute.xlu0 %2448
      %v2451 = vlaneseq
      %v2452 = vshrl.u32 %v2451, 7
      %v2453 = vsub.s32 4, %v2452
      %v2454 = vrot.slane %v2212, %v2453
      %v2455 = vmul.f32 %v2445, %v2454
      %v2456 = vmul.f32 %v2449, %v2454
      %v2457 = vadd.f32 %v2441, %v2455
      %v2458 = vadd.f32 %v2442, %v2456
      %2459 = vset.pattern.permute.xlu0 4
      %2460 = vperm.xlu0 %2459, %v2233
      %v2461 = vpop.permute.xlu0 %2460
      %2463 = vset.pattern.permute.xlu0 4
      %2464 = vperm.xlu0 %2463, %v2234
      %v2465 = vpop.permute.xlu0 %2464
      %v2467 = vmul.f32 %v2461, %v2457
      %v2468 = vmul.f32 %v2465, %v2458
      %v2469 = vadd.f32 %v2467, %v2468
      %v2470 = vrot.slane %v2469, 4
      %v2471 = vadd.f32 %v2469, %v2470
      %v2472 = vrot.slane %v2471, 2
      %v2473 = vadd.f32 %v2471, %v2472
      %v2474 = vrot.slane %v2473, 1
      %v2475 = vadd.f32 %v2473, %v2474
      %v2476 = vlaneseq
      %v2477 = vshrl.u32 %v2476, 7
      %v2478 = vsub.s32 5, %v2477
      %v2479 = vrot.slane %v2210, %v2478
      %v2480 = vmul.f32 %v2479, %v1384
      %v2481 = vmul.f32 %v2479, %v1385
      %v2482 = vmul.f32 %v2480, 1.442695
      %v2483 = vpow.pop %v2482
      %v2484 = vmul.f32 %v2481, 1.442695
      %v2485 = vpow.pop %v2484
      %v2486 = vmul.f32 %v2483, %v2457
      %v2487 = vmul.f32 %v2485, %v2458
      %2488 = vset.pattern.permute.xlu0 5
      %2489 = vperm.xlu0 %2488, %v2231
      %v2490 = vpop.permute.xlu0 %2489
      %2492 = vset.pattern.permute.xlu0 5
      %2493 = vperm.xlu0 %2492, %v2232
      %v2494 = vpop.permute.xlu0 %2493
      %v2496 = vlaneseq
      %v2497 = vshrl.u32 %v2496, 7
      %v2498 = vsub.s32 5, %v2497
      %v2499 = vrot.slane %v2212, %v2498
      %v2500 = vmul.f32 %v2490, %v2499
      %v2501 = vmul.f32 %v2494, %v2499
      %v2502 = vadd.f32 %v2486, %v2500
      %v2503 = vadd.f32 %v2487, %v2501
      %2504 = vset.pattern.permute.xlu0 5
      %2505 = vperm.xlu0 %2504, %v2233
      %v2506 = vpop.permute.xlu0 %2505
      %2508 = vset.pattern.permute.xlu0 5
      %2509 = vperm.xlu0 %2508, %v2234
      %v2510 = vpop.permute.xlu0 %2509
      %v2512 = vmul.f32 %v2506, %v2502
      %v2513 = vmul.f32 %v2510, %v2503
      %v2514 = vadd.f32 %v2512, %v2513
      %v2515 = vrot.slane %v2514, 4
      %v2516 = vadd.f32 %v2514, %v2515
      %v2517 = vrot.slane %v2516, 2
      %v2518 = vadd.f32 %v2516, %v2517
      %v2519 = vrot.slane %v2518, 1
      %v2520 = vadd.f32 %v2518, %v2519
      %v2521 = vlaneseq
      %v2522 = vshrl.u32 %v2521, 7
      %v2523 = vsub.s32 6, %v2522
      %v2524 = vrot.slane %v2210, %v2523
      %v2525 = vmul.f32 %v2524, %v1384
      %v2526 = vmul.f32 %v2524, %v1385
      %v2527 = vmul.f32 %v2525, 1.442695
      %v2528 = vpow.pop %v2527
      %v2529 = vmul.f32 %v2526, 1.442695
      %v2530 = vpow.pop %v2529
      %v2531 = vmul.f32 %v2528, %v2502
      %v2532 = vmul.f32 %v2530, %v2503
      %2533 = vset.pattern.permute.xlu0 6
      %2534 = vperm.xlu0 %2533, %v2231
      %v2535 = vpop.permute.xlu0 %2534
      %2537 = vset.pattern.permute.xlu0 6
      %2538 = vperm.xlu0 %2537, %v2232
      %v2539 = vpop.permute.xlu0 %2538
      %v2541 = vlaneseq
      %v2542 = vshrl.u32 %v2541, 7
      %v2543 = vsub.s32 6, %v2542
      %v2544 = vrot.slane %v2212, %v2543
      %v2545 = vmul.f32 %v2535, %v2544
      %v2546 = vmul.f32 %v2539, %v2544
      %v2547 = vadd.f32 %v2531, %v2545
      %v2548 = vadd.f32 %v2532, %v2546
      %2549 = vset.pattern.permute.xlu0 6
      %2550 = vperm.xlu0 %2549, %v2233
      %v2551 = vpop.permute.xlu0 %2550
      %2553 = vset.pattern.permute.xlu0 6
      %2554 = vperm.xlu0 %2553, %v2234
      %v2555 = vpop.permute.xlu0 %2554
      %v2557 = vmul.f32 %v2551, %v2547
      %v2558 = vmul.f32 %v2555, %v2548
      %v2559 = vadd.f32 %v2557, %v2558
      %v2560 = vrot.slane %v2559, 4
      %v2561 = vadd.f32 %v2559, %v2560
      %v2562 = vrot.slane %v2561, 2
      %v2563 = vadd.f32 %v2561, %v2562
      %v2564 = vrot.slane %v2563, 1
      %v2565 = vadd.f32 %v2563, %v2564
      %v2566 = vlaneseq
      %v2567 = vshrl.u32 %v2566, 7
      %v2568 = vsub.s32 7, %v2567
      %v2569 = vrot.slane %v2210, %v2568
      %v2570 = vmul.f32 %v2569, %v1384
      %v2571 = vmul.f32 %v2569, %v1385
      %v2572 = vmul.f32 %v2570, 1.442695
      %v2573 = vpow.pop %v2572
      %v2574 = vmul.f32 %v2571, 1.442695
      %v2575 = vpow.pop %v2574
      %v2576 = vmul.f32 %v2573, %v2547
      %v2577 = vmul.f32 %v2575, %v2548
      %2578 = vset.pattern.permute.xlu0 7
      %2579 = vperm.xlu0 %2578, %v2231
      %v2580 = vpop.permute.xlu0 %2579
      %2582 = vset.pattern.permute.xlu0 7
      %2583 = vperm.xlu0 %2582, %v2232
      %v2584 = vpop.permute.xlu0 %2583
      %v2586 = vlaneseq
      %v2587 = vshrl.u32 %v2586, 7
      %v2588 = vsub.s32 7, %v2587
      %v2589 = vrot.slane %v2212, %v2588
      %v2590 = vmul.f32 %v2580, %v2589
      %v2591 = vmul.f32 %v2584, %v2589
      %v2592 = vadd.f32 %v2576, %v2590
      %v2593 = vadd.f32 %v2577, %v2591
      %2594 = vset.pattern.permute.xlu0 7
      %2595 = vperm.xlu0 %2594, %v2233
      %v2596 = vpop.permute.xlu0 %2595
      %2598 = vset.pattern.permute.xlu0 7
      %2599 = vperm.xlu0 %2598, %v2234
      %v2600 = vpop.permute.xlu0 %2599
      %v2602 = vmul.f32 %v2596, %v2592
      %v2603 = vmul.f32 %v2600, %v2593
      %v2604 = vadd.f32 %v2602, %v2603
      %v2605 = vrot.slane %v2604, 4
      %v2606 = vadd.f32 %v2604, %v2605
      %v2607 = vrot.slane %v2606, 2
      %v2608 = vadd.f32 %v2606, %v2607
      %v2609 = vrot.slane %v2608, 1
      %v2610 = vadd.f32 %v2608, %v2609
      %v2611 = vsel %vm1787, %v2295, %v2340
      %v2612 = vsel %vm1789, %v2611, %v2385
      %v2613 = vsel %vm1342, %v2612, %v2430
      %v2614 = vsel %vm1792, %v2613, %v2475
      %v2615 = vsel %vm739, %v2614, %v2520
      %v2616 = vsel %vm682, %v2615, %v2565
      %v2617 = vsel %vm623, %v2616, %v2610
      %s2618 = scalar_lea.vmem [#allocation7], 16
      %2619 = vst [vmem:[%s2618] sm:$0xff] %v2617
      %s2620 = scalar_lea.vmem [#allocation4], 24
      %v2621 = vld [vmem:[%s2620] sm:$0xff]
      %s2622 = scalar_lea.vmem [#allocation5], 24
      %v2623 = vld [vmem:[%s2622] sm:$0xff]
      %s2624 = scalar_lea.vmem [#allocation6], 24
      %v2625 = vld [vmem:[%s2624] sm:$0xff]
      %2626 = vxpose.xlu0.b32.start [1/16] %v2625, 128
      %2627 = vxpose.xlu0.b32.cont [2/16] 0.0, 128
      %2628 = vxpose.xlu0.b32.cont [3/16] 0.0, 128
      %2629 = vxpose.xlu0.b32.cont [4/16] 0.0, 128
      %2630 = vxpose.xlu0.b32.cont [5/16] 0.0, 128
      %2631 = vxpose.xlu0.b32.cont [6/16] 0.0, 128
      %2632 = vxpose.xlu0.b32.cont [7/16] 0.0, 128
      %2633 = vxpose.xlu0.b32.cont [8/16] 0.0, 128
      %2634 = vxpose.xlu0.b32.cont [9/16] 0.0, 128
      %2635 = vxpose.xlu0.b32.cont [10/16] 0.0, 128
      %2636 = vxpose.xlu0.b32.cont [11/16] 0.0, 128
      %2637 = vxpose.xlu0.b32.cont [12/16] 0.0, 128
      %2638 = vxpose.xlu0.b32.cont [13/16] 0.0, 128
      %2639 = vxpose.xlu0.b32.cont [14/16] 0.0, 128
      %2640 = vxpose.xlu0.b32.cont [15/16] 0.0, 128
      %2641 = vxpose.xlu0.b32.end [16/16] 0.0, 128
      %v2642 = vpop.trf.xlu0
      %v2643 = vpop.trf.xlu0
      %v2644 = vpop.trf.xlu0
      %v2645 = vpop.trf.xlu0
      %v2646 = vpop.trf.xlu0
      %v2647 = vpop.trf.xlu0
      %v2648 = vpop.trf.xlu0
      %v2649 = vpop.trf.xlu0
      %v2650 = vpop.trf.xlu0
      %v2651 = vpop.trf.xlu0
      %v2652 = vpop.trf.xlu0
      %v2653 = vpop.trf.xlu0
      %v2654 = vpop.trf.xlu0
      %v2655 = vpop.trf.xlu0
      %v2656 = vpop.trf.xlu0
      %v2657 = vpop.trf.xlu0
      %v2658 = vlaneseq
      %v2659 = vshrl.u32 %v2658, 7
      %v2660 = vsub.s32 0, %v2659
      %v2661 = vrot.slane %v2621, %v2660
      %v2662 = vmul.f32 %v2661, %v1384
      %v2663 = vmul.f32 %v2661, %v1385
      %v2664 = vmul.f32 %v2662, 1.442695
      %v2665 = vpow.pop %v2664
      %v2666 = vmul.f32 %v2663, 1.442695
      %v2667 = vpow.pop %v2666
      %v2668 = vmul.f32 %v2665, %v2592
      %v2669 = vmul.f32 %v2667, %v2593
      %2671 = vset.pattern.permute.xlu0 0
      %2672 = vperm.xlu0 %2671, %v2642
      %v2673 = vpop.permute.xlu0 %2672
      %2676 = vset.pattern.permute.xlu0 0
      %2677 = vperm.xlu0 %2676, %v2643
      %v2678 = vpop.permute.xlu0 %2677
      %v2680 = vlaneseq
      %v2681 = vshrl.u32 %v2680, 7
      %v2682 = vsub.s32 0, %v2681
      %v2683 = vrot.slane %v2623, %v2682
      %v2684 = vmul.f32 %v2673, %v2683
      %v2685 = vmul.f32 %v2678, %v2683
      %v2686 = vadd.f32 %v2668, %v2684
      %v2687 = vadd.f32 %v2669, %v2685
      %2689 = vset.pattern.permute.xlu0 0
      %2690 = vperm.xlu0 %2689, %v2644
      %v2691 = vpop.permute.xlu0 %2690
      %2694 = vset.pattern.permute.xlu0 0
      %2695 = vperm.xlu0 %2694, %v2645
      %v2696 = vpop.permute.xlu0 %2695
      %v2698 = vmul.f32 %v2691, %v2686
      %v2699 = vmul.f32 %v2696, %v2687
      %v2700 = vadd.f32 %v2698, %v2699
      %v2701 = vrot.slane %v2700, 4
      %v2702 = vadd.f32 %v2700, %v2701
      %v2703 = vrot.slane %v2702, 2
      %v2704 = vadd.f32 %v2702, %v2703
      %v2705 = vrot.slane %v2704, 1
      %v2706 = vadd.f32 %v2704, %v2705
      %v2707 = vlaneseq
      %v2708 = vshrl.u32 %v2707, 7
      %v2709 = vsub.s32 1, %v2708
      %v2710 = vrot.slane %v2621, %v2709
      %v2711 = vmul.f32 %v2710, %v1384
      %v2712 = vmul.f32 %v2710, %v1385
      %v2713 = vmul.f32 %v2711, 1.442695
      %v2714 = vpow.pop %v2713
      %v2715 = vmul.f32 %v2712, 1.442695
      %v2716 = vpow.pop %v2715
      %v2717 = vmul.f32 %v2714, %v2686
      %v2718 = vmul.f32 %v2716, %v2687
      %2719 = vset.pattern.permute.xlu0 1
      %2720 = vperm.xlu0 %2719, %v2642
      %v2721 = vpop.permute.xlu0 %2720
      %2723 = vset.pattern.permute.xlu0 1
      %2724 = vperm.xlu0 %2723, %v2643
      %v2725 = vpop.permute.xlu0 %2724
      %v2727 = vlaneseq
      %v2728 = vshrl.u32 %v2727, 7
      %v2729 = vsub.s32 1, %v2728
      %v2730 = vrot.slane %v2623, %v2729
      %v2731 = vmul.f32 %v2721, %v2730
      %v2732 = vmul.f32 %v2725, %v2730
      %v2733 = vadd.f32 %v2717, %v2731
      %v2734 = vadd.f32 %v2718, %v2732
      %2735 = vset.pattern.permute.xlu0 1
      %2736 = vperm.xlu0 %2735, %v2644
      %v2737 = vpop.permute.xlu0 %2736
      %2739 = vset.pattern.permute.xlu0 1
      %2740 = vperm.xlu0 %2739, %v2645
      %v2741 = vpop.permute.xlu0 %2740
      %v2743 = vmul.f32 %v2737, %v2733
      %v2744 = vmul.f32 %v2741, %v2734
      %v2745 = vadd.f32 %v2743, %v2744
      %v2746 = vrot.slane %v2745, 4
      %v2747 = vadd.f32 %v2745, %v2746
      %v2748 = vrot.slane %v2747, 2
      %v2749 = vadd.f32 %v2747, %v2748
      %v2750 = vrot.slane %v2749, 1
      %v2751 = vadd.f32 %v2749, %v2750
      %v2752 = vlaneseq
      %v2753 = vshrl.u32 %v2752, 7
      %v2754 = vsub.s32 2, %v2753
      %v2755 = vrot.slane %v2621, %v2754
      %v2756 = vmul.f32 %v2755, %v1384
      %v2757 = vmul.f32 %v2755, %v1385
      %v2758 = vmul.f32 %v2756, 1.442695
      %v2759 = vpow.pop %v2758
      %v2760 = vmul.f32 %v2757, 1.442695
      %v2761 = vpow.pop %v2760
      %v2762 = vmul.f32 %v2759, %v2733
      %v2763 = vmul.f32 %v2761, %v2734
      %2764 = vset.pattern.permute.xlu0 2
      %2765 = vperm.xlu0 %2764, %v2642
      %v2766 = vpop.permute.xlu0 %2765
      %2768 = vset.pattern.permute.xlu0 2
      %2769 = vperm.xlu0 %2768, %v2643
      %v2770 = vpop.permute.xlu0 %2769
      %v2772 = vlaneseq
      %v2773 = vshrl.u32 %v2772, 7
      %v2774 = vsub.s32 2, %v2773
      %v2775 = vrot.slane %v2623, %v2774
      %v2776 = vmul.f32 %v2766, %v2775
      %v2777 = vmul.f32 %v2770, %v2775
      %v2778 = vadd.f32 %v2762, %v2776
      %v2779 = vadd.f32 %v2763, %v2777
      %2780 = vset.pattern.permute.xlu0 2
      %2781 = vperm.xlu0 %2780, %v2644
      %v2782 = vpop.permute.xlu0 %2781
      %2784 = vset.pattern.permute.xlu0 2
      %2785 = vperm.xlu0 %2784, %v2645
      %v2786 = vpop.permute.xlu0 %2785
      %v2788 = vmul.f32 %v2782, %v2778
      %v2789 = vmul.f32 %v2786, %v2779
      %v2790 = vadd.f32 %v2788, %v2789
      %v2791 = vrot.slane %v2790, 4
      %v2792 = vadd.f32 %v2790, %v2791
      %v2793 = vrot.slane %v2792, 2
      %v2794 = vadd.f32 %v2792, %v2793
      %v2795 = vrot.slane %v2794, 1
      %v2796 = vadd.f32 %v2794, %v2795
      %v2797 = vlaneseq
      %v2798 = vshrl.u32 %v2797, 7
      %v2799 = vsub.s32 3, %v2798
      %v2800 = vrot.slane %v2621, %v2799
      %v2801 = vmul.f32 %v2800, %v1384
      %v2802 = vmul.f32 %v2800, %v1385
      %v2803 = vmul.f32 %v2801, 1.442695
      %v2804 = vpow.pop %v2803
      %v2805 = vmul.f32 %v2802, 1.442695
      %v2806 = vpow.pop %v2805
      %v2807 = vmul.f32 %v2804, %v2778
      %v2808 = vmul.f32 %v2806, %v2779
      %2809 = vset.pattern.permute.xlu0 3
      %2810 = vperm.xlu0 %2809, %v2642
      %v2811 = vpop.permute.xlu0 %2810
      %2813 = vset.pattern.permute.xlu0 3
      %2814 = vperm.xlu0 %2813, %v2643
      %v2815 = vpop.permute.xlu0 %2814
      %v2817 = vlaneseq
      %v2818 = vshrl.u32 %v2817, 7
      %v2819 = vsub.s32 3, %v2818
      %v2820 = vrot.slane %v2623, %v2819
      %v2821 = vmul.f32 %v2811, %v2820
      %v2822 = vmul.f32 %v2815, %v2820
      %v2823 = vadd.f32 %v2807, %v2821
      %v2824 = vadd.f32 %v2808, %v2822
      %2825 = vset.pattern.permute.xlu0 3
      %2826 = vperm.xlu0 %2825, %v2644
      %v2827 = vpop.permute.xlu0 %2826
      %2829 = vset.pattern.permute.xlu0 3
      %2830 = vperm.xlu0 %2829, %v2645
      %v2831 = vpop.permute.xlu0 %2830
      %v2833 = vmul.f32 %v2827, %v2823
      %v2834 = vmul.f32 %v2831, %v2824
      %v2835 = vadd.f32 %v2833, %v2834
      %v2836 = vrot.slane %v2835, 4
      %v2837 = vadd.f32 %v2835, %v2836
      %v2838 = vrot.slane %v2837, 2
      %v2839 = vadd.f32 %v2837, %v2838
      %v2840 = vrot.slane %v2839, 1
      %v2841 = vadd.f32 %v2839, %v2840
      %v2842 = vlaneseq
      %v2843 = vshrl.u32 %v2842, 7
      %v2844 = vsub.s32 4, %v2843
      %v2845 = vrot.slane %v2621, %v2844
      %v2846 = vmul.f32 %v2845, %v1384
      %v2847 = vmul.f32 %v2845, %v1385
      %v2848 = vmul.f32 %v2846, 1.442695
      %v2849 = vpow.pop %v2848
      %v2850 = vmul.f32 %v2847, 1.442695
      %v2851 = vpow.pop %v2850
      %v2852 = vmul.f32 %v2849, %v2823
      %v2853 = vmul.f32 %v2851, %v2824
      %2854 = vset.pattern.permute.xlu0 4
      %2855 = vperm.xlu0 %2854, %v2642
      %v2856 = vpop.permute.xlu0 %2855
      %2858 = vset.pattern.permute.xlu0 4
      %2859 = vperm.xlu0 %2858, %v2643
      %v2860 = vpop.permute.xlu0 %2859
      %v2862 = vlaneseq
      %v2863 = vshrl.u32 %v2862, 7
      %v2864 = vsub.s32 4, %v2863
      %v2865 = vrot.slane %v2623, %v2864
      %v2866 = vmul.f32 %v2856, %v2865
      %v2867 = vmul.f32 %v2860, %v2865
      %v2868 = vadd.f32 %v2852, %v2866
      %v2869 = vadd.f32 %v2853, %v2867
      %2870 = vset.pattern.permute.xlu0 4
      %2871 = vperm.xlu0 %2870, %v2644
      %v2872 = vpop.permute.xlu0 %2871
      %2874 = vset.pattern.permute.xlu0 4
      %2875 = vperm.xlu0 %2874, %v2645
      %v2876 = vpop.permute.xlu0 %2875
      %v2878 = vmul.f32 %v2872, %v2868
      %v2879 = vmul.f32 %v2876, %v2869
      %v2880 = vadd.f32 %v2878, %v2879
      %v2881 = vrot.slane %v2880, 4
      %v2882 = vadd.f32 %v2880, %v2881
      %v2883 = vrot.slane %v2882, 2
      %v2884 = vadd.f32 %v2882, %v2883
      %v2885 = vrot.slane %v2884, 1
      %v2886 = vadd.f32 %v2884, %v2885
      %v2887 = vlaneseq
      %v2888 = vshrl.u32 %v2887, 7
      %v2889 = vsub.s32 5, %v2888
      %v2890 = vrot.slane %v2621, %v2889
      %v2891 = vmul.f32 %v2890, %v1384
      %v2892 = vmul.f32 %v2890, %v1385
      %v2893 = vmul.f32 %v2891, 1.442695
      %v2894 = vpow.pop %v2893
      %v2895 = vmul.f32 %v2892, 1.442695
      %v2896 = vpow.pop %v2895
      %v2897 = vmul.f32 %v2894, %v2868
      %v2898 = vmul.f32 %v2896, %v2869
      %2899 = vset.pattern.permute.xlu0 5
      %2900 = vperm.xlu0 %2899, %v2642
      %v2901 = vpop.permute.xlu0 %2900
      %2903 = vset.pattern.permute.xlu0 5
      %2904 = vperm.xlu0 %2903, %v2643
      %v2905 = vpop.permute.xlu0 %2904
      %v2907 = vlaneseq
      %v2908 = vshrl.u32 %v2907, 7
      %v2909 = vsub.s32 5, %v2908
      %v2910 = vrot.slane %v2623, %v2909
      %v2911 = vmul.f32 %v2901, %v2910
      %v2912 = vmul.f32 %v2905, %v2910
      %v2913 = vadd.f32 %v2897, %v2911
      %v2914 = vadd.f32 %v2898, %v2912
      %2915 = vset.pattern.permute.xlu0 5
      %2916 = vperm.xlu0 %2915, %v2644
      %v2917 = vpop.permute.xlu0 %2916
      %2919 = vset.pattern.permute.xlu0 5
      %2920 = vperm.xlu0 %2919, %v2645
      %v2921 = vpop.permute.xlu0 %2920
      %v2923 = vmul.f32 %v2917, %v2913
      %v2924 = vmul.f32 %v2921, %v2914
      %v2925 = vadd.f32 %v2923, %v2924
      %v2926 = vrot.slane %v2925, 4
      %v2927 = vadd.f32 %v2925, %v2926
      %v2928 = vrot.slane %v2927, 2
      %v2929 = vadd.f32 %v2927, %v2928
      %v2930 = vrot.slane %v2929, 1
      %v2931 = vadd.f32 %v2929, %v2930
      %v2932 = vlaneseq
      %v2933 = vshrl.u32 %v2932, 7
      %v2934 = vsub.s32 6, %v2933
      %v2935 = vrot.slane %v2621, %v2934
      %v2936 = vmul.f32 %v2935, %v1384
      %v2937 = vmul.f32 %v2935, %v1385
      %v2938 = vmul.f32 %v2936, 1.442695
      %v2939 = vpow.pop %v2938
      %v2940 = vmul.f32 %v2937, 1.442695
      %v2941 = vpow.pop %v2940
      %v2942 = vmul.f32 %v2939, %v2913
      %v2943 = vmul.f32 %v2941, %v2914
      %2944 = vset.pattern.permute.xlu0 6
      %2945 = vperm.xlu0 %2944, %v2642
      %v2946 = vpop.permute.xlu0 %2945
      %2948 = vset.pattern.permute.xlu0 6
      %2949 = vperm.xlu0 %2948, %v2643
      %v2950 = vpop.permute.xlu0 %2949
      %v2952 = vlaneseq
      %v2953 = vshrl.u32 %v2952, 7
      %v2954 = vsub.s32 6, %v2953
      %v2955 = vrot.slane %v2623, %v2954
      %v2956 = vmul.f32 %v2946, %v2955
      %v2957 = vmul.f32 %v2950, %v2955
      %v2958 = vadd.f32 %v2942, %v2956
      %v2959 = vadd.f32 %v2943, %v2957
      %2960 = vset.pattern.permute.xlu0 6
      %2961 = vperm.xlu0 %2960, %v2644
      %v2962 = vpop.permute.xlu0 %2961
      %2964 = vset.pattern.permute.xlu0 6
      %2965 = vperm.xlu0 %2964, %v2645
      %v2966 = vpop.permute.xlu0 %2965
      %v2968 = vmul.f32 %v2962, %v2958
      %v2969 = vmul.f32 %v2966, %v2959
      %v2970 = vadd.f32 %v2968, %v2969
      %v2971 = vrot.slane %v2970, 4
      %v2972 = vadd.f32 %v2970, %v2971
      %v2973 = vrot.slane %v2972, 2
      %v2974 = vadd.f32 %v2972, %v2973
      %v2975 = vrot.slane %v2974, 1
      %v2976 = vadd.f32 %v2974, %v2975
      %v2977 = vlaneseq
      %v2978 = vshrl.u32 %v2977, 7
      %v2979 = vsub.s32 7, %v2978
      %v2980 = vrot.slane %v2621, %v2979
      %v2981 = vmul.f32 %v2980, %v1384
      %v2982 = vmul.f32 %v2980, %v1385
      %v2983 = vmul.f32 %v2981, 1.442695
      %v2984 = vpow.pop %v2983
      %v2985 = vmul.f32 %v2982, 1.442695
      %v2986 = vpow.pop %v2985
      %v2987 = vmul.f32 %v2984, %v2958
      %v2988 = vmul.f32 %v2986, %v2959
      %2989 = vset.pattern.permute.xlu0 7
      %2990 = vperm.xlu0 %2989, %v2642
      %v2991 = vpop.permute.xlu0 %2990
      %2993 = vset.pattern.permute.xlu0 7
      %2994 = vperm.xlu0 %2993, %v2643
      %v2995 = vpop.permute.xlu0 %2994
      %v2997 = vlaneseq
      %v2998 = vshrl.u32 %v2997, 7
      %v2999 = vsub.s32 7, %v2998
      %v3000 = vrot.slane %v2623, %v2999
      %v3001 = vmul.f32 %v2991, %v3000
      %v3002 = vmul.f32 %v2995, %v3000
      %v3003 = vadd.f32 %v2987, %v3001
      %v3004 = vadd.f32 %v2988, %v3002
      %3005 = vset.pattern.permute.xlu0 7
      %3006 = vperm.xlu0 %3005, %v2644
      %v3007 = vpop.permute.xlu0 %3006
      %3009 = vset.pattern.permute.xlu0 7
      %3010 = vperm.xlu0 %3009, %v2645
      %v3011 = vpop.permute.xlu0 %3010
      %v3013 = vmul.f32 %v3007, %v3003
      %v3014 = vmul.f32 %v3011, %v3004
      %v3015 = vadd.f32 %v3013, %v3014
      %v3016 = vrot.slane %v3015, 4
      %v3017 = vadd.f32 %v3015, %v3016
      %v3018 = vrot.slane %v3017, 2
      %v3019 = vadd.f32 %v3017, %v3018
      %v3020 = vrot.slane %v3019, 1
      %v3021 = vadd.f32 %v3019, %v3020
      %v3022 = vsel %vm1787, %v2706, %v2751
      %v3023 = vsel %vm1789, %v3022, %v2796
      %v3024 = vsel %vm1342, %v3023, %v2841
      %v3025 = vsel %vm1792, %v3024, %v2886
      %v3026 = vsel %vm739, %v3025, %v2931
      %v3027 = vsel %vm682, %v3026, %v2976
      %v3028 = vsel %vm623, %v3027, %v3021
      %s3029 = scalar_lea.vmem [#allocation7], 24
      %3030 = vst [vmem:[%s3029] sm:$0xff] %v3028
      %s3031 = scalar_lea.vmem [#allocation4], 32
      %v3032 = vld [vmem:[%s3031] sm:$0xff]
      %s3033 = scalar_lea.vmem [#allocation5], 32
      %v3034 = vld [vmem:[%s3033] sm:$0xff]
      %s3035 = scalar_lea.vmem [#allocation6], 32
      %v3036 = vld [vmem:[%s3035] sm:$0xff]
      %3037 = vxpose.xlu0.b32.start [1/16] %v3036, 128
      %3038 = vxpose.xlu0.b32.cont [2/16] 0.0, 128
      %3039 = vxpose.xlu0.b32.cont [3/16] 0.0, 128
      %3040 = vxpose.xlu0.b32.cont [4/16] 0.0, 128
      %3041 = vxpose.xlu0.b32.cont [5/16] 0.0, 128
      %3042 = vxpose.xlu0.b32.cont [6/16] 0.0, 128
      %3043 = vxpose.xlu0.b32.cont [7/16] 0.0, 128
      %3044 = vxpose.xlu0.b32.cont [8/16] 0.0, 128
      %3045 = vxpose.xlu0.b32.cont [9/16] 0.0, 128
      %3046 = vxpose.xlu0.b32.cont [10/16] 0.0, 128
      %3047 = vxpose.xlu0.b32.cont [11/16] 0.0, 128
      %3048 = vxpose.xlu0.b32.cont [12/16] 0.0, 128
      %3049 = vxpose.xlu0.b32.cont [13/16] 0.0, 128
      %3050 = vxpose.xlu0.b32.cont [14/16] 0.0, 128
      %3051 = vxpose.xlu0.b32.cont [15/16] 0.0, 128
      %3052 = vxpose.xlu0.b32.end [16/16] 0.0, 128
      %v3053 = vpop.trf.xlu0
      %v3054 = vpop.trf.xlu0
      %v3055 = vpop.trf.xlu0
      %v3056 = vpop.trf.xlu0
      %v3057 = vpop.trf.xlu0
      %v3058 = vpop.trf.xlu0
      %v3059 = vpop.trf.xlu0
      %v3060 = vpop.trf.xlu0
      %v3061 = vpop.trf.xlu0
      %v3062 = vpop.trf.xlu0
      %v3063 = vpop.trf.xlu0
      %v3064 = vpop.trf.xlu0
      %v3065 = vpop.trf.xlu0
      %v3066 = vpop.trf.xlu0
      %v3067 = vpop.trf.xlu0
      %v3068 = vpop.trf.xlu0
      %v3069 = vlaneseq
      %v3070 = vshrl.u32 %v3069, 7
      %v3071 = vsub.s32 0, %v3070
      %v3072 = vrot.slane %v3032, %v3071
      %v3073 = vmul.f32 %v3072, %v1384
      %v3074 = vmul.f32 %v3072, %v1385
      %v3075 = vmul.f32 %v3073, 1.442695
      %v3076 = vpow.pop %v3075
      %v3077 = vmul.f32 %v3074, 1.442695
      %v3078 = vpow.pop %v3077
      %v3079 = vmul.f32 %v3076, %v3003
      %v3080 = vmul.f32 %v3078, %v3004
      %3082 = vset.pattern.permute.xlu0 0
      %3083 = vperm.xlu0 %3082, %v3053
      %v3084 = vpop.permute.xlu0 %3083
      %3087 = vset.pattern.permute.xlu0 0
      %3088 = vperm.xlu0 %3087, %v3054
      %v3089 = vpop.permute.xlu0 %3088
      %v3091 = vlaneseq
      %v3092 = vshrl.u32 %v3091, 7
      %v3093 = vsub.s32 0, %v3092
      %v3094 = vrot.slane %v3034, %v3093
      %v3095 = vmul.f32 %v3084, %v3094
      %v3096 = vmul.f32 %v3089, %v3094
      %v3097 = vadd.f32 %v3079, %v3095
      %v3098 = vadd.f32 %v3080, %v3096
      %3100 = vset.pattern.permute.xlu0 0
      %3101 = vperm.xlu0 %3100, %v3055
      %v3102 = vpop.permute.xlu0 %3101
      %3105 = vset.pattern.permute.xlu0 0
      %3106 = vperm.xlu0 %3105, %v3056
      %v3107 = vpop.permute.xlu0 %3106
      %v3109 = vmul.f32 %v3102, %v3097
      %v3110 = vmul.f32 %v3107, %v3098
      %v3111 = vadd.f32 %v3109, %v3110
      %v3112 = vrot.slane %v3111, 4
      %v3113 = vadd.f32 %v3111, %v3112
      %v3114 = vrot.slane %v3113, 2
      %v3115 = vadd.f32 %v3113, %v3114
      %v3116 = vrot.slane %v3115, 1
      %v3117 = vadd.f32 %v3115, %v3116
      %v3118 = vlaneseq
      %v3119 = vshrl.u32 %v3118, 7
      %v3120 = vsub.s32 1, %v3119
      %v3121 = vrot.slane %v3032, %v3120
      %v3122 = vmul.f32 %v3121, %v1384
      %v3123 = vmul.f32 %v3121, %v1385
      %v3124 = vmul.f32 %v3122, 1.442695
      %v3125 = vpow.pop %v3124
      %v3126 = vmul.f32 %v3123, 1.442695
      %v3127 = vpow.pop %v3126
      %v3128 = vmul.f32 %v3125, %v3097
      %v3129 = vmul.f32 %v3127, %v3098
      %3130 = vset.pattern.permute.xlu0 1
      %3131 = vperm.xlu0 %3130, %v3053
      %v3132 = vpop.permute.xlu0 %3131
      %3134 = vset.pattern.permute.xlu0 1
      %3135 = vperm.xlu0 %3134, %v3054
      %v3136 = vpop.permute.xlu0 %3135
      %v3138 = vlaneseq
      %v3139 = vshrl.u32 %v3138, 7
      %v3140 = vsub.s32 1, %v3139
      %v3141 = vrot.slane %v3034, %v3140
      %v3142 = vmul.f32 %v3132, %v3141
      %v3143 = vmul.f32 %v3136, %v3141
      %v3144 = vadd.f32 %v3128, %v3142
      %v3145 = vadd.f32 %v3129, %v3143
      %3146 = vset.pattern.permute.xlu0 1
      %3147 = vperm.xlu0 %3146, %v3055
      %v3148 = vpop.permute.xlu0 %3147
      %3150 = vset.pattern.permute.xlu0 1
      %3151 = vperm.xlu0 %3150, %v3056
      %v3152 = vpop.permute.xlu0 %3151
      %v3154 = vmul.f32 %v3148, %v3144
      %v3155 = vmul.f32 %v3152, %v3145
      %v3156 = vadd.f32 %v3154, %v3155
      %v3157 = vrot.slane %v3156, 4
      %v3158 = vadd.f32 %v3156, %v3157
      %v3159 = vrot.slane %v3158, 2
      %v3160 = vadd.f32 %v3158, %v3159
      %v3161 = vrot.slane %v3160, 1
      %v3162 = vadd.f32 %v3160, %v3161
      %v3163 = vlaneseq
      %v3164 = vshrl.u32 %v3163, 7
      %v3165 = vsub.s32 2, %v3164
      %v3166 = vrot.slane %v3032, %v3165
      %v3167 = vmul.f32 %v3166, %v1384
      %v3168 = vmul.f32 %v3166, %v1385
      %v3169 = vmul.f32 %v3167, 1.442695
      %v3170 = vpow.pop %v3169
      %v3171 = vmul.f32 %v3168, 1.442695
      %v3172 = vpow.pop %v3171
      %v3173 = vmul.f32 %v3170, %v3144
      %v3174 = vmul.f32 %v3172, %v3145
      %3175 = vset.pattern.permute.xlu0 2
      %3176 = vperm.xlu0 %3175, %v3053
      %v3177 = vpop.permute.xlu0 %3176
      %3179 = vset.pattern.permute.xlu0 2
      %3180 = vperm.xlu0 %3179, %v3054
      %v3181 = vpop.permute.xlu0 %3180
      %v3183 = vlaneseq
      %v3184 = vshrl.u32 %v3183, 7
      %v3185 = vsub.s32 2, %v3184
      %v3186 = vrot.slane %v3034, %v3185
      %v3187 = vmul.f32 %v3177, %v3186
      %v3188 = vmul.f32 %v3181, %v3186
      %v3189 = vadd.f32 %v3173, %v3187
      %v3190 = vadd.f32 %v3174, %v3188
      %3191 = vset.pattern.permute.xlu0 2
      %3192 = vperm.xlu0 %3191, %v3055
      %v3193 = vpop.permute.xlu0 %3192
      %3195 = vset.pattern.permute.xlu0 2
      %3196 = vperm.xlu0 %3195, %v3056
      %v3197 = vpop.permute.xlu0 %3196
      %v3199 = vmul.f32 %v3193, %v3189
      %v3200 = vmul.f32 %v3197, %v3190
      %v3201 = vadd.f32 %v3199, %v3200
      %v3202 = vrot.slane %v3201, 4
      %v3203 = vadd.f32 %v3201, %v3202
      %v3204 = vrot.slane %v3203, 2
      %v3205 = vadd.f32 %v3203, %v3204
      %v3206 = vrot.slane %v3205, 1
      %v3207 = vadd.f32 %v3205, %v3206
      %v3208 = vlaneseq
      %v3209 = vshrl.u32 %v3208, 7
      %v3210 = vsub.s32 3, %v3209
      %v3211 = vrot.slane %v3032, %v3210
      %v3212 = vmul.f32 %v3211, %v1384
      %v3213 = vmul.f32 %v3211, %v1385
      %v3214 = vmul.f32 %v3212, 1.442695
      %v3215 = vpow.pop %v3214
      %v3216 = vmul.f32 %v3213, 1.442695
      %v3217 = vpow.pop %v3216
      %v3218 = vmul.f32 %v3215, %v3189
      %v3219 = vmul.f32 %v3217, %v3190
      %3220 = vset.pattern.permute.xlu0 3
      %3221 = vperm.xlu0 %3220, %v3053
      %v3222 = vpop.permute.xlu0 %3221
      %3224 = vset.pattern.permute.xlu0 3
      %3225 = vperm.xlu0 %3224, %v3054
      %v3226 = vpop.permute.xlu0 %3225
      %v3228 = vlaneseq
      %v3229 = vshrl.u32 %v3228, 7
      %v3230 = vsub.s32 3, %v3229
      %v3231 = vrot.slane %v3034, %v3230
      %v3232 = vmul.f32 %v3222, %v3231
      %v3233 = vmul.f32 %v3226, %v3231
      %v3234 = vadd.f32 %v3218, %v3232
      %v3235 = vadd.f32 %v3219, %v3233
      %3236 = vset.pattern.permute.xlu0 3
      %3237 = vperm.xlu0 %3236, %v3055
      %v3238 = vpop.permute.xlu0 %3237
      %3240 = vset.pattern.permute.xlu0 3
      %3241 = vperm.xlu0 %3240, %v3056
      %v3242 = vpop.permute.xlu0 %3241
      %v3244 = vmul.f32 %v3238, %v3234
      %v3245 = vmul.f32 %v3242, %v3235
      %v3246 = vadd.f32 %v3244, %v3245
      %v3247 = vrot.slane %v3246, 4
      %v3248 = vadd.f32 %v3246, %v3247
      %v3249 = vrot.slane %v3248, 2
      %v3250 = vadd.f32 %v3248, %v3249
      %v3251 = vrot.slane %v3250, 1
      %v3252 = vadd.f32 %v3250, %v3251
      %v3253 = vlaneseq
      %v3254 = vshrl.u32 %v3253, 7
      %v3255 = vsub.s32 4, %v3254
      %v3256 = vrot.slane %v3032, %v3255
      %v3257 = vmul.f32 %v3256, %v1384
      %v3258 = vmul.f32 %v3256, %v1385
      %v3259 = vmul.f32 %v3257, 1.442695
      %v3260 = vpow.pop %v3259
      %v3261 = vmul.f32 %v3258, 1.442695
      %v3262 = vpow.pop %v3261
      %v3263 = vmul.f32 %v3260, %v3234
      %v3264 = vmul.f32 %v3262, %v3235
      %3265 = vset.pattern.permute.xlu0 4
      %3266 = vperm.xlu0 %3265, %v3053
      %v3267 = vpop.permute.xlu0 %3266
      %3269 = vset.pattern.permute.xlu0 4
      %3270 = vperm.xlu0 %3269, %v3054
      %v3271 = vpop.permute.xlu0 %3270
      %v3273 = vlaneseq
      %v3274 = vshrl.u32 %v3273, 7
      %v3275 = vsub.s32 4, %v3274
      %v3276 = vrot.slane %v3034, %v3275
      %v3277 = vmul.f32 %v3267, %v3276
      %v3278 = vmul.f32 %v3271, %v3276
      %v3279 = vadd.f32 %v3263, %v3277
      %v3280 = vadd.f32 %v3264, %v3278
      %3281 = vset.pattern.permute.xlu0 4
      %3282 = vperm.xlu0 %3281, %v3055
      %v3283 = vpop.permute.xlu0 %3282
      %3285 = vset.pattern.permute.xlu0 4
      %3286 = vperm.xlu0 %3285, %v3056
      %v3287 = vpop.permute.xlu0 %3286
      %v3289 = vmul.f32 %v3283, %v3279
      %v3290 = vmul.f32 %v3287, %v3280
      %v3291 = vadd.f32 %v3289, %v3290
      %v3292 = vrot.slane %v3291, 4
      %v3293 = vadd.f32 %v3291, %v3292
      %v3294 = vrot.slane %v3293, 2
      %v3295 = vadd.f32 %v3293, %v3294
      %v3296 = vrot.slane %v3295, 1
      %v3297 = vadd.f32 %v3295, %v3296
      %v3298 = vlaneseq
      %v3299 = vshrl.u32 %v3298, 7
      %v3300 = vsub.s32 5, %v3299
      %v3301 = vrot.slane %v3032, %v3300
      %v3302 = vmul.f32 %v3301, %v1384
      %v3303 = vmul.f32 %v3301, %v1385
      %v3304 = vmul.f32 %v3302, 1.442695
      %v3305 = vpow.pop %v3304
      %v3306 = vmul.f32 %v3303, 1.442695
      %v3307 = vpow.pop %v3306
      %v3308 = vmul.f32 %v3305, %v3279
      %v3309 = vmul.f32 %v3307, %v3280
      %3310 = vset.pattern.permute.xlu0 5
      %3311 = vperm.xlu0 %3310, %v3053
      %v3312 = vpop.permute.xlu0 %3311
      %3314 = vset.pattern.permute.xlu0 5
      %3315 = vperm.xlu0 %3314, %v3054
      %v3316 = vpop.permute.xlu0 %3315
      %v3318 = vlaneseq
      %v3319 = vshrl.u32 %v3318, 7
      %v3320 = vsub.s32 5, %v3319
      %v3321 = vrot.slane %v3034, %v3320
      %v3322 = vmul.f32 %v3312, %v3321
      %v3323 = vmul.f32 %v3316, %v3321
      %v3324 = vadd.f32 %v3308, %v3322
      %v3325 = vadd.f32 %v3309, %v3323
      %3326 = vset.pattern.permute.xlu0 5
      %3327 = vperm.xlu0 %3326, %v3055
      %v3328 = vpop.permute.xlu0 %3327
      %3330 = vset.pattern.permute.xlu0 5
      %3331 = vperm.xlu0 %3330, %v3056
      %v3332 = vpop.permute.xlu0 %3331
      %v3334 = vmul.f32 %v3328, %v3324
      %v3335 = vmul.f32 %v3332, %v3325
      %v3336 = vadd.f32 %v3334, %v3335
      %v3337 = vrot.slane %v3336, 4
      %v3338 = vadd.f32 %v3336, %v3337
      %v3339 = vrot.slane %v3338, 2
      %v3340 = vadd.f32 %v3338, %v3339
      %v3341 = vrot.slane %v3340, 1
      %v3342 = vadd.f32 %v3340, %v3341
      %v3343 = vlaneseq
      %v3344 = vshrl.u32 %v3343, 7
      %v3345 = vsub.s32 6, %v3344
      %v3346 = vrot.slane %v3032, %v3345
      %v3347 = vmul.f32 %v3346, %v1384
      %v3348 = vmul.f32 %v3346, %v1385
      %v3349 = vmul.f32 %v3347, 1.442695
      %v3350 = vpow.pop %v3349
      %v3351 = vmul.f32 %v3348, 1.442695
      %v3352 = vpow.pop %v3351
      %v3353 = vmul.f32 %v3350, %v3324
      %v3354 = vmul.f32 %v3352, %v3325
      %3355 = vset.pattern.permute.xlu0 6
      %3356 = vperm.xlu0 %3355, %v3053
      %v3357 = vpop.permute.xlu0 %3356
      %3359 = vset.pattern.permute.xlu0 6
      %3360 = vperm.xlu0 %3359, %v3054
      %v3361 = vpop.permute.xlu0 %3360
      %v3363 = vlaneseq
      %v3364 = vshrl.u32 %v3363, 7
      %v3365 = vsub.s32 6, %v3364
      %v3366 = vrot.slane %v3034, %v3365
      %v3367 = vmul.f32 %v3357, %v3366
      %v3368 = vmul.f32 %v3361, %v3366
      %v3369 = vadd.f32 %v3353, %v3367
      %v3370 = vadd.f32 %v3354, %v3368
      %3371 = vset.pattern.permute.xlu0 6
      %3372 = vperm.xlu0 %3371, %v3055
      %v3373 = vpop.permute.xlu0 %3372
      %3375 = vset.pattern.permute.xlu0 6
      %3376 = vperm.xlu0 %3375, %v3056
      %v3377 = vpop.permute.xlu0 %3376
      %v3379 = vmul.f32 %v3373, %v3369
      %v3380 = vmul.f32 %v3377, %v3370
      %v3381 = vadd.f32 %v3379, %v3380
      %v3382 = vrot.slane %v3381, 4
      %v3383 = vadd.f32 %v3381, %v3382
      %v3384 = vrot.slane %v3383, 2
      %v3385 = vadd.f32 %v3383, %v3384
      %v3386 = vrot.slane %v3385, 1
      %v3387 = vadd.f32 %v3385, %v3386
      %v3388 = vlaneseq
      %v3389 = vshrl.u32 %v3388, 7
      %v3390 = vsub.s32 7, %v3389
      %v3391 = vrot.slane %v3032, %v3390
      %v3392 = vmul.f32 %v3391, %v1384
      %v3393 = vmul.f32 %v3391, %v1385
      %v3394 = vmul.f32 %v3392, 1.442695
      %v3395 = vpow.pop %v3394
      %v3396 = vmul.f32 %v3393, 1.442695
      %v3397 = vpow.pop %v3396
      %v3398 = vmul.f32 %v3395, %v3369
      %v3399 = vmul.f32 %v3397, %v3370
      %3400 = vset.pattern.permute.xlu0 7
      %3401 = vperm.xlu0 %3400, %v3053
      %v3402 = vpop.permute.xlu0 %3401
      %3404 = vset.pattern.permute.xlu0 7
      %3405 = vperm.xlu0 %3404, %v3054
      %v3406 = vpop.permute.xlu0 %3405
      %v3408 = vlaneseq
      %v3409 = vshrl.u32 %v3408, 7
      %v3410 = vsub.s32 7, %v3409
      %v3411 = vrot.slane %v3034, %v3410
      %v3412 = vmul.f32 %v3402, %v3411
      %v3413 = vmul.f32 %v3406, %v3411
      %v3414 = vadd.f32 %v3398, %v3412
      %v3415 = vadd.f32 %v3399, %v3413
      %3416 = vset.pattern.permute.xlu0 7
      %3417 = vperm.xlu0 %3416, %v3055
      %v3418 = vpop.permute.xlu0 %3417
      %3420 = vset.pattern.permute.xlu0 7
      %3421 = vperm.xlu0 %3420, %v3056
      %v3422 = vpop.permute.xlu0 %3421
      %v3424 = vmul.f32 %v3418, %v3414
      %v3425 = vmul.f32 %v3422, %v3415
      %v3426 = vadd.f32 %v3424, %v3425
      %v3427 = vrot.slane %v3426, 4
      %v3428 = vadd.f32 %v3426, %v3427
      %v3429 = vrot.slane %v3428, 2
      %v3430 = vadd.f32 %v3428, %v3429
      %v3431 = vrot.slane %v3430, 1
      %v3432 = vadd.f32 %v3430, %v3431
      %v3433 = vsel %vm1787, %v3117, %v3162
      %v3434 = vsel %vm1789, %v3433, %v3207
      %v3435 = vsel %vm1342, %v3434, %v3252
      %v3436 = vsel %vm1792, %v3435, %v3297
      %v3437 = vsel %vm739, %v3436, %v3342
      %v3438 = vsel %vm682, %v3437, %v3387
      %v3439 = vsel %vm623, %v3438, %v3432
      %s3440 = scalar_lea.vmem [#allocation7], 32
      %3441 = vst [vmem:[%s3440] sm:$0xff] %v3439
      %s3442 = scalar_lea.vmem [#allocation4], 40
      %v3443 = vld [vmem:[%s3442] sm:$0xff]
      %s3444 = scalar_lea.vmem [#allocation5], 40
      %v3445 = vld [vmem:[%s3444] sm:$0xff]
      %s3446 = scalar_lea.vmem [#allocation6], 40
      %v3447 = vld [vmem:[%s3446] sm:$0xff]
      %3448 = vxpose.xlu0.b32.start [1/16] %v3447, 128
      %3449 = vxpose.xlu0.b32.cont [2/16] 0.0, 128
      %3450 = vxpose.xlu0.b32.cont [3/16] 0.0, 128
      %3451 = vxpose.xlu0.b32.cont [4/16] 0.0, 128
      %3452 = vxpose.xlu0.b32.cont [5/16] 0.0, 128
      %3453 = vxpose.xlu0.b32.cont [6/16] 0.0, 128
      %3454 = vxpose.xlu0.b32.cont [7/16] 0.0, 128
      %3455 = vxpose.xlu0.b32.cont [8/16] 0.0, 128
      %3456 = vxpose.xlu0.b32.cont [9/16] 0.0, 128
      %3457 = vxpose.xlu0.b32.cont [10/16] 0.0, 128
      %3458 = vxpose.xlu0.b32.cont [11/16] 0.0, 128
      %3459 = vxpose.xlu0.b32.cont [12/16] 0.0, 128
      %3460 = vxpose.xlu0.b32.cont [13/16] 0.0, 128
      %3461 = vxpose.xlu0.b32.cont [14/16] 0.0, 128
      %3462 = vxpose.xlu0.b32.cont [15/16] 0.0, 128
      %3463 = vxpose.xlu0.b32.end [16/16] 0.0, 128
      %v3464 = vpop.trf.xlu0
      %v3465 = vpop.trf.xlu0
      %v3466 = vpop.trf.xlu0
      %v3467 = vpop.trf.xlu0
      %v3468 = vpop.trf.xlu0
      %v3469 = vpop.trf.xlu0
      %v3470 = vpop.trf.xlu0
      %v3471 = vpop.trf.xlu0
      %v3472 = vpop.trf.xlu0
      %v3473 = vpop.trf.xlu0
      %v3474 = vpop.trf.xlu0
      %v3475 = vpop.trf.xlu0
      %v3476 = vpop.trf.xlu0
      %v3477 = vpop.trf.xlu0
      %v3478 = vpop.trf.xlu0
      %v3479 = vpop.trf.xlu0
      %v3480 = vlaneseq
      %v3481 = vshrl.u32 %v3480, 7
      %v3482 = vsub.s32 0, %v3481
      %v3483 = vrot.slane %v3443, %v3482
      %v3484 = vmul.f32 %v3483, %v1384
      %v3485 = vmul.f32 %v3483, %v1385
      %v3486 = vmul.f32 %v3484, 1.442695
      %v3487 = vpow.pop %v3486
      %v3488 = vmul.f32 %v3485, 1.442695
      %v3489 = vpow.pop %v3488
      %v3490 = vmul.f32 %v3487, %v3414
      %v3491 = vmul.f32 %v3489, %v3415
      %3493 = vset.pattern.permute.xlu0 0
      %3494 = vperm.xlu0 %3493, %v3464
      %v3495 = vpop.permute.xlu0 %3494
      %3498 = vset.pattern.permute.xlu0 0
      %3499 = vperm.xlu0 %3498, %v3465
      %v3500 = vpop.permute.xlu0 %3499
      %v3502 = vlaneseq
      %v3503 = vshrl.u32 %v3502, 7
      %v3504 = vsub.s32 0, %v3503
      %v3505 = vrot.slane %v3445, %v3504
      %v3506 = vmul.f32 %v3495, %v3505
      %v3507 = vmul.f32 %v3500, %v3505
      %v3508 = vadd.f32 %v3490, %v3506
      %v3509 = vadd.f32 %v3491, %v3507
      %3511 = vset.pattern.permute.xlu0 0
      %3512 = vperm.xlu0 %3511, %v3466
      %v3513 = vpop.permute.xlu0 %3512
      %3516 = vset.pattern.permute.xlu0 0
      %3517 = vperm.xlu0 %3516, %v3467
      %v3518 = vpop.permute.xlu0 %3517
      %v3520 = vmul.f32 %v3513, %v3508
      %v3521 = vmul.f32 %v3518, %v3509
      %v3522 = vadd.f32 %v3520, %v3521
      %v3523 = vrot.slane %v3522, 4
      %v3524 = vadd.f32 %v3522, %v3523
      %v3525 = vrot.slane %v3524, 2
      %v3526 = vadd.f32 %v3524, %v3525
      %v3527 = vrot.slane %v3526, 1
      %v3528 = vadd.f32 %v3526, %v3527
      %v3529 = vlaneseq
      %v3530 = vshrl.u32 %v3529, 7
      %v3531 = vsub.s32 1, %v3530
      %v3532 = vrot.slane %v3443, %v3531
      %v3533 = vmul.f32 %v3532, %v1384
      %v3534 = vmul.f32 %v3532, %v1385
      %v3535 = vmul.f32 %v3533, 1.442695
      %v3536 = vpow.pop %v3535
      %v3537 = vmul.f32 %v3534, 1.442695
      %v3538 = vpow.pop %v3537
      %v3539 = vmul.f32 %v3536, %v3508
      %v3540 = vmul.f32 %v3538, %v3509
      %3541 = vset.pattern.permute.xlu0 1
      %3542 = vperm.xlu0 %3541, %v3464
      %v3543 = vpop.permute.xlu0 %3542
      %3545 = vset.pattern.permute.xlu0 1
      %3546 = vperm.xlu0 %3545, %v3465
      %v3547 = vpop.permute.xlu0 %3546
      %v3549 = vlaneseq
      %v3550 = vshrl.u32 %v3549, 7
      %v3551 = vsub.s32 1, %v3550
      %v3552 = vrot.slane %v3445, %v3551
      %v3553 = vmul.f32 %v3543, %v3552
      %v3554 = vmul.f32 %v3547, %v3552
      %v3555 = vadd.f32 %v3539, %v3553
      %v3556 = vadd.f32 %v3540, %v3554
      %3557 = vset.pattern.permute.xlu0 1
      %3558 = vperm.xlu0 %3557, %v3466
      %v3559 = vpop.permute.xlu0 %3558
      %3561 = vset.pattern.permute.xlu0 1
      %3562 = vperm.xlu0 %3561, %v3467
      %v3563 = vpop.permute.xlu0 %3562
      %v3565 = vmul.f32 %v3559, %v3555
      %v3566 = vmul.f32 %v3563, %v3556
      %v3567 = vadd.f32 %v3565, %v3566
      %v3568 = vrot.slane %v3567, 4
      %v3569 = vadd.f32 %v3567, %v3568
      %v3570 = vrot.slane %v3569, 2
      %v3571 = vadd.f32 %v3569, %v3570
      %v3572 = vrot.slane %v3571, 1
      %v3573 = vadd.f32 %v3571, %v3572
      %v3574 = vlaneseq
      %v3575 = vshrl.u32 %v3574, 7
      %v3576 = vsub.s32 2, %v3575
      %v3577 = vrot.slane %v3443, %v3576
      %v3578 = vmul.f32 %v3577, %v1384
      %v3579 = vmul.f32 %v3577, %v1385
      %v3580 = vmul.f32 %v3578, 1.442695
      %v3581 = vpow.pop %v3580
      %v3582 = vmul.f32 %v3579, 1.442695
      %v3583 = vpow.pop %v3582
      %v3584 = vmul.f32 %v3581, %v3555
      %v3585 = vmul.f32 %v3583, %v3556
      %3586 = vset.pattern.permute.xlu0 2
      %3587 = vperm.xlu0 %3586, %v3464
      %v3588 = vpop.permute.xlu0 %3587
      %3590 = vset.pattern.permute.xlu0 2
      %3591 = vperm.xlu0 %3590, %v3465
      %v3592 = vpop.permute.xlu0 %3591
      %v3594 = vlaneseq
      %v3595 = vshrl.u32 %v3594, 7
      %v3596 = vsub.s32 2, %v3595
      %v3597 = vrot.slane %v3445, %v3596
      %v3598 = vmul.f32 %v3588, %v3597
      %v3599 = vmul.f32 %v3592, %v3597
      %v3600 = vadd.f32 %v3584, %v3598
      %v3601 = vadd.f32 %v3585, %v3599
      %3602 = vset.pattern.permute.xlu0 2
      %3603 = vperm.xlu0 %3602, %v3466
      %v3604 = vpop.permute.xlu0 %3603
      %3606 = vset.pattern.permute.xlu0 2
      %3607 = vperm.xlu0 %3606, %v3467
      %v3608 = vpop.permute.xlu0 %3607
      %v3610 = vmul.f32 %v3604, %v3600
      %v3611 = vmul.f32 %v3608, %v3601
      %v3612 = vadd.f32 %v3610, %v3611
      %v3613 = vrot.slane %v3612, 4
      %v3614 = vadd.f32 %v3612, %v3613
      %v3615 = vrot.slane %v3614, 2
      %v3616 = vadd.f32 %v3614, %v3615
      %v3617 = vrot.slane %v3616, 1
      %v3618 = vadd.f32 %v3616, %v3617
      %v3619 = vlaneseq
      %v3620 = vshrl.u32 %v3619, 7
      %v3621 = vsub.s32 3, %v3620
      %v3622 = vrot.slane %v3443, %v3621
      %v3623 = vmul.f32 %v3622, %v1384
      %v3624 = vmul.f32 %v3622, %v1385
      %v3625 = vmul.f32 %v3623, 1.442695
      %v3626 = vpow.pop %v3625
      %v3627 = vmul.f32 %v3624, 1.442695
      %v3628 = vpow.pop %v3627
      %v3629 = vmul.f32 %v3626, %v3600
      %v3630 = vmul.f32 %v3628, %v3601
      %3631 = vset.pattern.permute.xlu0 3
      %3632 = vperm.xlu0 %3631, %v3464
      %v3633 = vpop.permute.xlu0 %3632
      %3635 = vset.pattern.permute.xlu0 3
      %3636 = vperm.xlu0 %3635, %v3465
      %v3637 = vpop.permute.xlu0 %3636
      %v3639 = vlaneseq
      %v3640 = vshrl.u32 %v3639, 7
      %v3641 = vsub.s32 3, %v3640
      %v3642 = vrot.slane %v3445, %v3641
      %v3643 = vmul.f32 %v3633, %v3642
      %v3644 = vmul.f32 %v3637, %v3642
      %v3645 = vadd.f32 %v3629, %v3643
      %v3646 = vadd.f32 %v3630, %v3644
      %3647 = vset.pattern.permute.xlu0 3
      %3648 = vperm.xlu0 %3647, %v3466
      %v3649 = vpop.permute.xlu0 %3648
      %3651 = vset.pattern.permute.xlu0 3
      %3652 = vperm.xlu0 %3651, %v3467
      %v3653 = vpop.permute.xlu0 %3652
      %v3655 = vmul.f32 %v3649, %v3645
      %v3656 = vmul.f32 %v3653, %v3646
      %v3657 = vadd.f32 %v3655, %v3656
      %v3658 = vrot.slane %v3657, 4
      %v3659 = vadd.f32 %v3657, %v3658
      %v3660 = vrot.slane %v3659, 2
      %v3661 = vadd.f32 %v3659, %v3660
      %v3662 = vrot.slane %v3661, 1
      %v3663 = vadd.f32 %v3661, %v3662
      %v3664 = vlaneseq
      %v3665 = vshrl.u32 %v3664, 7
      %v3666 = vsub.s32 4, %v3665
      %v3667 = vrot.slane %v3443, %v3666
      %v3668 = vmul.f32 %v3667, %v1384
      %v3669 = vmul.f32 %v3667, %v1385
      %v3670 = vmul.f32 %v3668, 1.442695
      %v3671 = vpow.pop %v3670
      %v3672 = vmul.f32 %v3669, 1.442695
      %v3673 = vpow.pop %v3672
      %v3674 = vmul.f32 %v3671, %v3645
      %v3675 = vmul.f32 %v3673, %v3646
      %3676 = vset.pattern.permute.xlu0 4
      %3677 = vperm.xlu0 %3676, %v3464
      %v3678 = vpop.permute.xlu0 %3677
      %3680 = vset.pattern.permute.xlu0 4
      %3681 = vperm.xlu0 %3680, %v3465
      %v3682 = vpop.permute.xlu0 %3681
      %v3684 = vlaneseq
      %v3685 = vshrl.u32 %v3684, 7
      %v3686 = vsub.s32 4, %v3685
      %v3687 = vrot.slane %v3445, %v3686
      %v3688 = vmul.f32 %v3678, %v3687
      %v3689 = vmul.f32 %v3682, %v3687
      %v3690 = vadd.f32 %v3674, %v3688
      %v3691 = vadd.f32 %v3675, %v3689
      %3692 = vset.pattern.permute.xlu0 4
      %3693 = vperm.xlu0 %3692, %v3466
      %v3694 = vpop.permute.xlu0 %3693
      %3696 = vset.pattern.permute.xlu0 4
      %3697 = vperm.xlu0 %3696, %v3467
      %v3698 = vpop.permute.xlu0 %3697
      %v3700 = vmul.f32 %v3694, %v3690
      %v3701 = vmul.f32 %v3698, %v3691
      %v3702 = vadd.f32 %v3700, %v3701
      %v3703 = vrot.slane %v3702, 4
      %v3704 = vadd.f32 %v3702, %v3703
      %v3705 = vrot.slane %v3704, 2
      %v3706 = vadd.f32 %v3704, %v3705
      %v3707 = vrot.slane %v3706, 1
      %v3708 = vadd.f32 %v3706, %v3707
      %v3709 = vlaneseq
      %v3710 = vshrl.u32 %v3709, 7
      %v3711 = vsub.s32 5, %v3710
      %v3712 = vrot.slane %v3443, %v3711
      %v3713 = vmul.f32 %v3712, %v1384
      %v3714 = vmul.f32 %v3712, %v1385
      %v3715 = vmul.f32 %v3713, 1.442695
      %v3716 = vpow.pop %v3715
      %v3717 = vmul.f32 %v3714, 1.442695
      %v3718 = vpow.pop %v3717
      %v3719 = vmul.f32 %v3716, %v3690
      %v3720 = vmul.f32 %v3718, %v3691
      %3721 = vset.pattern.permute.xlu0 5
      %3722 = vperm.xlu0 %3721, %v3464
      %v3723 = vpop.permute.xlu0 %3722
      %3725 = vset.pattern.permute.xlu0 5
      %3726 = vperm.xlu0 %3725, %v3465
      %v3727 = vpop.permute.xlu0 %3726
      %v3729 = vlaneseq
      %v3730 = vshrl.u32 %v3729, 7
      %v3731 = vsub.s32 5, %v3730
      %v3732 = vrot.slane %v3445, %v3731
      %v3733 = vmul.f32 %v3723, %v3732
      %v3734 = vmul.f32 %v3727, %v3732
      %v3735 = vadd.f32 %v3719, %v3733
      %v3736 = vadd.f32 %v3720, %v3734
      %3737 = vset.pattern.permute.xlu0 5
      %3738 = vperm.xlu0 %3737, %v3466
      %v3739 = vpop.permute.xlu0 %3738
      %3741 = vset.pattern.permute.xlu0 5
      %3742 = vperm.xlu0 %3741, %v3467
      %v3743 = vpop.permute.xlu0 %3742
      %v3745 = vmul.f32 %v3739, %v3735
      %v3746 = vmul.f32 %v3743, %v3736
      %v3747 = vadd.f32 %v3745, %v3746
      %v3748 = vrot.slane %v3747, 4
      %v3749 = vadd.f32 %v3747, %v3748
      %v3750 = vrot.slane %v3749, 2
      %v3751 = vadd.f32 %v3749, %v3750
      %v3752 = vrot.slane %v3751, 1
      %v3753 = vadd.f32 %v3751, %v3752
      %v3754 = vlaneseq
      %v3755 = vshrl.u32 %v3754, 7
      %v3756 = vsub.s32 6, %v3755
      %v3757 = vrot.slane %v3443, %v3756
      %v3758 = vmul.f32 %v3757, %v1384
      %v3759 = vmul.f32 %v3757, %v1385
      %v3760 = vmul.f32 %v3758, 1.442695
      %v3761 = vpow.pop %v3760
      %v3762 = vmul.f32 %v3759, 1.442695
      %v3763 = vpow.pop %v3762
      %v3764 = vmul.f32 %v3761, %v3735
      %v3765 = vmul.f32 %v3763, %v3736
      %3766 = vset.pattern.permute.xlu0 6
      %3767 = vperm.xlu0 %3766, %v3464
      %v3768 = vpop.permute.xlu0 %3767
      %3770 = vset.pattern.permute.xlu0 6
      %3771 = vperm.xlu0 %3770, %v3465
      %v3772 = vpop.permute.xlu0 %3771
      %v3774 = vlaneseq
      %v3775 = vshrl.u32 %v3774, 7
      %v3776 = vsub.s32 6, %v3775
      %v3777 = vrot.slane %v3445, %v3776
      %v3778 = vmul.f32 %v3768, %v3777
      %v3779 = vmul.f32 %v3772, %v3777
      %v3780 = vadd.f32 %v3764, %v3778
      %v3781 = vadd.f32 %v3765, %v3779
      %3782 = vset.pattern.permute.xlu0 6
      %3783 = vperm.xlu0 %3782, %v3466
      %v3784 = vpop.permute.xlu0 %3783
      %3786 = vset.pattern.permute.xlu0 6
      %3787 = vperm.xlu0 %3786, %v3467
      %v3788 = vpop.permute.xlu0 %3787
      %v3790 = vmul.f32 %v3784, %v3780
      %v3791 = vmul.f32 %v3788, %v3781
      %v3792 = vadd.f32 %v3790, %v3791
      %v3793 = vrot.slane %v3792, 4
      %v3794 = vadd.f32 %v3792, %v3793
      %v3795 = vrot.slane %v3794, 2
      %v3796 = vadd.f32 %v3794, %v3795
      %v3797 = vrot.slane %v3796, 1
      %v3798 = vadd.f32 %v3796, %v3797
      %v3799 = vlaneseq
      %v3800 = vshrl.u32 %v3799, 7
      %v3801 = vsub.s32 7, %v3800
      %v3802 = vrot.slane %v3443, %v3801
      %v3803 = vmul.f32 %v3802, %v1384
      %v3804 = vmul.f32 %v3802, %v1385
      %v3805 = vmul.f32 %v3803, 1.442695
      %v3806 = vpow.pop %v3805
      %v3807 = vmul.f32 %v3804, 1.442695
      %v3808 = vpow.pop %v3807
      %v3809 = vmul.f32 %v3806, %v3780
      %v3810 = vmul.f32 %v3808, %v3781
      %3811 = vset.pattern.permute.xlu0 7
      %3812 = vperm.xlu0 %3811, %v3464
      %v3813 = vpop.permute.xlu0 %3812
      %3815 = vset.pattern.permute.xlu0 7
      %3816 = vperm.xlu0 %3815, %v3465
      %v3817 = vpop.permute.xlu0 %3816
      %v3819 = vlaneseq
      %v3820 = vshrl.u32 %v3819, 7
      %v3821 = vsub.s32 7, %v3820
      %v3822 = vrot.slane %v3445, %v3821
      %v3823 = vmul.f32 %v3813, %v3822
      %v3824 = vmul.f32 %v3817, %v3822
      %v3825 = vadd.f32 %v3809, %v3823
      %v3826 = vadd.f32 %v3810, %v3824
      %3827 = vset.pattern.permute.xlu0 7
      %3828 = vperm.xlu0 %3827, %v3466
      %v3829 = vpop.permute.xlu0 %3828
      %3831 = vset.pattern.permute.xlu0 7
      %3832 = vperm.xlu0 %3831, %v3467
      %v3833 = vpop.permute.xlu0 %3832
      %v3835 = vmul.f32 %v3829, %v3825
      %v3836 = vmul.f32 %v3833, %v3826
      %v3837 = vadd.f32 %v3835, %v3836
      %v3838 = vrot.slane %v3837, 4
      %v3839 = vadd.f32 %v3837, %v3838
      %v3840 = vrot.slane %v3839, 2
      %v3841 = vadd.f32 %v3839, %v3840
      %v3842 = vrot.slane %v3841, 1
      %v3843 = vadd.f32 %v3841, %v3842
      %v3844 = vsel %vm1787, %v3528, %v3573
      %v3845 = vsel %vm1789, %v3844, %v3618
      %v3846 = vsel %vm1342, %v3845, %v3663
      %v3847 = vsel %vm1792, %v3846, %v3708
      %v3848 = vsel %vm739, %v3847, %v3753
      %v3849 = vsel %vm682, %v3848, %v3798
      %v3850 = vsel %vm623, %v3849, %v3843
      %s3851 = scalar_lea.vmem [#allocation7], 40
      %3852 = vst [vmem:[%s3851] sm:$0xff] %v3850
      %s3853 = scalar_lea.vmem [#allocation4], 48
      %v3854 = vld [vmem:[%s3853] sm:$0xff]
      %s3855 = scalar_lea.vmem [#allocation5], 48
      %v3856 = vld [vmem:[%s3855] sm:$0xff]
      %s3857 = scalar_lea.vmem [#allocation6], 48
      %v3858 = vld [vmem:[%s3857] sm:$0xff]
      %3859 = vxpose.xlu0.b32.start [1/16] %v3858, 128
      %3860 = vxpose.xlu0.b32.cont [2/16] 0.0, 128
      %3861 = vxpose.xlu0.b32.cont [3/16] 0.0, 128
      %3862 = vxpose.xlu0.b32.cont [4/16] 0.0, 128
      %3863 = vxpose.xlu0.b32.cont [5/16] 0.0, 128
      %3864 = vxpose.xlu0.b32.cont [6/16] 0.0, 128
      %3865 = vxpose.xlu0.b32.cont [7/16] 0.0, 128
      %3866 = vxpose.xlu0.b32.cont [8/16] 0.0, 128
      %3867 = vxpose.xlu0.b32.cont [9/16] 0.0, 128
      %3868 = vxpose.xlu0.b32.cont [10/16] 0.0, 128
      %3869 = vxpose.xlu0.b32.cont [11/16] 0.0, 128
      %3870 = vxpose.xlu0.b32.cont [12/16] 0.0, 128
      %3871 = vxpose.xlu0.b32.cont [13/16] 0.0, 128
      %3872 = vxpose.xlu0.b32.cont [14/16] 0.0, 128
      %3873 = vxpose.xlu0.b32.cont [15/16] 0.0, 128
      %3874 = vxpose.xlu0.b32.end [16/16] 0.0, 128
      %v3875 = vpop.trf.xlu0
      %v3876 = vpop.trf.xlu0
      %v3877 = vpop.trf.xlu0
      %v3878 = vpop.trf.xlu0
      %v3879 = vpop.trf.xlu0
      %v3880 = vpop.trf.xlu0
      %v3881 = vpop.trf.xlu0
      %v3882 = vpop.trf.xlu0
      %v3883 = vpop.trf.xlu0
      %v3884 = vpop.trf.xlu0
      %v3885 = vpop.trf.xlu0
      %v3886 = vpop.trf.xlu0
      %v3887 = vpop.trf.xlu0
      %v3888 = vpop.trf.xlu0
      %v3889 = vpop.trf.xlu0
      %v3890 = vpop.trf.xlu0
      %v3891 = vlaneseq
      %v3892 = vshrl.u32 %v3891, 7
      %v3893 = vsub.s32 0, %v3892
      %v3894 = vrot.slane %v3854, %v3893
      %v3895 = vmul.f32 %v3894, %v1384
      %v3896 = vmul.f32 %v3894, %v1385
      %v3897 = vmul.f32 %v3895, 1.442695
      %v3898 = vpow.pop %v3897
      %v3899 = vmul.f32 %v3896, 1.442695
      %v3900 = vpow.pop %v3899
      %v3901 = vmul.f32 %v3898, %v3825
      %v3902 = vmul.f32 %v3900, %v3826
      %3904 = vset.pattern.permute.xlu0 0
      %3905 = vperm.xlu0 %3904, %v3875
      %v3906 = vpop.permute.xlu0 %3905
      %3909 = vset.pattern.permute.xlu0 0
      %3910 = vperm.xlu0 %3909, %v3876
      %v3911 = vpop.permute.xlu0 %3910
      %v3913 = vlaneseq
      %v3914 = vshrl.u32 %v3913, 7
      %v3915 = vsub.s32 0, %v3914
      %v3916 = vrot.slane %v3856, %v3915
      %v3917 = vmul.f32 %v3906, %v3916
      %v3918 = vmul.f32 %v3911, %v3916
      %v3919 = vadd.f32 %v3901, %v3917
      %v3920 = vadd.f32 %v3902, %v3918
      %3922 = vset.pattern.permute.xlu0 0
      %3923 = vperm.xlu0 %3922, %v3877
      %v3924 = vpop.permute.xlu0 %3923
      %3927 = vset.pattern.permute.xlu0 0
      %3928 = vperm.xlu0 %3927, %v3878
      %v3929 = vpop.permute.xlu0 %3928
      %v3931 = vmul.f32 %v3924, %v3919
      %v3932 = vmul.f32 %v3929, %v3920
      %v3933 = vadd.f32 %v3931, %v3932
      %v3934 = vrot.slane %v3933, 4
      %v3935 = vadd.f32 %v3933, %v3934
      %v3936 = vrot.slane %v3935, 2
      %v3937 = vadd.f32 %v3935, %v3936
      %v3938 = vrot.slane %v3937, 1
      %v3939 = vadd.f32 %v3937, %v3938
      %v3940 = vlaneseq
      %v3941 = vshrl.u32 %v3940, 7
      %v3942 = vsub.s32 1, %v3941
      %v3943 = vrot.slane %v3854, %v3942
      %v3944 = vmul.f32 %v3943, %v1384
      %v3945 = vmul.f32 %v3943, %v1385
      %v3946 = vmul.f32 %v3944, 1.442695
      %v3947 = vpow.pop %v3946
      %v3948 = vmul.f32 %v3945, 1.442695
      %v3949 = vpow.pop %v3948
      %v3950 = vmul.f32 %v3947, %v3919
      %v3951 = vmul.f32 %v3949, %v3920
      %3952 = vset.pattern.permute.xlu0 1
      %3953 = vperm.xlu0 %3952, %v3875
      %v3954 = vpop.permute.xlu0 %3953
      %3956 = vset.pattern.permute.xlu0 1
      %3957 = vperm.xlu0 %3956, %v3876
      %v3958 = vpop.permute.xlu0 %3957
      %v3960 = vlaneseq
      %v3961 = vshrl.u32 %v3960, 7
      %v3962 = vsub.s32 1, %v3961
      %v3963 = vrot.slane %v3856, %v3962
      %v3964 = vmul.f32 %v3954, %v3963
      %v3965 = vmul.f32 %v3958, %v3963
      %v3966 = vadd.f32 %v3950, %v3964
      %v3967 = vadd.f32 %v3951, %v3965
      %3968 = vset.pattern.permute.xlu0 1
      %3969 = vperm.xlu0 %3968, %v3877
      %v3970 = vpop.permute.xlu0 %3969
      %3972 = vset.pattern.permute.xlu0 1
      %3973 = vperm.xlu0 %3972, %v3878
      %v3974 = vpop.permute.xlu0 %3973
      %v3976 = vmul.f32 %v3970, %v3966
      %v3977 = vmul.f32 %v3974, %v3967
      %v3978 = vadd.f32 %v3976, %v3977
      %v3979 = vrot.slane %v3978, 4
      %v3980 = vadd.f32 %v3978, %v3979
      %v3981 = vrot.slane %v3980, 2
      %v3982 = vadd.f32 %v3980, %v3981
      %v3983 = vrot.slane %v3982, 1
      %v3984 = vadd.f32 %v3982, %v3983
      %v3985 = vlaneseq
      %v3986 = vshrl.u32 %v3985, 7
      %v3987 = vsub.s32 2, %v3986
      %v3988 = vrot.slane %v3854, %v3987
      %v3989 = vmul.f32 %v3988, %v1384
      %v3990 = vmul.f32 %v3988, %v1385
      %v3991 = vmul.f32 %v3989, 1.442695
      %v3992 = vpow.pop %v3991
      %v3993 = vmul.f32 %v3990, 1.442695
      %v3994 = vpow.pop %v3993
      %v3995 = vmul.f32 %v3992, %v3966
      %v3996 = vmul.f32 %v3994, %v3967
      %3997 = vset.pattern.permute.xlu0 2
      %3998 = vperm.xlu0 %3997, %v3875
      %v3999 = vpop.permute.xlu0 %3998
      %4001 = vset.pattern.permute.xlu0 2
      %4002 = vperm.xlu0 %4001, %v3876
      %v4003 = vpop.permute.xlu0 %4002
      %v4005 = vlaneseq
      %v4006 = vshrl.u32 %v4005, 7
      %v4007 = vsub.s32 2, %v4006
      %v4008 = vrot.slane %v3856, %v4007
      %v4009 = vmul.f32 %v3999, %v4008
      %v4010 = vmul.f32 %v4003, %v4008
      %v4011 = vadd.f32 %v3995, %v4009
      %v4012 = vadd.f32 %v3996, %v4010
      %4013 = vset.pattern.permute.xlu0 2
      %4014 = vperm.xlu0 %4013, %v3877
      %v4015 = vpop.permute.xlu0 %4014
      %4017 = vset.pattern.permute.xlu0 2
      %4018 = vperm.xlu0 %4017, %v3878
      %v4019 = vpop.permute.xlu0 %4018
      %v4021 = vmul.f32 %v4015, %v4011
      %v4022 = vmul.f32 %v4019, %v4012
      %v4023 = vadd.f32 %v4021, %v4022
      %v4024 = vrot.slane %v4023, 4
      %v4025 = vadd.f32 %v4023, %v4024
      %v4026 = vrot.slane %v4025, 2
      %v4027 = vadd.f32 %v4025, %v4026
      %v4028 = vrot.slane %v4027, 1
      %v4029 = vadd.f32 %v4027, %v4028
      %v4030 = vlaneseq
      %v4031 = vshrl.u32 %v4030, 7
      %v4032 = vsub.s32 3, %v4031
      %v4033 = vrot.slane %v3854, %v4032
      %v4034 = vmul.f32 %v4033, %v1384
      %v4035 = vmul.f32 %v4033, %v1385
      %v4036 = vmul.f32 %v4034, 1.442695
      %v4037 = vpow.pop %v4036
      %v4038 = vmul.f32 %v4035, 1.442695
      %v4039 = vpow.pop %v4038
      %v4040 = vmul.f32 %v4037, %v4011
      %v4041 = vmul.f32 %v4039, %v4012
      %4042 = vset.pattern.permute.xlu0 3
      %4043 = vperm.xlu0 %4042, %v3875
      %v4044 = vpop.permute.xlu0 %4043
      %4046 = vset.pattern.permute.xlu0 3
      %4047 = vperm.xlu0 %4046, %v3876
      %v4048 = vpop.permute.xlu0 %4047
      %v4050 = vlaneseq
      %v4051 = vshrl.u32 %v4050, 7
      %v4052 = vsub.s32 3, %v4051
      %v4053 = vrot.slane %v3856, %v4052
      %v4054 = vmul.f32 %v4044, %v4053
      %v4055 = vmul.f32 %v4048, %v4053
      %v4056 = vadd.f32 %v4040, %v4054
      %v4057 = vadd.f32 %v4041, %v4055
      %4058 = vset.pattern.permute.xlu0 3
      %4059 = vperm.xlu0 %4058, %v3877
      %v4060 = vpop.permute.xlu0 %4059
      %4062 = vset.pattern.permute.xlu0 3
      %4063 = vperm.xlu0 %4062, %v3878
      %v4064 = vpop.permute.xlu0 %4063
      %v4066 = vmul.f32 %v4060, %v4056
      %v4067 = vmul.f32 %v4064, %v4057
      %v4068 = vadd.f32 %v4066, %v4067
      %v4069 = vrot.slane %v4068, 4
      %v4070 = vadd.f32 %v4068, %v4069
      %v4071 = vrot.slane %v4070, 2
      %v4072 = vadd.f32 %v4070, %v4071
      %v4073 = vrot.slane %v4072, 1
      %v4074 = vadd.f32 %v4072, %v4073
      %v4075 = vlaneseq
      %v4076 = vshrl.u32 %v4075, 7
      %v4077 = vsub.s32 4, %v4076
      %v4078 = vrot.slane %v3854, %v4077
      %v4079 = vmul.f32 %v4078, %v1384
      %v4080 = vmul.f32 %v4078, %v1385
      %v4081 = vmul.f32 %v4079, 1.442695
      %v4082 = vpow.pop %v4081
      %v4083 = vmul.f32 %v4080, 1.442695
      %v4084 = vpow.pop %v4083
      %v4085 = vmul.f32 %v4082, %v4056
      %v4086 = vmul.f32 %v4084, %v4057
      %4087 = vset.pattern.permute.xlu0 4
      %4088 = vperm.xlu0 %4087, %v3875
      %v4089 = vpop.permute.xlu0 %4088
      %4091 = vset.pattern.permute.xlu0 4
      %4092 = vperm.xlu0 %4091, %v3876
      %v4093 = vpop.permute.xlu0 %4092
      %v4095 = vlaneseq
      %v4096 = vshrl.u32 %v4095, 7
      %v4097 = vsub.s32 4, %v4096
      %v4098 = vrot.slane %v3856, %v4097
      %v4099 = vmul.f32 %v4089, %v4098
      %v4100 = vmul.f32 %v4093, %v4098
      %v4101 = vadd.f32 %v4085, %v4099
      %v4102 = vadd.f32 %v4086, %v4100
      %4103 = vset.pattern.permute.xlu0 4
      %4104 = vperm.xlu0 %4103, %v3877
      %v4105 = vpop.permute.xlu0 %4104
      %4107 = vset.pattern.permute.xlu0 4
      %4108 = vperm.xlu0 %4107, %v3878
      %v4109 = vpop.permute.xlu0 %4108
      %v4111 = vmul.f32 %v4105, %v4101
      %v4112 = vmul.f32 %v4109, %v4102
      %v4113 = vadd.f32 %v4111, %v4112
      %v4114 = vrot.slane %v4113, 4
      %v4115 = vadd.f32 %v4113, %v4114
      %v4116 = vrot.slane %v4115, 2
      %v4117 = vadd.f32 %v4115, %v4116
      %v4118 = vrot.slane %v4117, 1
      %v4119 = vadd.f32 %v4117, %v4118
      %v4120 = vlaneseq
      %v4121 = vshrl.u32 %v4120, 7
      %v4122 = vsub.s32 5, %v4121
      %v4123 = vrot.slane %v3854, %v4122
      %v4124 = vmul.f32 %v4123, %v1384
      %v4125 = vmul.f32 %v4123, %v1385
      %v4126 = vmul.f32 %v4124, 1.442695
      %v4127 = vpow.pop %v4126
      %v4128 = vmul.f32 %v4125, 1.442695
      %v4129 = vpow.pop %v4128
      %v4130 = vmul.f32 %v4127, %v4101
      %v4131 = vmul.f32 %v4129, %v4102
      %4132 = vset.pattern.permute.xlu0 5
      %4133 = vperm.xlu0 %4132, %v3875
      %v4134 = vpop.permute.xlu0 %4133
      %4136 = vset.pattern.permute.xlu0 5
      %4137 = vperm.xlu0 %4136, %v3876
      %v4138 = vpop.permute.xlu0 %4137
      %v4140 = vlaneseq
      %v4141 = vshrl.u32 %v4140, 7
      %v4142 = vsub.s32 5, %v4141
      %v4143 = vrot.slane %v3856, %v4142
      %v4144 = vmul.f32 %v4134, %v4143
      %v4145 = vmul.f32 %v4138, %v4143
      %v4146 = vadd.f32 %v4130, %v4144
      %v4147 = vadd.f32 %v4131, %v4145
      %4148 = vset.pattern.permute.xlu0 5
      %4149 = vperm.xlu0 %4148, %v3877
      %v4150 = vpop.permute.xlu0 %4149
      %4152 = vset.pattern.permute.xlu0 5
      %4153 = vperm.xlu0 %4152, %v3878
      %v4154 = vpop.permute.xlu0 %4153
      %v4156 = vmul.f32 %v4150, %v4146
      %v4157 = vmul.f32 %v4154, %v4147
      %v4158 = vadd.f32 %v4156, %v4157
      %v4159 = vrot.slane %v4158, 4
      %v4160 = vadd.f32 %v4158, %v4159
      %v4161 = vrot.slane %v4160, 2
      %v4162 = vadd.f32 %v4160, %v4161
      %v4163 = vrot.slane %v4162, 1
      %v4164 = vadd.f32 %v4162, %v4163
      %v4165 = vlaneseq
      %v4166 = vshrl.u32 %v4165, 7
      %v4167 = vsub.s32 6, %v4166
      %v4168 = vrot.slane %v3854, %v4167
      %v4169 = vmul.f32 %v4168, %v1384
      %v4170 = vmul.f32 %v4168, %v1385
      %v4171 = vmul.f32 %v4169, 1.442695
      %v4172 = vpow.pop %v4171
      %v4173 = vmul.f32 %v4170, 1.442695
      %v4174 = vpow.pop %v4173
      %v4175 = vmul.f32 %v4172, %v4146
      %v4176 = vmul.f32 %v4174, %v4147
      %4177 = vset.pattern.permute.xlu0 6
      %4178 = vperm.xlu0 %4177, %v3875
      %v4179 = vpop.permute.xlu0 %4178
      %4181 = vset.pattern.permute.xlu0 6
      %4182 = vperm.xlu0 %4181, %v3876
      %v4183 = vpop.permute.xlu0 %4182
      %v4185 = vlaneseq
      %v4186 = vshrl.u32 %v4185, 7
      %v4187 = vsub.s32 6, %v4186
      %v4188 = vrot.slane %v3856, %v4187
      %v4189 = vmul.f32 %v4179, %v4188
      %v4190 = vmul.f32 %v4183, %v4188
      %v4191 = vadd.f32 %v4175, %v4189
      %v4192 = vadd.f32 %v4176, %v4190
      %4193 = vset.pattern.permute.xlu0 6
      %4194 = vperm.xlu0 %4193, %v3877
      %v4195 = vpop.permute.xlu0 %4194
      %4197 = vset.pattern.permute.xlu0 6
      %4198 = vperm.xlu0 %4197, %v3878
      %v4199 = vpop.permute.xlu0 %4198
      %v4201 = vmul.f32 %v4195, %v4191
      %v4202 = vmul.f32 %v4199, %v4192
      %v4203 = vadd.f32 %v4201, %v4202
      %v4204 = vrot.slane %v4203, 4
      %v4205 = vadd.f32 %v4203, %v4204
      %v4206 = vrot.slane %v4205, 2
      %v4207 = vadd.f32 %v4205, %v4206
      %v4208 = vrot.slane %v4207, 1
      %v4209 = vadd.f32 %v4207, %v4208
      %v4210 = vlaneseq
      %v4211 = vshrl.u32 %v4210, 7
      %v4212 = vsub.s32 7, %v4211
      %v4213 = vrot.slane %v3854, %v4212
      %v4214 = vmul.f32 %v4213, %v1384
      %v4215 = vmul.f32 %v4213, %v1385
      %v4216 = vmul.f32 %v4214, 1.442695
      %v4217 = vpow.pop %v4216
      %v4218 = vmul.f32 %v4215, 1.442695
      %v4219 = vpow.pop %v4218
      %v4220 = vmul.f32 %v4217, %v4191
      %v4221 = vmul.f32 %v4219, %v4192
      %4222 = vset.pattern.permute.xlu0 7
      %4223 = vperm.xlu0 %4222, %v3875
      %v4224 = vpop.permute.xlu0 %4223
      %4226 = vset.pattern.permute.xlu0 7
      %4227 = vperm.xlu0 %4226, %v3876
      %v4228 = vpop.permute.xlu0 %4227
      %v4230 = vlaneseq
      %v4231 = vshrl.u32 %v4230, 7
      %v4232 = vsub.s32 7, %v4231
      %v4233 = vrot.slane %v3856, %v4232
      %v4234 = vmul.f32 %v4224, %v4233
      %v4235 = vmul.f32 %v4228, %v4233
      %v4236 = vadd.f32 %v4220, %v4234
      %v4237 = vadd.f32 %v4221, %v4235
      %4238 = vset.pattern.permute.xlu0 7
      %4239 = vperm.xlu0 %4238, %v3877
      %v4240 = vpop.permute.xlu0 %4239
      %4242 = vset.pattern.permute.xlu0 7
      %4243 = vperm.xlu0 %4242, %v3878
      %v4244 = vpop.permute.xlu0 %4243
      %v4246 = vmul.f32 %v4240, %v4236
      %v4247 = vmul.f32 %v4244, %v4237
      %v4248 = vadd.f32 %v4246, %v4247
      %v4249 = vrot.slane %v4248, 4
      %v4250 = vadd.f32 %v4248, %v4249
      %v4251 = vrot.slane %v4250, 2
      %v4252 = vadd.f32 %v4250, %v4251
      %v4253 = vrot.slane %v4252, 1
      %v4254 = vadd.f32 %v4252, %v4253
      %v4255 = vsel %vm1787, %v3939, %v3984
      %v4256 = vsel %vm1789, %v4255, %v4029
      %v4257 = vsel %vm1342, %v4256, %v4074
      %v4258 = vsel %vm1792, %v4257, %v4119
      %v4259 = vsel %vm739, %v4258, %v4164
      %v4260 = vsel %vm682, %v4259, %v4209
      %v4261 = vsel %vm623, %v4260, %v4254
      %s4262 = scalar_lea.vmem [#allocation7], 48
      %4263 = vst [vmem:[%s4262] sm:$0xff] %v4261
      %s4264 = scalar_lea.vmem [#allocation4], 56
      %v4265 = vld [vmem:[%s4264] sm:$0xff]
      %s4266 = scalar_lea.vmem [#allocation5], 56
      %v4267 = vld [vmem:[%s4266] sm:$0xff]
      %s4268 = scalar_lea.vmem [#allocation6], 56
      %v4269 = vld [vmem:[%s4268] sm:$0xff]
      %4270 = vxpose.xlu0.b32.start [1/16] %v4269, 128
      %4271 = vxpose.xlu0.b32.cont [2/16] 0.0, 128
      %4272 = vxpose.xlu0.b32.cont [3/16] 0.0, 128
      %4273 = vxpose.xlu0.b32.cont [4/16] 0.0, 128
      %4274 = vxpose.xlu0.b32.cont [5/16] 0.0, 128
      %4275 = vxpose.xlu0.b32.cont [6/16] 0.0, 128
      %4276 = vxpose.xlu0.b32.cont [7/16] 0.0, 128
      %4277 = vxpose.xlu0.b32.cont [8/16] 0.0, 128
      %4278 = vxpose.xlu0.b32.cont [9/16] 0.0, 128
      %4279 = vxpose.xlu0.b32.cont [10/16] 0.0, 128
      %4280 = vxpose.xlu0.b32.cont [11/16] 0.0, 128
      %4281 = vxpose.xlu0.b32.cont [12/16] 0.0, 128
      %4282 = vxpose.xlu0.b32.cont [13/16] 0.0, 128
      %4283 = vxpose.xlu0.b32.cont [14/16] 0.0, 128
      %4284 = vxpose.xlu0.b32.cont [15/16] 0.0, 128
      %4285 = vxpose.xlu0.b32.end [16/16] 0.0, 128
      %v4286 = vpop.trf.xlu0
      %v4287 = vpop.trf.xlu0
      %v4288 = vpop.trf.xlu0
      %v4289 = vpop.trf.xlu0
      %v4290 = vpop.trf.xlu0
      %v4291 = vpop.trf.xlu0
      %v4292 = vpop.trf.xlu0
      %v4293 = vpop.trf.xlu0
      %v4294 = vpop.trf.xlu0
      %v4295 = vpop.trf.xlu0
      %v4296 = vpop.trf.xlu0
      %v4297 = vpop.trf.xlu0
      %v4298 = vpop.trf.xlu0
      %v4299 = vpop.trf.xlu0
      %v4300 = vpop.trf.xlu0
      %v4301 = vpop.trf.xlu0
      %v4302 = vlaneseq
      %v4303 = vshrl.u32 %v4302, 7
      %v4304 = vsub.s32 0, %v4303
      %v4305 = vrot.slane %v4265, %v4304
      %v4306 = vmul.f32 %v4305, %v1384
      %v4307 = vmul.f32 %v4305, %v1385
      %v4308 = vmul.f32 %v4306, 1.442695
      %v4309 = vpow.pop %v4308
      %v4310 = vmul.f32 %v4307, 1.442695
      %v4311 = vpow.pop %v4310
      %v4312 = vmul.f32 %v4309, %v4236
      %v4313 = vmul.f32 %v4311, %v4237
      %4315 = vset.pattern.permute.xlu0 0
      %4316 = vperm.xlu0 %4315, %v4286
      %v4317 = vpop.permute.xlu0 %4316
      %4320 = vset.pattern.permute.xlu0 0
      %4321 = vperm.xlu0 %4320, %v4287
      %v4322 = vpop.permute.xlu0 %4321
      %v4324 = vlaneseq
      %v4325 = vshrl.u32 %v4324, 7
      %v4326 = vsub.s32 0, %v4325
      %v4327 = vrot.slane %v4267, %v4326
      %v4328 = vmul.f32 %v4317, %v4327
      %v4329 = vmul.f32 %v4322, %v4327
      %v4330 = vadd.f32 %v4312, %v4328
      %v4331 = vadd.f32 %v4313, %v4329
      %4333 = vset.pattern.permute.xlu0 0
      %4334 = vperm.xlu0 %4333, %v4288
      %v4335 = vpop.permute.xlu0 %4334
      %4338 = vset.pattern.permute.xlu0 0
      %4339 = vperm.xlu0 %4338, %v4289
      %v4340 = vpop.permute.xlu0 %4339
      %v4342 = vmul.f32 %v4335, %v4330
      %v4343 = vmul.f32 %v4340, %v4331
      %v4344 = vadd.f32 %v4342, %v4343
      %v4345 = vrot.slane %v4344, 4
      %v4346 = vadd.f32 %v4344, %v4345
      %v4347 = vrot.slane %v4346, 2
      %v4348 = vadd.f32 %v4346, %v4347
      %v4349 = vrot.slane %v4348, 1
      %v4350 = vadd.f32 %v4348, %v4349
      %v4351 = vlaneseq
      %v4352 = vshrl.u32 %v4351, 7
      %v4353 = vsub.s32 1, %v4352
      %v4354 = vrot.slane %v4265, %v4353
      %v4355 = vmul.f32 %v4354, %v1384
      %v4356 = vmul.f32 %v4354, %v1385
      %v4357 = vmul.f32 %v4355, 1.442695
      %v4358 = vpow.pop %v4357
      %v4359 = vmul.f32 %v4356, 1.442695
      %v4360 = vpow.pop %v4359
      %v4361 = vmul.f32 %v4358, %v4330
      %v4362 = vmul.f32 %v4360, %v4331
      %4363 = vset.pattern.permute.xlu0 1
      %4364 = vperm.xlu0 %4363, %v4286
      %v4365 = vpop.permute.xlu0 %4364
      %4367 = vset.pattern.permute.xlu0 1
      %4368 = vperm.xlu0 %4367, %v4287
      %v4369 = vpop.permute.xlu0 %4368
      %v4371 = vlaneseq
      %v4372 = vshrl.u32 %v4371, 7
      %v4373 = vsub.s32 1, %v4372
      %v4374 = vrot.slane %v4267, %v4373
      %v4375 = vmul.f32 %v4365, %v4374
      %v4376 = vmul.f32 %v4369, %v4374
      %v4377 = vadd.f32 %v4361, %v4375
      %v4378 = vadd.f32 %v4362, %v4376
      %4379 = vset.pattern.permute.xlu0 1
      %4380 = vperm.xlu0 %4379, %v4288
      %v4381 = vpop.permute.xlu0 %4380
      %4383 = vset.pattern.permute.xlu0 1
      %4384 = vperm.xlu0 %4383, %v4289
      %v4385 = vpop.permute.xlu0 %4384
      %v4387 = vmul.f32 %v4381, %v4377
      %v4388 = vmul.f32 %v4385, %v4378
      %v4389 = vadd.f32 %v4387, %v4388
      %v4390 = vrot.slane %v4389, 4
      %v4391 = vadd.f32 %v4389, %v4390
      %v4392 = vrot.slane %v4391, 2
      %v4393 = vadd.f32 %v4391, %v4392
      %v4394 = vrot.slane %v4393, 1
      %v4395 = vadd.f32 %v4393, %v4394
      %v4396 = vlaneseq
      %v4397 = vshrl.u32 %v4396, 7
      %v4398 = vsub.s32 2, %v4397
      %v4399 = vrot.slane %v4265, %v4398
      %v4400 = vmul.f32 %v4399, %v1384
      %v4401 = vmul.f32 %v4399, %v1385
      %v4402 = vmul.f32 %v4400, 1.442695
      %v4403 = vpow.pop %v4402
      %v4404 = vmul.f32 %v4401, 1.442695
      %v4405 = vpow.pop %v4404
      %v4406 = vmul.f32 %v4403, %v4377
      %v4407 = vmul.f32 %v4405, %v4378
      %4408 = vset.pattern.permute.xlu0 2
      %4409 = vperm.xlu0 %4408, %v4286
      %v4410 = vpop.permute.xlu0 %4409
      %4412 = vset.pattern.permute.xlu0 2
      %4413 = vperm.xlu0 %4412, %v4287
      %v4414 = vpop.permute.xlu0 %4413
      %v4416 = vlaneseq
      %v4417 = vshrl.u32 %v4416, 7
      %v4418 = vsub.s32 2, %v4417
      %v4419 = vrot.slane %v4267, %v4418
      %v4420 = vmul.f32 %v4410, %v4419
      %v4421 = vmul.f32 %v4414, %v4419
      %v4422 = vadd.f32 %v4406, %v4420
      %v4423 = vadd.f32 %v4407, %v4421
      %4424 = vset.pattern.permute.xlu0 2
      %4425 = vperm.xlu0 %4424, %v4288
      %v4426 = vpop.permute.xlu0 %4425
      %4428 = vset.pattern.permute.xlu0 2
      %4429 = vperm.xlu0 %4428, %v4289
      %v4430 = vpop.permute.xlu0 %4429
      %v4432 = vmul.f32 %v4426, %v4422
      %v4433 = vmul.f32 %v4430, %v4423
      %v4434 = vadd.f32 %v4432, %v4433
      %v4435 = vrot.slane %v4434, 4
      %v4436 = vadd.f32 %v4434, %v4435
      %v4437 = vrot.slane %v4436, 2
      %v4438 = vadd.f32 %v4436, %v4437
      %v4439 = vrot.slane %v4438, 1
      %v4440 = vadd.f32 %v4438, %v4439
      %v4441 = vlaneseq
      %v4442 = vshrl.u32 %v4441, 7
      %v4443 = vsub.s32 3, %v4442
      %v4444 = vrot.slane %v4265, %v4443
      %v4445 = vmul.f32 %v4444, %v1384
      %v4446 = vmul.f32 %v4444, %v1385
      %v4447 = vmul.f32 %v4445, 1.442695
      %v4448 = vpow.pop %v4447
      %v4449 = vmul.f32 %v4446, 1.442695
      %v4450 = vpow.pop %v4449
      %v4451 = vmul.f32 %v4448, %v4422
      %v4452 = vmul.f32 %v4450, %v4423
      %4453 = vset.pattern.permute.xlu0 3
      %4454 = vperm.xlu0 %4453, %v4286
      %v4455 = vpop.permute.xlu0 %4454
      %4457 = vset.pattern.permute.xlu0 3
      %4458 = vperm.xlu0 %4457, %v4287
      %v4459 = vpop.permute.xlu0 %4458
      %v4461 = vlaneseq
      %v4462 = vshrl.u32 %v4461, 7
      %v4463 = vsub.s32 3, %v4462
      %v4464 = vrot.slane %v4267, %v4463
      %v4465 = vmul.f32 %v4455, %v4464
      %v4466 = vmul.f32 %v4459, %v4464
      %v4467 = vadd.f32 %v4451, %v4465
      %v4468 = vadd.f32 %v4452, %v4466
      %4469 = vset.pattern.permute.xlu0 3
      %4470 = vperm.xlu0 %4469, %v4288
      %v4471 = vpop.permute.xlu0 %4470
      %4473 = vset.pattern.permute.xlu0 3
      %4474 = vperm.xlu0 %4473, %v4289
      %v4475 = vpop.permute.xlu0 %4474
      %v4477 = vmul.f32 %v4471, %v4467
      %v4478 = vmul.f32 %v4475, %v4468
      %v4479 = vadd.f32 %v4477, %v4478
      %v4480 = vrot.slane %v4479, 4
      %v4481 = vadd.f32 %v4479, %v4480
      %v4482 = vrot.slane %v4481, 2
      %v4483 = vadd.f32 %v4481, %v4482
      %v4484 = vrot.slane %v4483, 1
      %v4485 = vadd.f32 %v4483, %v4484
      %v4486 = vlaneseq
      %v4487 = vshrl.u32 %v4486, 7
      %v4488 = vsub.s32 4, %v4487
      %v4489 = vrot.slane %v4265, %v4488
      %v4490 = vmul.f32 %v4489, %v1384
      %v4491 = vmul.f32 %v4489, %v1385
      %v4492 = vmul.f32 %v4490, 1.442695
      %v4493 = vpow.pop %v4492
      %v4494 = vmul.f32 %v4491, 1.442695
      %v4495 = vpow.pop %v4494
      %v4496 = vmul.f32 %v4493, %v4467
      %v4497 = vmul.f32 %v4495, %v4468
      %4498 = vset.pattern.permute.xlu0 4
      %4499 = vperm.xlu0 %4498, %v4286
      %v4500 = vpop.permute.xlu0 %4499
      %4502 = vset.pattern.permute.xlu0 4
      %4503 = vperm.xlu0 %4502, %v4287
      %v4504 = vpop.permute.xlu0 %4503
      %v4506 = vlaneseq
      %v4507 = vshrl.u32 %v4506, 7
      %v4508 = vsub.s32 4, %v4507
      %v4509 = vrot.slane %v4267, %v4508
      %v4510 = vmul.f32 %v4500, %v4509
      %v4511 = vmul.f32 %v4504, %v4509
      %v4512 = vadd.f32 %v4496, %v4510
      %v4513 = vadd.f32 %v4497, %v4511
      %4514 = vset.pattern.permute.xlu0 4
      %4515 = vperm.xlu0 %4514, %v4288
      %v4516 = vpop.permute.xlu0 %4515
      %4518 = vset.pattern.permute.xlu0 4
      %4519 = vperm.xlu0 %4518, %v4289
      %v4520 = vpop.permute.xlu0 %4519
      %v4522 = vmul.f32 %v4516, %v4512
      %v4523 = vmul.f32 %v4520, %v4513
      %v4524 = vadd.f32 %v4522, %v4523
      %v4525 = vrot.slane %v4524, 4
      %v4526 = vadd.f32 %v4524, %v4525
      %v4527 = vrot.slane %v4526, 2
      %v4528 = vadd.f32 %v4526, %v4527
      %v4529 = vrot.slane %v4528, 1
      %v4530 = vadd.f32 %v4528, %v4529
      %v4531 = vlaneseq
      %v4532 = vshrl.u32 %v4531, 7
      %v4533 = vsub.s32 5, %v4532
      %v4534 = vrot.slane %v4265, %v4533
      %v4535 = vmul.f32 %v4534, %v1384
      %v4536 = vmul.f32 %v4534, %v1385
      %v4537 = vmul.f32 %v4535, 1.442695
      %v4538 = vpow.pop %v4537
      %v4539 = vmul.f32 %v4536, 1.442695
      %v4540 = vpow.pop %v4539
      %v4541 = vmul.f32 %v4538, %v4512
      %v4542 = vmul.f32 %v4540, %v4513
      %4543 = vset.pattern.permute.xlu0 5
      %4544 = vperm.xlu0 %4543, %v4286
      %v4545 = vpop.permute.xlu0 %4544
      %4547 = vset.pattern.permute.xlu0 5
      %4548 = vperm.xlu0 %4547, %v4287
      %v4549 = vpop.permute.xlu0 %4548
      %v4551 = vlaneseq
      %v4552 = vshrl.u32 %v4551, 7
      %v4553 = vsub.s32 5, %v4552
      %v4554 = vrot.slane %v4267, %v4553
      %v4555 = vmul.f32 %v4545, %v4554
      %v4556 = vmul.f32 %v4549, %v4554
      %v4557 = vadd.f32 %v4541, %v4555
      %v4558 = vadd.f32 %v4542, %v4556
      %4559 = vset.pattern.permute.xlu0 5
      %4560 = vperm.xlu0 %4559, %v4288
      %v4561 = vpop.permute.xlu0 %4560
      %4563 = vset.pattern.permute.xlu0 5
      %4564 = vperm.xlu0 %4563, %v4289
      %v4565 = vpop.permute.xlu0 %4564
      %v4567 = vmul.f32 %v4561, %v4557
      %v4568 = vmul.f32 %v4565, %v4558
      %v4569 = vadd.f32 %v4567, %v4568
      %v4570 = vrot.slane %v4569, 4
      %v4571 = vadd.f32 %v4569, %v4570
      %v4572 = vrot.slane %v4571, 2
      %v4573 = vadd.f32 %v4571, %v4572
      %v4574 = vrot.slane %v4573, 1
      %v4575 = vadd.f32 %v4573, %v4574
      %v4576 = vlaneseq
      %v4577 = vshrl.u32 %v4576, 7
      %v4578 = vsub.s32 6, %v4577
      %v4579 = vrot.slane %v4265, %v4578
      %v4580 = vmul.f32 %v4579, %v1384
      %v4581 = vmul.f32 %v4579, %v1385
      %v4582 = vmul.f32 %v4580, 1.442695
      %v4583 = vpow.pop %v4582
      %v4584 = vmul.f32 %v4581, 1.442695
      %v4585 = vpow.pop %v4584
      %v4586 = vmul.f32 %v4583, %v4557
      %v4587 = vmul.f32 %v4585, %v4558
      %4588 = vset.pattern.permute.xlu0 6
      %4589 = vperm.xlu0 %4588, %v4286
      %v4590 = vpop.permute.xlu0 %4589
      %4592 = vset.pattern.permute.xlu0 6
      %4593 = vperm.xlu0 %4592, %v4287
      %v4594 = vpop.permute.xlu0 %4593
      %v4596 = vlaneseq
      %v4597 = vshrl.u32 %v4596, 7
      %v4598 = vsub.s32 6, %v4597
      %v4599 = vrot.slane %v4267, %v4598
      %v4600 = vmul.f32 %v4590, %v4599
      %v4601 = vmul.f32 %v4594, %v4599
      %v4602 = vadd.f32 %v4586, %v4600
      %v4603 = vadd.f32 %v4587, %v4601
      %4604 = vset.pattern.permute.xlu0 6
      %4605 = vperm.xlu0 %4604, %v4288
      %v4606 = vpop.permute.xlu0 %4605
      %4608 = vset.pattern.permute.xlu0 6
      %4609 = vperm.xlu0 %4608, %v4289
      %v4610 = vpop.permute.xlu0 %4609
      %v4612 = vmul.f32 %v4606, %v4602
      %v4613 = vmul.f32 %v4610, %v4603
      %v4614 = vadd.f32 %v4612, %v4613
      %v4615 = vrot.slane %v4614, 4
      %v4616 = vadd.f32 %v4614, %v4615
      %v4617 = vrot.slane %v4616, 2
      %v4618 = vadd.f32 %v4616, %v4617
      %v4619 = vrot.slane %v4618, 1
      %v4620 = vadd.f32 %v4618, %v4619
      %v4621 = vlaneseq
      %v4622 = vshrl.u32 %v4621, 7
      %v4623 = vsub.s32 7, %v4622
      %v4624 = vrot.slane %v4265, %v4623
      %v4625 = vmul.f32 %v4624, %v1384
      %v4626 = vmul.f32 %v4624, %v1385
      %v4627 = vmul.f32 %v4625, 1.442695
      %v4628 = vpow.pop %v4627
      %v4629 = vmul.f32 %v4626, 1.442695
      %v4630 = vpow.pop %v4629
      %v4631 = vmul.f32 %v4628, %v4602
      %v4632 = vmul.f32 %v4630, %v4603
      %4633 = vset.pattern.permute.xlu0 7
      %4634 = vperm.xlu0 %4633, %v4286
      %v4635 = vpop.permute.xlu0 %4634
      %4637 = vset.pattern.permute.xlu0 7
      %4638 = vperm.xlu0 %4637, %v4287
      %v4639 = vpop.permute.xlu0 %4638
      %v4641 = vlaneseq
      %v4642 = vshrl.u32 %v4641, 7
      %v4643 = vsub.s32 7, %v4642
      %v4644 = vrot.slane %v4267, %v4643
      %v4645 = vmul.f32 %v4635, %v4644
      %v4646 = vmul.f32 %v4639, %v4644
      %v4647 = vadd.f32 %v4631, %v4645
      %v4648 = vadd.f32 %v4632, %v4646
      %4649 = vset.pattern.permute.xlu0 7
      %4650 = vperm.xlu0 %4649, %v4288
      %v4651 = vpop.permute.xlu0 %4650
      %4653 = vset.pattern.permute.xlu0 7
      %4654 = vperm.xlu0 %4653, %v4289
      %v4655 = vpop.permute.xlu0 %4654
      %v4657 = vmul.f32 %v4651, %v4647
      %v4658 = vmul.f32 %v4655, %v4648
      %v4659 = vadd.f32 %v4657, %v4658
      %v4660 = vrot.slane %v4659, 4
      %v4661 = vadd.f32 %v4659, %v4660
      %v4662 = vrot.slane %v4661, 2
      %v4663 = vadd.f32 %v4661, %v4662
      %v4664 = vrot.slane %v4663, 1
      %v4665 = vadd.f32 %v4663, %v4664
      %v4666 = vsel %vm1787, %v4350, %v4395
      %v4667 = vsel %vm1789, %v4666, %v4440
      %v4668 = vsel %vm1342, %v4667, %v4485
      %v4669 = vsel %vm1792, %v4668, %v4530
      %v4670 = vsel %vm739, %v4669, %v4575
      %v4671 = vsel %vm682, %v4670, %v4620
      %v4672 = vsel %vm623, %v4671, %v4665
      %s4673 = scalar_lea.vmem [#allocation7], 56
      %4674 = vst [vmem:[%s4673] sm:$0xff] %v4672
      %4675 = vst [vmem:[#allocation2] sm:$0xff] %v4647
      %4676 = vst [vmem:[#allocation2 + $0x8] sm:$0xff] %v4648
      %v4677 = vld [vmem:[#allocation7] sm:$0xff]
      %v4678 = vld [vmem:[#allocation7 + $0x8] sm:$0xff]
      %v4679 = vld [vmem:[#allocation7 + $0x10] sm:$0xff]
      %v4680 = vld [vmem:[#allocation7 + $0x18] sm:$0xff]
      %v4681 = vld [vmem:[#allocation7 + $0x20] sm:$0xff]
      %v4682 = vld [vmem:[#allocation7 + $0x28] sm:$0xff]
      %v4683 = vld [vmem:[#allocation7 + $0x30] sm:$0xff]
      %v4684 = vld [vmem:[#allocation7 + $0x38] sm:$0xff]
      %v4685 = vld [vmem:[%s8] sm:$0x1]
      %v4687 = vlaneseq
      %v4688 = vshrl.u32 %v4687, 7
      %v4689 = vsub.s32 0, %v4688
      %v4690 = vrot.slane %v4685, %v4689
      %v4692 = vmul.f32 %v843, %v4690
      %v4693 = vmul.f32 %v844, %v4690
      %v4694 = vmul.f32 %v845, %v4690
      %v4695 = vmul.f32 %v846, %v4690
      %v4696 = vmul.f32 %v847, %v4690
      %v4697 = vmul.f32 %v848, %v4690
      %v4698 = vmul.f32 %v849, %v4690
      %v4699 = vmul.f32 %v850, %v4690
      %v4700 = vmul.f32 %v851, %v4690
      %v4710 = vrot.slane %v4692, 5
      %v4711 = vrot.slane %v4693, 5
      %v4712 = vsel %vm1342, %v4710, %v4711
      %v4713 = vrot.slane %v4694, 5
      %v4714 = vsel %vm1342, %v4711, %v4713
      %v4715 = vrot.slane %v4695, 5
      %v4716 = vsel %vm1342, %v4713, %v4715
      %v4717 = vrot.slane %v4696, 5
      %v4718 = vsel %vm1342, %v4715, %v4717
      %v4719 = vrot.slane %v4697, 5
      %v4720 = vsel %vm1342, %v4717, %v4719
      %v4721 = vrot.slane %v4698, 5
      %v4722 = vsel %vm1342, %v4719, %v4721
      %v4723 = vrot.slane %v4699, 5
      %v4724 = vsel %vm1342, %v4721, %v4723
      %v4725 = vrot.slane %v4700, 5
      %v4726 = vsel %vm1342, %v4723, %v4725
      %v4735 = vadd.f32 %v4677, %v4712
      %v4736 = vadd.f32 %v4678, %v4714
      %v4737 = vadd.f32 %v4679, %v4716
      %v4738 = vadd.f32 %v4680, %v4718
      %v4739 = vadd.f32 %v4681, %v4720
      %v4740 = vadd.f32 %v4682, %v4722
      %v4741 = vadd.f32 %v4683, %v4724
      %v4742 = vadd.f32 %v4684, %v4726
      %v4743 = vxor.u32 %v533, 2147483648
      %v4744 = vxor.u32 %v537, 2147483648
      %v4745 = vxor.u32 %v543, 2147483648
      %v4746 = vxor.u32 %v547, 2147483648
      %v4747 = vxor.u32 %v553, 2147483648
      %v4748 = vxor.u32 %v557, 2147483648
      %v4749 = vxor.u32 %v563, 2147483648
      %v4750 = vxor.u32 %v567, 2147483648
      %v4751 = vmul.f32 %v4743, 1.442695
      %v4752 = vpow.pop %v4751
      %v4753 = vmul.f32 %v4744, 1.442695
      %v4754 = vpow.pop %v4753
      %v4755 = vmul.f32 %v4745, 1.442695
      %v4756 = vpow.pop %v4755
      %v4757 = vmul.f32 %v4746, 1.442695
      %v4758 = vpow.pop %v4757
      %v4759 = vmul.f32 %v4747, 1.442695
      %v4760 = vpow.pop %v4759
      %v4761 = vmul.f32 %v4748, 1.442695
      %v4762 = vpow.pop %v4761
      %v4763 = vmul.f32 %v4749, 1.442695
      %v4764 = vpow.pop %v4763
      %v4765 = vmul.f32 %v4750, 1.442695
      %v4766 = vpow.pop %v4765
      %v4767 = vadd.f32 %v4752, 1.0
      %v4768 = vadd.f32 %v4754, 1.0
      %v4769 = vadd.f32 %v4756, 1.0
      %v4770 = vadd.f32 %v4758, 1.0
      %v4771 = vadd.f32 %v4760, 1.0
      %v4772 = vadd.f32 %v4762, 1.0
      %v4773 = vadd.f32 %v4764, 1.0
      %v4774 = vadd.f32 %v4766, 1.0
      %v4775 = vrcp.pop %v4767
      %v4776 = vmul.f32 1.0, %v4775
      %v4777 = vrcp.pop %v4768
      %v4778 = vmul.f32 1.0, %v4777
      %v4779 = vrcp.pop %v4769
      %v4780 = vmul.f32 1.0, %v4779
      %v4781 = vrcp.pop %v4770
      %v4782 = vmul.f32 1.0, %v4781
      %v4783 = vrcp.pop %v4771
      %v4784 = vmul.f32 1.0, %v4783
      %v4785 = vrcp.pop %v4772
      %v4786 = vmul.f32 1.0, %v4785
      %v4787 = vrcp.pop %v4773
      %v4788 = vmul.f32 1.0, %v4787
      %v4789 = vrcp.pop %v4774
      %v4790 = vmul.f32 1.0, %v4789
      %v4791 = vmul.f32 %v533, %v4776
      %v4792 = vmul.f32 %v537, %v4778
      %v4793 = vmul.f32 %v543, %v4780
      %v4794 = vmul.f32 %v547, %v4782
      %v4795 = vmul.f32 %v553, %v4784
      %v4796 = vmul.f32 %v557, %v4786
      %v4797 = vmul.f32 %v563, %v4788
      %v4798 = vmul.f32 %v567, %v4790
      %v4799 = vmul.f32 %v4735, %v4791
      %v4800 = vmul.f32 %v4736, %v4792
      %v4801 = vmul.f32 %v4737, %v4793
      %v4802 = vmul.f32 %v4738, %v4794
      %v4803 = vmul.f32 %v4739, %v4795
      %v4804 = vmul.f32 %v4740, %v4796
      %v4805 = vmul.f32 %v4741, %v4797
      %v4806 = vmul.f32 %v4742, %v4798
      %v4807 = vpack.c.bf16 %v4800, %v4799
      %v4808 = vpack.c.bf16 %v4802, %v4801
      %v4809 = vpack.c.bf16 %v4804, %v4803
      %v4810 = vpack.c.bf16 %v4806, %v4805
      %v4811 = vld [vmem:[%s9] sm:$0xf]
      %v4812 = vld [vmem:[%s9 + $0x4] sm:$0xf]
      %v4813 = vld [vmem:[%s9 + $0x8] sm:$0xf]
      %v4814 = vld [vmem:[%s9 + $0xc] sm:$0xf]
      %v4815 = vld [vmem:[%s9 + $0x10] sm:$0xf]
      %v4816 = vld [vmem:[%s9 + $0x14] sm:$0xf]
      %v4817 = vld [vmem:[%s9 + $0x18] sm:$0xf]
      %v4818 = vld [vmem:[%s9 + $0x1c] sm:$0xf]
      %v4819 = vld [vmem:[%s9 + $0x20] sm:$0xf]
      %v4820 = vld [vmem:[%s9 + $0x24] sm:$0xf]
      %v4821 = vld [vmem:[%s9 + $0x28] sm:$0xf]
      %v4822 = vld [vmem:[%s9 + $0x2c] sm:$0xf]
      %v4823 = vld [vmem:[%s9 + $0x30] sm:$0xf]
      %v4824 = vld [vmem:[%s9 + $0x34] sm:$0xf]
      %v4825 = vld [vmem:[%s9 + $0x38] sm:$0xf]
      %v4826 = vld [vmem:[%s9 + $0x3c] sm:$0xf]
      %v4843 = vunpack.c.l.b16 %v4811
      %v4844 = vunpack.c.l.b16 %v4812
      %v4845 = vunpack.c.l.b16 %v4813
      %v4846 = vunpack.c.l.b16 %v4814
      %v4847 = vunpack.c.l.b16 %v4815
      %v4848 = vunpack.c.l.b16 %v4816
      %v4849 = vunpack.c.l.b16 %v4817
      %v4850 = vunpack.c.l.b16 %v4818
      %v4851 = vunpack.c.l.b16 %v4819
      %v4852 = vunpack.c.l.b16 %v4820
      %v4853 = vunpack.c.l.b16 %v4821
      %v4854 = vunpack.c.l.b16 %v4822
      %v4855 = vunpack.c.l.b16 %v4823
      %v4856 = vunpack.c.l.b16 %v4824
      %v4857 = vunpack.c.l.b16 %v4825
      %v4858 = vunpack.c.l.b16 %v4826
      %v4859 = vpack.c.b16 %v4844, %v4843
      %v4860 = vpack.c.b16 %v4846, %v4845
      %v4861 = vpack.c.b16 %v4848, %v4847
      %v4862 = vpack.c.b16 %v4850, %v4849
      %v4863 = vpack.c.b16 %v4852, %v4851
      %v4864 = vpack.c.b16 %v4854, %v4853
      %v4865 = vpack.c.b16 %v4856, %v4855
      %v4866 = vpack.c.b16 %v4858, %v4857
      %4875 = vmatprep.subr.bf16.mxu0 0
      %4876 = vmatpush1.bf16.msra.mxu0 %v4859
      %4877 = vmatprep.subr.bf16.mxu0 0
      %4878 = vmatpush1.bf16.msra.mxu0 %v4860
      %4879 = vmatprep.subr.bf16.mxu0 0
      %4880 = vmatpush1.bf16.msra.mxu0 %v4861
      %4881 = vmatprep.subr.bf16.mxu0 0
      %4882 = vmatpush1.bf16.msra.mxu0 %v4862
      %4883 = vmatprep.subr.bf16.mxu0 0
      %4884 = vmatpush1.bf16.msra.mxu0 %v4863
      %4885 = vmatprep.subr.bf16.mxu0 0
      %4886 = vmatpush1.bf16.msra.mxu0 %v4864
      %4887 = vmatprep.subr.bf16.mxu0 0
      %4888 = vmatpush1.bf16.msra.mxu0 %v4865
      %4889 = vmatprep.subr.bf16.mxu0 0
      %4890 = vmatpush1.bf16.msra.mxu0 %v4866
      %4891 = vmatprep.subr.bf16.mxu0 0
      %4892 = vmatpush1.bf16.msra.mxu0 0
      %4893 = vmatprep.subr.bf16.mxu0 0
      %4894 = vmatpush1.bf16.msra.mxu0 0
      %4895 = vmatprep.subr.bf16.mxu0 0
      %4896 = vmatpush1.bf16.msra.mxu0 0
      %4897 = vmatprep.subr.bf16.mxu0 0
      %4898 = vmatpush1.bf16.msra.mxu0 0
      %4899 = vmatprep.subr.bf16.mxu0 0
      %4900 = vmatpush1.bf16.msra.mxu0 0
      %4901 = vmatprep.subr.bf16.mxu0 0
      %4902 = vmatpush1.bf16.msra.mxu0 0
      %4903 = vmatprep.subr.bf16.mxu0 0
      %4904 = vmatpush1.bf16.msra.mxu0 0
      %4905 = vmatprep.subr.bf16.mxu0 0
      %4906 = vmatpush1.bf16.msra.mxu0 0
      %4907 = vmatprep.mubr.bf16.mxu0 0
      %4908 = vmatmul.mubr.bf16.gmra.mrb[0].mxu0 %v4807
      %v4909 = vpop.f32.mrb[0].mxu0
      %v4910 = vadd.f32 0.0, %v4909
      %v4911 = vpop.f32.mrb[0].mxu0
      %v4912 = vpop.f32.mrb[0].mxu0
      %v4913 = vadd.f32 0.0, %v4912
      %v4914 = vpop.f32.mrb[0].mxu0
      %4915 = vmatprep.mubr.bf16.mxu0 0
      %4916 = vmatmul.mubr.bf16.gmra.mrb[0].mxu0 %v4808
      %v4917 = vpop.f32.mrb[0].mxu0
      %v4918 = vadd.f32 0.0, %v4917
      %v4919 = vpop.f32.mrb[0].mxu0
      %v4920 = vpop.f32.mrb[0].mxu0
      %v4921 = vadd.f32 0.0, %v4920
      %v4922 = vpop.f32.mrb[0].mxu0
      %4923 = vmatprep.mubr.bf16.mxu0 0
      %4924 = vmatmul.mubr.bf16.gmra.mrb[0].mxu0 %v4809
      %v4925 = vpop.f32.mrb[0].mxu0
      %v4926 = vadd.f32 0.0, %v4925
      %v4927 = vpop.f32.mrb[0].mxu0
      %v4928 = vpop.f32.mrb[0].mxu0
      %v4929 = vadd.f32 0.0, %v4928
      %v4930 = vpop.f32.mrb[0].mxu0
      %4931 = vmatprep.mubr.bf16.mxu0 0
      %4932 = vmatmul.mubr.bf16.gmra.mrb[0].mxu0 %v4810
      %v4933 = vpop.f32.mrb[0].mxu0
      %v4934 = vadd.f32 0.0, %v4933
      %v4935 = vpop.f32.mrb[0].mxu0
      %v4936 = vpop.f32.mrb[0].mxu0
      %v4937 = vadd.f32 0.0, %v4936
      %v4938 = vpop.f32.mrb[0].mxu0
      %4939 = vdwg.mxu0
      %v4940 = vpack.c.bf16 %v4913, %v4910
      %v4941 = vpack.c.bf16 %v4921, %v4918
      %v4942 = vpack.c.bf16 %v4929, %v4926
      %v4943 = vpack.c.bf16 %v4937, %v4934
      %v4948 = vunpack.c.l.b16 %v4940
      %v4949 = vunpack.c.h.b16 %v4940
      %v4950 = vunpack.c.l.b16 %v4941
      %v4951 = vunpack.c.h.b16 %v4941
      %v4952 = vunpack.c.l.b16 %v4942
      %v4953 = vunpack.c.h.b16 %v4942
      %v4954 = vunpack.c.l.b16 %v4943
      %v4955 = vunpack.c.h.b16 %v4943
      %v4956 = vpack.c.b16 %v4948, %v4948
      %v4957 = vpack.c.b16 %v4949, %v4949
      %v4958 = vpack.c.b16 %v4950, %v4950
      %v4959 = vpack.c.b16 %v4951, %v4951
      %v4960 = vpack.c.b16 %v4952, %v4952
      %v4961 = vpack.c.b16 %v4953, %v4953
      %v4962 = vpack.c.b16 %v4954, %v4954
      %v4963 = vpack.c.b16 %v4955, %v4955
      %vm4972 = vcmask 519168
      %4973 = vst.msk [vmem:[%s397] sm:$0xf] %vm4972, %v4956
      %4974 = vst.msk [vmem:[%s397 + $0x4] sm:$0xf] %vm4972, %v4957
      %4975 = vst.msk [vmem:[%s397 + $0x8] sm:$0xf] %vm4972, %v4958
      %4976 = vst.msk [vmem:[%s397 + $0xc] sm:$0xf] %vm4972, %v4959
      %4977 = vst.msk [vmem:[%s397 + $0x10] sm:$0xf] %vm4972, %v4960
      %4978 = vst.msk [vmem:[%s397 + $0x14] sm:$0xf] %vm4972, %v4961
      %4979 = vst.msk [vmem:[%s397 + $0x18] sm:$0xf] %vm4972, %v4962
      %4980 = vst.msk [vmem:[%s397 + $0x1c] sm:$0xf] %vm4972, %v4963
      %s4981 = smul.u32 8, %s26
      %p4982 = scmp.lt.s32.totalorder %s25, 1
      %s4983 = scalar_select %p4982, %s25, 1
      %p4984 = scmp.lt.s32.totalorder %s4981, 15
      %s4985 = scalar_select %p4984, %s4981, 15
      %s4986 = smul.addr %s4983, 16
      %s4987 = sadd.s32 %s4985, %s4986
      %s4988 = smul.addr %s4987, 4
      %s4989 = scalar_lea.vmem %s10, %s4988
      // Predicated region
      $region65: #{tpu_custom_call.1} parent=59 // pred_check
        %p4990 = pneg %p270
      $region66: #{tpu_custom_call.1} parent=59 // pred_check_branch
        %4992 = sbr.rel (%p4990) target = $region68
      $region67: #{tpu_custom_call.1} parent=59 // pred_region
        %s4993 = smul.u32 8, %s26
      $region68: #{tpu_custom_call.1} parent=59 // pred_fallthru
        _
    $region60: #{tpu_custom_call.1} parent=5 // pred_fallthru
      _
    %p4994 = scmp.le.s32.totalorder 2, %s16
    // Predicated region
    $region69: #{tpu_custom_call.1} parent=5 // pred_check
      %p4995 = pneg %p4994
    $region70: #{tpu_custom_call.1} parent=5 // pred_check_branch
      %4997 = sbr.rel (%p4995) target = $region72
    $region71: #{tpu_custom_call.1} parent=5 // pred_region
      %s4998 = ssub.s32 %s16, 2
      // Predicated region
      $region73: #{tpu_custom_call.1} parent=71 // pred_check
        %p4999 = pneg %p276
      $region74: #{tpu_custom_call.1} parent=71 // pred_check_branch
        %5001 = sbr.rel (%p4999) target = $region76
      $region75: #{tpu_custom_call.1} parent=71 // pred_region
        %s5002 = smul.u32 8, %s28
        %p5003 = scmp.lt.s32.totalorder %s27, 1
        %s5004 = scalar_select %p5003, %s27, 1
        %p5005 = scmp.lt.s32.totalorder %s5002, 15
        %s5006 = scalar_select %p5005, %s5002, 15
        %s5007 = smul.addr %s5004, 16
        %s5008 = sadd.s32 %s5006, %s5007
        %s5009 = smul.addr %s5008, 4
        %s5010 = scalar_lea.vmem %s10, %s5009
      $region76: #{tpu_custom_call.1} parent=71 // pred_fallthru
        _
    $region72: #{tpu_custom_call.1} parent=5 // pred_fallthru
      _
  $region6: #{tpu_custom_call.1} parent=0 // loop_footer
    %s20 = sadd.s32 1, %s16
  $region7: #{tpu_custom_call.1} parent=0 // loop_footer_branch
    %15 = sbr.rel target = $region3
  $region8: #{tpu_custom_call.1} parent=0 // loop_exit
    _

</llo_original>
